<compile_context>
chip_gen: v7x
topology: tpu7x:2x2x1
jax: 0.10.0
libtpu: 0.0.40
codegen_flags: <defaults>
</compile_context>

<pallas_src>
import math
from functools import partial

import jax
import jax.numpy as jnp
from jax.experimental import pallas as pl
from jax.experimental.pallas import tpu as pltpu

_LANE = 128


# --------------------------------------------------------------------------
# generation-aware tuning knobs
# --------------------------------------------------------------------------
def _detect_v7():
    try:
        kind = jax.devices()[0].device_kind.lower()
    except Exception:
        return False
    return ("v7" in kind) or ("tpu7" in kind)


_IS_V7 = _detect_v7()
# bytes per (C, TS) activation block (double-buffered per stream by Pallas)
_CONV_CAP = (512 << 10) if _IS_V7 else (1 << 20)
_FREQ_CAP = (256 << 10) if _IS_V7 else (512 << 10)
_VMEM_LIMIT = (40 << 20) if _IS_V7 else (64 << 20)

_COMPILER_PARAMS = pltpu.CompilerParams(
    dimension_semantics=("parallel", "parallel"),
    vmem_limit_bytes=_VMEM_LIMIT)


# --------------------------------------------------------------------------
# helpers
# --------------------------------------------------------------------------
def _pad_lanes(x, mult):
    """Zero-pad last dim of x up to a multiple of `mult`. Returns (xp, S0)."""
    S = x.shape[-1]
    Sp = ((S + mult - 1) // mult) * mult
    if Sp == S:
        return x, S
    pad = [(0, 0)] * (x.ndim - 1) + [(0, Sp - S)]
    return jnp.pad(x, pad), S


def _spatial_tile(S, C, cap_bytes):
    """Largest lane-aligned tile dividing S with C*TS*4 <= cap_bytes."""
    cap_ts = max(_LANE, (cap_bytes // (4 * max(C, 1))) // _LANE * _LANE)
    ts = min(S, cap_ts)
    while S % ts != 0:
        ts -= _LANE
    return ts


def _mm(w, x):
    """(Cout,Cin) @ (Cin,TS). Tiny C -> exact-f32 VPU FMAs (no MXU)."""
    cout, cin = w.shape
    if cin <= 16:
        acc = w[:, 0:1] * x[0:1, :]
        for c in range(1, cin):
            acc = acc + w[:, c:c + 1] * x[c:c + 1, :]
        return acc
    return jnp.dot(w, x, preferred_element_type=jnp.float32)


def _lrelu(v, slope=0.1):
    return jnp.where(v >= 0, v, slope * v)


# --------------------------------------------------------------------------
# kernel 1: (optional clamp) + 1x1 conv      y = W @ clamp?(x) + b
# --------------------------------------------------------------------------
def _conv_kernel(x_ref, w_ref, b_ref, o_ref, *, clamp_in):
    x = x_ref[0]                                     # (Cin, TS) lane-dense
    if clamp_in:
        x = jnp.clip(x, -10.0, 10.0)
    o_ref[0] = _mm(w_ref[...], x) + b_ref[...]


def conv1x1_pallas(x, w, b, clamp_in=False):
    """x: (B, Cin, S) -> (B, Cout, S)."""
    B, Cin, S = x.shape
    Cout = w.shape[0]
    xp, S0 = _pad_lanes(x, _LANE)
    Sp = xp.shape[-1]
    TS = _spatial_tile(Sp, max(Cin, Cout), _CONV_CAP)
    out = pl.pallas_call(
        partial(_conv_kernel, clamp_in=clamp_in),
        grid=(B, Sp // TS),
        in_specs=[pl.BlockSpec((1, Cin, TS), lambda b_, s_: (b_, 0, s_)),
                  pl.BlockSpec((Cout, Cin), lambda b_, s_: (0, 0)),
                  pl.BlockSpec((Cout, 1), lambda b_, s_: (0, 0))],
        out_specs=pl.BlockSpec((1, Cout, TS), lambda b_, s_: (b_, 0, s_)),
        out_shape=jax.ShapeDtypeStruct((B, Cout, Sp), jnp.float32),
        compiler_params=_COMPILER_PARAMS,
    )(xp, w, b.reshape(Cout, 1))
    return out if Sp == S0 else out[:, :, :S0]


# --------------------------------------------------------------------------
# kernel 1b: dual-input clamp + 1x1 conv (concat-free fpre for 2C blocks)
#   y = Wa @ clamp(a) + Wb @ clamp(b) + bias
# --------------------------------------------------------------------------
def _conv2_kernel(a_ref, b_ref, wa_ref, wb_ref, bias_ref, o_ref):
    a = jnp.clip(a_ref[0], -10.0, 10.0)
    b = jnp.clip(b_ref[0], -10.0, 10.0)
    o_ref[0] = _mm(wa_ref[...], a) + _mm(wb_ref[...], b) + bias_ref[...]


def conv1x1_dual_pallas(a, b, w, bias):
    """a, b: (B, C, S); w: (2C, 2C) acting on cat(a, b); returns (B, 2C, S)."""
    B, C, S = a.shape
    C2 = w.shape[0]
    ap, S0 = _pad_lanes(a, _LANE)
    bp, _ = _pad_lanes(b, _LANE)
    Sp = ap.shape[-1]
    TS = _spatial_tile(Sp, C2, _CONV_CAP)
    act_in = pl.BlockSpec((1, C, TS), lambda b_, s_: (b_, 0, s_))
    out = pl.pallas_call(
        _conv2_kernel,
        grid=(B, Sp // TS),
        in_specs=[act_in, act_in,
                  pl.BlockSpec((C2, C), lambda b_, s_: (0, 0)),
                  pl.BlockSpec((C2, C), lambda b_, s_: (0, 0)),
                  pl.BlockSpec((C2, 1), lambda b_, s_: (0, 0))],
        out_specs=pl.BlockSpec((1, C2, TS), lambda b_, s_: (b_, 0, s_)),
        out_shape=jax.ShapeDtypeStruct((B, C2, Sp), jnp.float32),
        compiler_params=_COMPILER_PARAMS,
    )(ap, bp, w[:, :C], w[:, C:], bias.reshape(C2, 1))
    return out if Sp == S0 else out[:, :, :S0]


# --------------------------------------------------------------------------
# kernel 2: frequency-domain processing (mag/phase, process1, process2)
# --------------------------------------------------------------------------
def _freq_kernel(re_ref, im_ref,
                 w1a_ref, b1a_ref, w1b_ref, b1b_ref,
                 w2a_ref, b2a_ref, w2b_ref, b2b_ref,
                 ore_ref, oim_ref):
    re = re_ref[0]
    im = im_ref[0]

    mag = jnp.sqrt(re * re + im * im) + 1e-6          # torch.abs(complex)+eps
    pha = jnp.arctan2(im, re)                          # torch.angle

    # phase chain first (re/im die early; shorter live ranges at big TS)
    p = _mm(w2a_ref[...], pha) + b2a_ref[...]
    p = _lrelu(p)
    p = _mm(w2b_ref[...], p) + b2b_ref[...]
    cos_p = jnp.cos(p)
    sin_p = jnp.sin(p)

    # magnitude chain: conv1x1 -> LeakyReLU(0.1) -> conv1x1 -> clamp
    m = _mm(w1a_ref[...], mag) + b1a_ref[...]
    m = _lrelu(m)
    m = _mm(w1b_ref[...], m) + b1b_ref[...]
    m = jnp.clip(m, 0.0, 1e4)

    ore_ref[0] = m * cos_p
    oim_ref[0] = m * sin_p


def freq_pallas(re, im, p):
    """re, im: (B, C, Sf) -> (ore, oim) same shape."""
    B, C, Sf = re.shape
    # sublane fold: C=4 -> view as 8 "channels" with half the spatial length
    F = (8 // C) if (C < 8 and 8 % C == 0) else 1
    mult = _LANE * F
    rep, _ = _pad_lanes(re, mult)
    imp, _ = _pad_lanes(im, mult)
    Sp = rep.shape[-1]
    Cf, Sff = C * F, Sp // F
    rep = rep.reshape(B, Cf, Sff)          # free row-major reinterpretation
    imp = imp.reshape(B, Cf, Sff)

    if F > 1:
        eyeF = jnp.eye(F, dtype=jnp.float32)
        fw = lambda w: jnp.kron(w, eyeF)                 # block-diag duplication
        fb = lambda v: jnp.repeat(v, F).reshape(Cf, 1)
    else:
        fw = lambda w: w
        fb = lambda v: v.reshape(Cf, 1)

    TS = _spatial_tile(Sff, Cf, _FREQ_CAP)
    act = pl.BlockSpec((1, Cf, TS), lambda b_, s_: (b_, 0, s_))
    wsp = pl.BlockSpec((Cf, Cf), lambda b_, s_: (0, 0))
    bsp = pl.BlockSpec((Cf, 1), lambda b_, s_: (0, 0))
    ore, oim = pl.pallas_call(
        _freq_kernel,
        grid=(B, Sff // TS),
        in_specs=[act, act, wsp, bsp, wsp, bsp, wsp, bsp, wsp, bsp],
        out_specs=(act, act),
        out_shape=(jax.ShapeDtypeStruct((B, Cf, Sff), jnp.float32),
                   jax.ShapeDtypeStruct((B, Cf, Sff), jnp.float32)),
        compiler_params=_COMPILER_PARAMS,
    )(rep, imp,
      fw(p["p1a_w"]), fb(p["p1a_b"]), fw(p["p1b_w"]), fb(p["p1b_b"]),
      fw(p["p2a_w"]), fb(p["p2a_b"]), fw(p["p2b_w"]), fb(p["p2b_b"]))
    ore = ore.reshape(B, C, Sp)
    oim = oim.reshape(B, C, Sp)
    if Sp != Sf:
        ore = ore[:, :, :Sf]
        oim = oim[:, :, :Sf]
    return ore, oim


# --------------------------------------------------------------------------
# kernel 3: fused FEB-post (add + clamp) + ProcessBlock cat-conv + residual
#   t   = clamp(irfft_out + clamp(x,-10,10), -10, 10)      (FEB output)
#   out = Wcat @ t + bcat + x                              (ProcessBlock output)
# --------------------------------------------------------------------------
def _postcat_kernel(f_ref, x_ref, w_ref, b_ref, o_ref):
    x = x_ref[0]
    t = jnp.clip(f_ref[0] + jnp.clip(x, -10.0, 10.0), -10.0, 10.0)
    o_ref[0] = _mm(w_ref[...], t) + b_ref[...] + x


def postcat_pallas(f, x, w, b):
    B, C, S = f.shape
    fp, S0 = _pad_lanes(f, _LANE)
    xp, _ = _pad_lanes(x, _LANE)
    Sp = fp.shape[-1]
    TS = _spatial_tile(Sp, C, _CONV_CAP)
    act = pl.BlockSpec((1, C, TS), lambda b_, s_: (b_, 0, s_))
    out = pl.pallas_call(
        _postcat_kernel,
        grid=(B, Sp // TS),
        in_specs=[act, act,
                  pl.BlockSpec((C, C), lambda b_, s_: (0, 0)),
                  pl.BlockSpec((C, 1), lambda b_, s_: (0, 0))],
        out_specs=act,
        out_shape=jax.ShapeDtypeStruct((B, C, Sp), jnp.float32),
        compiler_params=_COMPILER_PARAMS,
    )(fp, xp, w, b.reshape(C, 1))
    return out if Sp == S0 else out[:, :, :S0]


# --------------------------------------------------------------------------
# kernel 3b: concat-free fused postcat + trailing Conv2d(2C, C)
#   t_top = clamp(f[:C]  + clamp(a), -10, 10)
#   t_bot = clamp(f[C:]  + clamp(b), -10, 10)
#   out   = (W2@Wcat)_top @ t_top + (W2@Wcat)_bot @ t_bot
#           + W2_a @ a + W2_b @ b + (W2@bcat + b2)
# --------------------------------------------------------------------------
def _postcat_fused_kernel(f_ref, a_ref, b_ref,
                          wct_ref, wcb_ref, w2a_ref, w2b_ref, bias_ref, o_ref):
    a = a_ref[0]
    b = b_ref[0]
    f = f_ref[0]
    C = a.shape[0]
    t_top = jnp.clip(f[:C] + jnp.clip(a, -10.0, 10.0), -10.0, 10.0)
    t_bot = jnp.clip(f[C:] + jnp.clip(b, -10.0, 10.0), -10.0, 10.0)
    o_ref[0] = (_mm(wct_ref[...], t_top) + _mm(wcb_ref[...], t_bot)
                + _mm(w2a_ref[...], a) + _mm(w2b_ref[...], b) + bias_ref[...])


def postcat_fused_pallas(f, a, b, cat_w, cat_b, w2, b2):
    """f: (B, 2C, S) irfft output; a, b: (B, C, S) concat halves -> (B, C, S)."""
    B, C, S = a.shape
    fp, S0 = _pad_lanes(f, _LANE)
    ap, _ = _pad_lanes(a, _LANE)
    bp, _ = _pad_lanes(b, _LANE)
    Sp = ap.shape[-1]
    # host-side exact affine composition of cat-conv and trailing conv
    hp = jax.lax.Precision.HIGHEST
    wc = jnp.dot(w2, cat_w, precision=hp)                     # (C, 2C)
    bias = (jnp.dot(w2, cat_b, precision=hp) + b2).reshape(C, 1)
    TS = _spatial_tile(Sp, 2 * C, _CONV_CAP)
    act_c = pl.BlockSpec((1, C, TS), lambda b_, s_: (b_, 0, s_))
    wsp = pl.BlockSpec((C, C), lambda b_, s_: (0, 0))
    out = pl.pallas_call(
        _postcat_fused_kernel,
        grid=(B, Sp // TS),
        in_specs=[pl.BlockSpec((1, 2 * C, TS), lambda b_, s_: (b_, 0, s_)),
                  act_c, act_c,
                  wsp, wsp, wsp, wsp,
                  pl.BlockSpec((C, 1), lambda b_, s_: (0, 0))],
        out_specs=act_c,
        out_shape=jax.ShapeDtypeStruct((B, C, Sp), jnp.float32),
        compiler_params=_COMPILER_PARAMS,
    )(fp, ap, bp, wc[:, :C], wc[:, C:], w2[:, :C], w2[:, C:], bias)
    return out if Sp == S0 else out[:, :, :S0]


# --------------------------------------------------------------------------
# FEB + ProcessBlock + FFAB forward (NCHW throughout; reshapes are free)
# --------------------------------------------------------------------------
def process_block(x, p):
    """ProcessBlock: x -> Conv1x1(FEB(x)) + x.   x: (B, C, H, W)."""
    B, C, H, W = x.shape
    S = H * W
    Wf = W // 2 + 1

    # FEB pre: clamp + fpre 1x1 conv (fused in one kernel)
    pre = conv1x1_pallas(x.reshape(B, C, S), p["fpre_w"], p["fpre_b"],
                         clamp_in=True)

    # TODO(synk): FFT has no Pallas primitive; jnp.fft glue (matches torch.fft).
    xf = jnp.fft.rfft2(pre.reshape(B, C, H, W), norm="ortho")
    re = jnp.real(xf).reshape(B, C, H * Wf)
    im = jnp.imag(xf).reshape(B, C, H * Wf)

    ore, oim = freq_pallas(re, im, p)
    xr = jnp.fft.irfft2(
        jax.lax.complex(ore.reshape(B, C, H, Wf), oim.reshape(B, C, H, Wf)),
        s=(H, W), norm="ortho")

    out = postcat_pallas(xr.reshape(B, C, S), x.reshape(B, C, S),
                         p["cat_w"], p["cat_b"])
    return out.reshape(B, C, H, W)


def process_block_fused(a, b, p, w2, b2):
    """Conv2d(2C,C)(ProcessBlock_2C(cat(a,b))) without materializing the concat
    or the 2C intermediate (trailing conv composed into the postcat kernel)."""
    B, C, H, W = a.shape
    S = H * W
    C2 = 2 * C
    Wf = W // 2 + 1

    pre = conv1x1_dual_pallas(a.reshape(B, C, S), b.reshape(B, C, S),
                              p["fpre_w"], p["fpre_b"])           # (B, 2C, S)

    # TODO(synk): FFT has no Pallas primitive; jnp.fft glue (matches torch.fft).
    xf = jnp.fft.rfft2(pre.reshape(B, C2, H, W), norm="ortho")
    re = jnp.real(xf).reshape(B, C2, H * Wf)
    im = jnp.imag(xf).reshape(B, C2, H * Wf)

    ore, oim = freq_pallas(re, im, p)
    xr = jnp.fft.irfft2(
        jax.lax.complex(ore.reshape(B, C2, H, Wf), oim.reshape(B, C2, H, Wf)),
        s=(H, W), norm="ortho")

    out = postcat_fused_pallas(xr.reshape(B, C2, S),
                               a.reshape(B, C, S), b.reshape(B, C, S),
                               p["cat_w"], p["cat_b"], w2, b2)    # (B, C, S)
    return out.reshape(B, C, H, W)


def ffab_forward(x, params):
    """x: (B, nc, H, W) float32 (NCHW, like PyTorch)."""
    B, C, H, W = x.shape
    S = H * W
    x = conv1x1_pallas(x.reshape(B, C, S), params["conv0_w"],
                       params["conv0_b"]).reshape(B, C, H, W)
    x = process_block(x, params["pb0"])
    x1 = process_block(x, params["pb1"])
    x2 = process_block(x1, params["pb2"])
    x3 = process_block(x2, params["pb3"])
    x4 = process_block_fused(x2, x3, params["pb4"],
                             params["conv4_w"], params["conv4_b"])
    x5 = process_block_fused(x1, x4, params["pb5"],
                             params["conv5_w"], params["conv5_b"])
    xout = process_block_fused(x, x5, params["pbout"],
                               params["convout_w"], params["convout_b"])
    return xout


# --------------------------------------------------------------------------
# pure-JAX reference (mirrors the PyTorch forward) for a sanity check
# --------------------------------------------------------------------------
def _conv_ref(x, w, b):
    return jnp.einsum("oc,bchw->bohw", w, x,
                      precision=jax.lax.Precision.HIGHEST) + b.reshape(1, -1, 1, 1)


def _feb_ref(x, p):
    H, W = x.shape[-2:]
    x = jnp.clip(x, -10.0, 10.0)
    xf = jnp.fft.rfft2(_conv_ref(x, p["fpre_w"], p["fpre_b"]), norm="ortho")
    mag = jnp.abs(xf) + 1e-6
    pha = jnp.angle(xf)
    m = _conv_ref(mag, p["p1a_w"], p["p1a_b"])
    m = jnp.where(m >= 0, m, 0.1 * m)
    m = jnp.clip(_conv_ref(m, p["p1b_w"], p["p1b_b"]), 0.0, 1e4)
    q = _conv_ref(pha, p["p2a_w"], p["p2a_b"])
    q = jnp.where(q >= 0, q, 0.1 * q)
    q = _conv_ref(q, p["p2b_w"], p["p2b_b"])
    xo = jnp.fft.irfft2(jax.lax.complex(m * jnp.cos(q), m * jnp.sin(q)),
                        s=(H, W), norm="ortho")
    return jnp.clip(xo + x, -10.0, 10.0)


def _pb_ref(x, p):
    return _conv_ref(_feb_ref(x, p), p["cat_w"], p["cat_b"]) + x


def ffab_reference(x, params):
    x = _conv_ref(x, params["conv0_w"], params["conv0_b"])
    x = _pb_ref(x, params["pb0"])
    x1 = _pb_ref(x, params["pb1"])
    x2 = _pb_ref(x1, params["pb2"])
    x3 = _pb_ref(x2, params["pb3"])
    x4 = _conv_ref(_pb_ref(jnp.concatenate([x2, x3], axis=1), params["pb4"]),
                   params["conv4_w"], params["conv4_b"])
    x5 = _conv_ref(_pb_ref(jnp.concatenate([x1, x4], axis=1), params["pb5"]),
                   params["conv5_w"], params["conv5_b"])
    return _conv_ref(_pb_ref(jnp.concatenate([x, x5], axis=1), params["pbout"]),
                     params["convout_w"], params["convout_b"])


# --------------------------------------------------------------------------
# deterministic parameter init (PyTorch Conv2d(cin, cout, 1) default init)
# --------------------------------------------------------------------------
def _init_conv(key, cout, cin):
    kw, kb = jax.random.split(key)
    bound = 1.0 / math.sqrt(cin)
    w = jax.random.uniform(kw, (cout, cin), minval=-bound, maxval=bound,
                           dtype=jnp.float32)
    b = jax.random.uniform(kb, (cout,), minval=-bound, maxval=bound,
                           dtype=jnp.float32)
    return w, b


def _init_pb(key, c):
    names = ["fpre", "p1a", "p1b", "p2a", "p2b", "cat"]
    keys = jax.random.split(key, len(names))
    p = {}
    for k, n in zip(keys, names):
        w, b = _init_conv(k, c, c)
        p[f"{n}_w"] = w
        p[f"{n}_b"] = b
    return p


def init_ffab_params(key, nc):
    keys = jax.random.split(key, 11)
    params = {}
    params["conv0_w"], params["conv0_b"] = _init_conv(keys[0], nc, nc)
    params["pb0"] = _init_pb(keys[1], nc)
    params["pb1"] = _init_pb(keys[2], nc)
    params["pb2"] = _init_pb(keys[3], nc)
    params["pb3"] = _init_pb(keys[4], nc)
    params["pb4"] = _init_pb(keys[5], 2 * nc)
    params["conv4_w"], params["conv4_b"] = _init_conv(keys[6], nc, 2 * nc)
    params["pb5"] = _init_pb(keys[7], 2 * nc)
    params["conv5_w"], params["conv5_b"] = _init_conv(keys[8], nc, 2 * nc)
    params["pbout"] = _init_pb(keys[9], 2 * nc)
    params["convout_w"], params["convout_b"] = _init_conv(keys[10], nc, 2 * nc)
    return params


# --------------------------------------------------------------------------
if __name__ == "__main__":
    key = jax.random.PRNGKey(0)
    k_x, k_p = jax.random.split(key)

    B, C, H, W = 2, 4, 16, 16
    x = jax.random.normal(k_x, (B, C, H, W), dtype=jnp.float32) * 3.0
    params = init_ffab_params(k_p, C)

    fwd = jax.jit(ffab_forward)
    out = jax.block_until_ready(fwd(x, params))
    ref = jax.block_until_ready(ffab_reference(x, params))

    assert out.shape == (B, C, H, W)
    max_err = float(jnp.max(jnp.abs(out - ref)))
    assert max_err < 2e-2, f"Pallas FFAB mismatch vs reference (max abs err {max_err})"

    print("KERNEL_OK")
</pallas_src>

<mosaic_0001>
module attributes {stable_mosaic.version = 11 : i64} {
  func.func @_conv_kernel(%arg0: i32, %arg1: i32, %arg2: memref<1x4x256xf32, #tpu.memory_space<vmem>>, %arg3: memref<4x4xf32, #tpu.memory_space<vmem>>, %arg4: memref<4x1xf32, #tpu.memory_space<vmem>>, %arg5: memref<1x4x256xf32, #tpu.memory_space<vmem>>) attributes {dimension_semantics = [#tpu.dimension_semantics<parallel>, #tpu.dimension_semantics<parallel>], iteration_bounds = array<i64: 2, 1>, scalar_prefetch = 0 : i64, scratch_operands = 0 : i64, tpu.core_type = #tpu.core_type<tc>, window_params = [{transform_indices = @transform_0, window_bounds = array<i64: 1, 4, 256>}, {pipeline_mode = #tpu.pipeline_mode<synchronous>, transform_indices = @transform_1, window_bounds = array<i64: 4, 4>}, {pipeline_mode = #tpu.pipeline_mode<synchronous>, transform_indices = @transform_2, window_bounds = array<i64: 4, 1>}, {transform_indices = @transform_3, window_bounds = array<i64: 1, 4, 256>}]} {
    %c0 = arith.constant 0 : index
    %c0_0 = arith.constant 0 : index
    %c0_1 = arith.constant 0 : index
    %0 = vector.load %arg2[%c0, %c0_0, %c0_1] : memref<1x4x256xf32, #tpu.memory_space<vmem>>, vector<1x4x256xf32>
    %1 = vector.shape_cast %0 : vector<1x4x256xf32> to vector<4x256xf32>
    %c0_2 = arith.constant 0 : index
    %c0_3 = arith.constant 0 : index
    %2 = vector.load %arg3[%c0_2, %c0_3] : memref<4x4xf32, #tpu.memory_space<vmem>>, vector<4x4xf32>
    %3 = vector.extract_strided_slice %2 {offsets = [0, 0], sizes = [4, 1], strides = [1, 1]} : vector<4x4xf32> to vector<4x1xf32>
    %4 = vector.extract_strided_slice %1 {offsets = [0, 0], sizes = [1, 256], strides = [1, 1]} : vector<4x256xf32> to vector<1x256xf32>
    %5 = vector.broadcast %3 : vector<4x1xf32> to vector<4x256xf32>
    %6 = vector.broadcast %4 : vector<1x256xf32> to vector<4x256xf32>
    %7 = arith.mulf %5, %6 : vector<4x256xf32>
    %8 = vector.extract_strided_slice %2 {offsets = [0, 1], sizes = [4, 1], strides = [1, 1]} : vector<4x4xf32> to vector<4x1xf32>
    %9 = vector.extract_strided_slice %1 {offsets = [1, 0], sizes = [1, 256], strides = [1, 1]} : vector<4x256xf32> to vector<1x256xf32>
    %10 = vector.broadcast %8 : vector<4x1xf32> to vector<4x256xf32>
    %11 = vector.broadcast %9 : vector<1x256xf32> to vector<4x256xf32>
    %12 = arith.mulf %10, %11 : vector<4x256xf32>
    %13 = arith.addf %7, %12 : vector<4x256xf32>
    %14 = vector.extract_strided_slice %2 {offsets = [0, 2], sizes = [4, 1], strides = [1, 1]} : vector<4x4xf32> to vector<4x1xf32>
    %15 = vector.extract_strided_slice %1 {offsets = [2, 0], sizes = [1, 256], strides = [1, 1]} : vector<4x256xf32> to vector<1x256xf32>
    %16 = vector.broadcast %14 : vector<4x1xf32> to vector<4x256xf32>
    %17 = vector.broadcast %15 : vector<1x256xf32> to vector<4x256xf32>
    %18 = arith.mulf %16, %17 : vector<4x256xf32>
    %19 = arith.addf %13, %18 : vector<4x256xf32>
    %20 = vector.extract_strided_slice %2 {offsets = [0, 3], sizes = [4, 1], strides = [1, 1]} : vector<4x4xf32> to vector<4x1xf32>
    %21 = vector.extract_strided_slice %1 {offsets = [3, 0], sizes = [1, 256], strides = [1, 1]} : vector<4x256xf32> to vector<1x256xf32>
    %22 = vector.broadcast %20 : vector<4x1xf32> to vector<4x256xf32>
    %23 = vector.broadcast %21 : vector<1x256xf32> to vector<4x256xf32>
    %24 = arith.mulf %22, %23 : vector<4x256xf32>
    %25 = arith.addf %19, %24 : vector<4x256xf32>
    %c0_4 = arith.constant 0 : index
    %c0_5 = arith.constant 0 : index
    %26 = vector.load %arg4[%c0_4, %c0_5] : memref<4x1xf32, #tpu.memory_space<vmem>>, vector<4x1xf32>
    %27 = vector.broadcast %26 : vector<4x1xf32> to vector<4x256xf32>
    %28 = arith.addf %25, %27 : vector<4x256xf32>
    %c0_6 = arith.constant 0 : index
    %c0_7 = arith.constant 0 : index
    %c0_8 = arith.constant 0 : index
    %29 = vector.load %arg5[%c0_6, %c0_7, %c0_8] : memref<1x4x256xf32, #tpu.memory_space<vmem>>, vector<1x4x256xf32>
    %30 = vector.shape_cast %29 : vector<1x4x256xf32> to vector<4x256xf32>
    %31 = vector.shape_cast %28 : vector<4x256xf32> to vector<1x4x256xf32>
    tpu.vector_store %arg5[%c0_6, %c0_7, %c0_8], %31 {strides = array<i32>} : memref<1x4x256xf32, #tpu.memory_space<vmem>>, vector<1x4x256xf32>,
    return
  }
  func.func @transform_0(%arg0: i32, %arg1: i32) -> (i32, i32, i32) {
    %c0_i32 = arith.constant 0 : i32
    %c0_i32_0 = arith.constant 0 : i32
    return %arg0, %c0_i32, %arg1 : i32, i32, i32
  }
  func.func @transform_1(%arg0: i32, %arg1: i32) -> (i32, i32) {
    %c0_i32 = arith.constant 0 : i32
    %c0_i32_0 = arith.constant 0 : i32
    %c0_i32_1 = arith.constant 0 : i32
    return %c0_i32, %c0_i32_0 : i32, i32
  }
  func.func @transform_2(%arg0: i32, %arg1: i32) -> (i32, i32) {
    %c0_i32 = arith.constant 0 : i32
    %c0_i32_0 = arith.constant 0 : i32
    %c0_i32_1 = arith.constant 0 : i32
    return %c0_i32, %c0_i32_0 : i32, i32
  }
  func.func @transform_3(%arg0: i32, %arg1: i32) -> (i32, i32, i32) {
    %c0_i32 = arith.constant 0 : i32
    %c0_i32_0 = arith.constant 0 : i32
    return %arg0, %c0_i32, %arg1 : i32, i32, i32
  }
}

module attributes {stable_mosaic.version = 11 : i64} {
  func.func @_conv_kernel(%arg0: i32, %arg1: i32, %arg2: memref<1x4x256xf32, #tpu.memory_space<vmem>>, %arg3: memref<4x4xf32, #tpu.memory_space<vmem>>, %arg4: memref<4x1xf32, #tpu.memory_space<vmem>>, %arg5: memref<1x4x256xf32, #tpu.memory_space<vmem>>) attributes {dimension_semantics = [#tpu.dimension_semantics<parallel>, #tpu.dimension_semantics<parallel>], iteration_bounds = array<i64: 2, 1>, scalar_prefetch = 0 : i64, scratch_operands = 0 : i64, tpu.core_type = #tpu.core_type<tc>, window_params = [{transform_indices = @transform_0, window_bounds = array<i64: 1, 4, 256>}, {pipeline_mode = #tpu.pipeline_mode<synchronous>, transform_indices = @transform_1, window_bounds = array<i64: 4, 4>}, {pipeline_mode = #tpu.pipeline_mode<synchronous>, transform_indices = @transform_2, window_bounds = array<i64: 4, 1>}, {transform_indices = @transform_3, window_bounds = array<i64: 1, 4, 256>}]} {
    %c0 = arith.constant 0 : index
    %c0_0 = arith.constant 0 : index
    %c0_1 = arith.constant 0 : index
    %0 = vector.load %arg2[%c0, %c0_0, %c0_1] : memref<1x4x256xf32, #tpu.memory_space<vmem>>, vector<1x4x256xf32>
    %1 = vector.shape_cast %0 : vector<1x4x256xf32> to vector<4x256xf32>
    %cst = arith.constant -1.000000e+01 : f32
    %cst_2 = arith.constant 1.000000e+01 : f32
    %2 = vector.broadcast %cst : f32 to vector<4x256xf32>
    %3 = arith.maximumf %2, %1 : vector<4x256xf32>
    %4 = vector.broadcast %cst_2 : f32 to vector<4x256xf32>
    %5 = arith.minimumf %4, %3 : vector<4x256xf32>
    %c0_3 = arith.constant 0 : index
    %c0_4 = arith.constant 0 : index
    %6 = vector.load %arg3[%c0_3, %c0_4] : memref<4x4xf32, #tpu.memory_space<vmem>>, vector<4x4xf32>
    %7 = vector.extract_strided_slice %6 {offsets = [0, 0], sizes = [4, 1], strides = [1, 1]} : vector<4x4xf32> to vector<4x1xf32>
    %8 = vector.extract_strided_slice %5 {offsets = [0, 0], sizes = [1, 256], strides = [1, 1]} : vector<4x256xf32> to vector<1x256xf32>
    %9 = vector.broadcast %7 : vector<4x1xf32> to vector<4x256xf32>
    %10 = vector.broadcast %8 : vector<1x256xf32> to vector<4x256xf32>
    %11 = arith.mulf %9, %10 : vector<4x256xf32>
    %12 = vector.extract_strided_slice %6 {offsets = [0, 1], sizes = [4, 1], strides = [1, 1]} : vector<4x4xf32> to vector<4x1xf32>
    %13 = vector.extract_strided_slice %5 {offsets = [1, 0], sizes = [1, 256], strides = [1, 1]} : vector<4x256xf32> to vector<1x256xf32>
    %14 = vector.broadcast %12 : vector<4x1xf32> to vector<4x256xf32>
    %15 = vector.broadcast %13 : vector<1x256xf32> to vector<4x256xf32>
    %16 = arith.mulf %14, %15 : vector<4x256xf32>
    %17 = arith.addf %11, %16 : vector<4x256xf32>
    %18 = vector.extract_strided_slice %6 {offsets = [0, 2], sizes = [4, 1], strides = [1, 1]} : vector<4x4xf32> to vector<4x1xf32>
    %19 = vector.extract_strided_slice %5 {offsets = [2, 0], sizes = [1, 256], strides = [1, 1]} : vector<4x256xf32> to vector<1x256xf32>
    %20 = vector.broadcast %18 : vector<4x1xf32> to vector<4x256xf32>
    %21 = vector.broadcast %19 : vector<1x256xf32> to vector<4x256xf32>
    %22 = arith.mulf %20, %21 : vector<4x256xf32>
    %23 = arith.addf %17, %22 : vector<4x256xf32>
    %24 = vector.extract_strided_slice %6 {offsets = [0, 3], sizes = [4, 1], strides = [1, 1]} : vector<4x4xf32> to vector<4x1xf32>
    %25 = vector.extract_strided_slice %5 {offsets = [3, 0], sizes = [1, 256], strides = [1, 1]} : vector<4x256xf32> to vector<1x256xf32>
    %26 = vector.broadcast %24 : vector<4x1xf32> to vector<4x256xf32>
    %27 = vector.broadcast %25 : vector<1x256xf32> to vector<4x256xf32>
    %28 = arith.mulf %26, %27 : vector<4x256xf32>
    %29 = arith.addf %23, %28 : vector<4x256xf32>
    %c0_5 = arith.constant 0 : index
    %c0_6 = arith.constant 0 : index
    %30 = vector.load %arg4[%c0_5, %c0_6] : memref<4x1xf32, #tpu.memory_space<vmem>>, vector<4x1xf32>
    %31 = vector.broadcast %30 : vector<4x1xf32> to vector<4x256xf32>
    %32 = arith.addf %29, %31 : vector<4x256xf32>
    %c0_7 = arith.constant 0 : index
    %c0_8 = arith.constant 0 : index
    %c0_9 = arith.constant 0 : index
    %33 = vector.load %arg5[%c0_7, %c0_8, %c0_9] : memref<1x4x256xf32, #tpu.memory_space<vmem>>, vector<1x4x256xf32>
    %34 = vector.shape_cast %33 : vector<1x4x256xf32> to vector<4x256xf32>
    %35 = vector.shape_cast %32 : vector<4x256xf32> to vector<1x4x256xf32>
    tpu.vector_store %arg5[%c0_7, %c0_8, %c0_9], %35 {strides = array<i32>} : memref<1x4x256xf32, #tpu.memory_space<vmem>>, vector<1x4x256xf32>,
    return
  }
  func.func @transform_0(%arg0: i32, %arg1: i32) -> (i32, i32, i32) {
    %c0_i32 = arith.constant 0 : i32
    %c0_i32_0 = arith.constant 0 : i32
    return %arg0, %c0_i32, %arg1 : i32, i32, i32
  }
  func.func @transform_1(%arg0: i32, %arg1: i32) -> (i32, i32) {
    %c0_i32 = arith.constant 0 : i32
    %c0_i32_0 = arith.constant 0 : i32
    %c0_i32_1 = arith.constant 0 : i32
    return %c0_i32, %c0_i32_0 : i32, i32
  }
  func.func @transform_2(%arg0: i32, %arg1: i32) -> (i32, i32) {
    %c0_i32 = arith.constant 0 : i32
    %c0_i32_0 = arith.constant 0 : i32
    %c0_i32_1 = arith.constant 0 : i32
    return %c0_i32, %c0_i32_0 : i32, i32
  }
  func.func @transform_3(%arg0: i32, %arg1: i32) -> (i32, i32, i32) {
    %c0_i32 = arith.constant 0 : i32
    %c0_i32_0 = arith.constant 0 : i32
    return %arg0, %c0_i32, %arg1 : i32, i32, i32
  }
}

module attributes {stable_mosaic.version = 11 : i64} {
  func.func @_freq_kernel(%arg0: i32, %arg1: i32, %arg2: memref<1x8x128xf32, #tpu.memory_space<vmem>>, %arg3: memref<1x8x128xf32, #tpu.memory_space<vmem>>, %arg4: memref<8x8xf32, #tpu.memory_space<vmem>>, %arg5: memref<8x1xf32, #tpu.memory_space<vmem>>, %arg6: memref<8x8xf32, #tpu.memory_space<vmem>>, %arg7: memref<8x1xf32, #tpu.memory_space<vmem>>, %arg8: memref<8x8xf32, #tpu.memory_space<vmem>>, %arg9: memref<8x1xf32, #tpu.memory_space<vmem>>, %arg10: memref<8x8xf32, #tpu.memory_space<vmem>>, %arg11: memref<8x1xf32, #tpu.memory_space<vmem>>, %arg12: memref<1x8x128xf32, #tpu.memory_space<vmem>>, %arg13: memref<1x8x128xf32, #tpu.memory_space<vmem>>) attributes {dimension_semantics = [#tpu.dimension_semantics<parallel>, #tpu.dimension_semantics<parallel>], iteration_bounds = array<i64: 2, 1>, scalar_prefetch = 0 : i64, scratch_operands = 0 : i64, tpu.core_type = #tpu.core_type<tc>, window_params = [{transform_indices = @transform_0, window_bounds = array<i64: 1, 8, 128>}, {transform_indices = @transform_1, window_bounds = array<i64: 1, 8, 128>}, {pipeline_mode = #tpu.pipeline_mode<synchronous>, transform_indices = @transform_2, window_bounds = array<i64: 8, 8>}, {pipeline_mode = #tpu.pipeline_mode<synchronous>, transform_indices = @transform_3, window_bounds = array<i64: 8, 1>}, {pipeline_mode = #tpu.pipeline_mode<synchronous>, transform_indices = @transform_4, window_bounds = array<i64: 8, 8>}, {pipeline_mode = #tpu.pipeline_mode<synchronous>, transform_indices = @transform_5, window_bounds = array<i64: 8, 1>}, {pipeline_mode = #tpu.pipeline_mode<synchronous>, transform_indices = @transform_6, window_bounds = array<i64: 8, 8>}, {pipeline_mode = #tpu.pipeline_mode<synchronous>, transform_indices = @transform_7, window_bounds = array<i64: 8, 1>}, {pipeline_mode = #tpu.pipeline_mode<synchronous>, transform_indices = @transform_8, window_bounds = array<i64: 8, 8>}, {pipeline_mode = #tpu.pipeline_mode<synchronous>, transform_indices = @transform_9, window_bounds = array<i64: 8, 1>}, {transform_indices = @transform_10, window_bounds = array<i64: 1, 8, 128>}, {transform_indices = @transform_11, window_bounds = array<i64: 1, 8, 128>}]} {
    %c0 = arith.constant 0 : index
    %c0_0 = arith.constant 0 : index
    %c0_1 = arith.constant 0 : index
    %0 = vector.load %arg2[%c0, %c0_0, %c0_1] : memref<1x8x128xf32, #tpu.memory_space<vmem>>, vector<1x8x128xf32>
    %1 = vector.shape_cast %0 : vector<1x8x128xf32> to vector<8x128xf32>
    %c0_2 = arith.constant 0 : index
    %c0_3 = arith.constant 0 : index
    %c0_4 = arith.constant 0 : index
    %2 = vector.load %arg3[%c0_2, %c0_3, %c0_4] : memref<1x8x128xf32, #tpu.memory_space<vmem>>, vector<1x8x128xf32>
    %3 = vector.shape_cast %2 : vector<1x8x128xf32> to vector<8x128xf32>
    %4 = arith.mulf %1, %1 : vector<8x128xf32>
    %5 = arith.mulf %3, %3 : vector<8x128xf32>
    %6 = arith.addf %4, %5 : vector<8x128xf32>
    %7 = math.sqrt %6 : vector<8x128xf32>
    %cst = arith.constant 9.99999997E-7 : f32
    %8 = vector.broadcast %cst : f32 to vector<8x128xf32>
    %9 = arith.addf %7, %8 : vector<8x128xf32>
    %10 = math.atan2 %3, %1 : vector<8x128xf32>
    %c0_5 = arith.constant 0 : index
    %c0_6 = arith.constant 0 : index
    %11 = vector.load %arg8[%c0_5, %c0_6] : memref<8x8xf32, #tpu.memory_space<vmem>>, vector<8x8xf32>
    %12 = vector.extract_strided_slice %11 {offsets = [0, 0], sizes = [8, 1], strides = [1, 1]} : vector<8x8xf32> to vector<8x1xf32>
    %13 = vector.extract_strided_slice %10 {offsets = [0, 0], sizes = [1, 128], strides = [1, 1]} : vector<8x128xf32> to vector<1x128xf32>
    %14 = vector.broadcast %12 : vector<8x1xf32> to vector<8x128xf32>
    %15 = vector.broadcast %13 : vector<1x128xf32> to vector<8x128xf32>
    %16 = arith.mulf %14, %15 : vector<8x128xf32>
    %17 = vector.extract_strided_slice %11 {offsets = [0, 1], sizes = [8, 1], strides = [1, 1]} : vector<8x8xf32> to vector<8x1xf32>
    %18 = vector.extract_strided_slice %10 {offsets = [1, 0], sizes = [1, 128], strides = [1, 1]} : vector<8x128xf32> to vector<1x128xf32>
    %19 = vector.broadcast %17 : vector<8x1xf32> to vector<8x128xf32>
    %20 = vector.broadcast %18 : vector<1x128xf32> to vector<8x128xf32>
    %21 = arith.mulf %19, %20 : vector<8x128xf32>
    %22 = arith.addf %16, %21 : vector<8x128xf32>
    %23 = vector.extract_strided_slice %11 {offsets = [0, 2], sizes = [8, 1], strides = [1, 1]} : vector<8x8xf32> to vector<8x1xf32>
    %24 = vector.extract_strided_slice %10 {offsets = [2, 0], sizes = [1, 128], strides = [1, 1]} : vector<8x128xf32> to vector<1x128xf32>
    %25 = vector.broadcast %23 : vector<8x1xf32> to vector<8x128xf32>
    %26 = vector.broadcast %24 : vector<1x128xf32> to vector<8x128xf32>
    %27 = arith.mulf %25, %26 : vector<8x128xf32>
    %28 = arith.addf %22, %27 : vector<8x128xf32>
    %29 = vector.extract_strided_slice %11 {offsets = [0, 3], sizes = [8, 1], strides = [1, 1]} : vector<8x8xf32> to vector<8x1xf32>
    %30 = vector.extract_strided_slice %10 {offsets = [3, 0], sizes = [1, 128], strides = [1, 1]} : vector<8x128xf32> to vector<1x128xf32>
    %31 = vector.broadcast %29 : vector<8x1xf32> to vector<8x128xf32>
    %32 = vector.broadcast %30 : vector<1x128xf32> to vector<8x128xf32>
    %33 = arith.mulf %31, %32 : vector<8x128xf32>
    %34 = arith.addf %28, %33 : vector<8x128xf32>
    %35 = vector.extract_strided_slice %11 {offsets = [0, 4], sizes = [8, 1], strides = [1, 1]} : vector<8x8xf32> to vector<8x1xf32>
    %36 = vector.extract_strided_slice %10 {offsets = [4, 0], sizes = [1, 128], strides = [1, 1]} : vector<8x128xf32> to vector<1x128xf32>
    %37 = vector.broadcast %35 : vector<8x1xf32> to vector<8x128xf32>
    %38 = vector.broadcast %36 : vector<1x128xf32> to vector<8x128xf32>
    %39 = arith.mulf %37, %38 : vector<8x128xf32>
    %40 = arith.addf %34, %39 : vector<8x128xf32>
    %41 = vector.extract_strided_slice %11 {offsets = [0, 5], sizes = [8, 1], strides = [1, 1]} : vector<8x8xf32> to vector<8x1xf32>
    %42 = vector.extract_strided_slice %10 {offsets = [5, 0], sizes = [1, 128], strides = [1, 1]} : vector<8x128xf32> to vector<1x128xf32>
    %43 = vector.broadcast %41 : vector<8x1xf32> to vector<8x128xf32>
    %44 = vector.broadcast %42 : vector<1x128xf32> to vector<8x128xf32>
    %45 = arith.mulf %43, %44 : vector<8x128xf32>
    %46 = arith.addf %40, %45 : vector<8x128xf32>
    %47 = vector.extract_strided_slice %11 {offsets = [0, 6], sizes = [8, 1], strides = [1, 1]} : vector<8x8xf32> to vector<8x1xf32>
    %48 = vector.extract_strided_slice %10 {offsets = [6, 0], sizes = [1, 128], strides = [1, 1]} : vector<8x128xf32> to vector<1x128xf32>
    %49 = vector.broadcast %47 : vector<8x1xf32> to vector<8x128xf32>
    %50 = vector.broadcast %48 : vector<1x128xf32> to vector<8x128xf32>
    %51 = arith.mulf %49, %50 : vector<8x128xf32>
    %52 = arith.addf %46, %51 : vector<8x128xf32>
    %53 = vector.extract_strided_slice %11 {offsets = [0, 7], sizes = [8, 1], strides = [1, 1]} : vector<8x8xf32> to vector<8x1xf32>
    %54 = vector.extract_strided_slice %10 {offsets = [7, 0], sizes = [1, 128], strides = [1, 1]} : vector<8x128xf32> to vector<1x128xf32>
    %55 = vector.broadcast %53 : vector<8x1xf32> to vector<8x128xf32>
    %56 = vector.broadcast %54 : vector<1x128xf32> to vector<8x128xf32>
    %57 = arith.mulf %55, %56 : vector<8x128xf32>
    %58 = arith.addf %52, %57 : vector<8x128xf32>
    %c0_7 = arith.constant 0 : index
    %c0_8 = arith.constant 0 : index
    %59 = vector.load %arg9[%c0_7, %c0_8] : memref<8x1xf32, #tpu.memory_space<vmem>>, vector<8x1xf32>
    %60 = vector.broadcast %59 : vector<8x1xf32> to vector<8x128xf32>
    %61 = arith.addf %58, %60 : vector<8x128xf32>
    %cst_9 = arith.constant 0.000000e+00 : f32
    %62 = vector.broadcast %cst_9 : f32 to vector<8x128xf32>
    %63 = arith.cmpf oge, %61, %62 : vector<8x128xf32>
    %cst_10 = arith.constant 1.000000e-01 : f32
    %64 = vector.broadcast %cst_10 : f32 to vector<8x128xf32>
    %65 = arith.mulf %64, %61 : vector<8x128xf32>
    %66 = arith.select %63, %61, %65 : vector<8x128xi1>, vector<8x128xf32>
    %c0_11 = arith.constant 0 : index
    %c0_12 = arith.constant 0 : index
    %67 = vector.load %arg10[%c0_11, %c0_12] : memref<8x8xf32, #tpu.memory_space<vmem>>, vector<8x8xf32>
    %68 = vector.extract_strided_slice %67 {offsets = [0, 0], sizes = [8, 1], strides = [1, 1]} : vector<8x8xf32> to vector<8x1xf32>
    %69 = vector.extract_strided_slice %66 {offsets = [0, 0], sizes = [1, 128], strides = [1, 1]} : vector<8x128xf32> to vector<1x128xf32>
    %70 = vector.broadcast %68 : vector<8x1xf32> to vector<8x128xf32>
    %71 = vector.broadcast %69 : vector<1x128xf32> to vector<8x128xf32>
    %72 = arith.mulf %70, %71 : vector<8x128xf32>
    %73 = vector.extract_strided_slice %67 {offsets = [0, 1], sizes = [8, 1], strides = [1, 1]} : vector<8x8xf32> to vector<8x1xf32>
    %74 = vector.extract_strided_slice %66 {offsets = [1, 0], sizes = [1, 128], strides = [1, 1]} : vector<8x128xf32> to vector<1x128xf32>
    %75 = vector.broadcast %73 : vector<8x1xf32> to vector<8x128xf32>
    %76 = vector.broadcast %74 : vector<1x128xf32> to vector<8x128xf32>
    %77 = arith.mulf %75, %76 : vector<8x128xf32>
    %78 = arith.addf %72, %77 : vector<8x128xf32>
    %79 = vector.extract_strided_slice %67 {offsets = [0, 2], sizes = [8, 1], strides = [1, 1]} : vector<8x8xf32> to vector<8x1xf32>
    %80 = vector.extract_strided_slice %66 {offsets = [2, 0], sizes = [1, 128], strides = [1, 1]} : vector<8x128xf32> to vector<1x128xf32>
    %81 = vector.broadcast %79 : vector<8x1xf32> to vector<8x128xf32>
    %82 = vector.broadcast %80 : vector<1x128xf32> to vector<8x128xf32>
    %83 = arith.mulf %81, %82 : vector<8x128xf32>
    %84 = arith.addf %78, %83 : vector<8x128xf32>
    %85 = vector.extract_strided_slice %67 {offsets = [0, 3], sizes = [8, 1], strides = [1, 1]} : vector<8x8xf32> to vector<8x1xf32>
    %86 = vector.extract_strided_slice %66 {offsets = [3, 0], sizes = [1, 128], strides = [1, 1]} : vector<8x128xf32> to vector<1x128xf32>
    %87 = vector.broadcast %85 : vector<8x1xf32> to vector<8x128xf32>
    %88 = vector.broadcast %86 : vector<1x128xf32> to vector<8x128xf32>
    %89 = arith.mulf %87, %88 : vector<8x128xf32>
    %90 = arith.addf %84, %89 : vector<8x128xf32>
    %91 = vector.extract_strided_slice %67 {offsets = [0, 4], sizes = [8, 1], strides = [1, 1]} : vector<8x8xf32> to vector<8x1xf32>
    %92 = vector.extract_strided_slice %66 {offsets = [4, 0], sizes = [1, 128], strides = [1, 1]} : vector<8x128xf32> to vector<1x128xf32>
    %93 = vector.broadcast %91 : vector<8x1xf32> to vector<8x128xf32>
    %94 = vector.broadcast %92 : vector<1x128xf32> to vector<8x128xf32>
    %95 = arith.mulf %93, %94 : vector<8x128xf32>
    %96 = arith.addf %90, %95 : vector<8x128xf32>
    %97 = vector.extract_strided_slice %67 {offsets = [0, 5], sizes = [8, 1], strides = [1, 1]} : vector<8x8xf32> to vector<8x1xf32>
    %98 = vector.extract_strided_slice %66 {offsets = [5, 0], sizes = [1, 128], strides = [1, 1]} : vector<8x128xf32> to vector<1x128xf32>
    %99 = vector.broadcast %97 : vector<8x1xf32> to vector<8x128xf32>
    %100 = vector.broadcast %98 : vector<1x128xf32> to vector<8x128xf32>
    %101 = arith.mulf %99, %100 : vector<8x128xf32>
    %102 = arith.addf %96, %101 : vector<8x128xf32>
    %103 = vector.extract_strided_slice %67 {offsets = [0, 6], sizes = [8, 1], strides = [1, 1]} : vector<8x8xf32> to vector<8x1xf32>
    %104 = vector.extract_strided_slice %66 {offsets = [6, 0], sizes = [1, 128], strides = [1, 1]} : vector<8x128xf32> to vector<1x128xf32>
    %105 = vector.broadcast %103 : vector<8x1xf32> to vector<8x128xf32>
    %106 = vector.broadcast %104 : vector<1x128xf32> to vector<8x128xf32>
    %107 = arith.mulf %105, %106 : vector<8x128xf32>
    %108 = arith.addf %102, %107 : vector<8x128xf32>
    %109 = vector.extract_strided_slice %67 {offsets = [0, 7], sizes = [8, 1], strides = [1, 1]} : vector<8x8xf32> to vector<8x1xf32>
    %110 = vector.extract_strided_slice %66 {offsets = [7, 0], sizes = [1, 128], strides = [1, 1]} : vector<8x128xf32> to vector<1x128xf32>
    %111 = vector.broadcast %109 : vector<8x1xf32> to vector<8x128xf32>
    %112 = vector.broadcast %110 : vector<1x128xf32> to vector<8x128xf32>
    %113 = arith.mulf %111, %112 : vector<8x128xf32>
    %114 = arith.addf %108, %113 : vector<8x128xf32>
    %c0_13 = arith.constant 0 : index
    %c0_14 = arith.constant 0 : index
    %115 = vector.load %arg11[%c0_13, %c0_14] : memref<8x1xf32, #tpu.memory_space<vmem>>, vector<8x1xf32>
    %116 = vector.broadcast %115 : vector<8x1xf32> to vector<8x128xf32>
    %117 = arith.addf %114, %116 : vector<8x128xf32>
    %118 = math.cos %117 : vector<8x128xf32>
    %119 = math.sin %117 : vector<8x128xf32>
    %c0_15 = arith.constant 0 : index
    %c0_16 = arith.constant 0 : index
    %120 = vector.load %arg4[%c0_15, %c0_16] : memref<8x8xf32, #tpu.memory_space<vmem>>, vector<8x8xf32>
    %121 = vector.extract_strided_slice %120 {offsets = [0, 0], sizes = [8, 1], strides = [1, 1]} : vector<8x8xf32> to vector<8x1xf32>
    %122 = vector.extract_strided_slice %9 {offsets = [0, 0], sizes = [1, 128], strides = [1, 1]} : vector<8x128xf32> to vector<1x128xf32>
    %123 = vector.broadcast %121 : vector<8x1xf32> to vector<8x128xf32>
    %124 = vector.broadcast %122 : vector<1x128xf32> to vector<8x128xf32>
    %125 = arith.mulf %123, %124 : vector<8x128xf32>
    %126 = vector.extract_strided_slice %120 {offsets = [0, 1], sizes = [8, 1], strides = [1, 1]} : vector<8x8xf32> to vector<8x1xf32>
    %127 = vector.extract_strided_slice %9 {offsets = [1, 0], sizes = [1, 128], strides = [1, 1]} : vector<8x128xf32> to vector<1x128xf32>
    %128 = vector.broadcast %126 : vector<8x1xf32> to vector<8x128xf32>
    %129 = vector.broadcast %127 : vector<1x128xf32> to vector<8x128xf32>
    %130 = arith.mulf %128, %129 : vector<8x128xf32>
    %131 = arith.addf %125, %130 : vector<8x128xf32>
    %132 = vector.extract_strided_slice %120 {offsets = [0, 2], sizes = [8, 1], strides = [1, 1]} : vector<8x8xf32> to vector<8x1xf32>
    %133 = vector.extract_strided_slice %9 {offsets = [2, 0], sizes = [1, 128], strides = [1, 1]} : vector<8x128xf32> to vector<1x128xf32>
    %134 = vector.broadcast %132 : vector<8x1xf32> to vector<8x128xf32>
    %135 = vector.broadcast %133 : vector<1x128xf32> to vector<8x128xf32>
    %136 = arith.mulf %134, %135 : vector<8x128xf32>
    %137 = arith.addf %131, %136 : vector<8x128xf32>
    %138 = vector.extract_strided_slice %120 {offsets = [0, 3], sizes = [8, 1], strides = [1, 1]} : vector<8x8xf32> to vector<8x1xf32>
    %139 = vector.extract_strided_slice %9 {offsets = [3, 0], sizes = [1, 128], strides = [1, 1]} : vector<8x128xf32> to vector<1x128xf32>
    %140 = vector.broadcast %138 : vector<8x1xf32> to vector<8x128xf32>
    %141 = vector.broadcast %139 : vector<1x128xf32> to vector<8x128xf32>
    %142 = arith.mulf %140, %141 : vector<8x128xf32>
    %143 = arith.addf %137, %142 : vector<8x128xf32>
    %144 = vector.extract_strided_slice %120 {offsets = [0, 4], sizes = [8, 1], strides = [1, 1]} : vector<8x8xf32> to vector<8x1xf32>
    %145 = vector.extract_strided_slice %9 {offsets = [4, 0], sizes = [1, 128], strides = [1, 1]} : vector<8x128xf32> to vector<1x128xf32>
    %146 = vector.broadcast %144 : vector<8x1xf32> to vector<8x128xf32>
    %147 = vector.broadcast %145 : vector<1x128xf32> to vector<8x128xf32>
    %148 = arith.mulf %146, %147 : vector<8x128xf32>
    %149 = arith.addf %143, %148 : vector<8x128xf32>
    %150 = vector.extract_strided_slice %120 {offsets = [0, 5], sizes = [8, 1], strides = [1, 1]} : vector<8x8xf32> to vector<8x1xf32>
    %151 = vector.extract_strided_slice %9 {offsets = [5, 0], sizes = [1, 128], strides = [1, 1]} : vector<8x128xf32> to vector<1x128xf32>
    %152 = vector.broadcast %150 : vector<8x1xf32> to vector<8x128xf32>
    %153 = vector.broadcast %151 : vector<1x128xf32> to vector<8x128xf32>
    %154 = arith.mulf %152, %153 : vector<8x128xf32>
    %155 = arith.addf %149, %154 : vector<8x128xf32>
    %156 = vector.extract_strided_slice %120 {offsets = [0, 6], sizes = [8, 1], strides = [1, 1]} : vector<8x8xf32> to vector<8x1xf32>
    %157 = vector.extract_strided_slice %9 {offsets = [6, 0], sizes = [1, 128], strides = [1, 1]} : vector<8x128xf32> to vector<1x128xf32>
    %158 = vector.broadcast %156 : vector<8x1xf32> to vector<8x128xf32>
    %159 = vector.broadcast %157 : vector<1x128xf32> to vector<8x128xf32>
    %160 = arith.mulf %158, %159 : vector<8x128xf32>
    %161 = arith.addf %155, %160 : vector<8x128xf32>
    %162 = vector.extract_strided_slice %120 {offsets = [0, 7], sizes = [8, 1], strides = [1, 1]} : vector<8x8xf32> to vector<8x1xf32>
    %163 = vector.extract_strided_slice %9 {offsets = [7, 0], sizes = [1, 128], strides = [1, 1]} : vector<8x128xf32> to vector<1x128xf32>
    %164 = vector.broadcast %162 : vector<8x1xf32> to vector<8x128xf32>
    %165 = vector.broadcast %163 : vector<1x128xf32> to vector<8x128xf32>
    %166 = arith.mulf %164, %165 : vector<8x128xf32>
    %167 = arith.addf %161, %166 : vector<8x128xf32>
    %c0_17 = arith.constant 0 : index
    %c0_18 = arith.constant 0 : index
    %168 = vector.load %arg5[%c0_17, %c0_18] : memref<8x1xf32, #tpu.memory_space<vmem>>, vector<8x1xf32>
    %169 = vector.broadcast %168 : vector<8x1xf32> to vector<8x128xf32>
    %170 = arith.addf %167, %169 : vector<8x128xf32>
    %cst_19 = arith.constant 0.000000e+00 : f32
    %171 = vector.broadcast %cst_19 : f32 to vector<8x128xf32>
    %172 = arith.cmpf oge, %170, %171 : vector<8x128xf32>
    %cst_20 = arith.constant 1.000000e-01 : f32
    %173 = vector.broadcast %cst_20 : f32 to vector<8x128xf32>
    %174 = arith.mulf %173, %170 : vector<8x128xf32>
    %175 = arith.select %172, %170, %174 : vector<8x128xi1>, vector<8x128xf32>
    %c0_21 = arith.constant 0 : index
    %c0_22 = arith.constant 0 : index
    %176 = vector.load %arg6[%c0_21, %c0_22] : memref<8x8xf32, #tpu.memory_space<vmem>>, vector<8x8xf32>
    %177 = vector.extract_strided_slice %176 {offsets = [0, 0], sizes = [8, 1], strides = [1, 1]} : vector<8x8xf32> to vector<8x1xf32>
    %178 = vector.extract_strided_slice %175 {offsets = [0, 0], sizes = [1, 128], strides = [1, 1]} : vector<8x128xf32> to vector<1x128xf32>
    %179 = vector.broadcast %177 : vector<8x1xf32> to vector<8x128xf32>
    %180 = vector.broadcast %178 : vector<1x128xf32> to vector<8x128xf32>
    %181 = arith.mulf %179, %180 : vector<8x128xf32>
    %182 = vector.extract_strided_slice %176 {offsets = [0, 1], sizes = [8, 1], strides = [1, 1]} : vector<8x8xf32> to vector<8x1xf32>
    %183 = vector.extract_strided_slice %175 {offsets = [1, 0], sizes = [1, 128], strides = [1, 1]} : vector<8x128xf32> to vector<1x128xf32>
    %184 = vector.broadcast %182 : vector<8x1xf32> to vector<8x128xf32>
    %185 = vector.broadcast %183 : vector<1x128xf32> to vector<8x128xf32>
    %186 = arith.mulf %184, %185 : vector<8x128xf32>
    %187 = arith.addf %181, %186 : vector<8x128xf32>
    %188 = vector.extract_strided_slice %176 {offsets = [0, 2], sizes = [8, 1], strides = [1, 1]} : vector<8x8xf32> to vector<8x1xf32>
    %189 = vector.extract_strided_slice %175 {offsets = [2, 0], sizes = [1, 128], strides = [1, 1]} : vector<8x128xf32> to vector<1x128xf32>
    %190 = vector.broadcast %188 : vector<8x1xf32> to vector<8x128xf32>
    %191 = vector.broadcast %189 : vector<1x128xf32> to vector<8x128xf32>
    %192 = arith.mulf %190, %191 : vector<8x128xf32>
    %193 = arith.addf %187, %192 : vector<8x128xf32>
    %194 = vector.extract_strided_slice %176 {offsets = [0, 3], sizes = [8, 1], strides = [1, 1]} : vector<8x8xf32> to vector<8x1xf32>
    %195 = vector.extract_strided_slice %175 {offsets = [3, 0], sizes = [1, 128], strides = [1, 1]} : vector<8x128xf32> to vector<1x128xf32>
    %196 = vector.broadcast %194 : vector<8x1xf32> to vector<8x128xf32>
    %197 = vector.broadcast %195 : vector<1x128xf32> to vector<8x128xf32>
    %198 = arith.mulf %196, %197 : vector<8x128xf32>
    %199 = arith.addf %193, %198 : vector<8x128xf32>
    %200 = vector.extract_strided_slice %176 {offsets = [0, 4], sizes = [8, 1], strides = [1, 1]} : vector<8x8xf32> to vector<8x1xf32>
    %201 = vector.extract_strided_slice %175 {offsets = [4, 0], sizes = [1, 128], strides = [1, 1]} : vector<8x128xf32> to vector<1x128xf32>
    %202 = vector.broadcast %200 : vector<8x1xf32> to vector<8x128xf32>
    %203 = vector.broadcast %201 : vector<1x128xf32> to vector<8x128xf32>
    %204 = arith.mulf %202, %203 : vector<8x128xf32>
    %205 = arith.addf %199, %204 : vector<8x128xf32>
    %206 = vector.extract_strided_slice %176 {offsets = [0, 5], sizes = [8, 1], strides = [1, 1]} : vector<8x8xf32> to vector<8x1xf32>
    %207 = vector.extract_strided_slice %175 {offsets = [5, 0], sizes = [1, 128], strides = [1, 1]} : vector<8x128xf32> to vector<1x128xf32>
    %208 = vector.broadcast %206 : vector<8x1xf32> to vector<8x128xf32>
    %209 = vector.broadcast %207 : vector<1x128xf32> to vector<8x128xf32>
    %210 = arith.mulf %208, %209 : vector<8x128xf32>
    %211 = arith.addf %205, %210 : vector<8x128xf32>
    %212 = vector.extract_strided_slice %176 {offsets = [0, 6], sizes = [8, 1], strides = [1, 1]} : vector<8x8xf32> to vector<8x1xf32>
    %213 = vector.extract_strided_slice %175 {offsets = [6, 0], sizes = [1, 128], strides = [1, 1]} : vector<8x128xf32> to vector<1x128xf32>
    %214 = vector.broadcast %212 : vector<8x1xf32> to vector<8x128xf32>
    %215 = vector.broadcast %213 : vector<1x128xf32> to vector<8x128xf32>
    %216 = arith.mulf %214, %215 : vector<8x128xf32>
    %217 = arith.addf %211, %216 : vector<8x128xf32>
    %218 = vector.extract_strided_slice %176 {offsets = [0, 7], sizes = [8, 1], strides = [1, 1]} : vector<8x8xf32> to vector<8x1xf32>
    %219 = vector.extract_strided_slice %175 {offsets = [7, 0], sizes = [1, 128], strides = [1, 1]} : vector<8x128xf32> to vector<1x128xf32>
    %220 = vector.broadcast %218 : vector<8x1xf32> to vector<8x128xf32>
    %221 = vector.broadcast %219 : vector<1x128xf32> to vector<8x128xf32>
    %222 = arith.mulf %220, %221 : vector<8x128xf32>
    %223 = arith.addf %217, %222 : vector<8x128xf32>
    %c0_23 = arith.constant 0 : index
    %c0_24 = arith.constant 0 : index
    %224 = vector.load %arg7[%c0_23, %c0_24] : memref<8x1xf32, #tpu.memory_space<vmem>>, vector<8x1xf32>
    %225 = vector.broadcast %224 : vector<8x1xf32> to vector<8x128xf32>
    %226 = arith.addf %223, %225 : vector<8x128xf32>
    %cst_25 = arith.constant 0.000000e+00 : f32
    %cst_26 = arith.constant 1.000000e+04 : f32
    %227 = vector.broadcast %cst_25 : f32 to vector<8x128xf32>
    %228 = arith.maximumf %227, %226 : vector<8x128xf32>
    %229 = vector.broadcast %cst_26 : f32 to vector<8x128xf32>
    %230 = arith.minimumf %229, %228 : vector<8x128xf32>
    %231 = arith.mulf %230, %118 : vector<8x128xf32>
    %c0_27 = arith.constant 0 : index
    %c0_28 = arith.constant 0 : index
    %c0_29 = arith.constant 0 : index
    %232 = vector.load %arg12[%c0_27, %c0_28, %c0_29] : memref<1x8x128xf32, #tpu.memory_space<vmem>>, vector<1x8x128xf32>
    %233 = vector.shape_cast %232 : vector<1x8x128xf32> to vector<8x128xf32>
    %234 = vector.shape_cast %231 : vector<8x128xf32> to vector<1x8x128xf32>
    tpu.vector_store %arg12[%c0_27, %c0_28, %c0_29], %234 {strides = array<i32>} : memref<1x8x128xf32, #tpu.memory_space<vmem>>, vector<1x8x128xf32>,
    %235 = arith.mulf %230, %119 : vector<8x128xf32>
    %c0_30 = arith.constant 0 : index
    %c0_31 = arith.constant 0 : index
    %c0_32 = arith.constant 0 : index
    %236 = vector.load %arg13[%c0_30, %c0_31, %c0_32] : memref<1x8x128xf32, #tpu.memory_space<vmem>>, vector<1x8x128xf32>
    %237 = vector.shape_cast %236 : vector<1x8x128xf32> to vector<8x128xf32>
    %238 = vector.shape_cast %235 : vector<8x128xf32> to vector<1x8x128xf32>
    tpu.vector_store %arg13[%c0_30, %c0_31, %c0_32], %238 {strides = array<i32>} : memref<1x8x128xf32, #tpu.memory_space<vmem>>, vector<1x8x128xf32>,
    return
  }
  func.func @transform_0(%arg0: i32, %arg1: i32) -> (i32, i32, i32) {
    %c0_i32 = arith.constant 0 : i32
    %c0_i32_0 = arith.constant 0 : i32
    return %arg0, %c0_i32, %arg1 : i32, i32, i32
  }
  func.func @transform_1(%arg0: i32, %arg1: i32) -> (i32, i32, i32) {
    %c0_i32 = arith.constant 0 : i32
    %c0_i32_0 = arith.constant 0 : i32
    return %arg0, %c0_i32, %arg1 : i32, i32, i32
  }
  func.func @transform_2(%arg0: i32, %arg1: i32) -> (i32, i32) {
    %c0_i32 = arith.constant 0 : i32
    %c0_i32_0 = arith.constant 0 : i32
    %c0_i32_1 = arith.constant 0 : i32
    return %c0_i32, %c0_i32_0 : i32, i32
  }
  func.func @transform_3(%arg0: i32, %arg1: i32) -> (i32, i32) {
    %c0_i32 = arith.constant 0 : i32
    %c0_i32_0 = arith.constant 0 : i32
    %c0_i32_1 = arith.constant 0 : i32
    return %c0_i32, %c0_i32_0 : i32, i32
  }
  func.func @transform_4(%arg0: i32, %arg1: i32) -> (i32, i32) {
    %c0_i32 = arith.constant 0 : i32
    %c0_i32_0 = arith.constant 0 : i32
    %c0_i32_1 = arith.constant 0 : i32
    return %c0_i32, %c0_i32_0 : i32, i32
  }
  func.func @transform_5(%arg0: i32, %arg1: i32) -> (i32, i32) {
    %c0_i32 = arith.constant 0 : i32
    %c0_i32_0 = arith.constant 0 : i32
    %c0_i32_1 = arith.constant 0 : i32
    return %c0_i32, %c0_i32_0 : i32, i32
  }
  func.func @transform_6(%arg0: i32, %arg1: i32) -> (i32, i32) {
    %c0_i32 = arith.constant 0 : i32
    %c0_i32_0 = arith.constant 0 : i32
    %c0_i32_1 = arith.constant 0 : i32
    return %c0_i32, %c0_i32_0 : i32, i32
  }
  func.func @transform_7(%arg0: i32, %arg1: i32) -> (i32, i32) {
    %c0_i32 = arith.constant 0 : i32
    %c0_i32_0 = arith.constant 0 : i32
    %c0_i32_1 = arith.constant 0 : i32
    return %c0_i32, %c0_i32_0 : i32, i32
  }
  func.func @transform_8(%arg0: i32, %arg1: i32) -> (i32, i32) {
    %c0_i32 = arith.constant 0 : i32
    %c0_i32_0 = arith.constant 0 : i32
    %c0_i32_1 = arith.constant 0 : i32
    return %c0_i32, %c0_i32_0 : i32, i32
  }
  func.func @transform_9(%arg0: i32, %arg1: i32) -> (i32, i32) {
    %c0_i32 = arith.constant 0 : i32
    %c0_i32_0 = arith.constant 0 : i32
    %c0_i32_1 = arith.constant 0 : i32
    return %c0_i32, %c0_i32_0 : i32, i32
  }
  func.func @transform_10(%arg0: i32, %arg1: i32) -> (i32, i32, i32) {
    %c0_i32 = arith.constant 0 : i32
    %c0_i32_0 = arith.constant 0 : i32
    return %arg0, %c0_i32, %arg1 : i32, i32, i32
  }
  func.func @transform_11(%arg0: i32, %arg1: i32) -> (i32, i32, i32) {
    %c0_i32 = arith.constant 0 : i32
    %c0_i32_0 = arith.constant 0 : i32
    return %arg0, %c0_i32, %arg1 : i32, i32, i32
  }
}

module attributes {stable_mosaic.version = 11 : i64} {
  func.func @_postcat_kernel(%arg0: i32, %arg1: i32, %arg2: memref<1x4x256xf32, #tpu.memory_space<vmem>>, %arg3: memref<1x4x256xf32, #tpu.memory_space<vmem>>, %arg4: memref<4x4xf32, #tpu.memory_space<vmem>>, %arg5: memref<4x1xf32, #tpu.memory_space<vmem>>, %arg6: memref<1x4x256xf32, #tpu.memory_space<vmem>>) attributes {dimension_semantics = [#tpu.dimension_semantics<parallel>, #tpu.dimension_semantics<parallel>], iteration_bounds = array<i64: 2, 1>, scalar_prefetch = 0 : i64, scratch_operands = 0 : i64, tpu.core_type = #tpu.core_type<tc>, window_params = [{transform_indices = @transform_0, window_bounds = array<i64: 1, 4, 256>}, {transform_indices = @transform_1, window_bounds = array<i64: 1, 4, 256>}, {pipeline_mode = #tpu.pipeline_mode<synchronous>, transform_indices = @transform_2, window_bounds = array<i64: 4, 4>}, {pipeline_mode = #tpu.pipeline_mode<synchronous>, transform_indices = @transform_3, window_bounds = array<i64: 4, 1>}, {transform_indices = @transform_4, window_bounds = array<i64: 1, 4, 256>}]} {
    %c0 = arith.constant 0 : index
    %c0_0 = arith.constant 0 : index
    %c0_1 = arith.constant 0 : index
    %0 = vector.load %arg3[%c0, %c0_0, %c0_1] : memref<1x4x256xf32, #tpu.memory_space<vmem>>, vector<1x4x256xf32>
    %1 = vector.shape_cast %0 : vector<1x4x256xf32> to vector<4x256xf32>
    %c0_2 = arith.constant 0 : index
    %c0_3 = arith.constant 0 : index
    %c0_4 = arith.constant 0 : index
    %2 = vector.load %arg2[%c0_2, %c0_3, %c0_4] : memref<1x4x256xf32, #tpu.memory_space<vmem>>, vector<1x4x256xf32>
    %3 = vector.shape_cast %2 : vector<1x4x256xf32> to vector<4x256xf32>
    %cst = arith.constant -1.000000e+01 : f32
    %cst_5 = arith.constant 1.000000e+01 : f32
    %4 = vector.broadcast %cst : f32 to vector<4x256xf32>
    %5 = arith.maximumf %4, %1 : vector<4x256xf32>
    %6 = vector.broadcast %cst_5 : f32 to vector<4x256xf32>
    %7 = arith.minimumf %6, %5 : vector<4x256xf32>
    %8 = arith.addf %3, %7 : vector<4x256xf32>
    %cst_6 = arith.constant -1.000000e+01 : f32
    %cst_7 = arith.constant 1.000000e+01 : f32
    %9 = vector.broadcast %cst_6 : f32 to vector<4x256xf32>
    %10 = arith.maximumf %9, %8 : vector<4x256xf32>
    %11 = vector.broadcast %cst_7 : f32 to vector<4x256xf32>
    %12 = arith.minimumf %11, %10 : vector<4x256xf32>
    %c0_8 = arith.constant 0 : index
    %c0_9 = arith.constant 0 : index
    %13 = vector.load %arg4[%c0_8, %c0_9] : memref<4x4xf32, #tpu.memory_space<vmem>>, vector<4x4xf32>
    %14 = vector.extract_strided_slice %13 {offsets = [0, 0], sizes = [4, 1], strides = [1, 1]} : vector<4x4xf32> to vector<4x1xf32>
    %15 = vector.extract_strided_slice %12 {offsets = [0, 0], sizes = [1, 256], strides = [1, 1]} : vector<4x256xf32> to vector<1x256xf32>
    %16 = vector.broadcast %14 : vector<4x1xf32> to vector<4x256xf32>
    %17 = vector.broadcast %15 : vector<1x256xf32> to vector<4x256xf32>
    %18 = arith.mulf %16, %17 : vector<4x256xf32>
    %19 = vector.extract_strided_slice %13 {offsets = [0, 1], sizes = [4, 1], strides = [1, 1]} : vector<4x4xf32> to vector<4x1xf32>
    %20 = vector.extract_strided_slice %12 {offsets = [1, 0], sizes = [1, 256], strides = [1, 1]} : vector<4x256xf32> to vector<1x256xf32>
    %21 = vector.broadcast %19 : vector<4x1xf32> to vector<4x256xf32>
    %22 = vector.broadcast %20 : vector<1x256xf32> to vector<4x256xf32>
    %23 = arith.mulf %21, %22 : vector<4x256xf32>
    %24 = arith.addf %18, %23 : vector<4x256xf32>
    %25 = vector.extract_strided_slice %13 {offsets = [0, 2], sizes = [4, 1], strides = [1, 1]} : vector<4x4xf32> to vector<4x1xf32>
    %26 = vector.extract_strided_slice %12 {offsets = [2, 0], sizes = [1, 256], strides = [1, 1]} : vector<4x256xf32> to vector<1x256xf32>
    %27 = vector.broadcast %25 : vector<4x1xf32> to vector<4x256xf32>
    %28 = vector.broadcast %26 : vector<1x256xf32> to vector<4x256xf32>
    %29 = arith.mulf %27, %28 : vector<4x256xf32>
    %30 = arith.addf %24, %29 : vector<4x256xf32>
    %31 = vector.extract_strided_slice %13 {offsets = [0, 3], sizes = [4, 1], strides = [1, 1]} : vector<4x4xf32> to vector<4x1xf32>
    %32 = vector.extract_strided_slice %12 {offsets = [3, 0], sizes = [1, 256], strides = [1, 1]} : vector<4x256xf32> to vector<1x256xf32>
    %33 = vector.broadcast %31 : vector<4x1xf32> to vector<4x256xf32>
    %34 = vector.broadcast %32 : vector<1x256xf32> to vector<4x256xf32>
    %35 = arith.mulf %33, %34 : vector<4x256xf32>
    %36 = arith.addf %30, %35 : vector<4x256xf32>
    %c0_10 = arith.constant 0 : index
    %c0_11 = arith.constant 0 : index
    %37 = vector.load %arg5[%c0_10, %c0_11] : memref<4x1xf32, #tpu.memory_space<vmem>>, vector<4x1xf32>
    %38 = vector.broadcast %37 : vector<4x1xf32> to vector<4x256xf32>
    %39 = arith.addf %36, %38 : vector<4x256xf32>
    %40 = arith.addf %39, %1 : vector<4x256xf32>
    %c0_12 = arith.constant 0 : index
    %c0_13 = arith.constant 0 : index
    %c0_14 = arith.constant 0 : index
    %41 = vector.load %arg6[%c0_12, %c0_13, %c0_14] : memref<1x4x256xf32, #tpu.memory_space<vmem>>, vector<1x4x256xf32>
    %42 = vector.shape_cast %41 : vector<1x4x256xf32> to vector<4x256xf32>
    %43 = vector.shape_cast %40 : vector<4x256xf32> to vector<1x4x256xf32>
    tpu.vector_store %arg6[%c0_12, %c0_13, %c0_14], %43 {strides = array<i32>} : memref<1x4x256xf32, #tpu.memory_space<vmem>>, vector<1x4x256xf32>,
    return
  }
  func.func @transform_0(%arg0: i32, %arg1: i32) -> (i32, i32, i32) {
    %c0_i32 = arith.constant 0 : i32
    %c0_i32_0 = arith.constant 0 : i32
    return %arg0, %c0_i32, %arg1 : i32, i32, i32
  }
  func.func @transform_1(%arg0: i32, %arg1: i32) -> (i32, i32, i32) {
    %c0_i32 = arith.constant 0 : i32
    %c0_i32_0 = arith.constant 0 : i32
    return %arg0, %c0_i32, %arg1 : i32, i32, i32
  }
  func.func @transform_2(%arg0: i32, %arg1: i32) -> (i32, i32) {
    %c0_i32 = arith.constant 0 : i32
    %c0_i32_0 = arith.constant 0 : i32
    %c0_i32_1 = arith.constant 0 : i32
    return %c0_i32, %c0_i32_0 : i32, i32
  }
  func.func @transform_3(%arg0: i32, %arg1: i32) -> (i32, i32) {
    %c0_i32 = arith.constant 0 : i32
    %c0_i32_0 = arith.constant 0 : i32
    %c0_i32_1 = arith.constant 0 : i32
    return %c0_i32, %c0_i32_0 : i32, i32
  }
  func.func @transform_4(%arg0: i32, %arg1: i32) -> (i32, i32, i32) {
    %c0_i32 = arith.constant 0 : i32
    %c0_i32_0 = arith.constant 0 : i32
    return %arg0, %c0_i32, %arg1 : i32, i32, i32
  }
}

module attributes {stable_mosaic.version = 11 : i64} {
  func.func @_conv2_kernel(%arg0: i32, %arg1: i32, %arg2: memref<1x4x256xf32, #tpu.memory_space<vmem>>, %arg3: memref<1x4x256xf32, #tpu.memory_space<vmem>>, %arg4: memref<8x4xf32, #tpu.memory_space<vmem>>, %arg5: memref<8x4xf32, #tpu.memory_space<vmem>>, %arg6: memref<8x1xf32, #tpu.memory_space<vmem>>, %arg7: memref<1x8x256xf32, #tpu.memory_space<vmem>>) attributes {dimension_semantics = [#tpu.dimension_semantics<parallel>, #tpu.dimension_semantics<parallel>], iteration_bounds = array<i64: 2, 1>, scalar_prefetch = 0 : i64, scratch_operands = 0 : i64, tpu.core_type = #tpu.core_type<tc>, window_params = [{transform_indices = @transform_0, window_bounds = array<i64: 1, 4, 256>}, {transform_indices = @transform_1, window_bounds = array<i64: 1, 4, 256>}, {pipeline_mode = #tpu.pipeline_mode<synchronous>, transform_indices = @transform_2, window_bounds = array<i64: 8, 4>}, {pipeline_mode = #tpu.pipeline_mode<synchronous>, transform_indices = @transform_3, window_bounds = array<i64: 8, 4>}, {pipeline_mode = #tpu.pipeline_mode<synchronous>, transform_indices = @transform_4, window_bounds = array<i64: 8, 1>}, {transform_indices = @transform_5, window_bounds = array<i64: 1, 8, 256>}]} {
    %c0 = arith.constant 0 : index
    %c0_0 = arith.constant 0 : index
    %c0_1 = arith.constant 0 : index
    %0 = vector.load %arg2[%c0, %c0_0, %c0_1] : memref<1x4x256xf32, #tpu.memory_space<vmem>>, vector<1x4x256xf32>
    %1 = vector.shape_cast %0 : vector<1x4x256xf32> to vector<4x256xf32>
    %cst = arith.constant -1.000000e+01 : f32
    %cst_2 = arith.constant 1.000000e+01 : f32
    %2 = vector.broadcast %cst : f32 to vector<4x256xf32>
    %3 = arith.maximumf %2, %1 : vector<4x256xf32>
    %4 = vector.broadcast %cst_2 : f32 to vector<4x256xf32>
    %5 = arith.minimumf %4, %3 : vector<4x256xf32>
    %c0_3 = arith.constant 0 : index
    %c0_4 = arith.constant 0 : index
    %c0_5 = arith.constant 0 : index
    %6 = vector.load %arg3[%c0_3, %c0_4, %c0_5] : memref<1x4x256xf32, #tpu.memory_space<vmem>>, vector<1x4x256xf32>
    %7 = vector.shape_cast %6 : vector<1x4x256xf32> to vector<4x256xf32>
    %cst_6 = arith.constant -1.000000e+01 : f32
    %cst_7 = arith.constant 1.000000e+01 : f32
    %8 = vector.broadcast %cst_6 : f32 to vector<4x256xf32>
    %9 = arith.maximumf %8, %7 : vector<4x256xf32>
    %10 = vector.broadcast %cst_7 : f32 to vector<4x256xf32>
    %11 = arith.minimumf %10, %9 : vector<4x256xf32>
    %c0_8 = arith.constant 0 : index
    %c0_9 = arith.constant 0 : index
    %12 = vector.load %arg4[%c0_8, %c0_9] : memref<8x4xf32, #tpu.memory_space<vmem>>, vector<8x4xf32>
    %13 = vector.extract_strided_slice %12 {offsets = [0, 0], sizes = [8, 1], strides = [1, 1]} : vector<8x4xf32> to vector<8x1xf32>
    %14 = vector.extract_strided_slice %5 {offsets = [0, 0], sizes = [1, 256], strides = [1, 1]} : vector<4x256xf32> to vector<1x256xf32>
    %15 = vector.broadcast %13 : vector<8x1xf32> to vector<8x256xf32>
    %16 = vector.broadcast %14 : vector<1x256xf32> to vector<8x256xf32>
    %17 = arith.mulf %15, %16 : vector<8x256xf32>
    %18 = vector.extract_strided_slice %12 {offsets = [0, 1], sizes = [8, 1], strides = [1, 1]} : vector<8x4xf32> to vector<8x1xf32>
    %19 = vector.extract_strided_slice %5 {offsets = [1, 0], sizes = [1, 256], strides = [1, 1]} : vector<4x256xf32> to vector<1x256xf32>
    %20 = vector.broadcast %18 : vector<8x1xf32> to vector<8x256xf32>
    %21 = vector.broadcast %19 : vector<1x256xf32> to vector<8x256xf32>
    %22 = arith.mulf %20, %21 : vector<8x256xf32>
    %23 = arith.addf %17, %22 : vector<8x256xf32>
    %24 = vector.extract_strided_slice %12 {offsets = [0, 2], sizes = [8, 1], strides = [1, 1]} : vector<8x4xf32> to vector<8x1xf32>
    %25 = vector.extract_strided_slice %5 {offsets = [2, 0], sizes = [1, 256], strides = [1, 1]} : vector<4x256xf32> to vector<1x256xf32>
    %26 = vector.broadcast %24 : vector<8x1xf32> to vector<8x256xf32>
    %27 = vector.broadcast %25 : vector<1x256xf32> to vector<8x256xf32>
    %28 = arith.mulf %26, %27 : vector<8x256xf32>
    %29 = arith.addf %23, %28 : vector<8x256xf32>
    %30 = vector.extract_strided_slice %12 {offsets = [0, 3], sizes = [8, 1], strides = [1, 1]} : vector<8x4xf32> to vector<8x1xf32>
    %31 = vector.extract_strided_slice %5 {offsets = [3, 0], sizes = [1, 256], strides = [1, 1]} : vector<4x256xf32> to vector<1x256xf32>
    %32 = vector.broadcast %30 : vector<8x1xf32> to vector<8x256xf32>
    %33 = vector.broadcast %31 : vector<1x256xf32> to vector<8x256xf32>
    %34 = arith.mulf %32, %33 : vector<8x256xf32>
    %35 = arith.addf %29, %34 : vector<8x256xf32>
    %c0_10 = arith.constant 0 : index
    %c0_11 = arith.constant 0 : index
    %36 = vector.load %arg5[%c0_10, %c0_11] : memref<8x4xf32, #tpu.memory_space<vmem>>, vector<8x4xf32>
    %37 = vector.extract_strided_slice %36 {offsets = [0, 0], sizes = [8, 1], strides = [1, 1]} : vector<8x4xf32> to vector<8x1xf32>
    %38 = vector.extract_strided_slice %11 {offsets = [0, 0], sizes = [1, 256], strides = [1, 1]} : vector<4x256xf32> to vector<1x256xf32>
    %39 = vector.broadcast %37 : vector<8x1xf32> to vector<8x256xf32>
    %40 = vector.broadcast %38 : vector<1x256xf32> to vector<8x256xf32>
    %41 = arith.mulf %39, %40 : vector<8x256xf32>
    %42 = vector.extract_strided_slice %36 {offsets = [0, 1], sizes = [8, 1], strides = [1, 1]} : vector<8x4xf32> to vector<8x1xf32>
    %43 = vector.extract_strided_slice %11 {offsets = [1, 0], sizes = [1, 256], strides = [1, 1]} : vector<4x256xf32> to vector<1x256xf32>
    %44 = vector.broadcast %42 : vector<8x1xf32> to vector<8x256xf32>
    %45 = vector.broadcast %43 : vector<1x256xf32> to vector<8x256xf32>
    %46 = arith.mulf %44, %45 : vector<8x256xf32>
    %47 = arith.addf %41, %46 : vector<8x256xf32>
    %48 = vector.extract_strided_slice %36 {offsets = [0, 2], sizes = [8, 1], strides = [1, 1]} : vector<8x4xf32> to vector<8x1xf32>
    %49 = vector.extract_strided_slice %11 {offsets = [2, 0], sizes = [1, 256], strides = [1, 1]} : vector<4x256xf32> to vector<1x256xf32>
    %50 = vector.broadcast %48 : vector<8x1xf32> to vector<8x256xf32>
    %51 = vector.broadcast %49 : vector<1x256xf32> to vector<8x256xf32>
    %52 = arith.mulf %50, %51 : vector<8x256xf32>
    %53 = arith.addf %47, %52 : vector<8x256xf32>
    %54 = vector.extract_strided_slice %36 {offsets = [0, 3], sizes = [8, 1], strides = [1, 1]} : vector<8x4xf32> to vector<8x1xf32>
    %55 = vector.extract_strided_slice %11 {offsets = [3, 0], sizes = [1, 256], strides = [1, 1]} : vector<4x256xf32> to vector<1x256xf32>
    %56 = vector.broadcast %54 : vector<8x1xf32> to vector<8x256xf32>
    %57 = vector.broadcast %55 : vector<1x256xf32> to vector<8x256xf32>
    %58 = arith.mulf %56, %57 : vector<8x256xf32>
    %59 = arith.addf %53, %58 : vector<8x256xf32>
    %60 = arith.addf %35, %59 : vector<8x256xf32>
    %c0_12 = arith.constant 0 : index
    %c0_13 = arith.constant 0 : index
    %61 = vector.load %arg6[%c0_12, %c0_13] : memref<8x1xf32, #tpu.memory_space<vmem>>, vector<8x1xf32>
    %62 = vector.broadcast %61 : vector<8x1xf32> to vector<8x256xf32>
    %63 = arith.addf %60, %62 : vector<8x256xf32>
    %c0_14 = arith.constant 0 : index
    %c0_15 = arith.constant 0 : index
    %c0_16 = arith.constant 0 : index
    %64 = vector.load %arg7[%c0_14, %c0_15, %c0_16] : memref<1x8x256xf32, #tpu.memory_space<vmem>>, vector<1x8x256xf32>
    %65 = vector.shape_cast %64 : vector<1x8x256xf32> to vector<8x256xf32>
    %66 = vector.shape_cast %63 : vector<8x256xf32> to vector<1x8x256xf32>
    tpu.vector_store %arg7[%c0_14, %c0_15, %c0_16], %66 {strides = array<i32>} : memref<1x8x256xf32, #tpu.memory_space<vmem>>, vector<1x8x256xf32>,
    return
  }
  func.func @transform_0(%arg0: i32, %arg1: i32) -> (i32, i32, i32) {
    %c0_i32 = arith.constant 0 : i32
    %c0_i32_0 = arith.constant 0 : i32
    return %arg0, %c0_i32, %arg1 : i32, i32, i32
  }
  func.func @transform_1(%arg0: i32, %arg1: i32) -> (i32, i32, i32) {
    %c0_i32 = arith.constant 0 : i32
    %c0_i32_0 = arith.constant 0 : i32
    return %arg0, %c0_i32, %arg1 : i32, i32, i32
  }
  func.func @transform_2(%arg0: i32, %arg1: i32) -> (i32, i32) {
    %c0_i32 = arith.constant 0 : i32
    %c0_i32_0 = arith.constant 0 : i32
    %c0_i32_1 = arith.constant 0 : i32
    return %c0_i32, %c0_i32_0 : i32, i32
  }
  func.func @transform_3(%arg0: i32, %arg1: i32) -> (i32, i32) {
    %c0_i32 = arith.constant 0 : i32
    %c0_i32_0 = arith.constant 0 : i32
    %c0_i32_1 = arith.constant 0 : i32
    return %c0_i32, %c0_i32_0 : i32, i32
  }
  func.func @transform_4(%arg0: i32, %arg1: i32) -> (i32, i32) {
    %c0_i32 = arith.constant 0 : i32
    %c0_i32_0 = arith.constant 0 : i32
    %c0_i32_1 = arith.constant 0 : i32
    return %c0_i32, %c0_i32_0 : i32, i32
  }
  func.func @transform_5(%arg0: i32, %arg1: i32) -> (i32, i32, i32) {
    %c0_i32 = arith.constant 0 : i32
    %c0_i32_0 = arith.constant 0 : i32
    return %arg0, %c0_i32, %arg1 : i32, i32, i32
  }
}

module attributes {stable_mosaic.version = 11 : i64} {
  func.func @_freq_kernel(%arg0: i32, %arg1: i32, %arg2: memref<1x8x256xf32, #tpu.memory_space<vmem>>, %arg3: memref<1x8x256xf32, #tpu.memory_space<vmem>>, %arg4: memref<8x8xf32, #tpu.memory_space<vmem>>, %arg5: memref<8x1xf32, #tpu.memory_space<vmem>>, %arg6: memref<8x8xf32, #tpu.memory_space<vmem>>, %arg7: memref<8x1xf32, #tpu.memory_space<vmem>>, %arg8: memref<8x8xf32, #tpu.memory_space<vmem>>, %arg9: memref<8x1xf32, #tpu.memory_space<vmem>>, %arg10: memref<8x8xf32, #tpu.memory_space<vmem>>, %arg11: memref<8x1xf32, #tpu.memory_space<vmem>>, %arg12: memref<1x8x256xf32, #tpu.memory_space<vmem>>, %arg13: memref<1x8x256xf32, #tpu.memory_space<vmem>>) attributes {dimension_semantics = [#tpu.dimension_semantics<parallel>, #tpu.dimension_semantics<parallel>], iteration_bounds = array<i64: 2, 1>, scalar_prefetch = 0 : i64, scratch_operands = 0 : i64, tpu.core_type = #tpu.core_type<tc>, window_params = [{transform_indices = @transform_0, window_bounds = array<i64: 1, 8, 256>}, {transform_indices = @transform_1, window_bounds = array<i64: 1, 8, 256>}, {pipeline_mode = #tpu.pipeline_mode<synchronous>, transform_indices = @transform_2, window_bounds = array<i64: 8, 8>}, {pipeline_mode = #tpu.pipeline_mode<synchronous>, transform_indices = @transform_3, window_bounds = array<i64: 8, 1>}, {pipeline_mode = #tpu.pipeline_mode<synchronous>, transform_indices = @transform_4, window_bounds = array<i64: 8, 8>}, {pipeline_mode = #tpu.pipeline_mode<synchronous>, transform_indices = @transform_5, window_bounds = array<i64: 8, 1>}, {pipeline_mode = #tpu.pipeline_mode<synchronous>, transform_indices = @transform_6, window_bounds = array<i64: 8, 8>}, {pipeline_mode = #tpu.pipeline_mode<synchronous>, transform_indices = @transform_7, window_bounds = array<i64: 8, 1>}, {pipeline_mode = #tpu.pipeline_mode<synchronous>, transform_indices = @transform_8, window_bounds = array<i64: 8, 8>}, {pipeline_mode = #tpu.pipeline_mode<synchronous>, transform_indices = @transform_9, window_bounds = array<i64: 8, 1>}, {transform_indices = @transform_10, window_bounds = array<i64: 1, 8, 256>}, {transform_indices = @transform_11, window_bounds = array<i64: 1, 8, 256>}]} {
    %c0 = arith.constant 0 : index
    %c0_0 = arith.constant 0 : index
    %c0_1 = arith.constant 0 : index
    %0 = vector.load %arg2[%c0, %c0_0, %c0_1] : memref<1x8x256xf32, #tpu.memory_space<vmem>>, vector<1x8x256xf32>
    %1 = vector.shape_cast %0 : vector<1x8x256xf32> to vector<8x256xf32>
    %c0_2 = arith.constant 0 : index
    %c0_3 = arith.constant 0 : index
    %c0_4 = arith.constant 0 : index
    %2 = vector.load %arg3[%c0_2, %c0_3, %c0_4] : memref<1x8x256xf32, #tpu.memory_space<vmem>>, vector<1x8x256xf32>
    %3 = vector.shape_cast %2 : vector<1x8x256xf32> to vector<8x256xf32>
    %4 = arith.mulf %1, %1 : vector<8x256xf32>
    %5 = arith.mulf %3, %3 : vector<8x256xf32>
    %6 = arith.addf %4, %5 : vector<8x256xf32>
    %7 = math.sqrt %6 : vector<8x256xf32>
    %cst = arith.constant 9.99999997E-7 : f32
    %8 = vector.broadcast %cst : f32 to vector<8x256xf32>
    %9 = arith.addf %7, %8 : vector<8x256xf32>
    %10 = math.atan2 %3, %1 : vector<8x256xf32>
    %c0_5 = arith.constant 0 : index
    %c0_6 = arith.constant 0 : index
    %11 = vector.load %arg8[%c0_5, %c0_6] : memref<8x8xf32, #tpu.memory_space<vmem>>, vector<8x8xf32>
    %12 = vector.extract_strided_slice %11 {offsets = [0, 0], sizes = [8, 1], strides = [1, 1]} : vector<8x8xf32> to vector<8x1xf32>
    %13 = vector.extract_strided_slice %10 {offsets = [0, 0], sizes = [1, 256], strides = [1, 1]} : vector<8x256xf32> to vector<1x256xf32>
    %14 = vector.broadcast %12 : vector<8x1xf32> to vector<8x256xf32>
    %15 = vector.broadcast %13 : vector<1x256xf32> to vector<8x256xf32>
    %16 = arith.mulf %14, %15 : vector<8x256xf32>
    %17 = vector.extract_strided_slice %11 {offsets = [0, 1], sizes = [8, 1], strides = [1, 1]} : vector<8x8xf32> to vector<8x1xf32>
    %18 = vector.extract_strided_slice %10 {offsets = [1, 0], sizes = [1, 256], strides = [1, 1]} : vector<8x256xf32> to vector<1x256xf32>
    %19 = vector.broadcast %17 : vector<8x1xf32> to vector<8x256xf32>
    %20 = vector.broadcast %18 : vector<1x256xf32> to vector<8x256xf32>
    %21 = arith.mulf %19, %20 : vector<8x256xf32>
    %22 = arith.addf %16, %21 : vector<8x256xf32>
    %23 = vector.extract_strided_slice %11 {offsets = [0, 2], sizes = [8, 1], strides = [1, 1]} : vector<8x8xf32> to vector<8x1xf32>
    %24 = vector.extract_strided_slice %10 {offsets = [2, 0], sizes = [1, 256], strides = [1, 1]} : vector<8x256xf32> to vector<1x256xf32>
    %25 = vector.broadcast %23 : vector<8x1xf32> to vector<8x256xf32>
    %26 = vector.broadcast %24 : vector<1x256xf32> to vector<8x256xf32>
    %27 = arith.mulf %25, %26 : vector<8x256xf32>
    %28 = arith.addf %22, %27 : vector<8x256xf32>
    %29 = vector.extract_strided_slice %11 {offsets = [0, 3], sizes = [8, 1], strides = [1, 1]} : vector<8x8xf32> to vector<8x1xf32>
    %30 = vector.extract_strided_slice %10 {offsets = [3, 0], sizes = [1, 256], strides = [1, 1]} : vector<8x256xf32> to vector<1x256xf32>
    %31 = vector.broadcast %29 : vector<8x1xf32> to vector<8x256xf32>
    %32 = vector.broadcast %30 : vector<1x256xf32> to vector<8x256xf32>
    %33 = arith.mulf %31, %32 : vector<8x256xf32>
    %34 = arith.addf %28, %33 : vector<8x256xf32>
    %35 = vector.extract_strided_slice %11 {offsets = [0, 4], sizes = [8, 1], strides = [1, 1]} : vector<8x8xf32> to vector<8x1xf32>
    %36 = vector.extract_strided_slice %10 {offsets = [4, 0], sizes = [1, 256], strides = [1, 1]} : vector<8x256xf32> to vector<1x256xf32>
    %37 = vector.broadcast %35 : vector<8x1xf32> to vector<8x256xf32>
    %38 = vector.broadcast %36 : vector<1x256xf32> to vector<8x256xf32>
    %39 = arith.mulf %37, %38 : vector<8x256xf32>
    %40 = arith.addf %34, %39 : vector<8x256xf32>
    %41 = vector.extract_strided_slice %11 {offsets = [0, 5], sizes = [8, 1], strides = [1, 1]} : vector<8x8xf32> to vector<8x1xf32>
    %42 = vector.extract_strided_slice %10 {offsets = [5, 0], sizes = [1, 256], strides = [1, 1]} : vector<8x256xf32> to vector<1x256xf32>
    %43 = vector.broadcast %41 : vector<8x1xf32> to vector<8x256xf32>
    %44 = vector.broadcast %42 : vector<1x256xf32> to vector<8x256xf32>
    %45 = arith.mulf %43, %44 : vector<8x256xf32>
    %46 = arith.addf %40, %45 : vector<8x256xf32>
    %47 = vector.extract_strided_slice %11 {offsets = [0, 6], sizes = [8, 1], strides = [1, 1]} : vector<8x8xf32> to vector<8x1xf32>
    %48 = vector.extract_strided_slice %10 {offsets = [6, 0], sizes = [1, 256], strides = [1, 1]} : vector<8x256xf32> to vector<1x256xf32>
    %49 = vector.broadcast %47 : vector<8x1xf32> to vector<8x256xf32>
    %50 = vector.broadcast %48 : vector<1x256xf32> to vector<8x256xf32>
    %51 = arith.mulf %49, %50 : vector<8x256xf32>
    %52 = arith.addf %46, %51 : vector<8x256xf32>
    %53 = vector.extract_strided_slice %11 {offsets = [0, 7], sizes = [8, 1], strides = [1, 1]} : vector<8x8xf32> to vector<8x1xf32>
    %54 = vector.extract_strided_slice %10 {offsets = [7, 0], sizes = [1, 256], strides = [1, 1]} : vector<8x256xf32> to vector<1x256xf32>
    %55 = vector.broadcast %53 : vector<8x1xf32> to vector<8x256xf32>
    %56 = vector.broadcast %54 : vector<1x256xf32> to vector<8x256xf32>
    %57 = arith.mulf %55, %56 : vector<8x256xf32>
    %58 = arith.addf %52, %57 : vector<8x256xf32>
    %c0_7 = arith.constant 0 : index
    %c0_8 = arith.constant 0 : index
    %59 = vector.load %arg9[%c0_7, %c0_8] : memref<8x1xf32, #tpu.memory_space<vmem>>, vector<8x1xf32>
    %60 = vector.broadcast %59 : vector<8x1xf32> to vector<8x256xf32>
    %61 = arith.addf %58, %60 : vector<8x256xf32>
    %cst_9 = arith.constant 0.000000e+00 : f32
    %62 = vector.broadcast %cst_9 : f32 to vector<8x256xf32>
    %63 = arith.cmpf oge, %61, %62 : vector<8x256xf32>
    %cst_10 = arith.constant 1.000000e-01 : f32
    %64 = vector.broadcast %cst_10 : f32 to vector<8x256xf32>
    %65 = arith.mulf %64, %61 : vector<8x256xf32>
    %66 = arith.select %63, %61, %65 : vector<8x256xi1>, vector<8x256xf32>
    %c0_11 = arith.constant 0 : index
    %c0_12 = arith.constant 0 : index
    %67 = vector.load %arg10[%c0_11, %c0_12] : memref<8x8xf32, #tpu.memory_space<vmem>>, vector<8x8xf32>
    %68 = vector.extract_strided_slice %67 {offsets = [0, 0], sizes = [8, 1], strides = [1, 1]} : vector<8x8xf32> to vector<8x1xf32>
    %69 = vector.extract_strided_slice %66 {offsets = [0, 0], sizes = [1, 256], strides = [1, 1]} : vector<8x256xf32> to vector<1x256xf32>
    %70 = vector.broadcast %68 : vector<8x1xf32> to vector<8x256xf32>
    %71 = vector.broadcast %69 : vector<1x256xf32> to vector<8x256xf32>
    %72 = arith.mulf %70, %71 : vector<8x256xf32>
    %73 = vector.extract_strided_slice %67 {offsets = [0, 1], sizes = [8, 1], strides = [1, 1]} : vector<8x8xf32> to vector<8x1xf32>
    %74 = vector.extract_strided_slice %66 {offsets = [1, 0], sizes = [1, 256], strides = [1, 1]} : vector<8x256xf32> to vector<1x256xf32>
    %75 = vector.broadcast %73 : vector<8x1xf32> to vector<8x256xf32>
    %76 = vector.broadcast %74 : vector<1x256xf32> to vector<8x256xf32>
    %77 = arith.mulf %75, %76 : vector<8x256xf32>
    %78 = arith.addf %72, %77 : vector<8x256xf32>
    %79 = vector.extract_strided_slice %67 {offsets = [0, 2], sizes = [8, 1], strides = [1, 1]} : vector<8x8xf32> to vector<8x1xf32>
    %80 = vector.extract_strided_slice %66 {offsets = [2, 0], sizes = [1, 256], strides = [1, 1]} : vector<8x256xf32> to vector<1x256xf32>
    %81 = vector.broadcast %79 : vector<8x1xf32> to vector<8x256xf32>
    %82 = vector.broadcast %80 : vector<1x256xf32> to vector<8x256xf32>
    %83 = arith.mulf %81, %82 : vector<8x256xf32>
    %84 = arith.addf %78, %83 : vector<8x256xf32>
    %85 = vector.extract_strided_slice %67 {offsets = [0, 3], sizes = [8, 1], strides = [1, 1]} : vector<8x8xf32> to vector<8x1xf32>
    %86 = vector.extract_strided_slice %66 {offsets = [3, 0], sizes = [1, 256], strides = [1, 1]} : vector<8x256xf32> to vector<1x256xf32>
    %87 = vector.broadcast %85 : vector<8x1xf32> to vector<8x256xf32>
    %88 = vector.broadcast %86 : vector<1x256xf32> to vector<8x256xf32>
    %89 = arith.mulf %87, %88 : vector<8x256xf32>
    %90 = arith.addf %84, %89 : vector<8x256xf32>
    %91 = vector.extract_strided_slice %67 {offsets = [0, 4], sizes = [8, 1], strides = [1, 1]} : vector<8x8xf32> to vector<8x1xf32>
    %92 = vector.extract_strided_slice %66 {offsets = [4, 0], sizes = [1, 256], strides = [1, 1]} : vector<8x256xf32> to vector<1x256xf32>
    %93 = vector.broadcast %91 : vector<8x1xf32> to vector<8x256xf32>
    %94 = vector.broadcast %92 : vector<1x256xf32> to vector<8x256xf32>
    %95 = arith.mulf %93, %94 : vector<8x256xf32>
    %96 = arith.addf %90, %95 : vector<8x256xf32>
    %97 = vector.extract_strided_slice %67 {offsets = [0, 5], sizes = [8, 1], strides = [1, 1]} : vector<8x8xf32> to vector<8x1xf32>
    %98 = vector.extract_strided_slice %66 {offsets = [5, 0], sizes = [1, 256], strides = [1, 1]} : vector<8x256xf32> to vector<1x256xf32>
    %99 = vector.broadcast %97 : vector<8x1xf32> to vector<8x256xf32>
    %100 = vector.broadcast %98 : vector<1x256xf32> to vector<8x256xf32>
    %101 = arith.mulf %99, %100 : vector<8x256xf32>
    %102 = arith.addf %96, %101 : vector<8x256xf32>
    %103 = vector.extract_strided_slice %67 {offsets = [0, 6], sizes = [8, 1], strides = [1, 1]} : vector<8x8xf32> to vector<8x1xf32>
    %104 = vector.extract_strided_slice %66 {offsets = [6, 0], sizes = [1, 256], strides = [1, 1]} : vector<8x256xf32> to vector<1x256xf32>
    %105 = vector.broadcast %103 : vector<8x1xf32> to vector<8x256xf32>
    %106 = vector.broadcast %104 : vector<1x256xf32> to vector<8x256xf32>
    %107 = arith.mulf %105, %106 : vector<8x256xf32>
    %108 = arith.addf %102, %107 : vector<8x256xf32>
    %109 = vector.extract_strided_slice %67 {offsets = [0, 7], sizes = [8, 1], strides = [1, 1]} : vector<8x8xf32> to vector<8x1xf32>
    %110 = vector.extract_strided_slice %66 {offsets = [7, 0], sizes = [1, 256], strides = [1, 1]} : vector<8x256xf32> to vector<1x256xf32>
    %111 = vector.broadcast %109 : vector<8x1xf32> to vector<8x256xf32>
    %112 = vector.broadcast %110 : vector<1x256xf32> to vector<8x256xf32>
    %113 = arith.mulf %111, %112 : vector<8x256xf32>
    %114 = arith.addf %108, %113 : vector<8x256xf32>
    %c0_13 = arith.constant 0 : index
    %c0_14 = arith.constant 0 : index
    %115 = vector.load %arg11[%c0_13, %c0_14] : memref<8x1xf32, #tpu.memory_space<vmem>>, vector<8x1xf32>
    %116 = vector.broadcast %115 : vector<8x1xf32> to vector<8x256xf32>
    %117 = arith.addf %114, %116 : vector<8x256xf32>
    %118 = math.cos %117 : vector<8x256xf32>
    %119 = math.sin %117 : vector<8x256xf32>
    %c0_15 = arith.constant 0 : index
    %c0_16 = arith.constant 0 : index
    %120 = vector.load %arg4[%c0_15, %c0_16] : memref<8x8xf32, #tpu.memory_space<vmem>>, vector<8x8xf32>
    %121 = vector.extract_strided_slice %120 {offsets = [0, 0], sizes = [8, 1], strides = [1, 1]} : vector<8x8xf32> to vector<8x1xf32>
    %122 = vector.extract_strided_slice %9 {offsets = [0, 0], sizes = [1, 256], strides = [1, 1]} : vector<8x256xf32> to vector<1x256xf32>
    %123 = vector.broadcast %121 : vector<8x1xf32> to vector<8x256xf32>
    %124 = vector.broadcast %122 : vector<1x256xf32> to vector<8x256xf32>
    %125 = arith.mulf %123, %124 : vector<8x256xf32>
    %126 = vector.extract_strided_slice %120 {offsets = [0, 1], sizes = [8, 1], strides = [1, 1]} : vector<8x8xf32> to vector<8x1xf32>
    %127 = vector.extract_strided_slice %9 {offsets = [1, 0], sizes = [1, 256], strides = [1, 1]} : vector<8x256xf32> to vector<1x256xf32>
    %128 = vector.broadcast %126 : vector<8x1xf32> to vector<8x256xf32>
    %129 = vector.broadcast %127 : vector<1x256xf32> to vector<8x256xf32>
    %130 = arith.mulf %128, %129 : vector<8x256xf32>
    %131 = arith.addf %125, %130 : vector<8x256xf32>
    %132 = vector.extract_strided_slice %120 {offsets = [0, 2], sizes = [8, 1], strides = [1, 1]} : vector<8x8xf32> to vector<8x1xf32>
    %133 = vector.extract_strided_slice %9 {offsets = [2, 0], sizes = [1, 256], strides = [1, 1]} : vector<8x256xf32> to vector<1x256xf32>
    %134 = vector.broadcast %132 : vector<8x1xf32> to vector<8x256xf32>
    %135 = vector.broadcast %133 : vector<1x256xf32> to vector<8x256xf32>
    %136 = arith.mulf %134, %135 : vector<8x256xf32>
    %137 = arith.addf %131, %136 : vector<8x256xf32>
    %138 = vector.extract_strided_slice %120 {offsets = [0, 3], sizes = [8, 1], strides = [1, 1]} : vector<8x8xf32> to vector<8x1xf32>
    %139 = vector.extract_strided_slice %9 {offsets = [3, 0], sizes = [1, 256], strides = [1, 1]} : vector<8x256xf32> to vector<1x256xf32>
    %140 = vector.broadcast %138 : vector<8x1xf32> to vector<8x256xf32>
    %141 = vector.broadcast %139 : vector<1x256xf32> to vector<8x256xf32>
    %142 = arith.mulf %140, %141 : vector<8x256xf32>
    %143 = arith.addf %137, %142 : vector<8x256xf32>
    %144 = vector.extract_strided_slice %120 {offsets = [0, 4], sizes = [8, 1], strides = [1, 1]} : vector<8x8xf32> to vector<8x1xf32>
    %145 = vector.extract_strided_slice %9 {offsets = [4, 0], sizes = [1, 256], strides = [1, 1]} : vector<8x256xf32> to vector<1x256xf32>
    %146 = vector.broadcast %144 : vector<8x1xf32> to vector<8x256xf32>
    %147 = vector.broadcast %145 : vector<1x256xf32> to vector<8x256xf32>
    %148 = arith.mulf %146, %147 : vector<8x256xf32>
    %149 = arith.addf %143, %148 : vector<8x256xf32>
    %150 = vector.extract_strided_slice %120 {offsets = [0, 5], sizes = [8, 1], strides = [1, 1]} : vector<8x8xf32> to vector<8x1xf32>
    %151 = vector.extract_strided_slice %9 {offsets = [5, 0], sizes = [1, 256], strides = [1, 1]} : vector<8x256xf32> to vector<1x256xf32>
    %152 = vector.broadcast %150 : vector<8x1xf32> to vector<8x256xf32>
    %153 = vector.broadcast %151 : vector<1x256xf32> to vector<8x256xf32>
    %154 = arith.mulf %152, %153 : vector<8x256xf32>
    %155 = arith.addf %149, %154 : vector<8x256xf32>
    %156 = vector.extract_strided_slice %120 {offsets = [0, 6], sizes = [8, 1], strides = [1, 1]} : vector<8x8xf32> to vector<8x1xf32>
    %157 = vector.extract_strided_slice %9 {offsets = [6, 0], sizes = [1, 256], strides = [1, 1]} : vector<8x256xf32> to vector<1x256xf32>
    %158 = vector.broadcast %156 : vector<8x1xf32> to vector<8x256xf32>
    %159 = vector.broadcast %157 : vector<1x256xf32> to vector<8x256xf32>
    %160 = arith.mulf %158, %159 : vector<8x256xf32>
    %161 = arith.addf %155, %160 : vector<8x256xf32>
    %162 = vector.extract_strided_slice %120 {offsets = [0, 7], sizes = [8, 1], strides = [1, 1]} : vector<8x8xf32> to vector<8x1xf32>
    %163 = vector.extract_strided_slice %9 {offsets = [7, 0], sizes = [1, 256], strides = [1, 1]} : vector<8x256xf32> to vector<1x256xf32>
    %164 = vector.broadcast %162 : vector<8x1xf32> to vector<8x256xf32>
    %165 = vector.broadcast %163 : vector<1x256xf32> to vector<8x256xf32>
    %166 = arith.mulf %164, %165 : vector<8x256xf32>
    %167 = arith.addf %161, %166 : vector<8x256xf32>
    %c0_17 = arith.constant 0 : index
    %c0_18 = arith.constant 0 : index
    %168 = vector.load %arg5[%c0_17, %c0_18] : memref<8x1xf32, #tpu.memory_space<vmem>>, vector<8x1xf32>
    %169 = vector.broadcast %168 : vector<8x1xf32> to vector<8x256xf32>
    %170 = arith.addf %167, %169 : vector<8x256xf32>
    %cst_19 = arith.constant 0.000000e+00 : f32
    %171 = vector.broadcast %cst_19 : f32 to vector<8x256xf32>
    %172 = arith.cmpf oge, %170, %171 : vector<8x256xf32>
    %cst_20 = arith.constant 1.000000e-01 : f32
    %173 = vector.broadcast %cst_20 : f32 to vector<8x256xf32>
    %174 = arith.mulf %173, %170 : vector<8x256xf32>
    %175 = arith.select %172, %170, %174 : vector<8x256xi1>, vector<8x256xf32>
    %c0_21 = arith.constant 0 : index
    %c0_22 = arith.constant 0 : index
    %176 = vector.load %arg6[%c0_21, %c0_22] : memref<8x8xf32, #tpu.memory_space<vmem>>, vector<8x8xf32>
    %177 = vector.extract_strided_slice %176 {offsets = [0, 0], sizes = [8, 1], strides = [1, 1]} : vector<8x8xf32> to vector<8x1xf32>
    %178 = vector.extract_strided_slice %175 {offsets = [0, 0], sizes = [1, 256], strides = [1, 1]} : vector<8x256xf32> to vector<1x256xf32>
    %179 = vector.broadcast %177 : vector<8x1xf32> to vector<8x256xf32>
    %180 = vector.broadcast %178 : vector<1x256xf32> to vector<8x256xf32>
    %181 = arith.mulf %179, %180 : vector<8x256xf32>
    %182 = vector.extract_strided_slice %176 {offsets = [0, 1], sizes = [8, 1], strides = [1, 1]} : vector<8x8xf32> to vector<8x1xf32>
    %183 = vector.extract_strided_slice %175 {offsets = [1, 0], sizes = [1, 256], strides = [1, 1]} : vector<8x256xf32> to vector<1x256xf32>
    %184 = vector.broadcast %182 : vector<8x1xf32> to vector<8x256xf32>
    %185 = vector.broadcast %183 : vector<1x256xf32> to vector<8x256xf32>
    %186 = arith.mulf %184, %185 : vector<8x256xf32>
    %187 = arith.addf %181, %186 : vector<8x256xf32>
    %188 = vector.extract_strided_slice %176 {offsets = [0, 2], sizes = [8, 1], strides = [1, 1]} : vector<8x8xf32> to vector<8x1xf32>
    %189 = vector.extract_strided_slice %175 {offsets = [2, 0], sizes = [1, 256], strides = [1, 1]} : vector<8x256xf32> to vector<1x256xf32>
    %190 = vector.broadcast %188 : vector<8x1xf32> to vector<8x256xf32>
    %191 = vector.broadcast %189 : vector<1x256xf32> to vector<8x256xf32>
    %192 = arith.mulf %190, %191 : vector<8x256xf32>
    %193 = arith.addf %187, %192 : vector<8x256xf32>
    %194 = vector.extract_strided_slice %176 {offsets = [0, 3], sizes = [8, 1], strides = [1, 1]} : vector<8x8xf32> to vector<8x1xf32>
    %195 = vector.extract_strided_slice %175 {offsets = [3, 0], sizes = [1, 256], strides = [1, 1]} : vector<8x256xf32> to vector<1x256xf32>
    %196 = vector.broadcast %194 : vector<8x1xf32> to vector<8x256xf32>
    %197 = vector.broadcast %195 : vector<1x256xf32> to vector<8x256xf32>
    %198 = arith.mulf %196, %197 : vector<8x256xf32>
    %199 = arith.addf %193, %198 : vector<8x256xf32>
    %200 = vector.extract_strided_slice %176 {offsets = [0, 4], sizes = [8, 1], strides = [1, 1]} : vector<8x8xf32> to vector<8x1xf32>
    %201 = vector.extract_strided_slice %175 {offsets = [4, 0], sizes = [1, 256], strides = [1, 1]} : vector<8x256xf32> to vector<1x256xf32>
    %202 = vector.broadcast %200 : vector<8x1xf32> to vector<8x256xf32>
    %203 = vector.broadcast %201 : vector<1x256xf32> to vector<8x256xf32>
    %204 = arith.mulf %202, %203 : vector<8x256xf32>
    %205 = arith.addf %199, %204 : vector<8x256xf32>
    %206 = vector.extract_strided_slice %176 {offsets = [0, 5], sizes = [8, 1], strides = [1, 1]} : vector<8x8xf32> to vector<8x1xf32>
    %207 = vector.extract_strided_slice %175 {offsets = [5, 0], sizes = [1, 256], strides = [1, 1]} : vector<8x256xf32> to vector<1x256xf32>
    %208 = vector.broadcast %206 : vector<8x1xf32> to vector<8x256xf32>
    %209 = vector.broadcast %207 : vector<1x256xf32> to vector<8x256xf32>
    %210 = arith.mulf %208, %209 : vector<8x256xf32>
    %211 = arith.addf %205, %210 : vector<8x256xf32>
    %212 = vector.extract_strided_slice %176 {offsets = [0, 6], sizes = [8, 1], strides = [1, 1]} : vector<8x8xf32> to vector<8x1xf32>
    %213 = vector.extract_strided_slice %175 {offsets = [6, 0], sizes = [1, 256], strides = [1, 1]} : vector<8x256xf32> to vector<1x256xf32>
    %214 = vector.broadcast %212 : vector<8x1xf32> to vector<8x256xf32>
    %215 = vector.broadcast %213 : vector<1x256xf32> to vector<8x256xf32>
    %216 = arith.mulf %214, %215 : vector<8x256xf32>
    %217 = arith.addf %211, %216 : vector<8x256xf32>
    %218 = vector.extract_strided_slice %176 {offsets = [0, 7], sizes = [8, 1], strides = [1, 1]} : vector<8x8xf32> to vector<8x1xf32>
    %219 = vector.extract_strided_slice %175 {offsets = [7, 0], sizes = [1, 256], strides = [1, 1]} : vector<8x256xf32> to vector<1x256xf32>
    %220 = vector.broadcast %218 : vector<8x1xf32> to vector<8x256xf32>
    %221 = vector.broadcast %219 : vector<1x256xf32> to vector<8x256xf32>
    %222 = arith.mulf %220, %221 : vector<8x256xf32>
    %223 = arith.addf %217, %222 : vector<8x256xf32>
    %c0_23 = arith.constant 0 : index
    %c0_24 = arith.constant 0 : index
    %224 = vector.load %arg7[%c0_23, %c0_24] : memref<8x1xf32, #tpu.memory_space<vmem>>, vector<8x1xf32>
    %225 = vector.broadcast %224 : vector<8x1xf32> to vector<8x256xf32>
    %226 = arith.addf %223, %225 : vector<8x256xf32>
    %cst_25 = arith.constant 0.000000e+00 : f32
    %cst_26 = arith.constant 1.000000e+04 : f32
    %227 = vector.broadcast %cst_25 : f32 to vector<8x256xf32>
    %228 = arith.maximumf %227, %226 : vector<8x256xf32>
    %229 = vector.broadcast %cst_26 : f32 to vector<8x256xf32>
    %230 = arith.minimumf %229, %228 : vector<8x256xf32>
    %231 = arith.mulf %230, %118 : vector<8x256xf32>
    %c0_27 = arith.constant 0 : index
    %c0_28 = arith.constant 0 : index
    %c0_29 = arith.constant 0 : index
    %232 = vector.load %arg12[%c0_27, %c0_28, %c0_29] : memref<1x8x256xf32, #tpu.memory_space<vmem>>, vector<1x8x256xf32>
    %233 = vector.shape_cast %232 : vector<1x8x256xf32> to vector<8x256xf32>
    %234 = vector.shape_cast %231 : vector<8x256xf32> to vector<1x8x256xf32>
    tpu.vector_store %arg12[%c0_27, %c0_28, %c0_29], %234 {strides = array<i32>} : memref<1x8x256xf32, #tpu.memory_space<vmem>>, vector<1x8x256xf32>,
    %235 = arith.mulf %230, %119 : vector<8x256xf32>
    %c0_30 = arith.constant 0 : index
    %c0_31 = arith.constant 0 : index
    %c0_32 = arith.constant 0 : index
    %236 = vector.load %arg13[%c0_30, %c0_31, %c0_32] : memref<1x8x256xf32, #tpu.memory_space<vmem>>, vector<1x8x256xf32>
    %237 = vector.shape_cast %236 : vector<1x8x256xf32> to vector<8x256xf32>
    %238 = vector.shape_cast %235 : vector<8x256xf32> to vector<1x8x256xf32>
    tpu.vector_store %arg13[%c0_30, %c0_31, %c0_32], %238 {strides = array<i32>} : memref<1x8x256xf32, #tpu.memory_space<vmem>>, vector<1x8x256xf32>,
    return
  }
  func.func @transform_0(%arg0: i32, %arg1: i32) -> (i32, i32, i32) {
    %c0_i32 = arith.constant 0 : i32
    %c0_i32_0 = arith.constant 0 : i32
    return %arg0, %c0_i32, %arg1 : i32, i32, i32
  }
  func.func @transform_1(%arg0: i32, %arg1: i32) -> (i32, i32, i32) {
    %c0_i32 = arith.constant 0 : i32
    %c0_i32_0 = arith.constant 0 : i32
    return %arg0, %c0_i32, %arg1 : i32, i32, i32
  }
  func.func @transform_2(%arg0: i32, %arg1: i32) -> (i32, i32) {
    %c0_i32 = arith.constant 0 : i32
    %c0_i32_0 = arith.constant 0 : i32
    %c0_i32_1 = arith.constant 0 : i32
    return %c0_i32, %c0_i32_0 : i32, i32
  }
  func.func @transform_3(%arg0: i32, %arg1: i32) -> (i32, i32) {
    %c0_i32 = arith.constant 0 : i32
    %c0_i32_0 = arith.constant 0 : i32
    %c0_i32_1 = arith.constant 0 : i32
    return %c0_i32, %c0_i32_0 : i32, i32
  }
  func.func @transform_4(%arg0: i32, %arg1: i32) -> (i32, i32) {
    %c0_i32 = arith.constant 0 : i32
    %c0_i32_0 = arith.constant 0 : i32
    %c0_i32_1 = arith.constant 0 : i32
    return %c0_i32, %c0_i32_0 : i32, i32
  }
  func.func @transform_5(%arg0: i32, %arg1: i32) -> (i32, i32) {
    %c0_i32 = arith.constant 0 : i32
    %c0_i32_0 = arith.constant 0 : i32
    %c0_i32_1 = arith.constant 0 : i32
    return %c0_i32, %c0_i32_0 : i32, i32
  }
  func.func @transform_6(%arg0: i32, %arg1: i32) -> (i32, i32) {
    %c0_i32 = arith.constant 0 : i32
    %c0_i32_0 = arith.constant 0 : i32
    %c0_i32_1 = arith.constant 0 : i32
    return %c0_i32, %c0_i32_0 : i32, i32
  }
  func.func @transform_7(%arg0: i32, %arg1: i32) -> (i32, i32) {
    %c0_i32 = arith.constant 0 : i32
    %c0_i32_0 = arith.constant 0 : i32
    %c0_i32_1 = arith.constant 0 : i32
    return %c0_i32, %c0_i32_0 : i32, i32
  }
  func.func @transform_8(%arg0: i32, %arg1: i32) -> (i32, i32) {
    %c0_i32 = arith.constant 0 : i32
    %c0_i32_0 = arith.constant 0 : i32
    %c0_i32_1 = arith.constant 0 : i32
    return %c0_i32, %c0_i32_0 : i32, i32
  }
  func.func @transform_9(%arg0: i32, %arg1: i32) -> (i32, i32) {
    %c0_i32 = arith.constant 0 : i32
    %c0_i32_0 = arith.constant 0 : i32
    %c0_i32_1 = arith.constant 0 : i32
    return %c0_i32, %c0_i32_0 : i32, i32
  }
  func.func @transform_10(%arg0: i32, %arg1: i32) -> (i32, i32, i32) {
    %c0_i32 = arith.constant 0 : i32
    %c0_i32_0 = arith.constant 0 : i32
    return %arg0, %c0_i32, %arg1 : i32, i32, i32
  }
  func.func @transform_11(%arg0: i32, %arg1: i32) -> (i32, i32, i32) {
    %c0_i32 = arith.constant 0 : i32
    %c0_i32_0 = arith.constant 0 : i32
    return %arg0, %c0_i32, %arg1 : i32, i32, i32
  }
}

module attributes {stable_mosaic.version = 11 : i64} {
  func.func @_postcat_fused_kernel(%arg0: i32, %arg1: i32, %arg2: memref<1x8x256xf32, #tpu.memory_space<vmem>>, %arg3: memref<1x4x256xf32, #tpu.memory_space<vmem>>, %arg4: memref<1x4x256xf32, #tpu.memory_space<vmem>>, %arg5: memref<4x4xf32, #tpu.memory_space<vmem>>, %arg6: memref<4x4xf32, #tpu.memory_space<vmem>>, %arg7: memref<4x4xf32, #tpu.memory_space<vmem>>, %arg8: memref<4x4xf32, #tpu.memory_space<vmem>>, %arg9: memref<4x1xf32, #tpu.memory_space<vmem>>, %arg10: memref<1x4x256xf32, #tpu.memory_space<vmem>>) attributes {dimension_semantics = [#tpu.dimension_semantics<parallel>, #tpu.dimension_semantics<parallel>], iteration_bounds = array<i64: 2, 1>, scalar_prefetch = 0 : i64, scratch_operands = 0 : i64, tpu.core_type = #tpu.core_type<tc>, window_params = [{transform_indices = @transform_0, window_bounds = array<i64: 1, 8, 256>}, {transform_indices = @transform_1, window_bounds = array<i64: 1, 4, 256>}, {transform_indices = @transform_2, window_bounds = array<i64: 1, 4, 256>}, {pipeline_mode = #tpu.pipeline_mode<synchronous>, transform_indices = @transform_3, window_bounds = array<i64: 4, 4>}, {pipeline_mode = #tpu.pipeline_mode<synchronous>, transform_indices = @transform_4, window_bounds = array<i64: 4, 4>}, {pipeline_mode = #tpu.pipeline_mode<synchronous>, transform_indices = @transform_5, window_bounds = array<i64: 4, 4>}, {pipeline_mode = #tpu.pipeline_mode<synchronous>, transform_indices = @transform_6, window_bounds = array<i64: 4, 4>}, {pipeline_mode = #tpu.pipeline_mode<synchronous>, transform_indices = @transform_7, window_bounds = array<i64: 4, 1>}, {transform_indices = @transform_8, window_bounds = array<i64: 1, 4, 256>}]} {
    %c0 = arith.constant 0 : index
    %c0_0 = arith.constant 0 : index
    %c0_1 = arith.constant 0 : index
    %0 = vector.load %arg3[%c0, %c0_0, %c0_1] : memref<1x4x256xf32, #tpu.memory_space<vmem>>, vector<1x4x256xf32>
    %1 = vector.shape_cast %0 : vector<1x4x256xf32> to vector<4x256xf32>
    %c0_2 = arith.constant 0 : index
    %c0_3 = arith.constant 0 : index
    %c0_4 = arith.constant 0 : index
    %2 = vector.load %arg4[%c0_2, %c0_3, %c0_4] : memref<1x4x256xf32, #tpu.memory_space<vmem>>, vector<1x4x256xf32>
    %3 = vector.shape_cast %2 : vector<1x4x256xf32> to vector<4x256xf32>
    %c0_5 = arith.constant 0 : index
    %c0_6 = arith.constant 0 : index
    %c0_7 = arith.constant 0 : index
    %4 = vector.load %arg2[%c0_5, %c0_6, %c0_7] : memref<1x8x256xf32, #tpu.memory_space<vmem>>, vector<1x8x256xf32>
    %5 = vector.shape_cast %4 : vector<1x8x256xf32> to vector<8x256xf32>
    %6 = vector.extract_strided_slice %5 {offsets = [0, 0], sizes = [4, 256], strides = [1, 1]} : vector<8x256xf32> to vector<4x256xf32>
    %cst = arith.constant -1.000000e+01 : f32
    %cst_8 = arith.constant 1.000000e+01 : f32
    %7 = vector.broadcast %cst : f32 to vector<4x256xf32>
    %8 = arith.maximumf %7, %1 : vector<4x256xf32>
    %9 = vector.broadcast %cst_8 : f32 to vector<4x256xf32>
    %10 = arith.minimumf %9, %8 : vector<4x256xf32>
    %11 = arith.addf %6, %10 : vector<4x256xf32>
    %cst_9 = arith.constant -1.000000e+01 : f32
    %cst_10 = arith.constant 1.000000e+01 : f32
    %12 = vector.broadcast %cst_9 : f32 to vector<4x256xf32>
    %13 = arith.maximumf %12, %11 : vector<4x256xf32>
    %14 = vector.broadcast %cst_10 : f32 to vector<4x256xf32>
    %15 = arith.minimumf %14, %13 : vector<4x256xf32>
    %16 = vector.extract_strided_slice %5 {offsets = [4, 0], sizes = [4, 256], strides = [1, 1]} : vector<8x256xf32> to vector<4x256xf32>
    %cst_11 = arith.constant -1.000000e+01 : f32
    %cst_12 = arith.constant 1.000000e+01 : f32
    %17 = vector.broadcast %cst_11 : f32 to vector<4x256xf32>
    %18 = arith.maximumf %17, %3 : vector<4x256xf32>
    %19 = vector.broadcast %cst_12 : f32 to vector<4x256xf32>
    %20 = arith.minimumf %19, %18 : vector<4x256xf32>
    %21 = arith.addf %16, %20 : vector<4x256xf32>
    %cst_13 = arith.constant -1.000000e+01 : f32
    %cst_14 = arith.constant 1.000000e+01 : f32
    %22 = vector.broadcast %cst_13 : f32 to vector<4x256xf32>
    %23 = arith.maximumf %22, %21 : vector<4x256xf32>
    %24 = vector.broadcast %cst_14 : f32 to vector<4x256xf32>
    %25 = arith.minimumf %24, %23 : vector<4x256xf32>
    %c0_15 = arith.constant 0 : index
    %c0_16 = arith.constant 0 : index
    %26 = vector.load %arg5[%c0_15, %c0_16] : memref<4x4xf32, #tpu.memory_space<vmem>>, vector<4x4xf32>
    %27 = vector.extract_strided_slice %26 {offsets = [0, 0], sizes = [4, 1], strides = [1, 1]} : vector<4x4xf32> to vector<4x1xf32>
    %28 = vector.extract_strided_slice %15 {offsets = [0, 0], sizes = [1, 256], strides = [1, 1]} : vector<4x256xf32> to vector<1x256xf32>
    %29 = vector.broadcast %27 : vector<4x1xf32> to vector<4x256xf32>
    %30 = vector.broadcast %28 : vector<1x256xf32> to vector<4x256xf32>
    %31 = arith.mulf %29, %30 : vector<4x256xf32>
    %32 = vector.extract_strided_slice %26 {offsets = [0, 1], sizes = [4, 1], strides = [1, 1]} : vector<4x4xf32> to vector<4x1xf32>
    %33 = vector.extract_strided_slice %15 {offsets = [1, 0], sizes = [1, 256], strides = [1, 1]} : vector<4x256xf32> to vector<1x256xf32>
    %34 = vector.broadcast %32 : vector<4x1xf32> to vector<4x256xf32>
    %35 = vector.broadcast %33 : vector<1x256xf32> to vector<4x256xf32>
    %36 = arith.mulf %34, %35 : vector<4x256xf32>
    %37 = arith.addf %31, %36 : vector<4x256xf32>
    %38 = vector.extract_strided_slice %26 {offsets = [0, 2], sizes = [4, 1], strides = [1, 1]} : vector<4x4xf32> to vector<4x1xf32>
    %39 = vector.extract_strided_slice %15 {offsets = [2, 0], sizes = [1, 256], strides = [1, 1]} : vector<4x256xf32> to vector<1x256xf32>
    %40 = vector.broadcast %38 : vector<4x1xf32> to vector<4x256xf32>
    %41 = vector.broadcast %39 : vector<1x256xf32> to vector<4x256xf32>
    %42 = arith.mulf %40, %41 : vector<4x256xf32>
    %43 = arith.addf %37, %42 : vector<4x256xf32>
    %44 = vector.extract_strided_slice %26 {offsets = [0, 3], sizes = [4, 1], strides = [1, 1]} : vector<4x4xf32> to vector<4x1xf32>
    %45 = vector.extract_strided_slice %15 {offsets = [3, 0], sizes = [1, 256], strides = [1, 1]} : vector<4x256xf32> to vector<1x256xf32>
    %46 = vector.broadcast %44 : vector<4x1xf32> to vector<4x256xf32>
    %47 = vector.broadcast %45 : vector<1x256xf32> to vector<4x256xf32>
    %48 = arith.mulf %46, %47 : vector<4x256xf32>
    %49 = arith.addf %43, %48 : vector<4x256xf32>
    %c0_17 = arith.constant 0 : index
    %c0_18 = arith.constant 0 : index
    %50 = vector.load %arg6[%c0_17, %c0_18] : memref<4x4xf32, #tpu.memory_space<vmem>>, vector<4x4xf32>
    %51 = vector.extract_strided_slice %50 {offsets = [0, 0], sizes = [4, 1], strides = [1, 1]} : vector<4x4xf32> to vector<4x1xf32>
    %52 = vector.extract_strided_slice %25 {offsets = [0, 0], sizes = [1, 256], strides = [1, 1]} : vector<4x256xf32> to vector<1x256xf32>
    %53 = vector.broadcast %51 : vector<4x1xf32> to vector<4x256xf32>
    %54 = vector.broadcast %52 : vector<1x256xf32> to vector<4x256xf32>
    %55 = arith.mulf %53, %54 : vector<4x256xf32>
    %56 = vector.extract_strided_slice %50 {offsets = [0, 1], sizes = [4, 1], strides = [1, 1]} : vector<4x4xf32> to vector<4x1xf32>
    %57 = vector.extract_strided_slice %25 {offsets = [1, 0], sizes = [1, 256], strides = [1, 1]} : vector<4x256xf32> to vector<1x256xf32>
    %58 = vector.broadcast %56 : vector<4x1xf32> to vector<4x256xf32>
    %59 = vector.broadcast %57 : vector<1x256xf32> to vector<4x256xf32>
    %60 = arith.mulf %58, %59 : vector<4x256xf32>
    %61 = arith.addf %55, %60 : vector<4x256xf32>
    %62 = vector.extract_strided_slice %50 {offsets = [0, 2], sizes = [4, 1], strides = [1, 1]} : vector<4x4xf32> to vector<4x1xf32>
    %63 = vector.extract_strided_slice %25 {offsets = [2, 0], sizes = [1, 256], strides = [1, 1]} : vector<4x256xf32> to vector<1x256xf32>
    %64 = vector.broadcast %62 : vector<4x1xf32> to vector<4x256xf32>
    %65 = vector.broadcast %63 : vector<1x256xf32> to vector<4x256xf32>
    %66 = arith.mulf %64, %65 : vector<4x256xf32>
    %67 = arith.addf %61, %66 : vector<4x256xf32>
    %68 = vector.extract_strided_slice %50 {offsets = [0, 3], sizes = [4, 1], strides = [1, 1]} : vector<4x4xf32> to vector<4x1xf32>
    %69 = vector.extract_strided_slice %25 {offsets = [3, 0], sizes = [1, 256], strides = [1, 1]} : vector<4x256xf32> to vector<1x256xf32>
    %70 = vector.broadcast %68 : vector<4x1xf32> to vector<4x256xf32>
    %71 = vector.broadcast %69 : vector<1x256xf32> to vector<4x256xf32>
    %72 = arith.mulf %70, %71 : vector<4x256xf32>
    %73 = arith.addf %67, %72 : vector<4x256xf32>
    %74 = arith.addf %49, %73 : vector<4x256xf32>
    %c0_19 = arith.constant 0 : index
    %c0_20 = arith.constant 0 : index
    %75 = vector.load %arg7[%c0_19, %c0_20] : memref<4x4xf32, #tpu.memory_space<vmem>>, vector<4x4xf32>
    %76 = vector.extract_strided_slice %75 {offsets = [0, 0], sizes = [4, 1], strides = [1, 1]} : vector<4x4xf32> to vector<4x1xf32>
    %77 = vector.extract_strided_slice %1 {offsets = [0, 0], sizes = [1, 256], strides = [1, 1]} : vector<4x256xf32> to vector<1x256xf32>
    %78 = vector.broadcast %76 : vector<4x1xf32> to vector<4x256xf32>
    %79 = vector.broadcast %77 : vector<1x256xf32> to vector<4x256xf32>
    %80 = arith.mulf %78, %79 : vector<4x256xf32>
    %81 = vector.extract_strided_slice %75 {offsets = [0, 1], sizes = [4, 1], strides = [1, 1]} : vector<4x4xf32> to vector<4x1xf32>
    %82 = vector.extract_strided_slice %1 {offsets = [1, 0], sizes = [1, 256], strides = [1, 1]} : vector<4x256xf32> to vector<1x256xf32>
    %83 = vector.broadcast %81 : vector<4x1xf32> to vector<4x256xf32>
    %84 = vector.broadcast %82 : vector<1x256xf32> to vector<4x256xf32>
    %85 = arith.mulf %83, %84 : vector<4x256xf32>
    %86 = arith.addf %80, %85 : vector<4x256xf32>
    %87 = vector.extract_strided_slice %75 {offsets = [0, 2], sizes = [4, 1], strides = [1, 1]} : vector<4x4xf32> to vector<4x1xf32>
    %88 = vector.extract_strided_slice %1 {offsets = [2, 0], sizes = [1, 256], strides = [1, 1]} : vector<4x256xf32> to vector<1x256xf32>
    %89 = vector.broadcast %87 : vector<4x1xf32> to vector<4x256xf32>
    %90 = vector.broadcast %88 : vector<1x256xf32> to vector<4x256xf32>
    %91 = arith.mulf %89, %90 : vector<4x256xf32>
    %92 = arith.addf %86, %91 : vector<4x256xf32>
    %93 = vector.extract_strided_slice %75 {offsets = [0, 3], sizes = [4, 1], strides = [1, 1]} : vector<4x4xf32> to vector<4x1xf32>
    %94 = vector.extract_strided_slice %1 {offsets = [3, 0], sizes = [1, 256], strides = [1, 1]} : vector<4x256xf32> to vector<1x256xf32>
    %95 = vector.broadcast %93 : vector<4x1xf32> to vector<4x256xf32>
    %96 = vector.broadcast %94 : vector<1x256xf32> to vector<4x256xf32>
    %97 = arith.mulf %95, %96 : vector<4x256xf32>
    %98 = arith.addf %92, %97 : vector<4x256xf32>
    %99 = arith.addf %74, %98 : vector<4x256xf32>
    %c0_21 = arith.constant 0 : index
    %c0_22 = arith.constant 0 : index
    %100 = vector.load %arg8[%c0_21, %c0_22] : memref<4x4xf32, #tpu.memory_space<vmem>>, vector<4x4xf32>
    %101 = vector.extract_strided_slice %100 {offsets = [0, 0], sizes = [4, 1], strides = [1, 1]} : vector<4x4xf32> to vector<4x1xf32>
    %102 = vector.extract_strided_slice %3 {offsets = [0, 0], sizes = [1, 256], strides = [1, 1]} : vector<4x256xf32> to vector<1x256xf32>
    %103 = vector.broadcast %101 : vector<4x1xf32> to vector<4x256xf32>
    %104 = vector.broadcast %102 : vector<1x256xf32> to vector<4x256xf32>
    %105 = arith.mulf %103, %104 : vector<4x256xf32>
    %106 = vector.extract_strided_slice %100 {offsets = [0, 1], sizes = [4, 1], strides = [1, 1]} : vector<4x4xf32> to vector<4x1xf32>
    %107 = vector.extract_strided_slice %3 {offsets = [1, 0], sizes = [1, 256], strides = [1, 1]} : vector<4x256xf32> to vector<1x256xf32>
    %108 = vector.broadcast %106 : vector<4x1xf32> to vector<4x256xf32>
    %109 = vector.broadcast %107 : vector<1x256xf32> to vector<4x256xf32>
    %110 = arith.mulf %108, %109 : vector<4x256xf32>
    %111 = arith.addf %105, %110 : vector<4x256xf32>
    %112 = vector.extract_strided_slice %100 {offsets = [0, 2], sizes = [4, 1], strides = [1, 1]} : vector<4x4xf32> to vector<4x1xf32>
    %113 = vector.extract_strided_slice %3 {offsets = [2, 0], sizes = [1, 256], strides = [1, 1]} : vector<4x256xf32> to vector<1x256xf32>
    %114 = vector.broadcast %112 : vector<4x1xf32> to vector<4x256xf32>
    %115 = vector.broadcast %113 : vector<1x256xf32> to vector<4x256xf32>
    %116 = arith.mulf %114, %115 : vector<4x256xf32>
    %117 = arith.addf %111, %116 : vector<4x256xf32>
    %118 = vector.extract_strided_slice %100 {offsets = [0, 3], sizes = [4, 1], strides = [1, 1]} : vector<4x4xf32> to vector<4x1xf32>
    %119 = vector.extract_strided_slice %3 {offsets = [3, 0], sizes = [1, 256], strides = [1, 1]} : vector<4x256xf32> to vector<1x256xf32>
    %120 = vector.broadcast %118 : vector<4x1xf32> to vector<4x256xf32>
    %121 = vector.broadcast %119 : vector<1x256xf32> to vector<4x256xf32>
    %122 = arith.mulf %120, %121 : vector<4x256xf32>
    %123 = arith.addf %117, %122 : vector<4x256xf32>
    %124 = arith.addf %99, %123 : vector<4x256xf32>
    %c0_23 = arith.constant 0 : index
    %c0_24 = arith.constant 0 : index
    %125 = vector.load %arg9[%c0_23, %c0_24] : memref<4x1xf32, #tpu.memory_space<vmem>>, vector<4x1xf32>
    %126 = vector.broadcast %125 : vector<4x1xf32> to vector<4x256xf32>
    %127 = arith.addf %124, %126 : vector<4x256xf32>
    %c0_25 = arith.constant 0 : index
    %c0_26 = arith.constant 0 : index
    %c0_27 = arith.constant 0 : index
    %128 = vector.load %arg10[%c0_25, %c0_26, %c0_27] : memref<1x4x256xf32, #tpu.memory_space<vmem>>, vector<1x4x256xf32>
    %129 = vector.shape_cast %128 : vector<1x4x256xf32> to vector<4x256xf32>
    %130 = vector.shape_cast %127 : vector<4x256xf32> to vector<1x4x256xf32>
    tpu.vector_store %arg10[%c0_25, %c0_26, %c0_27], %130 {strides = array<i32>} : memref<1x4x256xf32, #tpu.memory_space<vmem>>, vector<1x4x256xf32>,
    return
  }
  func.func @transform_0(%arg0: i32, %arg1: i32) -> (i32, i32, i32) {
    %c0_i32 = arith.constant 0 : i32
    %c0_i32_0 = arith.constant 0 : i32
    return %arg0, %c0_i32, %arg1 : i32, i32, i32
  }
  func.func @transform_1(%arg0: i32, %arg1: i32) -> (i32, i32, i32) {
    %c0_i32 = arith.constant 0 : i32
    %c0_i32_0 = arith.constant 0 : i32
    return %arg0, %c0_i32, %arg1 : i32, i32, i32
  }
  func.func @transform_2(%arg0: i32, %arg1: i32) -> (i32, i32, i32) {
    %c0_i32 = arith.constant 0 : i32
    %c0_i32_0 = arith.constant 0 : i32
    return %arg0, %c0_i32, %arg1 : i32, i32, i32
  }
  func.func @transform_3(%arg0: i32, %arg1: i32) -> (i32, i32) {
    %c0_i32 = arith.constant 0 : i32
    %c0_i32_0 = arith.constant 0 : i32
    %c0_i32_1 = arith.constant 0 : i32
    return %c0_i32, %c0_i32_0 : i32, i32
  }
  func.func @transform_4(%arg0: i32, %arg1: i32) -> (i32, i32) {
    %c0_i32 = arith.constant 0 : i32
    %c0_i32_0 = arith.constant 0 : i32
    %c0_i32_1 = arith.constant 0 : i32
    return %c0_i32, %c0_i32_0 : i32, i32
  }
  func.func @transform_5(%arg0: i32, %arg1: i32) -> (i32, i32) {
    %c0_i32 = arith.constant 0 : i32
    %c0_i32_0 = arith.constant 0 : i32
    %c0_i32_1 = arith.constant 0 : i32
    return %c0_i32, %c0_i32_0 : i32, i32
  }
  func.func @transform_6(%arg0: i32, %arg1: i32) -> (i32, i32) {
    %c0_i32 = arith.constant 0 : i32
    %c0_i32_0 = arith.constant 0 : i32
    %c0_i32_1 = arith.constant 0 : i32
    return %c0_i32, %c0_i32_0 : i32, i32
  }
  func.func @transform_7(%arg0: i32, %arg1: i32) -> (i32, i32) {
    %c0_i32 = arith.constant 0 : i32
    %c0_i32_0 = arith.constant 0 : i32
    %c0_i32_1 = arith.constant 0 : i32
    return %c0_i32, %c0_i32_0 : i32, i32
  }
  func.func @transform_8(%arg0: i32, %arg1: i32) -> (i32, i32, i32) {
    %c0_i32 = arith.constant 0 : i32
    %c0_i32_0 = arith.constant 0 : i32
    return %arg0, %c0_i32, %arg1 : i32, i32, i32
  }
}

</mosaic_0001>

<llo_original>
// kernel: ffab_forward.23
$region0: #{ffab_forward.23}
  #allocation0 [shape = 'u32[]', space=smem, size = 0x4, offset = 0x4, fixed_abs, tag = 'smem constant byte address 0x4 - core index']
  #allocation1 [shape = 'u32[144,128]{1,0:T(1,128)}', space=vmem, size = 0x12000, scoped, tag = 'internal scratch']
  %s0 = inlined_call_operand.hbm [shape: f32[2,4,256], index: 0, kind: input, shape index: {}]
  %s1 = inlined_call_operand.hbm [shape: f32[4,4], index: 1, kind: input, shape index: {}]
  %s2 = inlined_call_operand.hbm [shape: f32[4,1], index: 2, kind: input, shape index: {}]
  %s3 = inlined_call_operand.hbm [shape: f32[2,4,256], index: 3, kind: output, shape index: {}]
  %s4 = sld [smem:[#allocation0]]
  $region57: #{ffab_forward.23} parent=0
    _
  %s6 = ssub.s32 1, %s4
  %s7 = scalar_select 0, %s6, %s4
  $region1: #{ffab_forward.23} parent=0
    #allocation2 [shape = 'u8[8192]{0}', space=vmem, size = 0x2000, scoped, tag = 'input window, operand 0']
    #allocation3 [shape = 's32[2]{0}', space=sflag, size = 0x8, scoped, tag = 'scoped memory for ffab_forward.23']
    #allocation4 [shape = 's32[2]{0}', space=sflag, size = 0x8, scoped, tag = 'scoped memory for ffab_forward.23']
    #allocation5 [shape = 'u8[2048]{0}', space=vmem, size = 0x800, scoped, tag = 'input window, operand 1, single buffered']
    #allocation6 [shape = 's32[1]{0}', space=sflag, size = 0x4, scoped, tag = 'scoped memory for ffab_forward.23']
    #allocation7 [shape = 'u8[2048]{0}', space=vmem, size = 0x800, scoped, tag = 'input window, operand 2, single buffered']
    #allocation8 [shape = 'u8[8192]{0}', space=vmem, size = 0x2000, scoped, tag = 'output window, operand 0']
    %8 = vsyncpa [#allocation3], 0
    %s9 = scalar_lea.sflag [#allocation3], 1
    %10 = vsyncpa %s9, 0
    %11 = vsyncpa [#allocation6], 0
    %12 = vsyncpa [#allocation4], 0
    %s13 = scalar_lea.sflag [#allocation4], 1
    %14 = vsyncpa %s13, 0
    loop: start=0, step=1, limit=4
    $region2: #{ffab_forward.23} parent=1 // loop_pre_header
      _
    $region3: #{ffab_forward.23} parent=1 // loop_header
      %s16 = sphi 0, %s20
      %p17 = scmp.ge.s32.totalorder %s16, 4
      %s23 = sphi 0, %s35
      %s24 = sphi 0, %s31
      %s25 = sphi 0, %s23
      %s26 = sphi 0, %s24
      %s27 = sphi 0, %s25
      %s28 = sphi 0, %s26
      %s40 = sphi 0, %s42
      %s43 = sphi 0, %s40
      %s44 = sphi 0, %s43
      %s60 = sphi 0, %s44
      %s64 = sphi 0, %s64
      %s66 = sphi 0, %s64
      %s67 = sphi 0, %s66
      %s81 = sphi 0, %s67
      %s85 = sphi 0, %s85
      %s87 = sphi 0, %s85
      %s88 = sphi 0, %s87
      %s102 = sphi 0, %s88
      %s110 = sphi 0, %s112
      %s113 = sphi 0, %s110
      %s114 = sphi 0, %s113
      %s130 = sphi 0, %s114
    $region4: #{ffab_forward.23} parent=1 // loop_header_branch
      %19 = sbr.rel (%p17) target = $region8
    $region5: #{ffab_forward.23} parent=1 // loop_body
      %s21 = ssub.s32 %s16, 1
      %s22 = ssub.s32 %s16, 2
      %s29 = sadd.s32 1, %s24
      %p30 = scmp.ge.s32.totalorder %s29, 1
      %s31 = scalar_select %p30, 0, %s29
      %s32 = sadd.s32 1, %s23
      %s33 = scalar_select %p30, %s32, %s23
      %p34 = scmp.ge.s32.totalorder %s33, 2
      %s35 = scalar_select %p34, 0, %s33
      %s36 = ssub.s32 %s23, %s35
      %s37 = ssub.s32 %s24, %s31
      %s38 = sor.u32 %s36, %s37
      %p39 = scmp.eq.s32.totalorder %s38, 0
      %s41 = sadd.s32 %s40, 1
      %s42 = scalar_select %p39, %s40, %s41
      %p45 = pneg %p39
      %p46 = scmp.eq.s32.totalorder %s16, 1
      %p47 = por %p45, %p46
      %p48 = scmp.ne.s32.totalorder %s40, %s43
      %p49 = scmp.eq.s32.totalorder %s16, 0
      %p50 = por %p48, %p49
      %p51 = scmp.ne.s32.totalorder %s40, %s43
      %p52 = scmp.eq.s32.totalorder %s21, 1
      %p53 = por %p51, %p52
      %p54 = scmp.ne.s32.totalorder %s43, %s44
      %p55 = scmp.eq.s32.totalorder %s21, 0
      %p56 = por %p54, %p55
      %p57 = scmp.ne.s32.totalorder %s43, %s44
      %p58 = scmp.eq.s32.totalorder %s22, 1
      %p59 = por %p57, %p58
      %p61 = scmp.ne.s32.totalorder %s44, %s60
      %p62 = scmp.eq.s32.totalorder %s22, 0
      %p63 = por %p61, %p62
      %s65 = sadd.s32 %s64, 1
      %p68 = scmp.eq.s32.totalorder %s16, 1
      %p69 = scmp.ne.s32.totalorder %s64, %s66
      %p70 = scmp.eq.s32.totalorder %s16, 0
      %p71 = por %p69, %p70
      %p72 = scmp.ne.s32.totalorder %s64, %s66
      %p73 = scmp.eq.s32.totalorder %s21, 1
      %p74 = por %p72, %p73
      %p75 = scmp.ne.s32.totalorder %s66, %s67
      %p76 = scmp.eq.s32.totalorder %s21, 0
      %p77 = por %p75, %p76
      %p78 = scmp.ne.s32.totalorder %s66, %s67
      %p79 = scmp.eq.s32.totalorder %s22, 1
      %p80 = por %p78, %p79
      %p82 = scmp.ne.s32.totalorder %s67, %s81
      %p83 = scmp.eq.s32.totalorder %s22, 0
      %p84 = por %p82, %p83
      %s86 = sadd.s32 %s85, 1
      %p89 = scmp.eq.s32.totalorder %s16, 1
      %p90 = scmp.ne.s32.totalorder %s85, %s87
      %p91 = scmp.eq.s32.totalorder %s16, 0
      %p92 = por %p90, %p91
      %p93 = scmp.ne.s32.totalorder %s85, %s87
      %p94 = scmp.eq.s32.totalorder %s21, 1
      %p95 = por %p93, %p94
      %p96 = scmp.ne.s32.totalorder %s87, %s88
      %p97 = scmp.eq.s32.totalorder %s21, 0
      %p98 = por %p96, %p97
      %p99 = scmp.ne.s32.totalorder %s87, %s88
      %p100 = scmp.eq.s32.totalorder %s22, 1
      %p101 = por %p99, %p100
      %p103 = scmp.ne.s32.totalorder %s88, %s102
      %p104 = scmp.eq.s32.totalorder %s22, 0
      %p105 = por %p103, %p104
      %s106 = ssub.s32 %s23, %s35
      %s107 = ssub.s32 %s24, %s31
      %s108 = sor.u32 %s106, %s107
      %p109 = scmp.eq.s32.totalorder %s108, 0
      %s111 = sadd.s32 %s110, 1
      %s112 = scalar_select %p109, %s110, %s111
      %p115 = pneg %p109
      %p116 = scmp.eq.s32.totalorder %s16, 1
      %p117 = por %p115, %p116
      %p118 = scmp.ne.s32.totalorder %s110, %s113
      %p119 = scmp.eq.s32.totalorder %s16, 0
      %p120 = por %p118, %p119
      %p121 = scmp.ne.s32.totalorder %s110, %s113
      %p122 = scmp.eq.s32.totalorder %s21, 1
      %p123 = por %p121, %p122
      %p124 = scmp.ne.s32.totalorder %s113, %s114
      %p125 = scmp.eq.s32.totalorder %s21, 0
      %p126 = por %p124, %p125
      %p127 = scmp.ne.s32.totalorder %s113, %s114
      %p128 = scmp.eq.s32.totalorder %s22, 1
      %p129 = por %p127, %p128
      %p131 = scmp.ne.s32.totalorder %s114, %s130
      %p132 = scmp.eq.s32.totalorder %s22, 0
      %p133 = por %p131, %p132
      %p134 = scmp.le.s32.totalorder 1, %s16
      %p135 = scmp.lt.s32.totalorder %s16, 3
      %p136 = pnand %p134, %p135
      %p137 = pneg %p136
      // Predicated region
      $region9: #{ffab_forward.23} parent=5 // pred_check
        _
      $region10: #{ffab_forward.23} parent=5 // pred_check_branch
        %139 = sbr.rel (%p136) target = $region12
      $region11: #{ffab_forward.23} parent=5 // pred_region
        %s140 = ssub.s32 %s16, 1
        // Predicated region
        $region13: #{ffab_forward.23} parent=11 // pred_check
          %p141 = pneg %p77
        $region14: #{ffab_forward.23} parent=11 // pred_check_branch
          %143 = sbr.rel (%p141) target = $region16
        $region15: #{ffab_forward.23} parent=11 // pred_region
          %s145 = ssub.s32 64, 64
          %146 = vsyncadd [#allocation6], %s145
          %s148 = sshll.u32 [#allocation5], 4
          %s149 = int_to_ptr.vmem [resolvable:$true] %s148
          %151 = dma.hbm_to_vmem [thread:$0]  %s1, 64, %s149, [#allocation6]
        $region16: #{ffab_forward.23} parent=11 // pred_fallthru
          _
        // Predicated region
        $region17: #{ffab_forward.23} parent=11 // pred_check
          %p152 = pneg %p98
        $region18: #{ffab_forward.23} parent=11 // pred_check_branch
          %154 = sbr.rel (%p152) target = $region20
        $region19: #{ffab_forward.23} parent=11 // pred_region
          %s156 = ssub.s32 64, 64
          %157 = vsyncadd [#allocation6], %s156
          %s159 = sshll.u32 [#allocation7], 4
          %s160 = int_to_ptr.vmem [resolvable:$true] %s159
          %162 = dma.hbm_to_vmem [thread:$0]  %s2, 64, %s160, [#allocation6]
        $region20: #{ffab_forward.23} parent=11 // pred_fallthru
          _
      $region12: #{ffab_forward.23} parent=5 // pred_fallthru
        _
      %p163 = scmp.lt.s32.totalorder %s16, 2
      // Predicated region
      $region21: #{ffab_forward.23} parent=5 // pred_check
        %p164 = pneg %p163
      $region22: #{ffab_forward.23} parent=5 // pred_check_branch
        %166 = sbr.rel (%p164) target = $region24
      $region23: #{ffab_forward.23} parent=5 // pred_region
        // Predicated region
        $region25: #{ffab_forward.23} parent=23 // pred_check
          %p167 = pneg %p50
        $region26: #{ffab_forward.23} parent=23 // pred_check_branch
          %169 = sbr.rel (%p167) target = $region28
        $region27: #{ffab_forward.23} parent=23 // pred_region
          %s170 = sand.u32 %s40, 1
          %s171 = scalar_lea.sflag [#allocation3], %s170
          %s172 = sand.u32 %s40, 1
          %s173 = smul.addr %s172, 8
          %s174 = scalar_lea.vmem [#allocation2], %s173
          %s175 = smul.u32 2, %s24
          %s177 = ssub.s32 128, 128
          %178 = vsyncadd %s171, %s177
          %s179 = smul.addr %s23, 2
          %s180 = sadd.s32 %s175, %s179
          %s181 = smul.addr %s180, 64
          %s182 = scalar_lea.hbm %s0, %s181
          %s184 = sshll.u32 %s174, 4
          %s185 = int_to_ptr.vmem [resolvable:$true] %s184
          %187 = dma.hbm_to_vmem [thread:$0]  %s182, 128, %s185, %s171
        $region28: #{ffab_forward.23} parent=23 // pred_fallthru
          _
      $region24: #{ffab_forward.23} parent=5 // pred_fallthru
        _
      %p188 = scmp.le.s32.totalorder 1, %s16
      %p189 = scmp.lt.s32.totalorder %s16, 3
      %p190 = pnand %p188, %p189
      %p191 = pneg %p190
      // Predicated region
      $region29: #{ffab_forward.23} parent=5 // pred_check
        _
      $region30: #{ffab_forward.23} parent=5 // pred_check_branch
        %193 = sbr.rel (%p190) target = $region32
      $region31: #{ffab_forward.23} parent=5 // pred_region
        %s194 = ssub.s32 %s16, 1
        %s195 = sand.u32 %s43, 1
        %s196 = scalar_lea.sflag [#allocation3], %s195
        %s197 = sand.u32 %s43, 1
        %s198 = smul.addr %s197, 8
        %s199 = scalar_lea.vmem [#allocation2], %s198
        // Predicated region
        $region33: #{ffab_forward.23} parent=31 // pred_check
          %p200 = pneg %p56
        $region34: #{ffab_forward.23} parent=31 // pred_check_branch
          %202 = sbr.rel (%p200) target = $region36
        $region35: #{ffab_forward.23} parent=31 // pred_region
          %203 = dma.done %s196, 128
        $region36: #{ffab_forward.23} parent=31 // pred_fallthru
          _
        // Predicated region
        $region37: #{ffab_forward.23} parent=31 // pred_check
          %p204 = pneg %p77
        $region38: #{ffab_forward.23} parent=31 // pred_check_branch
          %206 = sbr.rel (%p204) target = $region40
        $region39: #{ffab_forward.23} parent=31 // pred_region
          %207 = dma.done [#allocation6], 64
        $region40: #{ffab_forward.23} parent=31 // pred_fallthru
          _
        // Predicated region
        $region41: #{ffab_forward.23} parent=31 // pred_check
          %p208 = pneg %p98
        $region42: #{ffab_forward.23} parent=31 // pred_check_branch
          %210 = sbr.rel (%p208) target = $region44
        $region43: #{ffab_forward.23} parent=31 // pred_region
          %211 = dma.done [#allocation6], 64
        $region44: #{ffab_forward.23} parent=31 // pred_fallthru
          _
        %s212 = sand.u32 %s43, 1
        %s213 = scalar_lea.sflag [#allocation3], %s212
        %s214 = sand.u32 %s43, 1
        %s215 = smul.addr %s214, 8
        %s216 = scalar_lea.vmem [#allocation2], %s215
        %p217 = pneg %p56
        %p218 = pneg %p53
        %p219 = pneg %p77
        %p220 = pneg %p74
        %p221 = pneg %p98
        %p222 = pneg %p95
        %p223 = pneg %p126
        %p224 = pneg %p123
        %s225 = sand.u32 %s113, 1
        %s226 = scalar_lea.sflag [#allocation4], %s225
        %s227 = sand.u32 %s113, 1
        %s228 = smul.addr %s227, 8
        %s229 = scalar_lea.vmem [#allocation8], %s228
        %s230 = smul.u32 2, %s26
        %s231 = smul.u32 2, %s26
        %v232 = vld [vmem:[%s199] sm:$0xff]
        %v233 = vmax.f32 %v232, -10.0
        %v234 = vmin.f32 %v233, 10.0
        %v235 = vld [vmem:[#allocation5] sm:$0xf]
        %237 = vset.pattern.permute.xlu0 0
        %238 = vperm.xlu0 %237, %v235
        %v239 = vpop.permute.xlu0 %238
        %v242 = vlaneseq
        %v243 = vshrl.u32 %v242, 7
        %v244 = vsub.s32 0, %v243
        %v245 = vrot.slane %v234, %v244
        %v246 = vlaneseq
        %v247 = vshrl.u32 %v246, 7
        %v248 = vsub.s32 4, %v247
        %v249 = vrot.slane %v234, %v248
        %v252 = vlaneseq
        %v253 = vshrl.u32 %v252, 7
        %v254 = vsub.s32 0, %v253
        %v255 = vrot.slane %v245, %v254
        %v256 = vlaneseq
        %v257 = vshrl.u32 %v256, 7
        %v258 = vsub.s32 0, %v257
        %v259 = vrot.slane %v249, %v258
        %v260 = vmul.f32 %v239, %v255
        %v261 = vmul.f32 %v239, %v259
        %262 = vset.pattern.permute.xlu0 1
        %263 = vperm.xlu0 %262, %v235
        %v264 = vpop.permute.xlu0 %263
        %v266 = vlaneseq
        %v267 = vshrl.u32 %v266, 7
        %v268 = vsub.s32 1, %v267
        %v269 = vrot.slane %v234, %v268
        %v270 = vlaneseq
        %v271 = vshrl.u32 %v270, 7
        %v272 = vsub.s32 5, %v271
        %v273 = vrot.slane %v234, %v272
        %v276 = vlaneseq
        %v277 = vshrl.u32 %v276, 7
        %v278 = vsub.s32 1, %v277
        %v279 = vrot.slane %v269, %v278
        %v280 = vlaneseq
        %v281 = vshrl.u32 %v280, 7
        %v282 = vsub.s32 1, %v281
        %v283 = vrot.slane %v273, %v282
        %v284 = vmul.f32 %v264, %v279
        %v285 = vmul.f32 %v264, %v283
        %v286 = vadd.f32 %v260, %v284
        %v287 = vadd.f32 %v261, %v285
        %288 = vset.pattern.permute.xlu0 2
        %289 = vperm.xlu0 %288, %v235
        %v290 = vpop.permute.xlu0 %289
        %v292 = vlaneseq
        %v293 = vshrl.u32 %v292, 7
        %v294 = vsub.s32 2, %v293
        %v295 = vrot.slane %v234, %v294
        %v296 = vlaneseq
        %v297 = vshrl.u32 %v296, 7
        %v298 = vsub.s32 6, %v297
        %v299 = vrot.slane %v234, %v298
        %v302 = vlaneseq
        %v303 = vshrl.u32 %v302, 7
        %v304 = vsub.s32 2, %v303
        %v305 = vrot.slane %v295, %v304
        %v306 = vlaneseq
        %v307 = vshrl.u32 %v306, 7
        %v308 = vsub.s32 2, %v307
        %v309 = vrot.slane %v299, %v308
        %v310 = vmul.f32 %v290, %v305
        %v311 = vmul.f32 %v290, %v309
        %v312 = vadd.f32 %v286, %v310
        %v313 = vadd.f32 %v287, %v311
        %314 = vset.pattern.permute.xlu0 3
        %315 = vperm.xlu0 %314, %v235
        %v316 = vpop.permute.xlu0 %315
        %v318 = vlaneseq
        %v319 = vshrl.u32 %v318, 7
        %v320 = vsub.s32 3, %v319
        %v321 = vrot.slane %v234, %v320
        %v322 = vlaneseq
        %v323 = vshrl.u32 %v322, 7
        %v324 = vsub.s32 7, %v323
        %v325 = vrot.slane %v234, %v324
        %v328 = vlaneseq
        %v329 = vshrl.u32 %v328, 7
        %v330 = vsub.s32 3, %v329
        %v331 = vrot.slane %v321, %v330
        %v332 = vlaneseq
        %v333 = vshrl.u32 %v332, 7
        %v334 = vsub.s32 3, %v333
        %v335 = vrot.slane %v325, %v334
        %v336 = vmul.f32 %v316, %v331
        %v337 = vmul.f32 %v316, %v335
        %v338 = vadd.f32 %v312, %v336
        %v339 = vadd.f32 %v313, %v337
        %v340 = vld [vmem:[#allocation7] sm:$0xf]
        %342 = vset.pattern.permute.xlu0 0
        %343 = vperm.xlu0 %342, %v340
        %v344 = vpop.permute.xlu0 %343
        %v346 = vadd.f32 %v338, %v344
        %v347 = vadd.f32 %v339, %v344
        %v350 = vcombine.low %v346, %v347
        %352 = vst [vmem:[%s229] sm:$0xff] %v350
        %s353 = sand.u32 %s113, 1
        %s354 = scalar_lea.sflag [#allocation4], %s353
        %s355 = sand.u32 %s113, 1
        %s356 = smul.addr %s355, 8
        %s357 = scalar_lea.vmem [#allocation8], %s356
        // Predicated region
        $region45: #{ffab_forward.23} parent=31 // pred_check
          %p358 = pneg %p123
        $region46: #{ffab_forward.23} parent=31 // pred_check_branch
          %360 = sbr.rel (%p358) target = $region48
        $region47: #{ffab_forward.23} parent=31 // pred_region
          %s361 = smul.u32 2, %s26
          %s363 = ssub.s32 128, 128
          %364 = vsyncadd %s354, %s363
          %s365 = smul.addr %s25, 2
          %s366 = sadd.s32 %s361, %s365
          %s367 = smul.addr %s366, 64
          %s368 = scalar_lea.hbm %s3, %s367
          %s370 = sshll.u32 %s357, 4
          %s371 = int_to_ptr.vmem [resolvable:$true] %s370
          %373 = dma.vmem_to_hbm [thread:$0]  %s371, 128, %s368, %s354
        $region48: #{ffab_forward.23} parent=31 // pred_fallthru
          _
      $region32: #{ffab_forward.23} parent=5 // pred_fallthru
        _
      %p374 = scmp.le.s32.totalorder 2, %s16
      // Predicated region
      $region49: #{ffab_forward.23} parent=5 // pred_check
        %p375 = pneg %p374
      $region50: #{ffab_forward.23} parent=5 // pred_check_branch
        %377 = sbr.rel (%p375) target = $region52
      $region51: #{ffab_forward.23} parent=5 // pred_region
        %s378 = ssub.s32 %s16, 2
        // Predicated region
        $region53: #{ffab_forward.23} parent=51 // pred_check
          %p379 = pneg %p129
        $region54: #{ffab_forward.23} parent=51 // pred_check_branch
          %381 = sbr.rel (%p379) target = $region56
        $region55: #{ffab_forward.23} parent=51 // pred_region
          %s382 = sand.u32 %s114, 1
          %s383 = scalar_lea.sflag [#allocation4], %s382
          %s384 = sand.u32 %s114, 1
          %s385 = smul.addr %s384, 8
          %s386 = scalar_lea.vmem [#allocation8], %s385
          %387 = dma.done %s383, 128
        $region56: #{ffab_forward.23} parent=51 // pred_fallthru
          _
      $region52: #{ffab_forward.23} parent=5 // pred_fallthru
        _
    $region6: #{ffab_forward.23} parent=1 // loop_footer
      %s20 = sadd.s32 1, %s16
    $region7: #{ffab_forward.23} parent=1 // loop_footer_branch
      %15 = sbr.rel target = $region3
    $region8: #{ffab_forward.23} parent=1 // loop_exit
      _
    %388 = vsyncpa [#allocation3], 1
    %s389 = scalar_lea.sflag [#allocation3], 1
    %390 = vsyncpa %s389, 1
    %391 = vsyncpa [#allocation6], 1
    %392 = vsyncpa [#allocation4], 1
    %s393 = scalar_lea.sflag [#allocation4], 1
    %394 = vsyncpa %s393, 1

// kernel: ffab_forward.22
$region0: #{ffab_forward.22}
  #allocation0 [shape = 'u32[]', space=smem, size = 0x4, offset = 0x4, fixed_abs, tag = 'smem constant byte address 0x4 - core index']
  #allocation1 [shape = 'u32[144,128]{1,0:T(1,128)}', space=vmem, size = 0x12000, scoped, tag = 'internal scratch']
  %s0 = inlined_call_operand.hbm [shape: f32[2,4,256], index: 0, kind: input, shape index: {}]
  %s1 = inlined_call_operand.hbm [shape: f32[4,4], index: 1, kind: input, shape index: {}]
  %s2 = inlined_call_operand.hbm [shape: f32[4,1], index: 2, kind: input, shape index: {}]
  %s3 = inlined_call_operand.hbm [shape: f32[2,4,256], index: 3, kind: output, shape index: {}]
  %s4 = sld [smem:[#allocation0]]
  $region57: #{ffab_forward.22} parent=0
    _
  %s6 = ssub.s32 1, %s4
  %s7 = scalar_select 0, %s6, %s4
  $region1: #{ffab_forward.22} parent=0
    #allocation2 [shape = 'u8[8192]{0}', space=vmem, size = 0x2000, scoped, tag = 'input window, operand 0']
    #allocation3 [shape = 's32[2]{0}', space=sflag, size = 0x8, scoped, tag = 'scoped memory for ffab_forward.22']
    #allocation4 [shape = 's32[2]{0}', space=sflag, size = 0x8, scoped, tag = 'scoped memory for ffab_forward.22']
    #allocation5 [shape = 'u8[2048]{0}', space=vmem, size = 0x800, scoped, tag = 'input window, operand 1, single buffered']
    #allocation6 [shape = 's32[1]{0}', space=sflag, size = 0x4, scoped, tag = 'scoped memory for ffab_forward.22']
    #allocation7 [shape = 'u8[2048]{0}', space=vmem, size = 0x800, scoped, tag = 'input window, operand 2, single buffered']
    #allocation8 [shape = 'u8[8192]{0}', space=vmem, size = 0x2000, scoped, tag = 'output window, operand 0']
    %8 = vsyncpa [#allocation3], 0
    %s9 = scalar_lea.sflag [#allocation3], 1
    %10 = vsyncpa %s9, 0
    %11 = vsyncpa [#allocation6], 0
    %12 = vsyncpa [#allocation4], 0
    %s13 = scalar_lea.sflag [#allocation4], 1
    %14 = vsyncpa %s13, 0
    loop: start=0, step=1, limit=4
    $region2: #{ffab_forward.22} parent=1 // loop_pre_header
      _
    $region3: #{ffab_forward.22} parent=1 // loop_header
      %s16 = sphi 0, %s20
      %p17 = scmp.ge.s32.totalorder %s16, 4
      %s23 = sphi 0, %s35
      %s24 = sphi 0, %s31
      %s25 = sphi 0, %s23
      %s26 = sphi 0, %s24
      %s27 = sphi 0, %s25
      %s28 = sphi 0, %s26
      %s40 = sphi 0, %s42
      %s43 = sphi 0, %s40
      %s44 = sphi 0, %s43
      %s60 = sphi 0, %s44
      %s64 = sphi 0, %s64
      %s66 = sphi 0, %s64
      %s67 = sphi 0, %s66
      %s81 = sphi 0, %s67
      %s85 = sphi 0, %s85
      %s87 = sphi 0, %s85
      %s88 = sphi 0, %s87
      %s102 = sphi 0, %s88
      %s110 = sphi 0, %s112
      %s113 = sphi 0, %s110
      %s114 = sphi 0, %s113
      %s130 = sphi 0, %s114
    $region4: #{ffab_forward.22} parent=1 // loop_header_branch
      %19 = sbr.rel (%p17) target = $region8
    $region5: #{ffab_forward.22} parent=1 // loop_body
      %s21 = ssub.s32 %s16, 1
      %s22 = ssub.s32 %s16, 2
      %s29 = sadd.s32 1, %s24
      %p30 = scmp.ge.s32.totalorder %s29, 1
      %s31 = scalar_select %p30, 0, %s29
      %s32 = sadd.s32 1, %s23
      %s33 = scalar_select %p30, %s32, %s23
      %p34 = scmp.ge.s32.totalorder %s33, 2
      %s35 = scalar_select %p34, 0, %s33
      %s36 = ssub.s32 %s23, %s35
      %s37 = ssub.s32 %s24, %s31
      %s38 = sor.u32 %s36, %s37
      %p39 = scmp.eq.s32.totalorder %s38, 0
      %s41 = sadd.s32 %s40, 1
      %s42 = scalar_select %p39, %s40, %s41
      %p45 = pneg %p39
      %p46 = scmp.eq.s32.totalorder %s16, 1
      %p47 = por %p45, %p46
      %p48 = scmp.ne.s32.totalorder %s40, %s43
      %p49 = scmp.eq.s32.totalorder %s16, 0
      %p50 = por %p48, %p49
      %p51 = scmp.ne.s32.totalorder %s40, %s43
      %p52 = scmp.eq.s32.totalorder %s21, 1
      %p53 = por %p51, %p52
      %p54 = scmp.ne.s32.totalorder %s43, %s44
      %p55 = scmp.eq.s32.totalorder %s21, 0
      %p56 = por %p54, %p55
      %p57 = scmp.ne.s32.totalorder %s43, %s44
      %p58 = scmp.eq.s32.totalorder %s22, 1
      %p59 = por %p57, %p58
      %p61 = scmp.ne.s32.totalorder %s44, %s60
      %p62 = scmp.eq.s32.totalorder %s22, 0
      %p63 = por %p61, %p62
      %s65 = sadd.s32 %s64, 1
      %p68 = scmp.eq.s32.totalorder %s16, 1
      %p69 = scmp.ne.s32.totalorder %s64, %s66
      %p70 = scmp.eq.s32.totalorder %s16, 0
      %p71 = por %p69, %p70
      %p72 = scmp.ne.s32.totalorder %s64, %s66
      %p73 = scmp.eq.s32.totalorder %s21, 1
      %p74 = por %p72, %p73
      %p75 = scmp.ne.s32.totalorder %s66, %s67
      %p76 = scmp.eq.s32.totalorder %s21, 0
      %p77 = por %p75, %p76
      %p78 = scmp.ne.s32.totalorder %s66, %s67
      %p79 = scmp.eq.s32.totalorder %s22, 1
      %p80 = por %p78, %p79
      %p82 = scmp.ne.s32.totalorder %s67, %s81
      %p83 = scmp.eq.s32.totalorder %s22, 0
      %p84 = por %p82, %p83
      %s86 = sadd.s32 %s85, 1
      %p89 = scmp.eq.s32.totalorder %s16, 1
      %p90 = scmp.ne.s32.totalorder %s85, %s87
      %p91 = scmp.eq.s32.totalorder %s16, 0
      %p92 = por %p90, %p91
      %p93 = scmp.ne.s32.totalorder %s85, %s87
      %p94 = scmp.eq.s32.totalorder %s21, 1
      %p95 = por %p93, %p94
      %p96 = scmp.ne.s32.totalorder %s87, %s88
      %p97 = scmp.eq.s32.totalorder %s21, 0
      %p98 = por %p96, %p97
      %p99 = scmp.ne.s32.totalorder %s87, %s88
      %p100 = scmp.eq.s32.totalorder %s22, 1
      %p101 = por %p99, %p100
      %p103 = scmp.ne.s32.totalorder %s88, %s102
      %p104 = scmp.eq.s32.totalorder %s22, 0
      %p105 = por %p103, %p104
      %s106 = ssub.s32 %s23, %s35
      %s107 = ssub.s32 %s24, %s31
      %s108 = sor.u32 %s106, %s107
      %p109 = scmp.eq.s32.totalorder %s108, 0
      %s111 = sadd.s32 %s110, 1
      %s112 = scalar_select %p109, %s110, %s111
      %p115 = pneg %p109
      %p116 = scmp.eq.s32.totalorder %s16, 1
      %p117 = por %p115, %p116
      %p118 = scmp.ne.s32.totalorder %s110, %s113
      %p119 = scmp.eq.s32.totalorder %s16, 0
      %p120 = por %p118, %p119
      %p121 = scmp.ne.s32.totalorder %s110, %s113
      %p122 = scmp.eq.s32.totalorder %s21, 1
      %p123 = por %p121, %p122
      %p124 = scmp.ne.s32.totalorder %s113, %s114
      %p125 = scmp.eq.s32.totalorder %s21, 0
      %p126 = por %p124, %p125
      %p127 = scmp.ne.s32.totalorder %s113, %s114
      %p128 = scmp.eq.s32.totalorder %s22, 1
      %p129 = por %p127, %p128
      %p131 = scmp.ne.s32.totalorder %s114, %s130
      %p132 = scmp.eq.s32.totalorder %s22, 0
      %p133 = por %p131, %p132
      %p134 = scmp.le.s32.totalorder 1, %s16
      %p135 = scmp.lt.s32.totalorder %s16, 3
      %p136 = pnand %p134, %p135
      %p137 = pneg %p136
      // Predicated region
      $region9: #{ffab_forward.22} parent=5 // pred_check
        _
      $region10: #{ffab_forward.22} parent=5 // pred_check_branch
        %139 = sbr.rel (%p136) target = $region12
      $region11: #{ffab_forward.22} parent=5 // pred_region
        %s140 = ssub.s32 %s16, 1
        // Predicated region
        $region13: #{ffab_forward.22} parent=11 // pred_check
          %p141 = pneg %p77
        $region14: #{ffab_forward.22} parent=11 // pred_check_branch
          %143 = sbr.rel (%p141) target = $region16
        $region15: #{ffab_forward.22} parent=11 // pred_region
          %s145 = ssub.s32 64, 64
          %146 = vsyncadd [#allocation6], %s145
          %s148 = sshll.u32 [#allocation5], 4
          %s149 = int_to_ptr.vmem [resolvable:$true] %s148
          %151 = dma.hbm_to_vmem [thread:$0]  %s1, 64, %s149, [#allocation6]
        $region16: #{ffab_forward.22} parent=11 // pred_fallthru
          _
        // Predicated region
        $region17: #{ffab_forward.22} parent=11 // pred_check
          %p152 = pneg %p98
        $region18: #{ffab_forward.22} parent=11 // pred_check_branch
          %154 = sbr.rel (%p152) target = $region20
        $region19: #{ffab_forward.22} parent=11 // pred_region
          %s156 = ssub.s32 64, 64
          %157 = vsyncadd [#allocation6], %s156
          %s159 = sshll.u32 [#allocation7], 4
          %s160 = int_to_ptr.vmem [resolvable:$true] %s159
          %162 = dma.hbm_to_vmem [thread:$0]  %s2, 64, %s160, [#allocation6]
        $region20: #{ffab_forward.22} parent=11 // pred_fallthru
          _
      $region12: #{ffab_forward.22} parent=5 // pred_fallthru
        _
      %p163 = scmp.lt.s32.totalorder %s16, 2
      // Predicated region
      $region21: #{ffab_forward.22} parent=5 // pred_check
        %p164 = pneg %p163
      $region22: #{ffab_forward.22} parent=5 // pred_check_branch
        %166 = sbr.rel (%p164) target = $region24
      $region23: #{ffab_forward.22} parent=5 // pred_region
        // Predicated region
        $region25: #{ffab_forward.22} parent=23 // pred_check
          %p167 = pneg %p50
        $region26: #{ffab_forward.22} parent=23 // pred_check_branch
          %169 = sbr.rel (%p167) target = $region28
        $region27: #{ffab_forward.22} parent=23 // pred_region
          %s170 = sand.u32 %s40, 1
          %s171 = scalar_lea.sflag [#allocation3], %s170
          %s172 = sand.u32 %s40, 1
          %s173 = smul.addr %s172, 8
          %s174 = scalar_lea.vmem [#allocation2], %s173
          %s175 = smul.u32 2, %s24
          %s177 = ssub.s32 128, 128
          %178 = vsyncadd %s171, %s177
          %s179 = smul.addr %s23, 2
          %s180 = sadd.s32 %s175, %s179
          %s181 = smul.addr %s180, 64
          %s182 = scalar_lea.hbm %s0, %s181
          %s184 = sshll.u32 %s174, 4
          %s185 = int_to_ptr.vmem [resolvable:$true] %s184
          %187 = dma.hbm_to_vmem [thread:$0]  %s182, 128, %s185, %s171
        $region28: #{ffab_forward.22} parent=23 // pred_fallthru
          _
      $region24: #{ffab_forward.22} parent=5 // pred_fallthru
        _
      %p188 = scmp.le.s32.totalorder 1, %s16
      %p189 = scmp.lt.s32.totalorder %s16, 3
      %p190 = pnand %p188, %p189
      %p191 = pneg %p190
      // Predicated region
      $region29: #{ffab_forward.22} parent=5 // pred_check
        _
      $region30: #{ffab_forward.22} parent=5 // pred_check_branch
        %193 = sbr.rel (%p190) target = $region32
      $region31: #{ffab_forward.22} parent=5 // pred_region
        %s194 = ssub.s32 %s16, 1
        %s195 = sand.u32 %s43, 1
        %s196 = scalar_lea.sflag [#allocation3], %s195
        %s197 = sand.u32 %s43, 1
        %s198 = smul.addr %s197, 8
        %s199 = scalar_lea.vmem [#allocation2], %s198
        // Predicated region
        $region33: #{ffab_forward.22} parent=31 // pred_check
          %p200 = pneg %p56
        $region34: #{ffab_forward.22} parent=31 // pred_check_branch
          %202 = sbr.rel (%p200) target = $region36
        $region35: #{ffab_forward.22} parent=31 // pred_region
          %203 = dma.done %s196, 128
        $region36: #{ffab_forward.22} parent=31 // pred_fallthru
          _
        // Predicated region
        $region37: #{ffab_forward.22} parent=31 // pred_check
          %p204 = pneg %p77
        $region38: #{ffab_forward.22} parent=31 // pred_check_branch
          %206 = sbr.rel (%p204) target = $region40
        $region39: #{ffab_forward.22} parent=31 // pred_region
          %207 = dma.done [#allocation6], 64
        $region40: #{ffab_forward.22} parent=31 // pred_fallthru
          _
        // Predicated region
        $region41: #{ffab_forward.22} parent=31 // pred_check
          %p208 = pneg %p98
        $region42: #{ffab_forward.22} parent=31 // pred_check_branch
          %210 = sbr.rel (%p208) target = $region44
        $region43: #{ffab_forward.22} parent=31 // pred_region
          %211 = dma.done [#allocation6], 64
        $region44: #{ffab_forward.22} parent=31 // pred_fallthru
          _
        %s212 = sand.u32 %s43, 1
        %s213 = scalar_lea.sflag [#allocation3], %s212
        %s214 = sand.u32 %s43, 1
        %s215 = smul.addr %s214, 8
        %s216 = scalar_lea.vmem [#allocation2], %s215
        %p217 = pneg %p56
        %p218 = pneg %p53
        %p219 = pneg %p77
        %p220 = pneg %p74
        %p221 = pneg %p98
        %p222 = pneg %p95
        %p223 = pneg %p126
        %p224 = pneg %p123
        %s225 = sand.u32 %s113, 1
        %s226 = scalar_lea.sflag [#allocation4], %s225
        %s227 = sand.u32 %s113, 1
        %s228 = smul.addr %s227, 8
        %s229 = scalar_lea.vmem [#allocation8], %s228
        %s230 = smul.u32 2, %s26
        %s231 = smul.u32 2, %s26
        %v232 = vld [vmem:[%s199] sm:$0xff]
        %v233 = vld [vmem:[#allocation5] sm:$0xf]
        %235 = vset.pattern.permute.xlu0 0
        %236 = vperm.xlu0 %235, %v233
        %v237 = vpop.permute.xlu0 %236
        %v240 = vlaneseq
        %v241 = vshrl.u32 %v240, 7
        %v242 = vsub.s32 0, %v241
        %v243 = vrot.slane %v232, %v242
        %v244 = vlaneseq
        %v245 = vshrl.u32 %v244, 7
        %v246 = vsub.s32 4, %v245
        %v247 = vrot.slane %v232, %v246
        %v250 = vlaneseq
        %v251 = vshrl.u32 %v250, 7
        %v252 = vsub.s32 0, %v251
        %v253 = vrot.slane %v243, %v252
        %v254 = vlaneseq
        %v255 = vshrl.u32 %v254, 7
        %v256 = vsub.s32 0, %v255
        %v257 = vrot.slane %v247, %v256
        %v258 = vmul.f32 %v237, %v253
        %v259 = vmul.f32 %v237, %v257
        %260 = vset.pattern.permute.xlu0 1
        %261 = vperm.xlu0 %260, %v233
        %v262 = vpop.permute.xlu0 %261
        %v264 = vlaneseq
        %v265 = vshrl.u32 %v264, 7
        %v266 = vsub.s32 1, %v265
        %v267 = vrot.slane %v232, %v266
        %v268 = vlaneseq
        %v269 = vshrl.u32 %v268, 7
        %v270 = vsub.s32 5, %v269
        %v271 = vrot.slane %v232, %v270
        %v274 = vlaneseq
        %v275 = vshrl.u32 %v274, 7
        %v276 = vsub.s32 1, %v275
        %v277 = vrot.slane %v267, %v276
        %v278 = vlaneseq
        %v279 = vshrl.u32 %v278, 7
        %v280 = vsub.s32 1, %v279
        %v281 = vrot.slane %v271, %v280
        %v282 = vmul.f32 %v262, %v277
        %v283 = vmul.f32 %v262, %v281
        %v284 = vadd.f32 %v258, %v282
        %v285 = vadd.f32 %v259, %v283
        %286 = vset.pattern.permute.xlu0 2
        %287 = vperm.xlu0 %286, %v233
        %v288 = vpop.permute.xlu0 %287
        %v290 = vlaneseq
        %v291 = vshrl.u32 %v290, 7
        %v292 = vsub.s32 2, %v291
        %v293 = vrot.slane %v232, %v292
        %v294 = vlaneseq
        %v295 = vshrl.u32 %v294, 7
        %v296 = vsub.s32 6, %v295
        %v297 = vrot.slane %v232, %v296
        %v300 = vlaneseq
        %v301 = vshrl.u32 %v300, 7
        %v302 = vsub.s32 2, %v301
        %v303 = vrot.slane %v293, %v302
        %v304 = vlaneseq
        %v305 = vshrl.u32 %v304, 7
        %v306 = vsub.s32 2, %v305
        %v307 = vrot.slane %v297, %v306
        %v308 = vmul.f32 %v288, %v303
        %v309 = vmul.f32 %v288, %v307
        %v310 = vadd.f32 %v284, %v308
        %v311 = vadd.f32 %v285, %v309
        %312 = vset.pattern.permute.xlu0 3
        %313 = vperm.xlu0 %312, %v233
        %v314 = vpop.permute.xlu0 %313
        %v316 = vlaneseq
        %v317 = vshrl.u32 %v316, 7
        %v318 = vsub.s32 3, %v317
        %v319 = vrot.slane %v232, %v318
        %v320 = vlaneseq
        %v321 = vshrl.u32 %v320, 7
        %v322 = vsub.s32 7, %v321
        %v323 = vrot.slane %v232, %v322
        %v326 = vlaneseq
        %v327 = vshrl.u32 %v326, 7
        %v328 = vsub.s32 3, %v327
        %v329 = vrot.slane %v319, %v328
        %v330 = vlaneseq
        %v331 = vshrl.u32 %v330, 7
        %v332 = vsub.s32 3, %v331
        %v333 = vrot.slane %v323, %v332
        %v334 = vmul.f32 %v314, %v329
        %v335 = vmul.f32 %v314, %v333
        %v336 = vadd.f32 %v310, %v334
        %v337 = vadd.f32 %v311, %v335
        %v338 = vld [vmem:[#allocation7] sm:$0xf]
        %340 = vset.pattern.permute.xlu0 0
        %341 = vperm.xlu0 %340, %v338
        %v342 = vpop.permute.xlu0 %341
        %v344 = vadd.f32 %v336, %v342
        %v345 = vadd.f32 %v337, %v342
        %v348 = vcombine.low %v344, %v345
        %350 = vst [vmem:[%s229] sm:$0xff] %v348
        %s351 = sand.u32 %s113, 1
        %s352 = scalar_lea.sflag [#allocation4], %s351
        %s353 = sand.u32 %s113, 1
        %s354 = smul.addr %s353, 8
        %s355 = scalar_lea.vmem [#allocation8], %s354
        // Predicated region
        $region45: #{ffab_forward.22} parent=31 // pred_check
          %p356 = pneg %p123
        $region46: #{ffab_forward.22} parent=31 // pred_check_branch
          %358 = sbr.rel (%p356) target = $region48
        $region47: #{ffab_forward.22} parent=31 // pred_region
          %s359 = smul.u32 2, %s26
          %s361 = ssub.s32 128, 128
          %362 = vsyncadd %s352, %s361
          %s363 = smul.addr %s25, 2
          %s364 = sadd.s32 %s359, %s363
          %s365 = smul.addr %s364, 64
          %s366 = scalar_lea.hbm %s3, %s365
          %s368 = sshll.u32 %s355, 4
          %s369 = int_to_ptr.vmem [resolvable:$true] %s368
          %371 = dma.vmem_to_hbm [thread:$0]  %s369, 128, %s366, %s352
        $region48: #{ffab_forward.22} parent=31 // pred_fallthru
          _
      $region32: #{ffab_forward.22} parent=5 // pred_fallthru
        _
      %p372 = scmp.le.s32.totalorder 2, %s16
      // Predicated region
      $region49: #{ffab_forward.22} parent=5 // pred_check
        %p373 = pneg %p372
      $region50: #{ffab_forward.22} parent=5 // pred_check_branch
        %375 = sbr.rel (%p373) target = $region52
      $region51: #{ffab_forward.22} parent=5 // pred_region
        %s376 = ssub.s32 %s16, 2
        // Predicated region
        $region53: #{ffab_forward.22} parent=51 // pred_check
          %p377 = pneg %p129
        $region54: #{ffab_forward.22} parent=51 // pred_check_branch
          %379 = sbr.rel (%p377) target = $region56
        $region55: #{ffab_forward.22} parent=51 // pred_region
          %s380 = sand.u32 %s114, 1
          %s381 = scalar_lea.sflag [#allocation4], %s380
          %s382 = sand.u32 %s114, 1
          %s383 = smul.addr %s382, 8
          %s384 = scalar_lea.vmem [#allocation8], %s383
          %385 = dma.done %s381, 128
        $region56: #{ffab_forward.22} parent=51 // pred_fallthru
          _
      $region52: #{ffab_forward.22} parent=5 // pred_fallthru
        _
    $region6: #{ffab_forward.22} parent=1 // loop_footer
      %s20 = sadd.s32 1, %s16
    $region7: #{ffab_forward.22} parent=1 // loop_footer_branch
      %15 = sbr.rel target = $region3
    $region8: #{ffab_forward.22} parent=1 // loop_exit
      _
    %386 = vsyncpa [#allocation3], 1
    %s387 = scalar_lea.sflag [#allocation3], 1
    %388 = vsyncpa %s387, 1
    %389 = vsyncpa [#allocation6], 1
    %390 = vsyncpa [#allocation4], 1
    %s391 = scalar_lea.sflag [#allocation4], 1
    %392 = vsyncpa %s391, 1

// kernel: reverse.15
$region0: #{reverse.15}
  %s0 = inlined_call_operand.vmem [shape: f32[2,4,16,7], index: 0, kind: input, shape index: {}]
  %s1 = inlined_call_operand.vmem [shape: f32[2,4,16,7], index: 1, kind: output, shape index: {}]
  $region1: #{reverse.15} parent=0
    #allocation0 [shape = 'u8[65536]{0}', space=vmem, size = 0x10000, scoped, tag = 'operand span for operand 0']
    #allocation1 [shape = 'u8[32768]{0}', space=vmem, size = 0x8000, scoped, tag = 'operand span for operand 1']
    %s2 = scalar_lea.vmem [#allocation0], 8
    // Predicated region
    $region2: #{reverse.15} parent=1 // pred_check
      _
    $region3: #{reverse.15} parent=1 // pred_check_branch
      %4 = sbr.rel (0) target = $region5
    $region4: #{reverse.15} parent=1 // pred_region
      // Predicated region
      $region6: #{reverse.15} parent=4 // pred_check
        _
      $region7: #{reverse.15} parent=4 // pred_check_branch
        %6 = sbr.rel (0) target = $region9
      $region8: #{reverse.15} parent=4 // pred_region
        // Predicated region
        $region21: #{reverse.15} parent=8 // pred_check
          _
        $region22: #{reverse.15} parent=8 // pred_check_branch
          %35 = sbr.rel (0) target = $region24
        $region23: #{reverse.15} parent=8 // pred_region
          loop: start=0, step=1, limit=1
          $region25: #{reverse.15} parent=23 // loop_pre_header
            _
          $region26: #{reverse.15} parent=23 // loop_header
            %s37 = sphi 0, %s41
            %p38 = scmp.ge.s32.totalorder %s37, 1
            %s42 = sphi %s0, %s0
            %s43 = sphi %s2, %s2
          $region27: #{reverse.15} parent=23 // loop_header_branch
            %40 = sbr.rel (%p38) target = $region31
          $region28: #{reverse.15} parent=23 // loop_body
            %v44 = vld [vmem:[%s42] sm:$0xff]
            %45 = vst [vmem:[%s43] sm:$0xff] %v44
            %v46 = vld [vmem:[%s42 + $0x8] sm:$0xff]
            %47 = vst [vmem:[%s43 + $0x10] sm:$0xff] %v46
            %v48 = vld [vmem:[%s42 + $0x10] sm:$0xff]
            %49 = vst [vmem:[%s43 + $0x20] sm:$0xff] %v48
            %v50 = vld [vmem:[%s42 + $0x18] sm:$0xff]
            %51 = vst [vmem:[%s43 + $0x30] sm:$0xff] %v50
            %v52 = vld [vmem:[%s42 + $0x20] sm:$0xff]
            %53 = vst [vmem:[%s43 + $0x40] sm:$0xff] %v52
            %v54 = vld [vmem:[%s42 + $0x28] sm:$0xff]
            %55 = vst [vmem:[%s43 + $0x50] sm:$0xff] %v54
            %v56 = vld [vmem:[%s42 + $0x30] sm:$0xff]
            %57 = vst [vmem:[%s43 + $0x60] sm:$0xff] %v56
            %v58 = vld [vmem:[%s42 + $0x38] sm:$0xff]
            %59 = vst [vmem:[%s43 + $0x70] sm:$0xff] %v58
          $region29: #{reverse.15} parent=23 // loop_footer
            %s41 = sadd.s32 1, %s37
          $region30: #{reverse.15} parent=23 // loop_footer_branch
            %36 = sbr.rel target = $region26
          $region31: #{reverse.15} parent=23 // loop_exit
            _
        $region24: #{reverse.15} parent=8 // pred_fallthru
          _
        // Predicated region
        $region32: #{reverse.15} parent=8 // pred_check
          _
        $region33: #{reverse.15} parent=8 // pred_check_branch
          %61 = sbr.rel target = $region35
        $region34: #{reverse.15} parent=8 // pred_region
          _
        $region35: #{reverse.15} parent=8 // pred_fallthru
          _
      $region9: #{reverse.15} parent=4 // pred_fallthru
        _
      // Predicated region
      $region10: #{reverse.15} parent=4 // pred_check
        _
      $region11: #{reverse.15} parent=4 // pred_check_branch
        %8 = sbr.rel target = $region13
      $region12: #{reverse.15} parent=4 // pred_region
        loop: start=0, step=1, limit=1
        $region14: #{reverse.15} parent=12 // loop_pre_header
          _
        $region15: #{reverse.15} parent=12 // loop_header
          %s11 = sphi 0, %s15
          %p12 = scmp.ge.s32.totalorder %s11, 1
          %s16 = sphi %s0, %s0
          %s17 = sphi %s2, %s2
        $region16: #{reverse.15} parent=12 // loop_header_branch
          %14 = sbr.rel (%p12) target = $region20
        $region17: #{reverse.15} parent=12 // loop_body
          %v18 = vld [vmem:[%s16] sm:$0xff]
          %19 = vst [vmem:[%s17] sm:$0xff] %v18
          %v20 = vld [vmem:[%s16 + $0x8] sm:$0xff]
          %21 = vst [vmem:[%s17 + $0x10] sm:$0xff] %v20
          %v22 = vld [vmem:[%s16 + $0x10] sm:$0xff]
          %23 = vst [vmem:[%s17 + $0x20] sm:$0xff] %v22
          %v24 = vld [vmem:[%s16 + $0x18] sm:$0xff]
          %25 = vst [vmem:[%s17 + $0x30] sm:$0xff] %v24
          %v26 = vld [vmem:[%s16 + $0x20] sm:$0xff]
          %27 = vst [vmem:[%s17 + $0x40] sm:$0xff] %v26
          %v28 = vld [vmem:[%s16 + $0x28] sm:$0xff]
          %29 = vst [vmem:[%s17 + $0x50] sm:$0xff] %v28
          %v30 = vld [vmem:[%s16 + $0x30] sm:$0xff]
          %31 = vst [vmem:[%s17 + $0x60] sm:$0xff] %v30
          %v32 = vld [vmem:[%s16 + $0x38] sm:$0xff]
          %33 = vst [vmem:[%s17 + $0x70] sm:$0xff] %v32
        $region18: #{reverse.15} parent=12 // loop_footer
          %s15 = sadd.s32 1, %s11
        $region19: #{reverse.15} parent=12 // loop_footer_branch
          %10 = sbr.rel target = $region15
        $region20: #{reverse.15} parent=12 // loop_exit
          _
      $region13: #{reverse.15} parent=4 // pred_fallthru
        _
    $region5: #{reverse.15} parent=1 // pred_fallthru
      _
    %62 = vnop
    %s63 = scalar_lea.vmem [#allocation0], 7
    %v64 = vld [vmem:[%s63] ss:$-1 sm:$0xff]
    %v65 = vrot.slane %v64, 1
    %66 = vst [vmem:[#allocation1] sm:$0xff] %v65
    %s67 = scalar_lea.vmem [#allocation0], 8
    %s68 = scalar_lea.vmem %s67, 7 [#allocation0]
    %v69 = vld [vmem:[%s68] ss:$-1 sm:$0xff]
    %v70 = vrot.slane %v69, 1
    %v71 = vlaneseq
    %v72 = vshrl.u32 %v71, 7
    %vm73 = vcmp.lt.s32.totalorder %v72, 7
    %74 = vst.msk [vmem:[#allocation1] sm:$0xff] %vm73, %v70
    %s75 = scalar_lea.vmem [#allocation1], 8
    %s76 = scalar_lea.vmem [#allocation0], 16
    %s77 = scalar_lea.vmem %s76, 7 [#allocation0]
    %v78 = vld [vmem:[%s77] ss:$-1 sm:$0xff]
    %v79 = vrot.slane %v78, 1
    %80 = vst [vmem:[%s75] sm:$0xff] %v79
    %s81 = scalar_lea.vmem %s76, 8 [#allocation0]
    %s82 = scalar_lea.vmem %s81, 7 [#allocation0]
    %v83 = vld [vmem:[%s82] ss:$-1 sm:$0xff]
    %v84 = vrot.slane %v83, 1
    %v85 = vlaneseq
    %v86 = vshrl.u32 %v85, 7
    %vm87 = vcmp.lt.s32.totalorder %v86, 7
    %88 = vst.msk [vmem:[%s75] sm:$0xff] %vm87, %v84
    %s89 = scalar_lea.vmem [#allocation1], 16
    %s90 = scalar_lea.vmem [#allocation0], 32
    %s91 = scalar_lea.vmem %s90, 7 [#allocation0]
    %v92 = vld [vmem:[%s91] ss:$-1 sm:$0xff]
    %v93 = vrot.slane %v92, 1
    %94 = vst [vmem:[%s89] sm:$0xff] %v93
    %s95 = scalar_lea.vmem %s90, 8 [#allocation0]
    %s96 = scalar_lea.vmem %s95, 7 [#allocation0]
    %v97 = vld [vmem:[%s96] ss:$-1 sm:$0xff]
    %v98 = vrot.slane %v97, 1
    %v99 = vlaneseq
    %v100 = vshrl.u32 %v99, 7
    %vm101 = vcmp.lt.s32.totalorder %v100, 7
    %102 = vst.msk [vmem:[%s89] sm:$0xff] %vm101, %v98
    %s103 = scalar_lea.vmem [#allocation1], 24
    %s104 = scalar_lea.vmem [#allocation0], 48
    %s105 = scalar_lea.vmem %s104, 7 [#allocation0]
    %v106 = vld [vmem:[%s105] ss:$-1 sm:$0xff]
    %v107 = vrot.slane %v106, 1
    %108 = vst [vmem:[%s103] sm:$0xff] %v107
    %s109 = scalar_lea.vmem %s104, 8 [#allocation0]
    %s110 = scalar_lea.vmem %s109, 7 [#allocation0]
    %v111 = vld [vmem:[%s110] ss:$-1 sm:$0xff]
    %v112 = vrot.slane %v111, 1
    %v113 = vlaneseq
    %v114 = vshrl.u32 %v113, 7
    %vm115 = vcmp.lt.s32.totalorder %v114, 7
    %116 = vst.msk [vmem:[%s103] sm:$0xff] %vm115, %v112
    %s117 = scalar_lea.vmem [#allocation1], 32
    %s118 = scalar_lea.vmem [#allocation0], 64
    %s119 = scalar_lea.vmem %s118, 7 [#allocation0]
    %v120 = vld [vmem:[%s119] ss:$-1 sm:$0xff]
    %v121 = vrot.slane %v120, 1
    %122 = vst [vmem:[%s117] sm:$0xff] %v121
    %s123 = scalar_lea.vmem %s118, 8 [#allocation0]
    %s124 = scalar_lea.vmem %s123, 7 [#allocation0]
    %v125 = vld [vmem:[%s124] ss:$-1 sm:$0xff]
    %v126 = vrot.slane %v125, 1
    %v127 = vlaneseq
    %v128 = vshrl.u32 %v127, 7
    %vm129 = vcmp.lt.s32.totalorder %v128, 7
    %130 = vst.msk [vmem:[%s117] sm:$0xff] %vm129, %v126
    %s131 = scalar_lea.vmem [#allocation1], 40
    %s132 = scalar_lea.vmem [#allocation0], 80
    %s133 = scalar_lea.vmem %s132, 7 [#allocation0]
    %v134 = vld [vmem:[%s133] ss:$-1 sm:$0xff]
    %v135 = vrot.slane %v134, 1
    %136 = vst [vmem:[%s131] sm:$0xff] %v135
    %s137 = scalar_lea.vmem %s132, 8 [#allocation0]
    %s138 = scalar_lea.vmem %s137, 7 [#allocation0]
    %v139 = vld [vmem:[%s138] ss:$-1 sm:$0xff]
    %v140 = vrot.slane %v139, 1
    %v141 = vlaneseq
    %v142 = vshrl.u32 %v141, 7
    %vm143 = vcmp.lt.s32.totalorder %v142, 7
    %144 = vst.msk [vmem:[%s131] sm:$0xff] %vm143, %v140
    %s145 = scalar_lea.vmem [#allocation1], 48
    %s146 = scalar_lea.vmem [#allocation0], 96
    %s147 = scalar_lea.vmem %s146, 7 [#allocation0]
    %v148 = vld [vmem:[%s147] ss:$-1 sm:$0xff]
    %v149 = vrot.slane %v148, 1
    %150 = vst [vmem:[%s145] sm:$0xff] %v149
    %s151 = scalar_lea.vmem %s146, 8 [#allocation0]
    %s152 = scalar_lea.vmem %s151, 7 [#allocation0]
    %v153 = vld [vmem:[%s152] ss:$-1 sm:$0xff]
    %v154 = vrot.slane %v153, 1
    %v155 = vlaneseq
    %v156 = vshrl.u32 %v155, 7
    %vm157 = vcmp.lt.s32.totalorder %v156, 7
    %158 = vst.msk [vmem:[%s145] sm:$0xff] %vm157, %v154
    %s159 = scalar_lea.vmem [#allocation1], 56
    %s160 = scalar_lea.vmem [#allocation0], 112
    %s161 = scalar_lea.vmem %s160, 7 [#allocation0]
    %v162 = vld [vmem:[%s161] ss:$-1 sm:$0xff]
    %v163 = vrot.slane %v162, 1
    %164 = vst [vmem:[%s159] sm:$0xff] %v163
    %s165 = scalar_lea.vmem %s160, 8 [#allocation0]
    %s166 = scalar_lea.vmem %s165, 7 [#allocation0]
    %v167 = vld [vmem:[%s166] ss:$-1 sm:$0xff]
    %v168 = vrot.slane %v167, 1
    %v169 = vlaneseq
    %v170 = vshrl.u32 %v169, 7
    %vm171 = vcmp.lt.s32.totalorder %v170, 7
    %172 = vst.msk [vmem:[%s159] sm:$0xff] %vm171, %v168
    // Predicated region
    $region36: #{reverse.15} parent=1 // pred_check
      _
    $region37: #{reverse.15} parent=1 // pred_check_branch
      %174 = sbr.rel (0) target = $region39
    $region38: #{reverse.15} parent=1 // pred_region
      // Predicated region
      $region40: #{reverse.15} parent=38 // pred_check
        _
      $region41: #{reverse.15} parent=38 // pred_check_branch
        %176 = sbr.rel (0) target = $region43
      $region42: #{reverse.15} parent=38 // pred_region
        // Predicated region
        $region55: #{reverse.15} parent=42 // pred_check
          _
        $region56: #{reverse.15} parent=42 // pred_check_branch
          %205 = sbr.rel (0) target = $region58
        $region57: #{reverse.15} parent=42 // pred_region
          loop: start=0, step=1, limit=1
          $region59: #{reverse.15} parent=57 // loop_pre_header
            _
          $region60: #{reverse.15} parent=57 // loop_header
            %s207 = sphi 0, %s211
            %p208 = scmp.ge.s32.totalorder %s207, 1
            %s212 = sphi [#allocation1], [#allocation1]
            %s213 = sphi %s1, %s1
          $region61: #{reverse.15} parent=57 // loop_header_branch
            %210 = sbr.rel (%p208) target = $region65
          $region62: #{reverse.15} parent=57 // loop_body
            %v214 = vld [vmem:[%s212] sm:$0xff]
            %215 = vst [vmem:[%s213] sm:$0xff] %v214
            %v216 = vld [vmem:[%s212 + $0x8] sm:$0xff]
            %217 = vst [vmem:[%s213 + $0x8] sm:$0xff] %v216
            %v218 = vld [vmem:[%s212 + $0x10] sm:$0xff]
            %219 = vst [vmem:[%s213 + $0x10] sm:$0xff] %v218
            %v220 = vld [vmem:[%s212 + $0x18] sm:$0xff]
            %221 = vst [vmem:[%s213 + $0x18] sm:$0xff] %v220
            %v222 = vld [vmem:[%s212 + $0x20] sm:$0xff]
            %223 = vst [vmem:[%s213 + $0x20] sm:$0xff] %v222
            %v224 = vld [vmem:[%s212 + $0x28] sm:$0xff]
            %225 = vst [vmem:[%s213 + $0x28] sm:$0xff] %v224
            %v226 = vld [vmem:[%s212 + $0x30] sm:$0xff]
            %227 = vst [vmem:[%s213 + $0x30] sm:$0xff] %v226
            %v228 = vld [vmem:[%s212 + $0x38] sm:$0xff]
            %229 = vst [vmem:[%s213 + $0x38] sm:$0xff] %v228
          $region63: #{reverse.15} parent=57 // loop_footer
            %s211 = sadd.s32 1, %s207
          $region64: #{reverse.15} parent=57 // loop_footer_branch
            %206 = sbr.rel target = $region60
          $region65: #{reverse.15} parent=57 // loop_exit
            _
        $region58: #{reverse.15} parent=42 // pred_fallthru
          _
        // Predicated region
        $region66: #{reverse.15} parent=42 // pred_check
          _
        $region67: #{reverse.15} parent=42 // pred_check_branch
          %231 = sbr.rel target = $region69
        $region68: #{reverse.15} parent=42 // pred_region
          _
        $region69: #{reverse.15} parent=42 // pred_fallthru
          _
      $region43: #{reverse.15} parent=38 // pred_fallthru
        _
      // Predicated region
      $region44: #{reverse.15} parent=38 // pred_check
        _
      $region45: #{reverse.15} parent=38 // pred_check_branch
        %178 = sbr.rel target = $region47
      $region46: #{reverse.15} parent=38 // pred_region
        loop: start=0, step=1, limit=1
        $region48: #{reverse.15} parent=46 // loop_pre_header
          _
        $region49: #{reverse.15} parent=46 // loop_header
          %s181 = sphi 0, %s185
          %p182 = scmp.ge.s32.totalorder %s181, 1
          %s186 = sphi [#allocation1], [#allocation1]
          %s187 = sphi %s1, %s1
        $region50: #{reverse.15} parent=46 // loop_header_branch
          %184 = sbr.rel (%p182) target = $region54
        $region51: #{reverse.15} parent=46 // loop_body
          %v188 = vld [vmem:[%s186] sm:$0xff]
          %189 = vst [vmem:[%s187] sm:$0xff] %v188
          %v190 = vld [vmem:[%s186 + $0x8] sm:$0xff]
          %191 = vst [vmem:[%s187 + $0x8] sm:$0xff] %v190
          %v192 = vld [vmem:[%s186 + $0x10] sm:$0xff]
          %193 = vst [vmem:[%s187 + $0x10] sm:$0xff] %v192
          %v194 = vld [vmem:[%s186 + $0x18] sm:$0xff]
          %195 = vst [vmem:[%s187 + $0x18] sm:$0xff] %v194
          %v196 = vld [vmem:[%s186 + $0x20] sm:$0xff]
          %197 = vst [vmem:[%s187 + $0x20] sm:$0xff] %v196
          %v198 = vld [vmem:[%s186 + $0x28] sm:$0xff]
          %199 = vst [vmem:[%s187 + $0x28] sm:$0xff] %v198
          %v200 = vld [vmem:[%s186 + $0x30] sm:$0xff]
          %201 = vst [vmem:[%s187 + $0x30] sm:$0xff] %v200
          %v202 = vld [vmem:[%s186 + $0x38] sm:$0xff]
          %203 = vst [vmem:[%s187 + $0x38] sm:$0xff] %v202
        $region52: #{reverse.15} parent=46 // loop_footer
          %s185 = sadd.s32 1, %s181
        $region53: #{reverse.15} parent=46 // loop_footer_branch
          %180 = sbr.rel target = $region49
        $region54: #{reverse.15} parent=46 // loop_exit
          _
      $region47: #{reverse.15} parent=38 // pred_fallthru
        _
    $region39: #{reverse.15} parent=1 // pred_fallthru
      _
    %232 = vnop

// kernel: ffab_forward.24
$region0: #{ffab_forward.24}
  #allocation0 [shape = 'u32[]', space=smem, size = 0x4, offset = 0x4, fixed_abs, tag = 'smem constant byte address 0x4 - core index']
  #allocation1 [shape = 'u32[144,128]{1,0:T(1,128)}', space=vmem, size = 0x12000, scoped, tag = 'internal scratch']
  %s0 = inlined_call_operand.hbm [shape: f32[2,8,128], index: 0, kind: input, shape index: {}]
  %s1 = inlined_call_operand.hbm [shape: f32[2,8,128], index: 1, kind: input, shape index: {}]
  %s2 = inlined_call_operand.hbm [shape: f32[8,8], index: 2, kind: input, shape index: {}]
  %s3 = inlined_call_operand.hbm [shape: f32[8,1], index: 3, kind: input, shape index: {}]
  %s4 = inlined_call_operand.hbm [shape: f32[8,8], index: 4, kind: input, shape index: {}]
  %s5 = inlined_call_operand.hbm [shape: f32[8,1], index: 5, kind: input, shape index: {}]
  %s6 = inlined_call_operand.hbm [shape: f32[8,8], index: 6, kind: input, shape index: {}]
  %s7 = inlined_call_operand.hbm [shape: f32[8,1], index: 7, kind: input, shape index: {}]
  %s8 = inlined_call_operand.hbm [shape: f32[8,8], index: 8, kind: input, shape index: {}]
  %s9 = inlined_call_operand.hbm [shape: f32[8,1], index: 9, kind: input, shape index: {}]
  %s10 = inlined_call_operand.hbm [shape: f32[2,8,128], index: 10, kind: output, shape index: {0}]
  %s11 = inlined_call_operand.hbm [shape: f32[2,8,128], index: 11, kind: output, shape index: {1}]
  %12 = xla_tuple %s10, %s11
  %s13 = sld [smem:[#allocation0]]
  $region121: #{ffab_forward.24} parent=0
    _
  %s15 = ssub.s32 1, %s13
  %s16 = scalar_select 0, %s15, %s13
  $region1: #{ffab_forward.24} parent=0
    #allocation2 [shape = 'u8[8192]{0}', space=vmem, size = 0x2000, scoped, tag = 'input window, operand 0']
    #allocation3 [shape = 's32[2]{0}', space=sflag, size = 0x8, scoped, tag = 'scoped memory for ffab_forward.24']
    #allocation4 [shape = 's32[2]{0}', space=sflag, size = 0x8, scoped, tag = 'scoped memory for ffab_forward.24']
    #allocation5 [shape = 'u8[8192]{0}', space=vmem, size = 0x2000, scoped, tag = 'input window, operand 1']
    #allocation6 [shape = 's32[2]{0}', space=sflag, size = 0x8, scoped, tag = 'scoped memory for ffab_forward.24']
    #allocation7 [shape = 'u8[4096]{0}', space=vmem, size = 0x1000, scoped, tag = 'input window, operand 2, single buffered']
    #allocation8 [shape = 'u8[4096]{0}', space=vmem, size = 0x1000, scoped, tag = 'input window, operand 3, single buffered']
    #allocation9 [shape = 's32[1]{0}', space=sflag, size = 0x4, scoped, tag = 'scoped memory for ffab_forward.24']
    #allocation10 [shape = 'u8[4096]{0}', space=vmem, size = 0x1000, scoped, tag = 'input window, operand 4, single buffered']
    #allocation11 [shape = 'u8[4096]{0}', space=vmem, size = 0x1000, scoped, tag = 'input window, operand 5, single buffered']
    #allocation12 [shape = 's32[1]{0}', space=sflag, size = 0x4, scoped, tag = 'scoped memory for ffab_forward.24']
    #allocation13 [shape = 'u8[4096]{0}', space=vmem, size = 0x1000, scoped, tag = 'input window, operand 6, single buffered']
    #allocation14 [shape = 'u8[4096]{0}', space=vmem, size = 0x1000, scoped, tag = 'input window, operand 7, single buffered']
    #allocation15 [shape = 's32[1]{0}', space=sflag, size = 0x4, scoped, tag = 'scoped memory for ffab_forward.24']
    #allocation16 [shape = 'u8[4096]{0}', space=vmem, size = 0x1000, scoped, tag = 'input window, operand 8, single buffered']
    #allocation17 [shape = 'u8[4096]{0}', space=vmem, size = 0x1000, scoped, tag = 'input window, operand 9, single buffered']
    #allocation18 [shape = 's32[1]{0}', space=sflag, size = 0x4, scoped, tag = 'scoped memory for ffab_forward.24']
    #allocation19 [shape = 'u8[8192]{0}', space=vmem, size = 0x2000, scoped, tag = 'output window, operand 0']
    #allocation20 [shape = 'u8[8192]{0}', space=vmem, size = 0x2000, scoped, tag = 'output window, operand 1']
    #allocation21 [shape = 's32[2]{0}', space=sflag, size = 0x8, scoped, tag = 'scoped memory for ffab_forward.24']
    %17 = vsyncpa [#allocation3], 0
    %s18 = scalar_lea.sflag [#allocation3], 1
    %19 = vsyncpa %s18, 0
    %20 = vsyncpa [#allocation6], 0
    %s21 = scalar_lea.sflag [#allocation6], 1
    %22 = vsyncpa %s21, 0
    %23 = vsyncpa [#allocation9], 0
    %24 = vsyncpa [#allocation12], 0
    %25 = vsyncpa [#allocation15], 0
    %26 = vsyncpa [#allocation18], 0
    %27 = vsyncpa [#allocation4], 0
    %s28 = scalar_lea.sflag [#allocation4], 1
    %29 = vsyncpa %s28, 0
    %30 = vsyncpa [#allocation21], 0
    %s31 = scalar_lea.sflag [#allocation21], 1
    %32 = vsyncpa %s31, 0
    loop: start=0, step=1, limit=4
    $region2: #{ffab_forward.24} parent=1 // loop_pre_header
      _
    $region3: #{ffab_forward.24} parent=1 // loop_header
      %s34 = sphi 0, %s38
      %p35 = scmp.ge.s32.totalorder %s34, 4
      %s41 = sphi 0, %s53
      %s42 = sphi 0, %s49
      %s43 = sphi 0, %s41
      %s44 = sphi 0, %s42
      %s45 = sphi 0, %s43
      %s46 = sphi 0, %s44
      %s58 = sphi 0, %s60
      %s61 = sphi 0, %s58
      %s62 = sphi 0, %s61
      %s78 = sphi 0, %s62
      %s86 = sphi 0, %s88
      %s89 = sphi 0, %s86
      %s90 = sphi 0, %s89
      %s106 = sphi 0, %s90
      %s110 = sphi 0, %s110
      %s112 = sphi 0, %s110
      %s113 = sphi 0, %s112
      %s127 = sphi 0, %s113
      %s131 = sphi 0, %s131
      %s133 = sphi 0, %s131
      %s134 = sphi 0, %s133
      %s148 = sphi 0, %s134
      %s152 = sphi 0, %s152
      %s154 = sphi 0, %s152
      %s155 = sphi 0, %s154
      %s169 = sphi 0, %s155
      %s173 = sphi 0, %s173
      %s175 = sphi 0, %s173
      %s176 = sphi 0, %s175
      %s190 = sphi 0, %s176
      %s194 = sphi 0, %s194
      %s196 = sphi 0, %s194
      %s197 = sphi 0, %s196
      %s211 = sphi 0, %s197
      %s215 = sphi 0, %s215
      %s217 = sphi 0, %s215
      %s218 = sphi 0, %s217
      %s232 = sphi 0, %s218
      %s236 = sphi 0, %s236
      %s238 = sphi 0, %s236
      %s239 = sphi 0, %s238
      %s253 = sphi 0, %s239
      %s257 = sphi 0, %s257
      %s259 = sphi 0, %s257
      %s260 = sphi 0, %s259
      %s274 = sphi 0, %s260
      %s282 = sphi 0, %s284
      %s285 = sphi 0, %s282
      %s286 = sphi 0, %s285
      %s302 = sphi 0, %s286
      %s310 = sphi 0, %s312
      %s313 = sphi 0, %s310
      %s314 = sphi 0, %s313
      %s330 = sphi 0, %s314
    $region4: #{ffab_forward.24} parent=1 // loop_header_branch
      %37 = sbr.rel (%p35) target = $region8
    $region5: #{ffab_forward.24} parent=1 // loop_body
      %s39 = ssub.s32 %s34, 1
      %s40 = ssub.s32 %s34, 2
      %s47 = sadd.s32 1, %s42
      %p48 = scmp.ge.s32.totalorder %s47, 1
      %s49 = scalar_select %p48, 0, %s47
      %s50 = sadd.s32 1, %s41
      %s51 = scalar_select %p48, %s50, %s41
      %p52 = scmp.ge.s32.totalorder %s51, 2
      %s53 = scalar_select %p52, 0, %s51
      %s54 = ssub.s32 %s41, %s53
      %s55 = ssub.s32 %s42, %s49
      %s56 = sor.u32 %s54, %s55
      %p57 = scmp.eq.s32.totalorder %s56, 0
      %s59 = sadd.s32 %s58, 1
      %s60 = scalar_select %p57, %s58, %s59
      %p63 = pneg %p57
      %p64 = scmp.eq.s32.totalorder %s34, 1
      %p65 = por %p63, %p64
      %p66 = scmp.ne.s32.totalorder %s58, %s61
      %p67 = scmp.eq.s32.totalorder %s34, 0
      %p68 = por %p66, %p67
      %p69 = scmp.ne.s32.totalorder %s58, %s61
      %p70 = scmp.eq.s32.totalorder %s39, 1
      %p71 = por %p69, %p70
      %p72 = scmp.ne.s32.totalorder %s61, %s62
      %p73 = scmp.eq.s32.totalorder %s39, 0
      %p74 = por %p72, %p73
      %p75 = scmp.ne.s32.totalorder %s61, %s62
      %p76 = scmp.eq.s32.totalorder %s40, 1
      %p77 = por %p75, %p76
      %p79 = scmp.ne.s32.totalorder %s62, %s78
      %p80 = scmp.eq.s32.totalorder %s40, 0
      %p81 = por %p79, %p80
      %s82 = ssub.s32 %s41, %s53
      %s83 = ssub.s32 %s42, %s49
      %s84 = sor.u32 %s82, %s83
      %p85 = scmp.eq.s32.totalorder %s84, 0
      %s87 = sadd.s32 %s86, 1
      %s88 = scalar_select %p85, %s86, %s87
      %p91 = pneg %p85
      %p92 = scmp.eq.s32.totalorder %s34, 1
      %p93 = por %p91, %p92
      %p94 = scmp.ne.s32.totalorder %s86, %s89
      %p95 = scmp.eq.s32.totalorder %s34, 0
      %p96 = por %p94, %p95
      %p97 = scmp.ne.s32.totalorder %s86, %s89
      %p98 = scmp.eq.s32.totalorder %s39, 1
      %p99 = por %p97, %p98
      %p100 = scmp.ne.s32.totalorder %s89, %s90
      %p101 = scmp.eq.s32.totalorder %s39, 0
      %p102 = por %p100, %p101
      %p103 = scmp.ne.s32.totalorder %s89, %s90
      %p104 = scmp.eq.s32.totalorder %s40, 1
      %p105 = por %p103, %p104
      %p107 = scmp.ne.s32.totalorder %s90, %s106
      %p108 = scmp.eq.s32.totalorder %s40, 0
      %p109 = por %p107, %p108
      %s111 = sadd.s32 %s110, 1
      %p114 = scmp.eq.s32.totalorder %s34, 1
      %p115 = scmp.ne.s32.totalorder %s110, %s112
      %p116 = scmp.eq.s32.totalorder %s34, 0
      %p117 = por %p115, %p116
      %p118 = scmp.ne.s32.totalorder %s110, %s112
      %p119 = scmp.eq.s32.totalorder %s39, 1
      %p120 = por %p118, %p119
      %p121 = scmp.ne.s32.totalorder %s112, %s113
      %p122 = scmp.eq.s32.totalorder %s39, 0
      %p123 = por %p121, %p122
      %p124 = scmp.ne.s32.totalorder %s112, %s113
      %p125 = scmp.eq.s32.totalorder %s40, 1
      %p126 = por %p124, %p125
      %p128 = scmp.ne.s32.totalorder %s113, %s127
      %p129 = scmp.eq.s32.totalorder %s40, 0
      %p130 = por %p128, %p129
      %s132 = sadd.s32 %s131, 1
      %p135 = scmp.eq.s32.totalorder %s34, 1
      %p136 = scmp.ne.s32.totalorder %s131, %s133
      %p137 = scmp.eq.s32.totalorder %s34, 0
      %p138 = por %p136, %p137
      %p139 = scmp.ne.s32.totalorder %s131, %s133
      %p140 = scmp.eq.s32.totalorder %s39, 1
      %p141 = por %p139, %p140
      %p142 = scmp.ne.s32.totalorder %s133, %s134
      %p143 = scmp.eq.s32.totalorder %s39, 0
      %p144 = por %p142, %p143
      %p145 = scmp.ne.s32.totalorder %s133, %s134
      %p146 = scmp.eq.s32.totalorder %s40, 1
      %p147 = por %p145, %p146
      %p149 = scmp.ne.s32.totalorder %s134, %s148
      %p150 = scmp.eq.s32.totalorder %s40, 0
      %p151 = por %p149, %p150
      %s153 = sadd.s32 %s152, 1
      %p156 = scmp.eq.s32.totalorder %s34, 1
      %p157 = scmp.ne.s32.totalorder %s152, %s154
      %p158 = scmp.eq.s32.totalorder %s34, 0
      %p159 = por %p157, %p158
      %p160 = scmp.ne.s32.totalorder %s152, %s154
      %p161 = scmp.eq.s32.totalorder %s39, 1
      %p162 = por %p160, %p161
      %p163 = scmp.ne.s32.totalorder %s154, %s155
      %p164 = scmp.eq.s32.totalorder %s39, 0
      %p165 = por %p163, %p164
      %p166 = scmp.ne.s32.totalorder %s154, %s155
      %p167 = scmp.eq.s32.totalorder %s40, 1
      %p168 = por %p166, %p167
      %p170 = scmp.ne.s32.totalorder %s155, %s169
      %p171 = scmp.eq.s32.totalorder %s40, 0
      %p172 = por %p170, %p171
      %s174 = sadd.s32 %s173, 1
      %p177 = scmp.eq.s32.totalorder %s34, 1
      %p178 = scmp.ne.s32.totalorder %s173, %s175
      %p179 = scmp.eq.s32.totalorder %s34, 0
      %p180 = por %p178, %p179
      %p181 = scmp.ne.s32.totalorder %s173, %s175
      %p182 = scmp.eq.s32.totalorder %s39, 1
      %p183 = por %p181, %p182
      %p184 = scmp.ne.s32.totalorder %s175, %s176
      %p185 = scmp.eq.s32.totalorder %s39, 0
      %p186 = por %p184, %p185
      %p187 = scmp.ne.s32.totalorder %s175, %s176
      %p188 = scmp.eq.s32.totalorder %s40, 1
      %p189 = por %p187, %p188
      %p191 = scmp.ne.s32.totalorder %s176, %s190
      %p192 = scmp.eq.s32.totalorder %s40, 0
      %p193 = por %p191, %p192
      %s195 = sadd.s32 %s194, 1
      %p198 = scmp.eq.s32.totalorder %s34, 1
      %p199 = scmp.ne.s32.totalorder %s194, %s196
      %p200 = scmp.eq.s32.totalorder %s34, 0
      %p201 = por %p199, %p200
      %p202 = scmp.ne.s32.totalorder %s194, %s196
      %p203 = scmp.eq.s32.totalorder %s39, 1
      %p204 = por %p202, %p203
      %p205 = scmp.ne.s32.totalorder %s196, %s197
      %p206 = scmp.eq.s32.totalorder %s39, 0
      %p207 = por %p205, %p206
      %p208 = scmp.ne.s32.totalorder %s196, %s197
      %p209 = scmp.eq.s32.totalorder %s40, 1
      %p210 = por %p208, %p209
      %p212 = scmp.ne.s32.totalorder %s197, %s211
      %p213 = scmp.eq.s32.totalorder %s40, 0
      %p214 = por %p212, %p213
      %s216 = sadd.s32 %s215, 1
      %p219 = scmp.eq.s32.totalorder %s34, 1
      %p220 = scmp.ne.s32.totalorder %s215, %s217
      %p221 = scmp.eq.s32.totalorder %s34, 0
      %p222 = por %p220, %p221
      %p223 = scmp.ne.s32.totalorder %s215, %s217
      %p224 = scmp.eq.s32.totalorder %s39, 1
      %p225 = por %p223, %p224
      %p226 = scmp.ne.s32.totalorder %s217, %s218
      %p227 = scmp.eq.s32.totalorder %s39, 0
      %p228 = por %p226, %p227
      %p229 = scmp.ne.s32.totalorder %s217, %s218
      %p230 = scmp.eq.s32.totalorder %s40, 1
      %p231 = por %p229, %p230
      %p233 = scmp.ne.s32.totalorder %s218, %s232
      %p234 = scmp.eq.s32.totalorder %s40, 0
      %p235 = por %p233, %p234
      %s237 = sadd.s32 %s236, 1
      %p240 = scmp.eq.s32.totalorder %s34, 1
      %p241 = scmp.ne.s32.totalorder %s236, %s238
      %p242 = scmp.eq.s32.totalorder %s34, 0
      %p243 = por %p241, %p242
      %p244 = scmp.ne.s32.totalorder %s236, %s238
      %p245 = scmp.eq.s32.totalorder %s39, 1
      %p246 = por %p244, %p245
      %p247 = scmp.ne.s32.totalorder %s238, %s239
      %p248 = scmp.eq.s32.totalorder %s39, 0
      %p249 = por %p247, %p248
      %p250 = scmp.ne.s32.totalorder %s238, %s239
      %p251 = scmp.eq.s32.totalorder %s40, 1
      %p252 = por %p250, %p251
      %p254 = scmp.ne.s32.totalorder %s239, %s253
      %p255 = scmp.eq.s32.totalorder %s40, 0
      %p256 = por %p254, %p255
      %s258 = sadd.s32 %s257, 1
      %p261 = scmp.eq.s32.totalorder %s34, 1
      %p262 = scmp.ne.s32.totalorder %s257, %s259
      %p263 = scmp.eq.s32.totalorder %s34, 0
      %p264 = por %p262, %p263
      %p265 = scmp.ne.s32.totalorder %s257, %s259
      %p266 = scmp.eq.s32.totalorder %s39, 1
      %p267 = por %p265, %p266
      %p268 = scmp.ne.s32.totalorder %s259, %s260
      %p269 = scmp.eq.s32.totalorder %s39, 0
      %p270 = por %p268, %p269
      %p271 = scmp.ne.s32.totalorder %s259, %s260
      %p272 = scmp.eq.s32.totalorder %s40, 1
      %p273 = por %p271, %p272
      %p275 = scmp.ne.s32.totalorder %s260, %s274
      %p276 = scmp.eq.s32.totalorder %s40, 0
      %p277 = por %p275, %p276
      %s278 = ssub.s32 %s41, %s53
      %s279 = ssub.s32 %s42, %s49
      %s280 = sor.u32 %s278, %s279
      %p281 = scmp.eq.s32.totalorder %s280, 0
      %s283 = sadd.s32 %s282, 1
      %s284 = scalar_select %p281, %s282, %s283
      %p287 = pneg %p281
      %p288 = scmp.eq.s32.totalorder %s34, 1
      %p289 = por %p287, %p288
      %p290 = scmp.ne.s32.totalorder %s282, %s285
      %p291 = scmp.eq.s32.totalorder %s34, 0
      %p292 = por %p290, %p291
      %p293 = scmp.ne.s32.totalorder %s282, %s285
      %p294 = scmp.eq.s32.totalorder %s39, 1
      %p295 = por %p293, %p294
      %p296 = scmp.ne.s32.totalorder %s285, %s286
      %p297 = scmp.eq.s32.totalorder %s39, 0
      %p298 = por %p296, %p297
      %p299 = scmp.ne.s32.totalorder %s285, %s286
      %p300 = scmp.eq.s32.totalorder %s40, 1
      %p301 = por %p299, %p300
      %p303 = scmp.ne.s32.totalorder %s286, %s302
      %p304 = scmp.eq.s32.totalorder %s40, 0
      %p305 = por %p303, %p304
      %s306 = ssub.s32 %s41, %s53
      %s307 = ssub.s32 %s42, %s49
      %s308 = sor.u32 %s306, %s307
      %p309 = scmp.eq.s32.totalorder %s308, 0
      %s311 = sadd.s32 %s310, 1
      %s312 = scalar_select %p309, %s310, %s311
      %p315 = pneg %p309
      %p316 = scmp.eq.s32.totalorder %s34, 1
      %p317 = por %p315, %p316
      %p318 = scmp.ne.s32.totalorder %s310, %s313
      %p319 = scmp.eq.s32.totalorder %s34, 0
      %p320 = por %p318, %p319
      %p321 = scmp.ne.s32.totalorder %s310, %s313
      %p322 = scmp.eq.s32.totalorder %s39, 1
      %p323 = por %p321, %p322
      %p324 = scmp.ne.s32.totalorder %s313, %s314
      %p325 = scmp.eq.s32.totalorder %s39, 0
      %p326 = por %p324, %p325
      %p327 = scmp.ne.s32.totalorder %s313, %s314
      %p328 = scmp.eq.s32.totalorder %s40, 1
      %p329 = por %p327, %p328
      %p331 = scmp.ne.s32.totalorder %s314, %s330
      %p332 = scmp.eq.s32.totalorder %s40, 0
      %p333 = por %p331, %p332
      %p334 = scmp.le.s32.totalorder 1, %s34
      %p335 = scmp.lt.s32.totalorder %s34, 3
      %p336 = pnand %p334, %p335
      %p337 = pneg %p336
      // Predicated region
      $region9: #{ffab_forward.24} parent=5 // pred_check
        _
      $region10: #{ffab_forward.24} parent=5 // pred_check_branch
        %339 = sbr.rel (%p336) target = $region12
      $region11: #{ffab_forward.24} parent=5 // pred_region
        %s340 = ssub.s32 %s34, 1
        // Predicated region
        $region13: #{ffab_forward.24} parent=11 // pred_check
          %p341 = pneg %p123
        $region14: #{ffab_forward.24} parent=11 // pred_check_branch
          %343 = sbr.rel (%p341) target = $region16
        $region15: #{ffab_forward.24} parent=11 // pred_region
          %s345 = ssub.s32 128, 128
          %346 = vsyncadd [#allocation6], %s345
          %s348 = sshll.u32 [#allocation7], 4
          %s349 = int_to_ptr.vmem [resolvable:$true] %s348
          %351 = dma.hbm_to_vmem [thread:$0]  %s2, 128, %s349, [#allocation6]
        $region16: #{ffab_forward.24} parent=11 // pred_fallthru
          _
        // Predicated region
        $region17: #{ffab_forward.24} parent=11 // pred_check
          %p352 = pneg %p144
        $region18: #{ffab_forward.24} parent=11 // pred_check_branch
          %354 = sbr.rel (%p352) target = $region20
        $region19: #{ffab_forward.24} parent=11 // pred_region
          %s356 = ssub.s32 128, 128
          %357 = vsyncadd [#allocation9], %s356
          %s359 = sshll.u32 [#allocation8], 4
          %s360 = int_to_ptr.vmem [resolvable:$true] %s359
          %362 = dma.hbm_to_vmem [thread:$0]  %s3, 128, %s360, [#allocation9]
        $region20: #{ffab_forward.24} parent=11 // pred_fallthru
          _
        // Predicated region
        $region21: #{ffab_forward.24} parent=11 // pred_check
          %p363 = pneg %p165
        $region22: #{ffab_forward.24} parent=11 // pred_check_branch
          %365 = sbr.rel (%p363) target = $region24
        $region23: #{ffab_forward.24} parent=11 // pred_region
          %s367 = ssub.s32 128, 128
          %368 = vsyncadd [#allocation9], %s367
          %s370 = sshll.u32 [#allocation10], 4
          %s371 = int_to_ptr.vmem [resolvable:$true] %s370
          %373 = dma.hbm_to_vmem [thread:$0]  %s4, 128, %s371, [#allocation9]
        $region24: #{ffab_forward.24} parent=11 // pred_fallthru
          _
        // Predicated region
        $region25: #{ffab_forward.24} parent=11 // pred_check
          %p374 = pneg %p186
        $region26: #{ffab_forward.24} parent=11 // pred_check_branch
          %376 = sbr.rel (%p374) target = $region28
        $region27: #{ffab_forward.24} parent=11 // pred_region
          %s378 = ssub.s32 128, 128
          %379 = vsyncadd [#allocation12], %s378
          %s381 = sshll.u32 [#allocation11], 4
          %s382 = int_to_ptr.vmem [resolvable:$true] %s381
          %384 = dma.hbm_to_vmem [thread:$0]  %s5, 128, %s382, [#allocation12]
        $region28: #{ffab_forward.24} parent=11 // pred_fallthru
          _
        // Predicated region
        $region29: #{ffab_forward.24} parent=11 // pred_check
          %p385 = pneg %p207
        $region30: #{ffab_forward.24} parent=11 // pred_check_branch
          %387 = sbr.rel (%p385) target = $region32
        $region31: #{ffab_forward.24} parent=11 // pred_region
          %s389 = ssub.s32 128, 128
          %390 = vsyncadd [#allocation12], %s389
          %s392 = sshll.u32 [#allocation13], 4
          %s393 = int_to_ptr.vmem [resolvable:$true] %s392
          %395 = dma.hbm_to_vmem [thread:$0]  %s6, 128, %s393, [#allocation12]
        $region32: #{ffab_forward.24} parent=11 // pred_fallthru
          _
        // Predicated region
        $region33: #{ffab_forward.24} parent=11 // pred_check
          %p396 = pneg %p228
        $region34: #{ffab_forward.24} parent=11 // pred_check_branch
          %398 = sbr.rel (%p396) target = $region36
        $region35: #{ffab_forward.24} parent=11 // pred_region
          %s400 = ssub.s32 128, 128
          %401 = vsyncadd [#allocation15], %s400
          %s403 = sshll.u32 [#allocation14], 4
          %s404 = int_to_ptr.vmem [resolvable:$true] %s403
          %406 = dma.hbm_to_vmem [thread:$0]  %s7, 128, %s404, [#allocation15]
        $region36: #{ffab_forward.24} parent=11 // pred_fallthru
          _
        // Predicated region
        $region37: #{ffab_forward.24} parent=11 // pred_check
          %p407 = pneg %p249
        $region38: #{ffab_forward.24} parent=11 // pred_check_branch
          %409 = sbr.rel (%p407) target = $region40
        $region39: #{ffab_forward.24} parent=11 // pred_region
          %s411 = ssub.s32 128, 128
          %412 = vsyncadd [#allocation15], %s411
          %s414 = sshll.u32 [#allocation16], 4
          %s415 = int_to_ptr.vmem [resolvable:$true] %s414
          %417 = dma.hbm_to_vmem [thread:$0]  %s8, 128, %s415, [#allocation15]
        $region40: #{ffab_forward.24} parent=11 // pred_fallthru
          _
        // Predicated region
        $region41: #{ffab_forward.24} parent=11 // pred_check
          %p418 = pneg %p270
        $region42: #{ffab_forward.24} parent=11 // pred_check_branch
          %420 = sbr.rel (%p418) target = $region44
        $region43: #{ffab_forward.24} parent=11 // pred_region
          %s422 = ssub.s32 128, 128
          %423 = vsyncadd [#allocation18], %s422
          %s425 = sshll.u32 [#allocation17], 4
          %s426 = int_to_ptr.vmem [resolvable:$true] %s425
          %428 = dma.hbm_to_vmem [thread:$0]  %s9, 128, %s426, [#allocation18]
        $region44: #{ffab_forward.24} parent=11 // pred_fallthru
          _
      $region12: #{ffab_forward.24} parent=5 // pred_fallthru
        _
      %p429 = scmp.lt.s32.totalorder %s34, 2
      // Predicated region
      $region45: #{ffab_forward.24} parent=5 // pred_check
        %p430 = pneg %p429
      $region46: #{ffab_forward.24} parent=5 // pred_check_branch
        %432 = sbr.rel (%p430) target = $region48
      $region47: #{ffab_forward.24} parent=5 // pred_region
        // Predicated region
        $region49: #{ffab_forward.24} parent=47 // pred_check
          %p433 = pneg %p68
        $region50: #{ffab_forward.24} parent=47 // pred_check_branch
          %435 = sbr.rel (%p433) target = $region52
        $region51: #{ffab_forward.24} parent=47 // pred_region
          %s436 = sand.u32 %s58, 1
          %s437 = scalar_lea.sflag [#allocation3], %s436
          %s438 = sand.u32 %s58, 1
          %s439 = smul.addr %s438, 8
          %s440 = scalar_lea.vmem [#allocation2], %s439
          %s442 = ssub.s32 128, 128
          %443 = vsyncadd %s437, %s442
          %s444 = sadd.s32 %s42, %s41
          %s445 = smul.addr %s444, 128
          %s446 = scalar_lea.hbm %s0, %s445
          %s448 = sshll.u32 %s440, 4
          %s449 = int_to_ptr.vmem [resolvable:$true] %s448
          %451 = dma.hbm_to_vmem [thread:$0]  %s446, 128, %s449, %s437
        $region52: #{ffab_forward.24} parent=47 // pred_fallthru
          _
        // Predicated region
        $region53: #{ffab_forward.24} parent=47 // pred_check
          %p452 = pneg %p96
        $region54: #{ffab_forward.24} parent=47 // pred_check_branch
          %454 = sbr.rel (%p452) target = $region56
        $region55: #{ffab_forward.24} parent=47 // pred_region
          %s455 = sand.u32 %s34, 1
          %s456 = scalar_lea.sflag [#allocation6], %s455
          %s457 = sand.u32 %s86, 1
          %s458 = smul.addr %s457, 8
          %s459 = scalar_lea.vmem [#allocation5], %s458
          %s461 = ssub.s32 128, 128
          %462 = vsyncadd %s456, %s461
          %s463 = sadd.s32 %s42, %s41
          %s464 = smul.addr %s463, 128
          %s465 = scalar_lea.hbm %s1, %s464
          %s467 = sshll.u32 %s459, 4
          %s468 = int_to_ptr.vmem [resolvable:$true] %s467
          %470 = dma.hbm_to_vmem [thread:$0]  %s465, 128, %s468, %s456
        $region56: #{ffab_forward.24} parent=47 // pred_fallthru
          _
      $region48: #{ffab_forward.24} parent=5 // pred_fallthru
        _
      %p471 = scmp.le.s32.totalorder 1, %s34
      %p472 = scmp.lt.s32.totalorder %s34, 3
      %p473 = pnand %p471, %p472
      %p474 = pneg %p473
      // Predicated region
      $region57: #{ffab_forward.24} parent=5 // pred_check
        _
      $region58: #{ffab_forward.24} parent=5 // pred_check_branch
        %476 = sbr.rel (%p473) target = $region60
      $region59: #{ffab_forward.24} parent=5 // pred_region
        %s477 = ssub.s32 %s34, 1
        %s478 = sand.u32 %s61, 1
        %s479 = scalar_lea.sflag [#allocation3], %s478
        %s480 = sand.u32 %s61, 1
        %s481 = smul.addr %s480, 8
        %s482 = scalar_lea.vmem [#allocation2], %s481
        // Predicated region
        $region61: #{ffab_forward.24} parent=59 // pred_check
          %p483 = pneg %p74
        $region62: #{ffab_forward.24} parent=59 // pred_check_branch
          %485 = sbr.rel (%p483) target = $region64
        $region63: #{ffab_forward.24} parent=59 // pred_region
          %486 = dma.done %s479, 128
        $region64: #{ffab_forward.24} parent=59 // pred_fallthru
          _
        %s487 = sand.u32 %s39, 1
        %s488 = scalar_lea.sflag [#allocation6], %s487
        %s489 = sand.u32 %s89, 1
        %s490 = smul.addr %s489, 8
        %s491 = scalar_lea.vmem [#allocation5], %s490
        // Predicated region
        $region65: #{ffab_forward.24} parent=59 // pred_check
          %p492 = pneg %p102
        $region66: #{ffab_forward.24} parent=59 // pred_check_branch
          %494 = sbr.rel (%p492) target = $region68
        $region67: #{ffab_forward.24} parent=59 // pred_region
          %495 = dma.done %s488, 128
        $region68: #{ffab_forward.24} parent=59 // pred_fallthru
          _
        // Predicated region
        $region69: #{ffab_forward.24} parent=59 // pred_check
          %p496 = pneg %p123
        $region70: #{ffab_forward.24} parent=59 // pred_check_branch
          %498 = sbr.rel (%p496) target = $region72
        $region71: #{ffab_forward.24} parent=59 // pred_region
          %499 = dma.done [#allocation6], 128
        $region72: #{ffab_forward.24} parent=59 // pred_fallthru
          _
        // Predicated region
        $region73: #{ffab_forward.24} parent=59 // pred_check
          %p500 = pneg %p144
        $region74: #{ffab_forward.24} parent=59 // pred_check_branch
          %502 = sbr.rel (%p500) target = $region76
        $region75: #{ffab_forward.24} parent=59 // pred_region
          %503 = dma.done [#allocation9], 128
        $region76: #{ffab_forward.24} parent=59 // pred_fallthru
          _
        // Predicated region
        $region77: #{ffab_forward.24} parent=59 // pred_check
          %p504 = pneg %p165
        $region78: #{ffab_forward.24} parent=59 // pred_check_branch
          %506 = sbr.rel (%p504) target = $region80
        $region79: #{ffab_forward.24} parent=59 // pred_region
          %507 = dma.done [#allocation9], 128
        $region80: #{ffab_forward.24} parent=59 // pred_fallthru
          _
        // Predicated region
        $region81: #{ffab_forward.24} parent=59 // pred_check
          %p508 = pneg %p186
        $region82: #{ffab_forward.24} parent=59 // pred_check_branch
          %510 = sbr.rel (%p508) target = $region84
        $region83: #{ffab_forward.24} parent=59 // pred_region
          %511 = dma.done [#allocation12], 128
        $region84: #{ffab_forward.24} parent=59 // pred_fallthru
          _
        // Predicated region
        $region85: #{ffab_forward.24} parent=59 // pred_check
          %p512 = pneg %p207
        $region86: #{ffab_forward.24} parent=59 // pred_check_branch
          %514 = sbr.rel (%p512) target = $region88
        $region87: #{ffab_forward.24} parent=59 // pred_region
          %515 = dma.done [#allocation12], 128
        $region88: #{ffab_forward.24} parent=59 // pred_fallthru
          _
        // Predicated region
        $region89: #{ffab_forward.24} parent=59 // pred_check
          %p516 = pneg %p228
        $region90: #{ffab_forward.24} parent=59 // pred_check_branch
          %518 = sbr.rel (%p516) target = $region92
        $region91: #{ffab_forward.24} parent=59 // pred_region
          %519 = dma.done [#allocation15], 128
        $region92: #{ffab_forward.24} parent=59 // pred_fallthru
          _
        // Predicated region
        $region93: #{ffab_forward.24} parent=59 // pred_check
          %p520 = pneg %p249
        $region94: #{ffab_forward.24} parent=59 // pred_check_branch
          %522 = sbr.rel (%p520) target = $region96
        $region95: #{ffab_forward.24} parent=59 // pred_region
          %523 = dma.done [#allocation15], 128
        $region96: #{ffab_forward.24} parent=59 // pred_fallthru
          _
        // Predicated region
        $region97: #{ffab_forward.24} parent=59 // pred_check
          %p524 = pneg %p270
        $region98: #{ffab_forward.24} parent=59 // pred_check_branch
          %526 = sbr.rel (%p524) target = $region100
        $region99: #{ffab_forward.24} parent=59 // pred_region
          %527 = dma.done [#allocation18], 128
        $region100: #{ffab_forward.24} parent=59 // pred_fallthru
          _
        %s528 = sand.u32 %s61, 1
        %s529 = scalar_lea.sflag [#allocation3], %s528
        %s530 = sand.u32 %s61, 1
        %s531 = smul.addr %s530, 8
        %s532 = scalar_lea.vmem [#allocation2], %s531
        %p533 = pneg %p74
        %p534 = pneg %p71
        %s535 = sand.u32 %s39, 1
        %s536 = scalar_lea.sflag [#allocation6], %s535
        %s537 = sand.u32 %s89, 1
        %s538 = smul.addr %s537, 8
        %s539 = scalar_lea.vmem [#allocation5], %s538
        %p540 = pneg %p102
        %p541 = pneg %p99
        %p542 = pneg %p123
        %p543 = pneg %p120
        %p544 = pneg %p144
        %p545 = pneg %p141
        %p546 = pneg %p165
        %p547 = pneg %p162
        %p548 = pneg %p186
        %p549 = pneg %p183
        %p550 = pneg %p207
        %p551 = pneg %p204
        %p552 = pneg %p228
        %p553 = pneg %p225
        %p554 = pneg %p249
        %p555 = pneg %p246
        %p556 = pneg %p270
        %p557 = pneg %p267
        %p558 = pneg %p298
        %p559 = pneg %p295
        %s560 = sand.u32 %s285, 1
        %s561 = scalar_lea.sflag [#allocation4], %s560
        %s562 = sand.u32 %s285, 1
        %s563 = smul.addr %s562, 8
        %s564 = scalar_lea.vmem [#allocation19], %s563
        %p565 = pneg %p326
        %p566 = pneg %p323
        %s567 = sand.u32 %s313, 1
        %s568 = scalar_lea.sflag [#allocation21], %s567
        %s569 = sand.u32 %s313, 1
        %s570 = smul.addr %s569, 8
        %s571 = scalar_lea.vmem [#allocation20], %s570
        %v572 = vld [vmem:[%s482] sm:$0xff]
        %v573 = vld [vmem:[%s491] sm:$0xff]
        %v574 = vmul.f32 %v572, %v572
        %v575 = vmul.f32 %v573, %v573
        %v576 = vadd.f32 %v574, %v575
        %v577 = vrsqrt.pop %v576
        %v578 = vmul.f32 %v576, %v577
        %vm579 = vcmp.eq.f32.partialorder %v576, inf
        %v580 = vsel %vm579, %v576, %v578
        %vm581 = vcmp.eq.f32.partialorder %v576, 0.0
        %v582 = vand.u32 %v576, 2147483648
        %v583 = vsel %vm581, %v582, %v580
        %v584 = vadd.f32 %v583, 1e-06
        %v585 = vand.u32 2147483647, %v572
        %v586 = vand.u32 2147483647, %v573
        %v587 = vmin.f32 %v585, %v586
        %v588 = vmax.f32 %v585, %v586
        %v589 = vrcp.pop %v588
        %v590 = vmul.f32 %v587, %v589
        %v591 = vmul.f32 %v590, %v590
        %v592 = vmul.f32 0.002785687, %v591
        %v593 = vadd.f32 %v592, -0.015866
        %v594 = vmul.f32 %v593, %v591
        %v595 = vadd.f32 %v594, 0.04247222
        %v596 = vmul.f32 %v595, %v591
        %v597 = vadd.f32 %v596, -0.074975304
        %v598 = vmul.f32 %v597, %v591
        %v599 = vadd.f32 %v598, 0.1064488
        %v600 = vmul.f32 %v599, %v591
        %v601 = vadd.f32 %v600, -0.14207031
        %v602 = vmul.f32 %v601, %v591
        %v603 = vadd.f32 %v602, 0.19993454
        %v604 = vmul.f32 %v603, %v591
        %v605 = vadd.f32 %v604, -0.33333147
        %v606 = vmul.f32 %v605, %v591
        %v607 = vmul.f32 %v606, %v590
        %v608 = vadd.f32 %v607, %v590
        %vm609 = vcmp.gt.f32.partialorder %v586, %v585
        %v610 = vsub.f32 1.5707964, %v608
        %v611 = vsel %vm609, %v610, %v608
        %vm612 = vcmp.lt.f32.partialorder %v572, 0.0
        %v613 = vsub.f32 3.1415927, %v611
        %v614 = vsel %vm612, %v613, %v611
        %vm615 = vcmp.lt.s32.totalorder %v572, 0
        %v616 = vsel %vm615, 3.1415927, 0.0
        %vm617 = vcmp.eq.f32.partialorder %v573, 0.0
        %v618 = vsel %vm617, %v616, %v614
        %vm619 = vcmp.ne.f32.partialorder %v572, %v572
        %vm620 = vcmp.ne.f32.partialorder %v573, %v573
        %vm621 = vmor %vm619, %vm620
        %v622 = vsel %vm621, nan, %v618
        %vm623 = vcmp.lt.f32.partialorder %v572, 0.0
        %v624 = vsel %vm623, 2.3561945, 0.7853982
        %vm625 = vcmp.eq.s32.totalorder %v585, inf
        %vm626 = vcmp.eq.s32.totalorder %v586, inf
        %vm627 = vmand %vm625, %vm626
        %v628 = vsel %vm627, %v624, %v622
        %v629 = vand.u32 2147483647, %v628
        %v630 = vand.u32 %v573, 2147483648
        %v631 = vor.u32 %v629, %v630
        %v632 = vld [vmem:[#allocation13] sm:$0xff]
        %634 = vset.pattern.permute.xlu0 0
        %635 = vperm.xlu0 %634, %v632
        %v636 = vpop.permute.xlu0 %635
        %v638 = vlaneseq
        %v639 = vshrl.u32 %v638, 7
        %v640 = vsub.s32 0, %v639
        %v641 = vrot.slane %v631, %v640
        %v642 = vmul.f32 %v636, %v641
        %643 = vset.pattern.permute.xlu0 1
        %644 = vperm.xlu0 %643, %v632
        %v645 = vpop.permute.xlu0 %644
        %v647 = vlaneseq
        %v648 = vshrl.u32 %v647, 7
        %v649 = vsub.s32 1, %v648
        %v650 = vrot.slane %v631, %v649
        %v651 = vmul.f32 %v645, %v650
        %v652 = vadd.f32 %v642, %v651
        %653 = vset.pattern.permute.xlu0 2
        %654 = vperm.xlu0 %653, %v632
        %v655 = vpop.permute.xlu0 %654
        %v657 = vlaneseq
        %v658 = vshrl.u32 %v657, 7
        %v659 = vsub.s32 2, %v658
        %v660 = vrot.slane %v631, %v659
        %v661 = vmul.f32 %v655, %v660
        %v662 = vadd.f32 %v652, %v661
        %663 = vset.pattern.permute.xlu0 3
        %664 = vperm.xlu0 %663, %v632
        %v665 = vpop.permute.xlu0 %664
        %v667 = vlaneseq
        %v668 = vshrl.u32 %v667, 7
        %v669 = vsub.s32 3, %v668
        %v670 = vrot.slane %v631, %v669
        %v671 = vmul.f32 %v665, %v670
        %v672 = vadd.f32 %v662, %v671
        %673 = vset.pattern.permute.xlu0 4
        %674 = vperm.xlu0 %673, %v632
        %v675 = vpop.permute.xlu0 %674
        %v677 = vlaneseq
        %v678 = vshrl.u32 %v677, 7
        %v679 = vsub.s32 4, %v678
        %v680 = vrot.slane %v631, %v679
        %v681 = vmul.f32 %v675, %v680
        %v682 = vadd.f32 %v672, %v681
        %683 = vset.pattern.permute.xlu0 5
        %684 = vperm.xlu0 %683, %v632
        %v685 = vpop.permute.xlu0 %684
        %v687 = vlaneseq
        %v688 = vshrl.u32 %v687, 7
        %v689 = vsub.s32 5, %v688
        %v690 = vrot.slane %v631, %v689
        %v691 = vmul.f32 %v685, %v690
        %v692 = vadd.f32 %v682, %v691
        %693 = vset.pattern.permute.xlu0 6
        %694 = vperm.xlu0 %693, %v632
        %v695 = vpop.permute.xlu0 %694
        %v697 = vlaneseq
        %v698 = vshrl.u32 %v697, 7
        %v699 = vsub.s32 6, %v698
        %v700 = vrot.slane %v631, %v699
        %v701 = vmul.f32 %v695, %v700
        %v702 = vadd.f32 %v692, %v701
        %703 = vset.pattern.permute.xlu0 7
        %704 = vperm.xlu0 %703, %v632
        %v705 = vpop.permute.xlu0 %704
        %v707 = vlaneseq
        %v708 = vshrl.u32 %v707, 7
        %v709 = vsub.s32 7, %v708
        %v710 = vrot.slane %v631, %v709
        %v711 = vmul.f32 %v705, %v710
        %v712 = vadd.f32 %v702, %v711
        %v713 = vld [vmem:[#allocation14] sm:$0xff]
        %715 = vset.pattern.permute.xlu0 0
        %716 = vperm.xlu0 %715, %v713
        %v717 = vpop.permute.xlu0 %716
        %v719 = vadd.f32 %v712, %v717
        %vm720 = vcmp.ge.f32.partialorder %v719, 0.0
        %v721 = vmul.f32 %v719, 0.1
        %v722 = vsel %vm720, %v719, %v721
        %v723 = vld [vmem:[#allocation16] sm:$0xff]
        %725 = vset.pattern.permute.xlu0 0
        %726 = vperm.xlu0 %725, %v723
        %v727 = vpop.permute.xlu0 %726
        %v729 = vlaneseq
        %v730 = vshrl.u32 %v729, 7
        %v731 = vsub.s32 0, %v730
        %v732 = vrot.slane %v722, %v731
        %v733 = vmul.f32 %v727, %v732
        %734 = vset.pattern.permute.xlu0 1
        %735 = vperm.xlu0 %734, %v723
        %v736 = vpop.permute.xlu0 %735
        %v738 = vlaneseq
        %v739 = vshrl.u32 %v738, 7
        %v740 = vsub.s32 1, %v739
        %v741 = vrot.slane %v722, %v740
        %v742 = vmul.f32 %v736, %v741
        %v743 = vadd.f32 %v733, %v742
        %744 = vset.pattern.permute.xlu0 2
        %745 = vperm.xlu0 %744, %v723
        %v746 = vpop.permute.xlu0 %745
        %v748 = vlaneseq
        %v749 = vshrl.u32 %v748, 7
        %v750 = vsub.s32 2, %v749
        %v751 = vrot.slane %v722, %v750
        %v752 = vmul.f32 %v746, %v751
        %v753 = vadd.f32 %v743, %v752
        %754 = vset.pattern.permute.xlu0 3
        %755 = vperm.xlu0 %754, %v723
        %v756 = vpop.permute.xlu0 %755
        %v758 = vlaneseq
        %v759 = vshrl.u32 %v758, 7
        %v760 = vsub.s32 3, %v759
        %v761 = vrot.slane %v722, %v760
        %v762 = vmul.f32 %v756, %v761
        %v763 = vadd.f32 %v753, %v762
        %764 = vset.pattern.permute.xlu0 4
        %765 = vperm.xlu0 %764, %v723
        %v766 = vpop.permute.xlu0 %765
        %v768 = vlaneseq
        %v769 = vshrl.u32 %v768, 7
        %v770 = vsub.s32 4, %v769
        %v771 = vrot.slane %v722, %v770
        %v772 = vmul.f32 %v766, %v771
        %v773 = vadd.f32 %v763, %v772
        %774 = vset.pattern.permute.xlu0 5
        %775 = vperm.xlu0 %774, %v723
        %v776 = vpop.permute.xlu0 %775
        %v778 = vlaneseq
        %v779 = vshrl.u32 %v778, 7
        %v780 = vsub.s32 5, %v779
        %v781 = vrot.slane %v722, %v780
        %v782 = vmul.f32 %v776, %v781
        %v783 = vadd.f32 %v773, %v782
        %784 = vset.pattern.permute.xlu0 6
        %785 = vperm.xlu0 %784, %v723
        %v786 = vpop.permute.xlu0 %785
        %v788 = vlaneseq
        %v789 = vshrl.u32 %v788, 7
        %v790 = vsub.s32 6, %v789
        %v791 = vrot.slane %v722, %v790
        %v792 = vmul.f32 %v786, %v791
        %v793 = vadd.f32 %v783, %v792
        %794 = vset.pattern.permute.xlu0 7
        %795 = vperm.xlu0 %794, %v723
        %v796 = vpop.permute.xlu0 %795
        %v798 = vlaneseq
        %v799 = vshrl.u32 %v798, 7
        %v800 = vsub.s32 7, %v799
        %v801 = vrot.slane %v722, %v800
        %v802 = vmul.f32 %v796, %v801
        %v803 = vadd.f32 %v793, %v802
        %v804 = vld [vmem:[#allocation17] sm:$0xff]
        %806 = vset.pattern.permute.xlu0 0
        %807 = vperm.xlu0 %806, %v804
        %v808 = vpop.permute.xlu0 %807
        %v810 = vadd.f32 %v803, %v808
        %v811 = vand.u32 2147483647, %v810
        %vm812 = vcmp.le.f32.partialorder %v811, 0.7853982
        %vm813 = vcmp.lt.s32.totalorder %v810, 0
        %v814 = vand.u32 %v810, 2139095040
        %v815 = vshrl.u32 %v814, 23
        %v816 = vsub.s32 %v815, 127
        %v817 = vand.u32 2147483647, %v810
        %v818 = vand.u32 %v817, 8388607
        %v819 = vor.u32 %v818, 8388608
        %v820 = vsub.s32 0, %v819
        %v821 = vadd.s32 %v816, 1
        %vm822 = vcmp.gt.s32.totalorder %v821, 0
        %v823 = vsel %vm822, %v821, 0
        %v824 = vshrl.u32 %v823, 5
        %v825 = vand.u32 %v823, 31
        %v826 = vsub.s32 32, %v825
        %v827 = vshrl.u32 683565275, %v826
        %v828 = vshll.u32 683565275, %v825
        %v829 = vshrl.u32 2475754826, %v826
        %v830 = vor.u32 %v828, %v829
        %v831 = vshll.u32 2475754826, %v825
        %v832 = vshrl.u32 2131351028, %v826
        %v833 = vor.u32 %v831, %v832
        %v834 = vshll.u32 2131351028, %v825
        %v835 = vshrl.u32 2102212464, %v826
        %v836 = vor.u32 %v834, %v835
        %v837 = vshll.u32 2102212464, %v825
        %v838 = vshrl.u32 920167782, %v826
        %v839 = vor.u32 %v837, %v838
        %v840 = vshll.u32 920167782, %v825
        %v841 = vshrl.u32 1326507024, %v826
        %v842 = vor.u32 %v840, %v841
        %vm843 = vcmp.lt.s32.totalorder %v824, 1
        %vm844 = vcmp.lt.s32.totalorder %v824, 2
        %vm845 = vcmp.lt.s32.totalorder %v824, 3
        %vm846 = vcmp.lt.s32.totalorder %v824, 4
        %v847 = vsel %vm843, %v827, %v830
        %v848 = vsel %vm846, %v836, 2102212464
        %v849 = vsel %vm845, %v833, %v848
        %v850 = vsel %vm844, %v847, %v849
        %v851 = vsel %vm843, %v830, %v833
        %v852 = vsel %vm846, %v839, 920167782
        %v853 = vsel %vm845, %v836, %v852
        %v854 = vsel %vm844, %v851, %v853
        %v855 = vsel %vm843, %v833, %v836
        %v856 = vsel %vm846, %v842, 1326507024
        %v857 = vsel %vm845, %v839, %v856
        %v858 = vsel %vm844, %v855, %v857
        %v859 = vshll.u32 %v819, 8
        %v860 = vmul.u32.u64.compose %v859, %v858
        %v861 = vextract.low.u32 %v860
        %v862 = vextract.high.u32 %v860
        %v863 = vmul.u32.u64.compose %v859, %v854
        %v864 = vextract.low.u32 %v863
        %v865 = vextract.high.u32 %v863
        %v866 = vmul.u32 %v859, %v850
        %v867 = vadd.s32 %v862, %v864
        %vm868 = vc.u32 %v862, %v864
        %v869 = vadd.s32 %v865, 1
        %v870 = vsel %vm868, %v869, %v865
        %v871 = vadd.s32 %v866, %v870
        %v872 = vadd.s32 %v871, 536870912
        %v873 = vshrl.u32 %v872, 30
        %v874 = vshll.u32 %v873, 30
        %v875 = vsub.s32 %v871, %v874
        %vm876 = vcmp.lt.s32.totalorder %v875, 0
        %v877 = vsub.s32 0, %v875
        %v878 = vsel %vm876, %v877, %v875
        %v879 = vclz %v878
        %v880 = vsub.s32 %v879, 2
        %vm881 = vcmp.gt.s32.totalorder 0, %v880
        %v882 = vsel %vm881, 0, %v880
        %v883 = vsub.s32 32, %v882
        %v884 = vshll.u32 %v875, %v882
        %v885 = vshrl.u32 %v867, %v883
        %v886 = vor.u32 %v884, %v885
        %v887 = vsub.s32 4294967266, %v882
        %v888 = vadd.s32 %v887, 127
        %v889 = vshll.u32 %v888, 23
        %v890 = vor.u32 4788187, %v889
        %v891 = vand.u32 2147483647, %v890
        %v893 = vcvt.s32.f32 %v886
        %v894 = vmul.f32 %v893, %v891
        %v895 = vxor.u32 %v894, 2147483648
        %v896 = vsel %vm813, %v895, %v894
        %v897 = vsub.s32 4, %v873
        %v898 = vsel %vm813, %v897, %v873
        %v899 = vsel %vm812, %v810, %v896
        %v900 = vsel %vm812, 0, %v898
        %v901 = vcosq.f32.pop %v899
        %v902 = vsinq.f32.pop %v899
        %vm903 = vweird.f32 %v810
        %v904 = vand.u32 %v900, 3
        %vm905 = vcmp.lt.s32.totalorder %v904, 2
        %vm906 = vcmp.eq.s32.totalorder %v904, 0
        %v907 = vxor.u32 %v902, 2147483648
        %v908 = vsel %vm906, %v901, %v907
        %vm909 = vcmp.eq.s32.totalorder %v904, 2
        %v910 = vxor.u32 %v901, 2147483648
        %v911 = vsel %vm909, %v910, %v902
        %v912 = vsel %vm905, %v908, %v911
        %v913 = vsel %vm903, nan, %v912
        %v914 = vand.u32 2147483647, %v810
        %vm915 = vcmp.le.f32.partialorder %v914, 0.7853982
        %vm916 = vcmp.lt.s32.totalorder %v810, 0
        %v917 = vand.u32 %v810, 2139095040
        %v918 = vshrl.u32 %v917, 23
        %v919 = vsub.s32 %v918, 127
        %v920 = vand.u32 2147483647, %v810
        %v921 = vand.u32 %v920, 8388607
        %v922 = vor.u32 %v921, 8388608
        %v923 = vsub.s32 0, %v922
        %v924 = vadd.s32 %v919, 1
        %vm925 = vcmp.gt.s32.totalorder %v924, 0
        %v926 = vsel %vm925, %v924, 0
        %v927 = vshrl.u32 %v926, 5
        %v928 = vand.u32 %v926, 31
        %v929 = vsub.s32 32, %v928
        %v930 = vshrl.u32 683565275, %v929
        %v931 = vshll.u32 683565275, %v928
        %v932 = vshrl.u32 2475754826, %v929
        %v933 = vor.u32 %v931, %v932
        %v934 = vshll.u32 2475754826, %v928
        %v935 = vshrl.u32 2131351028, %v929
        %v936 = vor.u32 %v934, %v935
        %v937 = vshll.u32 2131351028, %v928
        %v938 = vshrl.u32 2102212464, %v929
        %v939 = vor.u32 %v937, %v938
        %v940 = vshll.u32 2102212464, %v928
        %v941 = vshrl.u32 920167782, %v929
        %v942 = vor.u32 %v940, %v941
        %v943 = vshll.u32 920167782, %v928
        %v944 = vshrl.u32 1326507024, %v929
        %v945 = vor.u32 %v943, %v944
        %vm946 = vcmp.lt.s32.totalorder %v927, 1
        %vm947 = vcmp.lt.s32.totalorder %v927, 2
        %vm948 = vcmp.lt.s32.totalorder %v927, 3
        %vm949 = vcmp.lt.s32.totalorder %v927, 4
        %v950 = vsel %vm946, %v930, %v933
        %v951 = vsel %vm949, %v939, 2102212464
        %v952 = vsel %vm948, %v936, %v951
        %v953 = vsel %vm947, %v950, %v952
        %v954 = vsel %vm946, %v933, %v936
        %v955 = vsel %vm949, %v942, 920167782
        %v956 = vsel %vm948, %v939, %v955
        %v957 = vsel %vm947, %v954, %v956
        %v958 = vsel %vm946, %v936, %v939
        %v959 = vsel %vm949, %v945, 1326507024
        %v960 = vsel %vm948, %v942, %v959
        %v961 = vsel %vm947, %v958, %v960
        %v962 = vshll.u32 %v922, 8
        %v963 = vmul.u32.u64.compose %v962, %v961
        %v964 = vextract.low.u32 %v963
        %v965 = vextract.high.u32 %v963
        %v966 = vmul.u32.u64.compose %v962, %v957
        %v967 = vextract.low.u32 %v966
        %v968 = vextract.high.u32 %v966
        %v969 = vmul.u32 %v962, %v953
        %v970 = vadd.s32 %v965, %v967
        %vm971 = vc.u32 %v965, %v967
        %v972 = vadd.s32 %v968, 1
        %v973 = vsel %vm971, %v972, %v968
        %v974 = vadd.s32 %v969, %v973
        %v975 = vadd.s32 %v974, 536870912
        %v976 = vshrl.u32 %v975, 30
        %v977 = vshll.u32 %v976, 30
        %v978 = vsub.s32 %v974, %v977
        %vm979 = vcmp.lt.s32.totalorder %v978, 0
        %v980 = vsub.s32 0, %v978
        %v981 = vsel %vm979, %v980, %v978
        %v982 = vclz %v981
        %v983 = vsub.s32 %v982, 2
        %vm984 = vcmp.gt.s32.totalorder 0, %v983
        %v985 = vsel %vm984, 0, %v983
        %v986 = vsub.s32 32, %v985
        %v987 = vshll.u32 %v978, %v985
        %v988 = vshrl.u32 %v970, %v986
        %v989 = vor.u32 %v987, %v988
        %v990 = vsub.s32 4294967266, %v985
        %v991 = vadd.s32 %v990, 127
        %v992 = vshll.u32 %v991, 23
        %v993 = vor.u32 4788187, %v992
        %v994 = vand.u32 2147483647, %v993
        %v996 = vcvt.s32.f32 %v989
        %v997 = vmul.f32 %v996, %v994
        %v998 = vxor.u32 %v997, 2147483648
        %v999 = vsel %vm916, %v998, %v997
        %v1000 = vsub.s32 4, %v976
        %v1001 = vsel %vm916, %v1000, %v976
        %v1002 = vsel %vm915, %v810, %v999
        %v1003 = vsel %vm915, 0, %v1001
        %v1004 = vcosq.f32.pop %v1002
        %v1005 = vsinq.f32.pop %v1002
        %vm1006 = vweird.f32 %v810
        %v1007 = vadd.s32 %v1003, 3
        %v1008 = vand.u32 %v1007, 3
        %vm1009 = vcmp.lt.s32.totalorder %v1008, 2
        %vm1010 = vcmp.eq.s32.totalorder %v1008, 0
        %v1011 = vxor.u32 %v1005, 2147483648
        %v1012 = vsel %vm1010, %v1004, %v1011
        %vm1013 = vcmp.eq.s32.totalorder %v1008, 2
        %v1014 = vxor.u32 %v1004, 2147483648
        %v1015 = vsel %vm1013, %v1014, %v1005
        %v1016 = vsel %vm1009, %v1012, %v1015
        %v1017 = vsel %vm1006, nan, %v1016
        %v1018 = vld [vmem:[#allocation7] sm:$0xff]
        %1020 = vset.pattern.permute.xlu0 0
        %1021 = vperm.xlu0 %1020, %v1018
        %v1022 = vpop.permute.xlu0 %1021
        %v1024 = vlaneseq
        %v1025 = vshrl.u32 %v1024, 7
        %v1026 = vsub.s32 0, %v1025
        %v1027 = vrot.slane %v584, %v1026
        %v1028 = vmul.f32 %v1022, %v1027
        %1029 = vset.pattern.permute.xlu0 1
        %1030 = vperm.xlu0 %1029, %v1018
        %v1031 = vpop.permute.xlu0 %1030
        %v1033 = vlaneseq
        %v1034 = vshrl.u32 %v1033, 7
        %v1035 = vsub.s32 1, %v1034
        %v1036 = vrot.slane %v584, %v1035
        %v1037 = vmul.f32 %v1031, %v1036
        %v1038 = vadd.f32 %v1028, %v1037
        %1039 = vset.pattern.permute.xlu0 2
        %1040 = vperm.xlu0 %1039, %v1018
        %v1041 = vpop.permute.xlu0 %1040
        %v1043 = vlaneseq
        %v1044 = vshrl.u32 %v1043, 7
        %v1045 = vsub.s32 2, %v1044
        %v1046 = vrot.slane %v584, %v1045
        %v1047 = vmul.f32 %v1041, %v1046
        %v1048 = vadd.f32 %v1038, %v1047
        %1049 = vset.pattern.permute.xlu0 3
        %1050 = vperm.xlu0 %1049, %v1018
        %v1051 = vpop.permute.xlu0 %1050
        %v1053 = vlaneseq
        %v1054 = vshrl.u32 %v1053, 7
        %v1055 = vsub.s32 3, %v1054
        %v1056 = vrot.slane %v584, %v1055
        %v1057 = vmul.f32 %v1051, %v1056
        %v1058 = vadd.f32 %v1048, %v1057
        %1059 = vset.pattern.permute.xlu0 4
        %1060 = vperm.xlu0 %1059, %v1018
        %v1061 = vpop.permute.xlu0 %1060
        %v1063 = vlaneseq
        %v1064 = vshrl.u32 %v1063, 7
        %v1065 = vsub.s32 4, %v1064
        %v1066 = vrot.slane %v584, %v1065
        %v1067 = vmul.f32 %v1061, %v1066
        %v1068 = vadd.f32 %v1058, %v1067
        %1069 = vset.pattern.permute.xlu0 5
        %1070 = vperm.xlu0 %1069, %v1018
        %v1071 = vpop.permute.xlu0 %1070
        %v1073 = vlaneseq
        %v1074 = vshrl.u32 %v1073, 7
        %v1075 = vsub.s32 5, %v1074
        %v1076 = vrot.slane %v584, %v1075
        %v1077 = vmul.f32 %v1071, %v1076
        %v1078 = vadd.f32 %v1068, %v1077
        %1079 = vset.pattern.permute.xlu0 6
        %1080 = vperm.xlu0 %1079, %v1018
        %v1081 = vpop.permute.xlu0 %1080
        %v1083 = vlaneseq
        %v1084 = vshrl.u32 %v1083, 7
        %v1085 = vsub.s32 6, %v1084
        %v1086 = vrot.slane %v584, %v1085
        %v1087 = vmul.f32 %v1081, %v1086
        %v1088 = vadd.f32 %v1078, %v1087
        %1089 = vset.pattern.permute.xlu0 7
        %1090 = vperm.xlu0 %1089, %v1018
        %v1091 = vpop.permute.xlu0 %1090
        %v1093 = vlaneseq
        %v1094 = vshrl.u32 %v1093, 7
        %v1095 = vsub.s32 7, %v1094
        %v1096 = vrot.slane %v584, %v1095
        %v1097 = vmul.f32 %v1091, %v1096
        %v1098 = vadd.f32 %v1088, %v1097
        %v1099 = vld [vmem:[#allocation8] sm:$0xff]
        %1101 = vset.pattern.permute.xlu0 0
        %1102 = vperm.xlu0 %1101, %v1099
        %v1103 = vpop.permute.xlu0 %1102
        %v1105 = vadd.f32 %v1098, %v1103
        %vm1106 = vcmp.ge.f32.partialorder %v1105, 0.0
        %v1107 = vmul.f32 %v1105, 0.1
        %v1108 = vsel %vm1106, %v1105, %v1107
        %v1109 = vld [vmem:[#allocation10] sm:$0xff]
        %1111 = vset.pattern.permute.xlu0 0
        %1112 = vperm.xlu0 %1111, %v1109
        %v1113 = vpop.permute.xlu0 %1112
        %v1115 = vlaneseq
        %v1116 = vshrl.u32 %v1115, 7
        %v1117 = vsub.s32 0, %v1116
        %v1118 = vrot.slane %v1108, %v1117
        %v1119 = vmul.f32 %v1113, %v1118
        %1120 = vset.pattern.permute.xlu0 1
        %1121 = vperm.xlu0 %1120, %v1109
        %v1122 = vpop.permute.xlu0 %1121
        %v1124 = vlaneseq
        %v1125 = vshrl.u32 %v1124, 7
        %v1126 = vsub.s32 1, %v1125
        %v1127 = vrot.slane %v1108, %v1126
        %v1128 = vmul.f32 %v1122, %v1127
        %v1129 = vadd.f32 %v1119, %v1128
        %1130 = vset.pattern.permute.xlu0 2
        %1131 = vperm.xlu0 %1130, %v1109
        %v1132 = vpop.permute.xlu0 %1131
        %v1134 = vlaneseq
        %v1135 = vshrl.u32 %v1134, 7
        %v1136 = vsub.s32 2, %v1135
        %v1137 = vrot.slane %v1108, %v1136
        %v1138 = vmul.f32 %v1132, %v1137
        %v1139 = vadd.f32 %v1129, %v1138
        %1140 = vset.pattern.permute.xlu0 3
        %1141 = vperm.xlu0 %1140, %v1109
        %v1142 = vpop.permute.xlu0 %1141
        %v1144 = vlaneseq
        %v1145 = vshrl.u32 %v1144, 7
        %v1146 = vsub.s32 3, %v1145
        %v1147 = vrot.slane %v1108, %v1146
        %v1148 = vmul.f32 %v1142, %v1147
        %v1149 = vadd.f32 %v1139, %v1148
        %1150 = vset.pattern.permute.xlu0 4
        %1151 = vperm.xlu0 %1150, %v1109
        %v1152 = vpop.permute.xlu0 %1151
        %v1154 = vlaneseq
        %v1155 = vshrl.u32 %v1154, 7
        %v1156 = vsub.s32 4, %v1155
        %v1157 = vrot.slane %v1108, %v1156
        %v1158 = vmul.f32 %v1152, %v1157
        %v1159 = vadd.f32 %v1149, %v1158
        %1160 = vset.pattern.permute.xlu0 5
        %1161 = vperm.xlu0 %1160, %v1109
        %v1162 = vpop.permute.xlu0 %1161
        %v1164 = vlaneseq
        %v1165 = vshrl.u32 %v1164, 7
        %v1166 = vsub.s32 5, %v1165
        %v1167 = vrot.slane %v1108, %v1166
        %v1168 = vmul.f32 %v1162, %v1167
        %v1169 = vadd.f32 %v1159, %v1168
        %1170 = vset.pattern.permute.xlu0 6
        %1171 = vperm.xlu0 %1170, %v1109
        %v1172 = vpop.permute.xlu0 %1171
        %v1174 = vlaneseq
        %v1175 = vshrl.u32 %v1174, 7
        %v1176 = vsub.s32 6, %v1175
        %v1177 = vrot.slane %v1108, %v1176
        %v1178 = vmul.f32 %v1172, %v1177
        %v1179 = vadd.f32 %v1169, %v1178
        %1180 = vset.pattern.permute.xlu0 7
        %1181 = vperm.xlu0 %1180, %v1109
        %v1182 = vpop.permute.xlu0 %1181
        %v1184 = vlaneseq
        %v1185 = vshrl.u32 %v1184, 7
        %v1186 = vsub.s32 7, %v1185
        %v1187 = vrot.slane %v1108, %v1186
        %v1188 = vmul.f32 %v1182, %v1187
        %v1189 = vadd.f32 %v1179, %v1188
        %v1190 = vld [vmem:[#allocation11] sm:$0xff]
        %1192 = vset.pattern.permute.xlu0 0
        %1193 = vperm.xlu0 %1192, %v1190
        %v1194 = vpop.permute.xlu0 %1193
        %v1196 = vadd.f32 %v1189, %v1194
        %v1197 = vmax.f32 %v1196, 0.0
        %v1198 = vmin.f32 %v1197, 10000.0
        %v1199 = vmul.f32 %v1198, %v913
        %1200 = vst [vmem:[%s564] sm:$0xff] %v1199
        %v1201 = vmul.f32 %v1198, %v1017
        %1202 = vst [vmem:[%s571] sm:$0xff] %v1201
        %s1203 = sand.u32 %s285, 1
        %s1204 = scalar_lea.sflag [#allocation4], %s1203
        %s1205 = sand.u32 %s285, 1
        %s1206 = smul.addr %s1205, 8
        %s1207 = scalar_lea.vmem [#allocation19], %s1206
        %s1208 = sand.u32 %s313, 1
        %s1209 = scalar_lea.sflag [#allocation21], %s1208
        %s1210 = sand.u32 %s313, 1
        %s1211 = smul.addr %s1210, 8
        %s1212 = scalar_lea.vmem [#allocation20], %s1211
        // Predicated region
        $region101: #{ffab_forward.24} parent=59 // pred_check
          %p1213 = pneg %p295
        $region102: #{ffab_forward.24} parent=59 // pred_check_branch
          %1215 = sbr.rel (%p1213) target = $region104
        $region103: #{ffab_forward.24} parent=59 // pred_region
          %s1217 = ssub.s32 128, 128
          %1218 = vsyncadd %s1204, %s1217
          %s1219 = sadd.s32 %s44, %s43
          %s1220 = smul.addr %s1219, 128
          %s1221 = scalar_lea.hbm %s10, %s1220
          %s1223 = sshll.u32 %s1207, 4
          %s1224 = int_to_ptr.vmem [resolvable:$true] %s1223
          %1226 = dma.vmem_to_hbm [thread:$0]  %s1224, 128, %s1221, %s1204
        $region104: #{ffab_forward.24} parent=59 // pred_fallthru
          _
        // Predicated region
        $region105: #{ffab_forward.24} parent=59 // pred_check
          %p1227 = pneg %p323
        $region106: #{ffab_forward.24} parent=59 // pred_check_branch
          %1229 = sbr.rel (%p1227) target = $region108
        $region107: #{ffab_forward.24} parent=59 // pred_region
          %s1231 = ssub.s32 128, 128
          %1232 = vsyncadd %s1209, %s1231
          %s1233 = sadd.s32 %s44, %s43
          %s1234 = smul.addr %s1233, 128
          %s1235 = scalar_lea.hbm %s11, %s1234
          %s1237 = sshll.u32 %s1212, 4
          %s1238 = int_to_ptr.vmem [resolvable:$true] %s1237
          %1240 = dma.vmem_to_hbm [thread:$0]  %s1238, 128, %s1235, %s1209
        $region108: #{ffab_forward.24} parent=59 // pred_fallthru
          _
      $region60: #{ffab_forward.24} parent=5 // pred_fallthru
        _
      %p1241 = scmp.le.s32.totalorder 2, %s34
      // Predicated region
      $region109: #{ffab_forward.24} parent=5 // pred_check
        %p1242 = pneg %p1241
      $region110: #{ffab_forward.24} parent=5 // pred_check_branch
        %1244 = sbr.rel (%p1242) target = $region112
      $region111: #{ffab_forward.24} parent=5 // pred_region
        %s1245 = ssub.s32 %s34, 2
        // Predicated region
        $region113: #{ffab_forward.24} parent=111 // pred_check
          %p1246 = pneg %p301
        $region114: #{ffab_forward.24} parent=111 // pred_check_branch
          %1248 = sbr.rel (%p1246) target = $region116
        $region115: #{ffab_forward.24} parent=111 // pred_region
          %s1249 = sand.u32 %s286, 1
          %s1250 = scalar_lea.sflag [#allocation4], %s1249
          %s1251 = sand.u32 %s286, 1
          %s1252 = smul.addr %s1251, 8
          %s1253 = scalar_lea.vmem [#allocation19], %s1252
          %1254 = dma.done %s1250, 128
        $region116: #{ffab_forward.24} parent=111 // pred_fallthru
          _
        // Predicated region
        $region117: #{ffab_forward.24} parent=111 // pred_check
          %p1255 = pneg %p329
        $region118: #{ffab_forward.24} parent=111 // pred_check_branch
          %1257 = sbr.rel (%p1255) target = $region120
        $region119: #{ffab_forward.24} parent=111 // pred_region
          %s1258 = sand.u32 %s314, 1
          %s1259 = scalar_lea.sflag [#allocation21], %s1258
          %s1260 = sand.u32 %s314, 1
          %s1261 = smul.addr %s1260, 8
          %s1262 = scalar_lea.vmem [#allocation20], %s1261
          %1263 = dma.done %s1259, 128
        $region120: #{ffab_forward.24} parent=111 // pred_fallthru
          _
      $region112: #{ffab_forward.24} parent=5 // pred_fallthru
        _
    $region6: #{ffab_forward.24} parent=1 // loop_footer
      %s38 = sadd.s32 1, %s34
    $region7: #{ffab_forward.24} parent=1 // loop_footer_branch
      %33 = sbr.rel target = $region3
    $region8: #{ffab_forward.24} parent=1 // loop_exit
      _
    %1264 = vsyncpa [#allocation3], 1
    %s1265 = scalar_lea.sflag [#allocation3], 1
    %1266 = vsyncpa %s1265, 1
    %1267 = vsyncpa [#allocation6], 1
    %s1268 = scalar_lea.sflag [#allocation6], 1
    %1269 = vsyncpa %s1268, 1
    %1270 = vsyncpa [#allocation9], 1
    %1271 = vsyncpa [#allocation12], 1
    %1272 = vsyncpa [#allocation15], 1
    %1273 = vsyncpa [#allocation18], 1
    %1274 = vsyncpa [#allocation4], 1
    %s1275 = scalar_lea.sflag [#allocation4], 1
    %1276 = vsyncpa %s1275, 1
    %1277 = vsyncpa [#allocation21], 1
    %s1278 = scalar_lea.sflag [#allocation21], 1
    %1279 = vsyncpa %s1278, 1

// kernel: ffab_forward.25
$region0: #{ffab_forward.25}
  #allocation0 [shape = 'u32[]', space=smem, size = 0x4, offset = 0x4, fixed_abs, tag = 'smem constant byte address 0x4 - core index']
  #allocation1 [shape = 'u32[144,128]{1,0:T(1,128)}', space=vmem, size = 0x12000, scoped, tag = 'internal scratch']
  %s0 = inlined_call_operand.hbm [shape: f32[2,4,256], index: 0, kind: input, shape index: {}]
  %s1 = inlined_call_operand.hbm [shape: f32[2,4,256], index: 1, kind: input, shape index: {}]
  %s2 = inlined_call_operand.hbm [shape: f32[4,4], index: 2, kind: input, shape index: {}]
  %s3 = inlined_call_operand.hbm [shape: f32[4,1], index: 3, kind: input, shape index: {}]
  %s4 = inlined_call_operand.hbm [shape: f32[2,4,256], index: 4, kind: output, shape index: {}]
  %s5 = sld [smem:[#allocation0]]
  $region65: #{ffab_forward.25} parent=0
    _
  %s7 = ssub.s32 1, %s5
  %s8 = scalar_select 0, %s7, %s5
  $region1: #{ffab_forward.25} parent=0
    #allocation2 [shape = 'u8[8192]{0}', space=vmem, size = 0x2000, scoped, tag = 'input window, operand 0']
    #allocation3 [shape = 's32[2]{0}', space=sflag, size = 0x8, scoped, tag = 'scoped memory for ffab_forward.25']
    #allocation4 [shape = 's32[2]{0}', space=sflag, size = 0x8, scoped, tag = 'scoped memory for ffab_forward.25']
    #allocation5 [shape = 'u8[8192]{0}', space=vmem, size = 0x2000, scoped, tag = 'input window, operand 1']
    #allocation6 [shape = 's32[2]{0}', space=sflag, size = 0x8, scoped, tag = 'scoped memory for ffab_forward.25']
    #allocation7 [shape = 'u8[2048]{0}', space=vmem, size = 0x800, scoped, tag = 'input window, operand 2, single buffered']
    #allocation8 [shape = 'u8[2048]{0}', space=vmem, size = 0x800, scoped, tag = 'input window, operand 3, single buffered']
    #allocation9 [shape = 's32[1]{0}', space=sflag, size = 0x4, scoped, tag = 'scoped memory for ffab_forward.25']
    #allocation10 [shape = 'u8[8192]{0}', space=vmem, size = 0x2000, scoped, tag = 'output window, operand 0']
    %9 = vsyncpa [#allocation3], 0
    %s10 = scalar_lea.sflag [#allocation3], 1
    %11 = vsyncpa %s10, 0
    %12 = vsyncpa [#allocation6], 0
    %s13 = scalar_lea.sflag [#allocation6], 1
    %14 = vsyncpa %s13, 0
    %15 = vsyncpa [#allocation9], 0
    %16 = vsyncpa [#allocation4], 0
    %s17 = scalar_lea.sflag [#allocation4], 1
    %18 = vsyncpa %s17, 0
    loop: start=0, step=1, limit=4
    $region2: #{ffab_forward.25} parent=1 // loop_pre_header
      _
    $region3: #{ffab_forward.25} parent=1 // loop_header
      %s20 = sphi 0, %s24
      %p21 = scmp.ge.s32.totalorder %s20, 4
      %s27 = sphi 0, %s39
      %s28 = sphi 0, %s35
      %s29 = sphi 0, %s27
      %s30 = sphi 0, %s28
      %s31 = sphi 0, %s29
      %s32 = sphi 0, %s30
      %s44 = sphi 0, %s46
      %s47 = sphi 0, %s44
      %s48 = sphi 0, %s47
      %s64 = sphi 0, %s48
      %s72 = sphi 0, %s74
      %s75 = sphi 0, %s72
      %s76 = sphi 0, %s75
      %s92 = sphi 0, %s76
      %s96 = sphi 0, %s96
      %s98 = sphi 0, %s96
      %s99 = sphi 0, %s98
      %s113 = sphi 0, %s99
      %s117 = sphi 0, %s117
      %s119 = sphi 0, %s117
      %s120 = sphi 0, %s119
      %s134 = sphi 0, %s120
      %s142 = sphi 0, %s144
      %s145 = sphi 0, %s142
      %s146 = sphi 0, %s145
      %s162 = sphi 0, %s146
    $region4: #{ffab_forward.25} parent=1 // loop_header_branch
      %23 = sbr.rel (%p21) target = $region8
    $region5: #{ffab_forward.25} parent=1 // loop_body
      %s25 = ssub.s32 %s20, 1
      %s26 = ssub.s32 %s20, 2
      %s33 = sadd.s32 1, %s28
      %p34 = scmp.ge.s32.totalorder %s33, 1
      %s35 = scalar_select %p34, 0, %s33
      %s36 = sadd.s32 1, %s27
      %s37 = scalar_select %p34, %s36, %s27
      %p38 = scmp.ge.s32.totalorder %s37, 2
      %s39 = scalar_select %p38, 0, %s37
      %s40 = ssub.s32 %s27, %s39
      %s41 = ssub.s32 %s28, %s35
      %s42 = sor.u32 %s40, %s41
      %p43 = scmp.eq.s32.totalorder %s42, 0
      %s45 = sadd.s32 %s44, 1
      %s46 = scalar_select %p43, %s44, %s45
      %p49 = pneg %p43
      %p50 = scmp.eq.s32.totalorder %s20, 1
      %p51 = por %p49, %p50
      %p52 = scmp.ne.s32.totalorder %s44, %s47
      %p53 = scmp.eq.s32.totalorder %s20, 0
      %p54 = por %p52, %p53
      %p55 = scmp.ne.s32.totalorder %s44, %s47
      %p56 = scmp.eq.s32.totalorder %s25, 1
      %p57 = por %p55, %p56
      %p58 = scmp.ne.s32.totalorder %s47, %s48
      %p59 = scmp.eq.s32.totalorder %s25, 0
      %p60 = por %p58, %p59
      %p61 = scmp.ne.s32.totalorder %s47, %s48
      %p62 = scmp.eq.s32.totalorder %s26, 1
      %p63 = por %p61, %p62
      %p65 = scmp.ne.s32.totalorder %s48, %s64
      %p66 = scmp.eq.s32.totalorder %s26, 0
      %p67 = por %p65, %p66
      %s68 = ssub.s32 %s27, %s39
      %s69 = ssub.s32 %s28, %s35
      %s70 = sor.u32 %s68, %s69
      %p71 = scmp.eq.s32.totalorder %s70, 0
      %s73 = sadd.s32 %s72, 1
      %s74 = scalar_select %p71, %s72, %s73
      %p77 = pneg %p71
      %p78 = scmp.eq.s32.totalorder %s20, 1
      %p79 = por %p77, %p78
      %p80 = scmp.ne.s32.totalorder %s72, %s75
      %p81 = scmp.eq.s32.totalorder %s20, 0
      %p82 = por %p80, %p81
      %p83 = scmp.ne.s32.totalorder %s72, %s75
      %p84 = scmp.eq.s32.totalorder %s25, 1
      %p85 = por %p83, %p84
      %p86 = scmp.ne.s32.totalorder %s75, %s76
      %p87 = scmp.eq.s32.totalorder %s25, 0
      %p88 = por %p86, %p87
      %p89 = scmp.ne.s32.totalorder %s75, %s76
      %p90 = scmp.eq.s32.totalorder %s26, 1
      %p91 = por %p89, %p90
      %p93 = scmp.ne.s32.totalorder %s76, %s92
      %p94 = scmp.eq.s32.totalorder %s26, 0
      %p95 = por %p93, %p94
      %s97 = sadd.s32 %s96, 1
      %p100 = scmp.eq.s32.totalorder %s20, 1
      %p101 = scmp.ne.s32.totalorder %s96, %s98
      %p102 = scmp.eq.s32.totalorder %s20, 0
      %p103 = por %p101, %p102
      %p104 = scmp.ne.s32.totalorder %s96, %s98
      %p105 = scmp.eq.s32.totalorder %s25, 1
      %p106 = por %p104, %p105
      %p107 = scmp.ne.s32.totalorder %s98, %s99
      %p108 = scmp.eq.s32.totalorder %s25, 0
      %p109 = por %p107, %p108
      %p110 = scmp.ne.s32.totalorder %s98, %s99
      %p111 = scmp.eq.s32.totalorder %s26, 1
      %p112 = por %p110, %p111
      %p114 = scmp.ne.s32.totalorder %s99, %s113
      %p115 = scmp.eq.s32.totalorder %s26, 0
      %p116 = por %p114, %p115
      %s118 = sadd.s32 %s117, 1
      %p121 = scmp.eq.s32.totalorder %s20, 1
      %p122 = scmp.ne.s32.totalorder %s117, %s119
      %p123 = scmp.eq.s32.totalorder %s20, 0
      %p124 = por %p122, %p123
      %p125 = scmp.ne.s32.totalorder %s117, %s119
      %p126 = scmp.eq.s32.totalorder %s25, 1
      %p127 = por %p125, %p126
      %p128 = scmp.ne.s32.totalorder %s119, %s120
      %p129 = scmp.eq.s32.totalorder %s25, 0
      %p130 = por %p128, %p129
      %p131 = scmp.ne.s32.totalorder %s119, %s120
      %p132 = scmp.eq.s32.totalorder %s26, 1
      %p133 = por %p131, %p132
      %p135 = scmp.ne.s32.totalorder %s120, %s134
      %p136 = scmp.eq.s32.totalorder %s26, 0
      %p137 = por %p135, %p136
      %s138 = ssub.s32 %s27, %s39
      %s139 = ssub.s32 %s28, %s35
      %s140 = sor.u32 %s138, %s139
      %p141 = scmp.eq.s32.totalorder %s140, 0
      %s143 = sadd.s32 %s142, 1
      %s144 = scalar_select %p141, %s142, %s143
      %p147 = pneg %p141
      %p148 = scmp.eq.s32.totalorder %s20, 1
      %p149 = por %p147, %p148
      %p150 = scmp.ne.s32.totalorder %s142, %s145
      %p151 = scmp.eq.s32.totalorder %s20, 0
      %p152 = por %p150, %p151
      %p153 = scmp.ne.s32.totalorder %s142, %s145
      %p154 = scmp.eq.s32.totalorder %s25, 1
      %p155 = por %p153, %p154
      %p156 = scmp.ne.s32.totalorder %s145, %s146
      %p157 = scmp.eq.s32.totalorder %s25, 0
      %p158 = por %p156, %p157
      %p159 = scmp.ne.s32.totalorder %s145, %s146
      %p160 = scmp.eq.s32.totalorder %s26, 1
      %p161 = por %p159, %p160
      %p163 = scmp.ne.s32.totalorder %s146, %s162
      %p164 = scmp.eq.s32.totalorder %s26, 0
      %p165 = por %p163, %p164
      %p166 = scmp.le.s32.totalorder 1, %s20
      %p167 = scmp.lt.s32.totalorder %s20, 3
      %p168 = pnand %p166, %p167
      %p169 = pneg %p168
      // Predicated region
      $region9: #{ffab_forward.25} parent=5 // pred_check
        _
      $region10: #{ffab_forward.25} parent=5 // pred_check_branch
        %171 = sbr.rel (%p168) target = $region12
      $region11: #{ffab_forward.25} parent=5 // pred_region
        %s172 = ssub.s32 %s20, 1
        // Predicated region
        $region13: #{ffab_forward.25} parent=11 // pred_check
          %p173 = pneg %p109
        $region14: #{ffab_forward.25} parent=11 // pred_check_branch
          %175 = sbr.rel (%p173) target = $region16
        $region15: #{ffab_forward.25} parent=11 // pred_region
          %s177 = ssub.s32 64, 64
          %178 = vsyncadd [#allocation6], %s177
          %s180 = sshll.u32 [#allocation7], 4
          %s181 = int_to_ptr.vmem [resolvable:$true] %s180
          %183 = dma.hbm_to_vmem [thread:$0]  %s2, 64, %s181, [#allocation6]
        $region16: #{ffab_forward.25} parent=11 // pred_fallthru
          _
        // Predicated region
        $region17: #{ffab_forward.25} parent=11 // pred_check
          %p184 = pneg %p130
        $region18: #{ffab_forward.25} parent=11 // pred_check_branch
          %186 = sbr.rel (%p184) target = $region20
        $region19: #{ffab_forward.25} parent=11 // pred_region
          %s188 = ssub.s32 64, 64
          %189 = vsyncadd [#allocation9], %s188
          %s191 = sshll.u32 [#allocation8], 4
          %s192 = int_to_ptr.vmem [resolvable:$true] %s191
          %194 = dma.hbm_to_vmem [thread:$0]  %s3, 64, %s192, [#allocation9]
        $region20: #{ffab_forward.25} parent=11 // pred_fallthru
          _
      $region12: #{ffab_forward.25} parent=5 // pred_fallthru
        _
      %p195 = scmp.lt.s32.totalorder %s20, 2
      // Predicated region
      $region21: #{ffab_forward.25} parent=5 // pred_check
        %p196 = pneg %p195
      $region22: #{ffab_forward.25} parent=5 // pred_check_branch
        %198 = sbr.rel (%p196) target = $region24
      $region23: #{ffab_forward.25} parent=5 // pred_region
        // Predicated region
        $region25: #{ffab_forward.25} parent=23 // pred_check
          %p199 = pneg %p54
        $region26: #{ffab_forward.25} parent=23 // pred_check_branch
          %201 = sbr.rel (%p199) target = $region28
        $region27: #{ffab_forward.25} parent=23 // pred_region
          %s202 = sand.u32 %s44, 1
          %s203 = scalar_lea.sflag [#allocation3], %s202
          %s204 = sand.u32 %s44, 1
          %s205 = smul.addr %s204, 8
          %s206 = scalar_lea.vmem [#allocation2], %s205
          %s207 = smul.u32 2, %s28
          %s209 = ssub.s32 128, 128
          %210 = vsyncadd %s203, %s209
          %s211 = smul.addr %s27, 2
          %s212 = sadd.s32 %s207, %s211
          %s213 = smul.addr %s212, 64
          %s214 = scalar_lea.hbm %s0, %s213
          %s216 = sshll.u32 %s206, 4
          %s217 = int_to_ptr.vmem [resolvable:$true] %s216
          %219 = dma.hbm_to_vmem [thread:$0]  %s214, 128, %s217, %s203
        $region28: #{ffab_forward.25} parent=23 // pred_fallthru
          _
        // Predicated region
        $region29: #{ffab_forward.25} parent=23 // pred_check
          %p220 = pneg %p82
        $region30: #{ffab_forward.25} parent=23 // pred_check_branch
          %222 = sbr.rel (%p220) target = $region32
        $region31: #{ffab_forward.25} parent=23 // pred_region
          %s223 = sand.u32 %s20, 1
          %s224 = scalar_lea.sflag [#allocation6], %s223
          %s225 = sand.u32 %s72, 1
          %s226 = smul.addr %s225, 8
          %s227 = scalar_lea.vmem [#allocation5], %s226
          %s228 = smul.u32 2, %s28
          %s230 = ssub.s32 128, 128
          %231 = vsyncadd %s224, %s230
          %s232 = smul.addr %s27, 2
          %s233 = sadd.s32 %s228, %s232
          %s234 = smul.addr %s233, 64
          %s235 = scalar_lea.hbm %s1, %s234
          %s237 = sshll.u32 %s227, 4
          %s238 = int_to_ptr.vmem [resolvable:$true] %s237
          %240 = dma.hbm_to_vmem [thread:$0]  %s235, 128, %s238, %s224
        $region32: #{ffab_forward.25} parent=23 // pred_fallthru
          _
      $region24: #{ffab_forward.25} parent=5 // pred_fallthru
        _
      %p241 = scmp.le.s32.totalorder 1, %s20
      %p242 = scmp.lt.s32.totalorder %s20, 3
      %p243 = pnand %p241, %p242
      %p244 = pneg %p243
      // Predicated region
      $region33: #{ffab_forward.25} parent=5 // pred_check
        _
      $region34: #{ffab_forward.25} parent=5 // pred_check_branch
        %246 = sbr.rel (%p243) target = $region36
      $region35: #{ffab_forward.25} parent=5 // pred_region
        %s247 = ssub.s32 %s20, 1
        %s248 = sand.u32 %s47, 1
        %s249 = scalar_lea.sflag [#allocation3], %s248
        %s250 = sand.u32 %s47, 1
        %s251 = smul.addr %s250, 8
        %s252 = scalar_lea.vmem [#allocation2], %s251
        // Predicated region
        $region37: #{ffab_forward.25} parent=35 // pred_check
          %p253 = pneg %p60
        $region38: #{ffab_forward.25} parent=35 // pred_check_branch
          %255 = sbr.rel (%p253) target = $region40
        $region39: #{ffab_forward.25} parent=35 // pred_region
          %256 = dma.done %s249, 128
        $region40: #{ffab_forward.25} parent=35 // pred_fallthru
          _
        %s257 = sand.u32 %s25, 1
        %s258 = scalar_lea.sflag [#allocation6], %s257
        %s259 = sand.u32 %s75, 1
        %s260 = smul.addr %s259, 8
        %s261 = scalar_lea.vmem [#allocation5], %s260
        // Predicated region
        $region41: #{ffab_forward.25} parent=35 // pred_check
          %p262 = pneg %p88
        $region42: #{ffab_forward.25} parent=35 // pred_check_branch
          %264 = sbr.rel (%p262) target = $region44
        $region43: #{ffab_forward.25} parent=35 // pred_region
          %265 = dma.done %s258, 128
        $region44: #{ffab_forward.25} parent=35 // pred_fallthru
          _
        // Predicated region
        $region45: #{ffab_forward.25} parent=35 // pred_check
          %p266 = pneg %p109
        $region46: #{ffab_forward.25} parent=35 // pred_check_branch
          %268 = sbr.rel (%p266) target = $region48
        $region47: #{ffab_forward.25} parent=35 // pred_region
          %269 = dma.done [#allocation6], 64
        $region48: #{ffab_forward.25} parent=35 // pred_fallthru
          _
        // Predicated region
        $region49: #{ffab_forward.25} parent=35 // pred_check
          %p270 = pneg %p130
        $region50: #{ffab_forward.25} parent=35 // pred_check_branch
          %272 = sbr.rel (%p270) target = $region52
        $region51: #{ffab_forward.25} parent=35 // pred_region
          %273 = dma.done [#allocation9], 64
        $region52: #{ffab_forward.25} parent=35 // pred_fallthru
          _
        %s274 = sand.u32 %s47, 1
        %s275 = scalar_lea.sflag [#allocation3], %s274
        %s276 = sand.u32 %s47, 1
        %s277 = smul.addr %s276, 8
        %s278 = scalar_lea.vmem [#allocation2], %s277
        %p279 = pneg %p60
        %p280 = pneg %p57
        %s281 = sand.u32 %s25, 1
        %s282 = scalar_lea.sflag [#allocation6], %s281
        %s283 = sand.u32 %s75, 1
        %s284 = smul.addr %s283, 8
        %s285 = scalar_lea.vmem [#allocation5], %s284
        %p286 = pneg %p88
        %p287 = pneg %p85
        %p288 = pneg %p109
        %p289 = pneg %p106
        %p290 = pneg %p130
        %p291 = pneg %p127
        %p292 = pneg %p158
        %p293 = pneg %p155
        %s294 = sand.u32 %s145, 1
        %s295 = scalar_lea.sflag [#allocation4], %s294
        %s296 = sand.u32 %s145, 1
        %s297 = smul.addr %s296, 8
        %s298 = scalar_lea.vmem [#allocation10], %s297
        %s299 = smul.u32 2, %s30
        %s300 = smul.u32 2, %s30
        %s301 = smul.u32 2, %s30
        %v302 = vld [vmem:[%s261] sm:$0xff]
        %v303 = vld [vmem:[%s252] sm:$0xff]
        %v304 = vmax.f32 %v302, -10.0
        %v305 = vmin.f32 %v304, 10.0
        %v306 = vadd.f32 %v303, %v305
        %v307 = vmax.f32 %v306, -10.0
        %v308 = vmin.f32 %v307, 10.0
        %v309 = vld [vmem:[#allocation7] sm:$0xf]
        %311 = vset.pattern.permute.xlu0 0
        %312 = vperm.xlu0 %311, %v309
        %v313 = vpop.permute.xlu0 %312
        %v316 = vlaneseq
        %v317 = vshrl.u32 %v316, 7
        %v318 = vsub.s32 0, %v317
        %v319 = vrot.slane %v308, %v318
        %v320 = vlaneseq
        %v321 = vshrl.u32 %v320, 7
        %v322 = vsub.s32 4, %v321
        %v323 = vrot.slane %v308, %v322
        %v326 = vlaneseq
        %v327 = vshrl.u32 %v326, 7
        %v328 = vsub.s32 0, %v327
        %v329 = vrot.slane %v319, %v328
        %v330 = vlaneseq
        %v331 = vshrl.u32 %v330, 7
        %v332 = vsub.s32 0, %v331
        %v333 = vrot.slane %v323, %v332
        %v334 = vmul.f32 %v313, %v329
        %v335 = vmul.f32 %v313, %v333
        %336 = vset.pattern.permute.xlu0 1
        %337 = vperm.xlu0 %336, %v309
        %v338 = vpop.permute.xlu0 %337
        %v340 = vlaneseq
        %v341 = vshrl.u32 %v340, 7
        %v342 = vsub.s32 1, %v341
        %v343 = vrot.slane %v308, %v342
        %v344 = vlaneseq
        %v345 = vshrl.u32 %v344, 7
        %v346 = vsub.s32 5, %v345
        %v347 = vrot.slane %v308, %v346
        %v350 = vlaneseq
        %v351 = vshrl.u32 %v350, 7
        %v352 = vsub.s32 1, %v351
        %v353 = vrot.slane %v343, %v352
        %v354 = vlaneseq
        %v355 = vshrl.u32 %v354, 7
        %v356 = vsub.s32 1, %v355
        %v357 = vrot.slane %v347, %v356
        %v358 = vmul.f32 %v338, %v353
        %v359 = vmul.f32 %v338, %v357
        %v360 = vadd.f32 %v334, %v358
        %v361 = vadd.f32 %v335, %v359
        %362 = vset.pattern.permute.xlu0 2
        %363 = vperm.xlu0 %362, %v309
        %v364 = vpop.permute.xlu0 %363
        %v366 = vlaneseq
        %v367 = vshrl.u32 %v366, 7
        %v368 = vsub.s32 2, %v367
        %v369 = vrot.slane %v308, %v368
        %v370 = vlaneseq
        %v371 = vshrl.u32 %v370, 7
        %v372 = vsub.s32 6, %v371
        %v373 = vrot.slane %v308, %v372
        %v376 = vlaneseq
        %v377 = vshrl.u32 %v376, 7
        %v378 = vsub.s32 2, %v377
        %v379 = vrot.slane %v369, %v378
        %v380 = vlaneseq
        %v381 = vshrl.u32 %v380, 7
        %v382 = vsub.s32 2, %v381
        %v383 = vrot.slane %v373, %v382
        %v384 = vmul.f32 %v364, %v379
        %v385 = vmul.f32 %v364, %v383
        %v386 = vadd.f32 %v360, %v384
        %v387 = vadd.f32 %v361, %v385
        %388 = vset.pattern.permute.xlu0 3
        %389 = vperm.xlu0 %388, %v309
        %v390 = vpop.permute.xlu0 %389
        %v392 = vlaneseq
        %v393 = vshrl.u32 %v392, 7
        %v394 = vsub.s32 3, %v393
        %v395 = vrot.slane %v308, %v394
        %v396 = vlaneseq
        %v397 = vshrl.u32 %v396, 7
        %v398 = vsub.s32 7, %v397
        %v399 = vrot.slane %v308, %v398
        %v402 = vlaneseq
        %v403 = vshrl.u32 %v402, 7
        %v404 = vsub.s32 3, %v403
        %v405 = vrot.slane %v395, %v404
        %v406 = vlaneseq
        %v407 = vshrl.u32 %v406, 7
        %v408 = vsub.s32 3, %v407
        %v409 = vrot.slane %v399, %v408
        %v410 = vmul.f32 %v390, %v405
        %v411 = vmul.f32 %v390, %v409
        %v412 = vadd.f32 %v386, %v410
        %v413 = vadd.f32 %v387, %v411
        %v414 = vld [vmem:[#allocation8] sm:$0xf]
        %416 = vset.pattern.permute.xlu0 0
        %417 = vperm.xlu0 %416, %v414
        %v418 = vpop.permute.xlu0 %417
        %v420 = vadd.f32 %v412, %v418
        %v421 = vadd.f32 %v413, %v418
        %v423 = vcombine.high %v302, %v302
        %v425 = vadd.f32 %v420, %v302
        %v426 = vadd.f32 %v421, %v423
        %v429 = vcombine.low %v425, %v426
        %431 = vst [vmem:[%s298] sm:$0xff] %v429
        %s432 = sand.u32 %s145, 1
        %s433 = scalar_lea.sflag [#allocation4], %s432
        %s434 = sand.u32 %s145, 1
        %s435 = smul.addr %s434, 8
        %s436 = scalar_lea.vmem [#allocation10], %s435
        // Predicated region
        $region53: #{ffab_forward.25} parent=35 // pred_check
          %p437 = pneg %p155
        $region54: #{ffab_forward.25} parent=35 // pred_check_branch
          %439 = sbr.rel (%p437) target = $region56
        $region55: #{ffab_forward.25} parent=35 // pred_region
          %s440 = smul.u32 2, %s30
          %s442 = ssub.s32 128, 128
          %443 = vsyncadd %s433, %s442
          %s444 = smul.addr %s29, 2
          %s445 = sadd.s32 %s440, %s444
          %s446 = smul.addr %s445, 64
          %s447 = scalar_lea.hbm %s4, %s446
          %s449 = sshll.u32 %s436, 4
          %s450 = int_to_ptr.vmem [resolvable:$true] %s449
          %452 = dma.vmem_to_hbm [thread:$0]  %s450, 128, %s447, %s433
        $region56: #{ffab_forward.25} parent=35 // pred_fallthru
          _
      $region36: #{ffab_forward.25} parent=5 // pred_fallthru
        _
      %p453 = scmp.le.s32.totalorder 2, %s20
      // Predicated region
      $region57: #{ffab_forward.25} parent=5 // pred_check
        %p454 = pneg %p453
      $region58: #{ffab_forward.25} parent=5 // pred_check_branch
        %456 = sbr.rel (%p454) target = $region60
      $region59: #{ffab_forward.25} parent=5 // pred_region
        %s457 = ssub.s32 %s20, 2
        // Predicated region
        $region61: #{ffab_forward.25} parent=59 // pred_check
          %p458 = pneg %p161
        $region62: #{ffab_forward.25} parent=59 // pred_check_branch
          %460 = sbr.rel (%p458) target = $region64
        $region63: #{ffab_forward.25} parent=59 // pred_region
          %s461 = sand.u32 %s146, 1
          %s462 = scalar_lea.sflag [#allocation4], %s461
          %s463 = sand.u32 %s146, 1
          %s464 = smul.addr %s463, 8
          %s465 = scalar_lea.vmem [#allocation10], %s464
          %466 = dma.done %s462, 128
        $region64: #{ffab_forward.25} parent=59 // pred_fallthru
          _
      $region60: #{ffab_forward.25} parent=5 // pred_fallthru
        _
    $region6: #{ffab_forward.25} parent=1 // loop_footer
      %s24 = sadd.s32 1, %s20
    $region7: #{ffab_forward.25} parent=1 // loop_footer_branch
      %19 = sbr.rel target = $region3
    $region8: #{ffab_forward.25} parent=1 // loop_exit
      _
    %467 = vsyncpa [#allocation3], 1
    %s468 = scalar_lea.sflag [#allocation3], 1
    %469 = vsyncpa %s468, 1
    %470 = vsyncpa [#allocation6], 1
    %s471 = scalar_lea.sflag [#allocation6], 1
    %472 = vsyncpa %s471, 1
    %473 = vsyncpa [#allocation9], 1
    %474 = vsyncpa [#allocation4], 1
    %s475 = scalar_lea.sflag [#allocation4], 1
    %476 = vsyncpa %s475, 1

// kernel: ffab_forward.35
$region0: #{ffab_forward.35}
  #allocation0 [shape = 'u32[]', space=smem, size = 0x4, offset = 0x4, fixed_abs, tag = 'smem constant byte address 0x4 - core index']
  #allocation1 [shape = 'u32[144,128]{1,0:T(1,128)}', space=vmem, size = 0x12000, scoped, tag = 'internal scratch']
  %s0 = inlined_call_operand.hbm [shape: f32[2,4,256], index: 0, kind: input, shape index: {}]
  %s1 = inlined_call_operand.hbm [shape: f32[2,4,256], index: 1, kind: input, shape index: {}]
  %s2 = inlined_call_operand.hbm [shape: f32[8,4], index: 2, kind: input, shape index: {}]
  %s3 = inlined_call_operand.hbm [shape: f32[8,4], index: 3, kind: input, shape index: {}]
  %s4 = inlined_call_operand.hbm [shape: f32[8,1], index: 4, kind: input, shape index: {}]
  %s5 = inlined_call_operand.hbm [shape: f32[2,8,256], index: 5, kind: output, shape index: {}]
  %s6 = sld [smem:[#allocation0]]
  $region73: #{ffab_forward.35} parent=0
    _
  %s8 = ssub.s32 1, %s6
  %s9 = scalar_select 0, %s8, %s6
  $region1: #{ffab_forward.35} parent=0
    #allocation2 [shape = 'u8[8192]{0}', space=vmem, size = 0x2000, scoped, tag = 'input window, operand 0']
    #allocation3 [shape = 's32[2]{0}', space=sflag, size = 0x8, scoped, tag = 'scoped memory for ffab_forward.35']
    #allocation4 [shape = 's32[2]{0}', space=sflag, size = 0x8, scoped, tag = 'scoped memory for ffab_forward.35']
    #allocation5 [shape = 'u8[8192]{0}', space=vmem, size = 0x2000, scoped, tag = 'input window, operand 1']
    #allocation6 [shape = 's32[2]{0}', space=sflag, size = 0x8, scoped, tag = 'scoped memory for ffab_forward.35']
    #allocation7 [shape = 'u8[4096]{0}', space=vmem, size = 0x1000, scoped, tag = 'input window, operand 2, single buffered']
    #allocation8 [shape = 'u8[4096]{0}', space=vmem, size = 0x1000, scoped, tag = 'input window, operand 3, single buffered']
    #allocation9 [shape = 's32[1]{0}', space=sflag, size = 0x4, scoped, tag = 'scoped memory for ffab_forward.35']
    #allocation10 [shape = 'u8[4096]{0}', space=vmem, size = 0x1000, scoped, tag = 'input window, operand 4, single buffered']
    #allocation11 [shape = 'u8[16384]{0}', space=vmem, size = 0x4000, scoped, tag = 'output window, operand 0']
    %10 = vsyncpa [#allocation3], 0
    %s11 = scalar_lea.sflag [#allocation3], 1
    %12 = vsyncpa %s11, 0
    %13 = vsyncpa [#allocation6], 0
    %s14 = scalar_lea.sflag [#allocation6], 1
    %15 = vsyncpa %s14, 0
    %16 = vsyncpa [#allocation9], 0
    %17 = vsyncpa [#allocation4], 0
    %s18 = scalar_lea.sflag [#allocation4], 1
    %19 = vsyncpa %s18, 0
    loop: start=0, step=1, limit=4
    $region2: #{ffab_forward.35} parent=1 // loop_pre_header
      _
    $region3: #{ffab_forward.35} parent=1 // loop_header
      %s21 = sphi 0, %s25
      %p22 = scmp.ge.s32.totalorder %s21, 4
      %s28 = sphi 0, %s40
      %s29 = sphi 0, %s36
      %s30 = sphi 0, %s28
      %s31 = sphi 0, %s29
      %s32 = sphi 0, %s30
      %s33 = sphi 0, %s31
      %s45 = sphi 0, %s47
      %s48 = sphi 0, %s45
      %s49 = sphi 0, %s48
      %s65 = sphi 0, %s49
      %s73 = sphi 0, %s75
      %s76 = sphi 0, %s73
      %s77 = sphi 0, %s76
      %s93 = sphi 0, %s77
      %s97 = sphi 0, %s97
      %s99 = sphi 0, %s97
      %s100 = sphi 0, %s99
      %s114 = sphi 0, %s100
      %s118 = sphi 0, %s118
      %s120 = sphi 0, %s118
      %s121 = sphi 0, %s120
      %s135 = sphi 0, %s121
      %s139 = sphi 0, %s139
      %s141 = sphi 0, %s139
      %s142 = sphi 0, %s141
      %s156 = sphi 0, %s142
      %s164 = sphi 0, %s166
      %s167 = sphi 0, %s164
      %s168 = sphi 0, %s167
      %s184 = sphi 0, %s168
    $region4: #{ffab_forward.35} parent=1 // loop_header_branch
      %24 = sbr.rel (%p22) target = $region8
    $region5: #{ffab_forward.35} parent=1 // loop_body
      %s26 = ssub.s32 %s21, 1
      %s27 = ssub.s32 %s21, 2
      %s34 = sadd.s32 1, %s29
      %p35 = scmp.ge.s32.totalorder %s34, 1
      %s36 = scalar_select %p35, 0, %s34
      %s37 = sadd.s32 1, %s28
      %s38 = scalar_select %p35, %s37, %s28
      %p39 = scmp.ge.s32.totalorder %s38, 2
      %s40 = scalar_select %p39, 0, %s38
      %s41 = ssub.s32 %s28, %s40
      %s42 = ssub.s32 %s29, %s36
      %s43 = sor.u32 %s41, %s42
      %p44 = scmp.eq.s32.totalorder %s43, 0
      %s46 = sadd.s32 %s45, 1
      %s47 = scalar_select %p44, %s45, %s46
      %p50 = pneg %p44
      %p51 = scmp.eq.s32.totalorder %s21, 1
      %p52 = por %p50, %p51
      %p53 = scmp.ne.s32.totalorder %s45, %s48
      %p54 = scmp.eq.s32.totalorder %s21, 0
      %p55 = por %p53, %p54
      %p56 = scmp.ne.s32.totalorder %s45, %s48
      %p57 = scmp.eq.s32.totalorder %s26, 1
      %p58 = por %p56, %p57
      %p59 = scmp.ne.s32.totalorder %s48, %s49
      %p60 = scmp.eq.s32.totalorder %s26, 0
      %p61 = por %p59, %p60
      %p62 = scmp.ne.s32.totalorder %s48, %s49
      %p63 = scmp.eq.s32.totalorder %s27, 1
      %p64 = por %p62, %p63
      %p66 = scmp.ne.s32.totalorder %s49, %s65
      %p67 = scmp.eq.s32.totalorder %s27, 0
      %p68 = por %p66, %p67
      %s69 = ssub.s32 %s28, %s40
      %s70 = ssub.s32 %s29, %s36
      %s71 = sor.u32 %s69, %s70
      %p72 = scmp.eq.s32.totalorder %s71, 0
      %s74 = sadd.s32 %s73, 1
      %s75 = scalar_select %p72, %s73, %s74
      %p78 = pneg %p72
      %p79 = scmp.eq.s32.totalorder %s21, 1
      %p80 = por %p78, %p79
      %p81 = scmp.ne.s32.totalorder %s73, %s76
      %p82 = scmp.eq.s32.totalorder %s21, 0
      %p83 = por %p81, %p82
      %p84 = scmp.ne.s32.totalorder %s73, %s76
      %p85 = scmp.eq.s32.totalorder %s26, 1
      %p86 = por %p84, %p85
      %p87 = scmp.ne.s32.totalorder %s76, %s77
      %p88 = scmp.eq.s32.totalorder %s26, 0
      %p89 = por %p87, %p88
      %p90 = scmp.ne.s32.totalorder %s76, %s77
      %p91 = scmp.eq.s32.totalorder %s27, 1
      %p92 = por %p90, %p91
      %p94 = scmp.ne.s32.totalorder %s77, %s93
      %p95 = scmp.eq.s32.totalorder %s27, 0
      %p96 = por %p94, %p95
      %s98 = sadd.s32 %s97, 1
      %p101 = scmp.eq.s32.totalorder %s21, 1
      %p102 = scmp.ne.s32.totalorder %s97, %s99
      %p103 = scmp.eq.s32.totalorder %s21, 0
      %p104 = por %p102, %p103
      %p105 = scmp.ne.s32.totalorder %s97, %s99
      %p106 = scmp.eq.s32.totalorder %s26, 1
      %p107 = por %p105, %p106
      %p108 = scmp.ne.s32.totalorder %s99, %s100
      %p109 = scmp.eq.s32.totalorder %s26, 0
      %p110 = por %p108, %p109
      %p111 = scmp.ne.s32.totalorder %s99, %s100
      %p112 = scmp.eq.s32.totalorder %s27, 1
      %p113 = por %p111, %p112
      %p115 = scmp.ne.s32.totalorder %s100, %s114
      %p116 = scmp.eq.s32.totalorder %s27, 0
      %p117 = por %p115, %p116
      %s119 = sadd.s32 %s118, 1
      %p122 = scmp.eq.s32.totalorder %s21, 1
      %p123 = scmp.ne.s32.totalorder %s118, %s120
      %p124 = scmp.eq.s32.totalorder %s21, 0
      %p125 = por %p123, %p124
      %p126 = scmp.ne.s32.totalorder %s118, %s120
      %p127 = scmp.eq.s32.totalorder %s26, 1
      %p128 = por %p126, %p127
      %p129 = scmp.ne.s32.totalorder %s120, %s121
      %p130 = scmp.eq.s32.totalorder %s26, 0
      %p131 = por %p129, %p130
      %p132 = scmp.ne.s32.totalorder %s120, %s121
      %p133 = scmp.eq.s32.totalorder %s27, 1
      %p134 = por %p132, %p133
      %p136 = scmp.ne.s32.totalorder %s121, %s135
      %p137 = scmp.eq.s32.totalorder %s27, 0
      %p138 = por %p136, %p137
      %s140 = sadd.s32 %s139, 1
      %p143 = scmp.eq.s32.totalorder %s21, 1
      %p144 = scmp.ne.s32.totalorder %s139, %s141
      %p145 = scmp.eq.s32.totalorder %s21, 0
      %p146 = por %p144, %p145
      %p147 = scmp.ne.s32.totalorder %s139, %s141
      %p148 = scmp.eq.s32.totalorder %s26, 1
      %p149 = por %p147, %p148
      %p150 = scmp.ne.s32.totalorder %s141, %s142
      %p151 = scmp.eq.s32.totalorder %s26, 0
      %p152 = por %p150, %p151
      %p153 = scmp.ne.s32.totalorder %s141, %s142
      %p154 = scmp.eq.s32.totalorder %s27, 1
      %p155 = por %p153, %p154
      %p157 = scmp.ne.s32.totalorder %s142, %s156
      %p158 = scmp.eq.s32.totalorder %s27, 0
      %p159 = por %p157, %p158
      %s160 = ssub.s32 %s28, %s40
      %s161 = ssub.s32 %s29, %s36
      %s162 = sor.u32 %s160, %s161
      %p163 = scmp.eq.s32.totalorder %s162, 0
      %s165 = sadd.s32 %s164, 1
      %s166 = scalar_select %p163, %s164, %s165
      %p169 = pneg %p163
      %p170 = scmp.eq.s32.totalorder %s21, 1
      %p171 = por %p169, %p170
      %p172 = scmp.ne.s32.totalorder %s164, %s167
      %p173 = scmp.eq.s32.totalorder %s21, 0
      %p174 = por %p172, %p173
      %p175 = scmp.ne.s32.totalorder %s164, %s167
      %p176 = scmp.eq.s32.totalorder %s26, 1
      %p177 = por %p175, %p176
      %p178 = scmp.ne.s32.totalorder %s167, %s168
      %p179 = scmp.eq.s32.totalorder %s26, 0
      %p180 = por %p178, %p179
      %p181 = scmp.ne.s32.totalorder %s167, %s168
      %p182 = scmp.eq.s32.totalorder %s27, 1
      %p183 = por %p181, %p182
      %p185 = scmp.ne.s32.totalorder %s168, %s184
      %p186 = scmp.eq.s32.totalorder %s27, 0
      %p187 = por %p185, %p186
      %p188 = scmp.le.s32.totalorder 1, %s21
      %p189 = scmp.lt.s32.totalorder %s21, 3
      %p190 = pnand %p188, %p189
      %p191 = pneg %p190
      // Predicated region
      $region9: #{ffab_forward.35} parent=5 // pred_check
        _
      $region10: #{ffab_forward.35} parent=5 // pred_check_branch
        %193 = sbr.rel (%p190) target = $region12
      $region11: #{ffab_forward.35} parent=5 // pred_region
        %s194 = ssub.s32 %s21, 1
        // Predicated region
        $region13: #{ffab_forward.35} parent=11 // pred_check
          %p195 = pneg %p110
        $region14: #{ffab_forward.35} parent=11 // pred_check_branch
          %197 = sbr.rel (%p195) target = $region16
        $region15: #{ffab_forward.35} parent=11 // pred_region
          %s199 = ssub.s32 128, 128
          %200 = vsyncadd [#allocation6], %s199
          %s202 = sshll.u32 [#allocation7], 4
          %s203 = int_to_ptr.vmem [resolvable:$true] %s202
          %205 = dma.hbm_to_vmem [thread:$0]  %s2, 128, %s203, [#allocation6]
        $region16: #{ffab_forward.35} parent=11 // pred_fallthru
          _
        // Predicated region
        $region17: #{ffab_forward.35} parent=11 // pred_check
          %p206 = pneg %p131
        $region18: #{ffab_forward.35} parent=11 // pred_check_branch
          %208 = sbr.rel (%p206) target = $region20
        $region19: #{ffab_forward.35} parent=11 // pred_region
          %s210 = ssub.s32 128, 128
          %211 = vsyncadd [#allocation9], %s210
          %s213 = sshll.u32 [#allocation8], 4
          %s214 = int_to_ptr.vmem [resolvable:$true] %s213
          %216 = dma.hbm_to_vmem [thread:$0]  %s3, 128, %s214, [#allocation9]
        $region20: #{ffab_forward.35} parent=11 // pred_fallthru
          _
        // Predicated region
        $region21: #{ffab_forward.35} parent=11 // pred_check
          %p217 = pneg %p152
        $region22: #{ffab_forward.35} parent=11 // pred_check_branch
          %219 = sbr.rel (%p217) target = $region24
        $region23: #{ffab_forward.35} parent=11 // pred_region
          %s221 = ssub.s32 128, 128
          %222 = vsyncadd [#allocation9], %s221
          %s224 = sshll.u32 [#allocation10], 4
          %s225 = int_to_ptr.vmem [resolvable:$true] %s224
          %227 = dma.hbm_to_vmem [thread:$0]  %s4, 128, %s225, [#allocation9]
        $region24: #{ffab_forward.35} parent=11 // pred_fallthru
          _
      $region12: #{ffab_forward.35} parent=5 // pred_fallthru
        _
      %p228 = scmp.lt.s32.totalorder %s21, 2
      // Predicated region
      $region25: #{ffab_forward.35} parent=5 // pred_check
        %p229 = pneg %p228
      $region26: #{ffab_forward.35} parent=5 // pred_check_branch
        %231 = sbr.rel (%p229) target = $region28
      $region27: #{ffab_forward.35} parent=5 // pred_region
        // Predicated region
        $region29: #{ffab_forward.35} parent=27 // pred_check
          %p232 = pneg %p55
        $region30: #{ffab_forward.35} parent=27 // pred_check_branch
          %234 = sbr.rel (%p232) target = $region32
        $region31: #{ffab_forward.35} parent=27 // pred_region
          %s235 = sand.u32 %s45, 1
          %s236 = scalar_lea.sflag [#allocation3], %s235
          %s237 = sand.u32 %s45, 1
          %s238 = smul.addr %s237, 8
          %s239 = scalar_lea.vmem [#allocation2], %s238
          %s240 = smul.u32 2, %s29
          %s242 = ssub.s32 128, 128
          %243 = vsyncadd %s236, %s242
          %s244 = smul.addr %s28, 2
          %s245 = sadd.s32 %s240, %s244
          %s246 = smul.addr %s245, 64
          %s247 = scalar_lea.hbm %s0, %s246
          %s249 = sshll.u32 %s239, 4
          %s250 = int_to_ptr.vmem [resolvable:$true] %s249
          %252 = dma.hbm_to_vmem [thread:$0]  %s247, 128, %s250, %s236
        $region32: #{ffab_forward.35} parent=27 // pred_fallthru
          _
        // Predicated region
        $region33: #{ffab_forward.35} parent=27 // pred_check
          %p253 = pneg %p83
        $region34: #{ffab_forward.35} parent=27 // pred_check_branch
          %255 = sbr.rel (%p253) target = $region36
        $region35: #{ffab_forward.35} parent=27 // pred_region
          %s256 = sand.u32 %s21, 1
          %s257 = scalar_lea.sflag [#allocation6], %s256
          %s258 = sand.u32 %s73, 1
          %s259 = smul.addr %s258, 8
          %s260 = scalar_lea.vmem [#allocation5], %s259
          %s261 = smul.u32 2, %s29
          %s263 = ssub.s32 128, 128
          %264 = vsyncadd %s257, %s263
          %s265 = smul.addr %s28, 2
          %s266 = sadd.s32 %s261, %s265
          %s267 = smul.addr %s266, 64
          %s268 = scalar_lea.hbm %s1, %s267
          %s270 = sshll.u32 %s260, 4
          %s271 = int_to_ptr.vmem [resolvable:$true] %s270
          %273 = dma.hbm_to_vmem [thread:$0]  %s268, 128, %s271, %s257
        $region36: #{ffab_forward.35} parent=27 // pred_fallthru
          _
      $region28: #{ffab_forward.35} parent=5 // pred_fallthru
        _
      %p274 = scmp.le.s32.totalorder 1, %s21
      %p275 = scmp.lt.s32.totalorder %s21, 3
      %p276 = pnand %p274, %p275
      %p277 = pneg %p276
      // Predicated region
      $region37: #{ffab_forward.35} parent=5 // pred_check
        _
      $region38: #{ffab_forward.35} parent=5 // pred_check_branch
        %279 = sbr.rel (%p276) target = $region40
      $region39: #{ffab_forward.35} parent=5 // pred_region
        %s280 = ssub.s32 %s21, 1
        %s281 = sand.u32 %s48, 1
        %s282 = scalar_lea.sflag [#allocation3], %s281
        %s283 = sand.u32 %s48, 1
        %s284 = smul.addr %s283, 8
        %s285 = scalar_lea.vmem [#allocation2], %s284
        // Predicated region
        $region41: #{ffab_forward.35} parent=39 // pred_check
          %p286 = pneg %p61
        $region42: #{ffab_forward.35} parent=39 // pred_check_branch
          %288 = sbr.rel (%p286) target = $region44
        $region43: #{ffab_forward.35} parent=39 // pred_region
          %289 = dma.done %s282, 128
        $region44: #{ffab_forward.35} parent=39 // pred_fallthru
          _
        %s290 = sand.u32 %s26, 1
        %s291 = scalar_lea.sflag [#allocation6], %s290
        %s292 = sand.u32 %s76, 1
        %s293 = smul.addr %s292, 8
        %s294 = scalar_lea.vmem [#allocation5], %s293
        // Predicated region
        $region45: #{ffab_forward.35} parent=39 // pred_check
          %p295 = pneg %p89
        $region46: #{ffab_forward.35} parent=39 // pred_check_branch
          %297 = sbr.rel (%p295) target = $region48
        $region47: #{ffab_forward.35} parent=39 // pred_region
          %298 = dma.done %s291, 128
        $region48: #{ffab_forward.35} parent=39 // pred_fallthru
          _
        // Predicated region
        $region49: #{ffab_forward.35} parent=39 // pred_check
          %p299 = pneg %p110
        $region50: #{ffab_forward.35} parent=39 // pred_check_branch
          %301 = sbr.rel (%p299) target = $region52
        $region51: #{ffab_forward.35} parent=39 // pred_region
          %302 = dma.done [#allocation6], 128
        $region52: #{ffab_forward.35} parent=39 // pred_fallthru
          _
        // Predicated region
        $region53: #{ffab_forward.35} parent=39 // pred_check
          %p303 = pneg %p131
        $region54: #{ffab_forward.35} parent=39 // pred_check_branch
          %305 = sbr.rel (%p303) target = $region56
        $region55: #{ffab_forward.35} parent=39 // pred_region
          %306 = dma.done [#allocation9], 128
        $region56: #{ffab_forward.35} parent=39 // pred_fallthru
          _
        // Predicated region
        $region57: #{ffab_forward.35} parent=39 // pred_check
          %p307 = pneg %p152
        $region58: #{ffab_forward.35} parent=39 // pred_check_branch
          %309 = sbr.rel (%p307) target = $region60
        $region59: #{ffab_forward.35} parent=39 // pred_region
          %310 = dma.done [#allocation9], 128
        $region60: #{ffab_forward.35} parent=39 // pred_fallthru
          _
        %s311 = sand.u32 %s48, 1
        %s312 = scalar_lea.sflag [#allocation3], %s311
        %s313 = sand.u32 %s48, 1
        %s314 = smul.addr %s313, 8
        %s315 = scalar_lea.vmem [#allocation2], %s314
        %p316 = pneg %p61
        %p317 = pneg %p58
        %s318 = sand.u32 %s26, 1
        %s319 = scalar_lea.sflag [#allocation6], %s318
        %s320 = sand.u32 %s76, 1
        %s321 = smul.addr %s320, 8
        %s322 = scalar_lea.vmem [#allocation5], %s321
        %p323 = pneg %p89
        %p324 = pneg %p86
        %p325 = pneg %p110
        %p326 = pneg %p107
        %p327 = pneg %p131
        %p328 = pneg %p128
        %p329 = pneg %p152
        %p330 = pneg %p149
        %p331 = pneg %p180
        %p332 = pneg %p177
        %s333 = sand.u32 %s167, 1
        %s334 = scalar_lea.sflag [#allocation4], %s333
        %s335 = sand.u32 %s167, 1
        %s336 = smul.addr %s335, 16
        %s337 = scalar_lea.vmem [#allocation11], %s336
        %s338 = smul.u32 2, %s31
        %s339 = smul.u32 2, %s31
        %s340 = smul.u32 2, %s31
        %v341 = vld [vmem:[%s285] sm:$0xff]
        %v342 = vmax.f32 %v341, -10.0
        %v343 = vmin.f32 %v342, 10.0
        %v344 = vld [vmem:[%s294] sm:$0xff]
        %v345 = vmax.f32 %v344, -10.0
        %v346 = vmin.f32 %v345, 10.0
        %v347 = vld [vmem:[#allocation7] sm:$0xff]
        %349 = vset.pattern.permute.xlu0 0
        %350 = vperm.xlu0 %349, %v347
        %v351 = vpop.permute.xlu0 %350
        %v354 = vlaneseq
        %v355 = vshrl.u32 %v354, 7
        %v356 = vsub.s32 0, %v355
        %v357 = vrot.slane %v343, %v356
        %v358 = vlaneseq
        %v359 = vshrl.u32 %v358, 7
        %v360 = vsub.s32 4, %v359
        %v361 = vrot.slane %v343, %v360
        %v364 = vlaneseq
        %v365 = vshrl.u32 %v364, 7
        %v366 = vsub.s32 0, %v365
        %v367 = vrot.slane %v357, %v366
        %v368 = vlaneseq
        %v369 = vshrl.u32 %v368, 7
        %v370 = vsub.s32 0, %v369
        %v371 = vrot.slane %v361, %v370
        %v372 = vmul.f32 %v351, %v367
        %v373 = vmul.f32 %v351, %v371
        %374 = vset.pattern.permute.xlu0 1
        %375 = vperm.xlu0 %374, %v347
        %v376 = vpop.permute.xlu0 %375
        %v378 = vlaneseq
        %v379 = vshrl.u32 %v378, 7
        %v380 = vsub.s32 1, %v379
        %v381 = vrot.slane %v343, %v380
        %v382 = vlaneseq
        %v383 = vshrl.u32 %v382, 7
        %v384 = vsub.s32 5, %v383
        %v385 = vrot.slane %v343, %v384
        %v388 = vlaneseq
        %v389 = vshrl.u32 %v388, 7
        %v390 = vsub.s32 1, %v389
        %v391 = vrot.slane %v381, %v390
        %v392 = vlaneseq
        %v393 = vshrl.u32 %v392, 7
        %v394 = vsub.s32 1, %v393
        %v395 = vrot.slane %v385, %v394
        %v396 = vmul.f32 %v376, %v391
        %v397 = vmul.f32 %v376, %v395
        %v398 = vadd.f32 %v372, %v396
        %v399 = vadd.f32 %v373, %v397
        %400 = vset.pattern.permute.xlu0 2
        %401 = vperm.xlu0 %400, %v347
        %v402 = vpop.permute.xlu0 %401
        %v404 = vlaneseq
        %v405 = vshrl.u32 %v404, 7
        %v406 = vsub.s32 2, %v405
        %v407 = vrot.slane %v343, %v406
        %v408 = vlaneseq
        %v409 = vshrl.u32 %v408, 7
        %v410 = vsub.s32 6, %v409
        %v411 = vrot.slane %v343, %v410
        %v414 = vlaneseq
        %v415 = vshrl.u32 %v414, 7
        %v416 = vsub.s32 2, %v415
        %v417 = vrot.slane %v407, %v416
        %v418 = vlaneseq
        %v419 = vshrl.u32 %v418, 7
        %v420 = vsub.s32 2, %v419
        %v421 = vrot.slane %v411, %v420
        %v422 = vmul.f32 %v402, %v417
        %v423 = vmul.f32 %v402, %v421
        %v424 = vadd.f32 %v398, %v422
        %v425 = vadd.f32 %v399, %v423
        %426 = vset.pattern.permute.xlu0 3
        %427 = vperm.xlu0 %426, %v347
        %v428 = vpop.permute.xlu0 %427
        %v430 = vlaneseq
        %v431 = vshrl.u32 %v430, 7
        %v432 = vsub.s32 3, %v431
        %v433 = vrot.slane %v343, %v432
        %v434 = vlaneseq
        %v435 = vshrl.u32 %v434, 7
        %v436 = vsub.s32 7, %v435
        %v437 = vrot.slane %v343, %v436
        %v440 = vlaneseq
        %v441 = vshrl.u32 %v440, 7
        %v442 = vsub.s32 3, %v441
        %v443 = vrot.slane %v433, %v442
        %v444 = vlaneseq
        %v445 = vshrl.u32 %v444, 7
        %v446 = vsub.s32 3, %v445
        %v447 = vrot.slane %v437, %v446
        %v448 = vmul.f32 %v428, %v443
        %v449 = vmul.f32 %v428, %v447
        %v450 = vadd.f32 %v424, %v448
        %v451 = vadd.f32 %v425, %v449
        %v452 = vld [vmem:[#allocation8] sm:$0xff]
        %454 = vset.pattern.permute.xlu0 0
        %455 = vperm.xlu0 %454, %v452
        %v456 = vpop.permute.xlu0 %455
        %v459 = vlaneseq
        %v460 = vshrl.u32 %v459, 7
        %v461 = vsub.s32 0, %v460
        %v462 = vrot.slane %v346, %v461
        %v463 = vlaneseq
        %v464 = vshrl.u32 %v463, 7
        %v465 = vsub.s32 4, %v464
        %v466 = vrot.slane %v346, %v465
        %v469 = vlaneseq
        %v470 = vshrl.u32 %v469, 7
        %v471 = vsub.s32 0, %v470
        %v472 = vrot.slane %v462, %v471
        %v473 = vlaneseq
        %v474 = vshrl.u32 %v473, 7
        %v475 = vsub.s32 0, %v474
        %v476 = vrot.slane %v466, %v475
        %v477 = vmul.f32 %v456, %v472
        %v478 = vmul.f32 %v456, %v476
        %479 = vset.pattern.permute.xlu0 1
        %480 = vperm.xlu0 %479, %v452
        %v481 = vpop.permute.xlu0 %480
        %v483 = vlaneseq
        %v484 = vshrl.u32 %v483, 7
        %v485 = vsub.s32 1, %v484
        %v486 = vrot.slane %v346, %v485
        %v487 = vlaneseq
        %v488 = vshrl.u32 %v487, 7
        %v489 = vsub.s32 5, %v488
        %v490 = vrot.slane %v346, %v489
        %v493 = vlaneseq
        %v494 = vshrl.u32 %v493, 7
        %v495 = vsub.s32 1, %v494
        %v496 = vrot.slane %v486, %v495
        %v497 = vlaneseq
        %v498 = vshrl.u32 %v497, 7
        %v499 = vsub.s32 1, %v498
        %v500 = vrot.slane %v490, %v499
        %v501 = vmul.f32 %v481, %v496
        %v502 = vmul.f32 %v481, %v500
        %v503 = vadd.f32 %v477, %v501
        %v504 = vadd.f32 %v478, %v502
        %505 = vset.pattern.permute.xlu0 2
        %506 = vperm.xlu0 %505, %v452
        %v507 = vpop.permute.xlu0 %506
        %v509 = vlaneseq
        %v510 = vshrl.u32 %v509, 7
        %v511 = vsub.s32 2, %v510
        %v512 = vrot.slane %v346, %v511
        %v513 = vlaneseq
        %v514 = vshrl.u32 %v513, 7
        %v515 = vsub.s32 6, %v514
        %v516 = vrot.slane %v346, %v515
        %v519 = vlaneseq
        %v520 = vshrl.u32 %v519, 7
        %v521 = vsub.s32 2, %v520
        %v522 = vrot.slane %v512, %v521
        %v523 = vlaneseq
        %v524 = vshrl.u32 %v523, 7
        %v525 = vsub.s32 2, %v524
        %v526 = vrot.slane %v516, %v525
        %v527 = vmul.f32 %v507, %v522
        %v528 = vmul.f32 %v507, %v526
        %v529 = vadd.f32 %v503, %v527
        %v530 = vadd.f32 %v504, %v528
        %531 = vset.pattern.permute.xlu0 3
        %532 = vperm.xlu0 %531, %v452
        %v533 = vpop.permute.xlu0 %532
        %v535 = vlaneseq
        %v536 = vshrl.u32 %v535, 7
        %v537 = vsub.s32 3, %v536
        %v538 = vrot.slane %v346, %v537
        %v539 = vlaneseq
        %v540 = vshrl.u32 %v539, 7
        %v541 = vsub.s32 7, %v540
        %v542 = vrot.slane %v346, %v541
        %v545 = vlaneseq
        %v546 = vshrl.u32 %v545, 7
        %v547 = vsub.s32 3, %v546
        %v548 = vrot.slane %v538, %v547
        %v549 = vlaneseq
        %v550 = vshrl.u32 %v549, 7
        %v551 = vsub.s32 3, %v550
        %v552 = vrot.slane %v542, %v551
        %v553 = vmul.f32 %v533, %v548
        %v554 = vmul.f32 %v533, %v552
        %v555 = vadd.f32 %v529, %v553
        %v556 = vadd.f32 %v530, %v554
        %v557 = vadd.f32 %v450, %v555
        %v558 = vadd.f32 %v451, %v556
        %v559 = vld [vmem:[#allocation10] sm:$0xff]
        %561 = vset.pattern.permute.xlu0 0
        %562 = vperm.xlu0 %561, %v559
        %v563 = vpop.permute.xlu0 %562
        %v565 = vadd.f32 %v557, %v563
        %v566 = vadd.f32 %v558, %v563
        %567 = vst [vmem:[%s337] sm:$0xff] %v565
        %568 = vst [vmem:[%s337 + $0x8] sm:$0xff] %v566
        %s569 = sand.u32 %s167, 1
        %s570 = scalar_lea.sflag [#allocation4], %s569
        %s571 = sand.u32 %s167, 1
        %s572 = smul.addr %s571, 16
        %s573 = scalar_lea.vmem [#allocation11], %s572
        // Predicated region
        $region61: #{ffab_forward.35} parent=39 // pred_check
          %p574 = pneg %p177
        $region62: #{ffab_forward.35} parent=39 // pred_check_branch
          %576 = sbr.rel (%p574) target = $region64
        $region63: #{ffab_forward.35} parent=39 // pred_region
          %s577 = smul.u32 2, %s31
          %s579 = ssub.s32 256, 256
          %580 = vsyncadd %s570, %s579
          %s581 = smul.addr %s30, 2
          %s582 = sadd.s32 %s577, %s581
          %s583 = smul.addr %s582, 128
          %s584 = scalar_lea.hbm %s5, %s583
          %s586 = sshll.u32 %s573, 4
          %s587 = int_to_ptr.vmem [resolvable:$true] %s586
          %589 = dma.vmem_to_hbm [thread:$0]  %s587, 256, %s584, %s570
        $region64: #{ffab_forward.35} parent=39 // pred_fallthru
          _
      $region40: #{ffab_forward.35} parent=5 // pred_fallthru
        _
      %p590 = scmp.le.s32.totalorder 2, %s21
      // Predicated region
      $region65: #{ffab_forward.35} parent=5 // pred_check
        %p591 = pneg %p590
      $region66: #{ffab_forward.35} parent=5 // pred_check_branch
        %593 = sbr.rel (%p591) target = $region68
      $region67: #{ffab_forward.35} parent=5 // pred_region
        %s594 = ssub.s32 %s21, 2
        // Predicated region
        $region69: #{ffab_forward.35} parent=67 // pred_check
          %p595 = pneg %p183
        $region70: #{ffab_forward.35} parent=67 // pred_check_branch
          %597 = sbr.rel (%p595) target = $region72
        $region71: #{ffab_forward.35} parent=67 // pred_region
          %s598 = sand.u32 %s168, 1
          %s599 = scalar_lea.sflag [#allocation4], %s598
          %s600 = sand.u32 %s168, 1
          %s601 = smul.addr %s600, 16
          %s602 = scalar_lea.vmem [#allocation11], %s601
          %603 = dma.done %s599, 256
        $region72: #{ffab_forward.35} parent=67 // pred_fallthru
          _
      $region68: #{ffab_forward.35} parent=5 // pred_fallthru
        _
    $region6: #{ffab_forward.35} parent=1 // loop_footer
      %s25 = sadd.s32 1, %s21
    $region7: #{ffab_forward.35} parent=1 // loop_footer_branch
      %20 = sbr.rel target = $region3
    $region8: #{ffab_forward.35} parent=1 // loop_exit
      _
    %604 = vsyncpa [#allocation3], 1
    %s605 = scalar_lea.sflag [#allocation3], 1
    %606 = vsyncpa %s605, 1
    %607 = vsyncpa [#allocation6], 1
    %s608 = scalar_lea.sflag [#allocation6], 1
    %609 = vsyncpa %s608, 1
    %610 = vsyncpa [#allocation9], 1
    %611 = vsyncpa [#allocation4], 1
    %s612 = scalar_lea.sflag [#allocation4], 1
    %613 = vsyncpa %s612, 1

// kernel: ffab_forward.36
$region0: #{ffab_forward.36}
  #allocation0 [shape = 'u32[]', space=smem, size = 0x4, offset = 0x4, fixed_abs, tag = 'smem constant byte address 0x4 - core index']
  #allocation1 [shape = 'u32[144,128]{1,0:T(1,128)}', space=vmem, size = 0x12000, scoped, tag = 'internal scratch']
  %s0 = inlined_call_operand.hbm [shape: f32[2,8,256], index: 0, kind: input, shape index: {}]
  %s1 = inlined_call_operand.hbm [shape: f32[2,8,256], index: 1, kind: input, shape index: {}]
  %s2 = inlined_call_operand.hbm [shape: f32[8,8], index: 2, kind: input, shape index: {}]
  %s3 = inlined_call_operand.hbm [shape: f32[8,1], index: 3, kind: input, shape index: {}]
  %s4 = inlined_call_operand.hbm [shape: f32[8,8], index: 4, kind: input, shape index: {}]
  %s5 = inlined_call_operand.hbm [shape: f32[8,1], index: 5, kind: input, shape index: {}]
  %s6 = inlined_call_operand.hbm [shape: f32[8,8], index: 6, kind: input, shape index: {}]
  %s7 = inlined_call_operand.hbm [shape: f32[8,1], index: 7, kind: input, shape index: {}]
  %s8 = inlined_call_operand.hbm [shape: f32[8,8], index: 8, kind: input, shape index: {}]
  %s9 = inlined_call_operand.hbm [shape: f32[8,1], index: 9, kind: input, shape index: {}]
  %s10 = inlined_call_operand.hbm [shape: f32[2,8,256], index: 10, kind: output, shape index: {0}]
  %s11 = inlined_call_operand.hbm [shape: f32[2,8,256], index: 11, kind: output, shape index: {1}]
  %12 = xla_tuple %s10, %s11
  %s13 = sld [smem:[#allocation0]]
  $region121: #{ffab_forward.36} parent=0
    _
  %s15 = ssub.s32 1, %s13
  %s16 = scalar_select 0, %s15, %s13
  $region1: #{ffab_forward.36} parent=0
    #allocation2 [shape = 'u8[16384]{0}', space=vmem, size = 0x4000, scoped, tag = 'input window, operand 0']
    #allocation3 [shape = 's32[2]{0}', space=sflag, size = 0x8, scoped, tag = 'scoped memory for ffab_forward.36']
    #allocation4 [shape = 's32[2]{0}', space=sflag, size = 0x8, scoped, tag = 'scoped memory for ffab_forward.36']
    #allocation5 [shape = 'u8[16384]{0}', space=vmem, size = 0x4000, scoped, tag = 'input window, operand 1']
    #allocation6 [shape = 's32[2]{0}', space=sflag, size = 0x8, scoped, tag = 'scoped memory for ffab_forward.36']
    #allocation7 [shape = 'u8[4096]{0}', space=vmem, size = 0x1000, scoped, tag = 'input window, operand 2, single buffered']
    #allocation8 [shape = 'u8[4096]{0}', space=vmem, size = 0x1000, scoped, tag = 'input window, operand 3, single buffered']
    #allocation9 [shape = 's32[1]{0}', space=sflag, size = 0x4, scoped, tag = 'scoped memory for ffab_forward.36']
    #allocation10 [shape = 'u8[4096]{0}', space=vmem, size = 0x1000, scoped, tag = 'input window, operand 4, single buffered']
    #allocation11 [shape = 'u8[4096]{0}', space=vmem, size = 0x1000, scoped, tag = 'input window, operand 5, single buffered']
    #allocation12 [shape = 's32[1]{0}', space=sflag, size = 0x4, scoped, tag = 'scoped memory for ffab_forward.36']
    #allocation13 [shape = 'u8[4096]{0}', space=vmem, size = 0x1000, scoped, tag = 'input window, operand 6, single buffered']
    #allocation14 [shape = 'u8[4096]{0}', space=vmem, size = 0x1000, scoped, tag = 'input window, operand 7, single buffered']
    #allocation15 [shape = 's32[1]{0}', space=sflag, size = 0x4, scoped, tag = 'scoped memory for ffab_forward.36']
    #allocation16 [shape = 'u8[4096]{0}', space=vmem, size = 0x1000, scoped, tag = 'input window, operand 8, single buffered']
    #allocation17 [shape = 'u8[4096]{0}', space=vmem, size = 0x1000, scoped, tag = 'input window, operand 9, single buffered']
    #allocation18 [shape = 's32[1]{0}', space=sflag, size = 0x4, scoped, tag = 'scoped memory for ffab_forward.36']
    #allocation19 [shape = 'u8[16384]{0}', space=vmem, size = 0x4000, scoped, tag = 'output window, operand 0']
    #allocation20 [shape = 'u8[16384]{0}', space=vmem, size = 0x4000, scoped, tag = 'output window, operand 1']
    #allocation21 [shape = 's32[2]{0}', space=sflag, size = 0x8, scoped, tag = 'scoped memory for ffab_forward.36']
    %17 = vsyncpa [#allocation3], 0
    %s18 = scalar_lea.sflag [#allocation3], 1
    %19 = vsyncpa %s18, 0
    %20 = vsyncpa [#allocation6], 0
    %s21 = scalar_lea.sflag [#allocation6], 1
    %22 = vsyncpa %s21, 0
    %23 = vsyncpa [#allocation9], 0
    %24 = vsyncpa [#allocation12], 0
    %25 = vsyncpa [#allocation15], 0
    %26 = vsyncpa [#allocation18], 0
    %27 = vsyncpa [#allocation4], 0
    %s28 = scalar_lea.sflag [#allocation4], 1
    %29 = vsyncpa %s28, 0
    %30 = vsyncpa [#allocation21], 0
    %s31 = scalar_lea.sflag [#allocation21], 1
    %32 = vsyncpa %s31, 0
    loop: start=0, step=1, limit=4
    $region2: #{ffab_forward.36} parent=1 // loop_pre_header
      _
    $region3: #{ffab_forward.36} parent=1 // loop_header
      %s34 = sphi 0, %s38
      %p35 = scmp.ge.s32.totalorder %s34, 4
      %s41 = sphi 0, %s53
      %s42 = sphi 0, %s49
      %s43 = sphi 0, %s41
      %s44 = sphi 0, %s42
      %s45 = sphi 0, %s43
      %s46 = sphi 0, %s44
      %s58 = sphi 0, %s60
      %s61 = sphi 0, %s58
      %s62 = sphi 0, %s61
      %s78 = sphi 0, %s62
      %s86 = sphi 0, %s88
      %s89 = sphi 0, %s86
      %s90 = sphi 0, %s89
      %s106 = sphi 0, %s90
      %s110 = sphi 0, %s110
      %s112 = sphi 0, %s110
      %s113 = sphi 0, %s112
      %s127 = sphi 0, %s113
      %s131 = sphi 0, %s131
      %s133 = sphi 0, %s131
      %s134 = sphi 0, %s133
      %s148 = sphi 0, %s134
      %s152 = sphi 0, %s152
      %s154 = sphi 0, %s152
      %s155 = sphi 0, %s154
      %s169 = sphi 0, %s155
      %s173 = sphi 0, %s173
      %s175 = sphi 0, %s173
      %s176 = sphi 0, %s175
      %s190 = sphi 0, %s176
      %s194 = sphi 0, %s194
      %s196 = sphi 0, %s194
      %s197 = sphi 0, %s196
      %s211 = sphi 0, %s197
      %s215 = sphi 0, %s215
      %s217 = sphi 0, %s215
      %s218 = sphi 0, %s217
      %s232 = sphi 0, %s218
      %s236 = sphi 0, %s236
      %s238 = sphi 0, %s236
      %s239 = sphi 0, %s238
      %s253 = sphi 0, %s239
      %s257 = sphi 0, %s257
      %s259 = sphi 0, %s257
      %s260 = sphi 0, %s259
      %s274 = sphi 0, %s260
      %s282 = sphi 0, %s284
      %s285 = sphi 0, %s282
      %s286 = sphi 0, %s285
      %s302 = sphi 0, %s286
      %s310 = sphi 0, %s312
      %s313 = sphi 0, %s310
      %s314 = sphi 0, %s313
      %s330 = sphi 0, %s314
    $region4: #{ffab_forward.36} parent=1 // loop_header_branch
      %37 = sbr.rel (%p35) target = $region8
    $region5: #{ffab_forward.36} parent=1 // loop_body
      %s39 = ssub.s32 %s34, 1
      %s40 = ssub.s32 %s34, 2
      %s47 = sadd.s32 1, %s42
      %p48 = scmp.ge.s32.totalorder %s47, 1
      %s49 = scalar_select %p48, 0, %s47
      %s50 = sadd.s32 1, %s41
      %s51 = scalar_select %p48, %s50, %s41
      %p52 = scmp.ge.s32.totalorder %s51, 2
      %s53 = scalar_select %p52, 0, %s51
      %s54 = ssub.s32 %s41, %s53
      %s55 = ssub.s32 %s42, %s49
      %s56 = sor.u32 %s54, %s55
      %p57 = scmp.eq.s32.totalorder %s56, 0
      %s59 = sadd.s32 %s58, 1
      %s60 = scalar_select %p57, %s58, %s59
      %p63 = pneg %p57
      %p64 = scmp.eq.s32.totalorder %s34, 1
      %p65 = por %p63, %p64
      %p66 = scmp.ne.s32.totalorder %s58, %s61
      %p67 = scmp.eq.s32.totalorder %s34, 0
      %p68 = por %p66, %p67
      %p69 = scmp.ne.s32.totalorder %s58, %s61
      %p70 = scmp.eq.s32.totalorder %s39, 1
      %p71 = por %p69, %p70
      %p72 = scmp.ne.s32.totalorder %s61, %s62
      %p73 = scmp.eq.s32.totalorder %s39, 0
      %p74 = por %p72, %p73
      %p75 = scmp.ne.s32.totalorder %s61, %s62
      %p76 = scmp.eq.s32.totalorder %s40, 1
      %p77 = por %p75, %p76
      %p79 = scmp.ne.s32.totalorder %s62, %s78
      %p80 = scmp.eq.s32.totalorder %s40, 0
      %p81 = por %p79, %p80
      %s82 = ssub.s32 %s41, %s53
      %s83 = ssub.s32 %s42, %s49
      %s84 = sor.u32 %s82, %s83
      %p85 = scmp.eq.s32.totalorder %s84, 0
      %s87 = sadd.s32 %s86, 1
      %s88 = scalar_select %p85, %s86, %s87
      %p91 = pneg %p85
      %p92 = scmp.eq.s32.totalorder %s34, 1
      %p93 = por %p91, %p92
      %p94 = scmp.ne.s32.totalorder %s86, %s89
      %p95 = scmp.eq.s32.totalorder %s34, 0
      %p96 = por %p94, %p95
      %p97 = scmp.ne.s32.totalorder %s86, %s89
      %p98 = scmp.eq.s32.totalorder %s39, 1
      %p99 = por %p97, %p98
      %p100 = scmp.ne.s32.totalorder %s89, %s90
      %p101 = scmp.eq.s32.totalorder %s39, 0
      %p102 = por %p100, %p101
      %p103 = scmp.ne.s32.totalorder %s89, %s90
      %p104 = scmp.eq.s32.totalorder %s40, 1
      %p105 = por %p103, %p104
      %p107 = scmp.ne.s32.totalorder %s90, %s106
      %p108 = scmp.eq.s32.totalorder %s40, 0
      %p109 = por %p107, %p108
      %s111 = sadd.s32 %s110, 1
      %p114 = scmp.eq.s32.totalorder %s34, 1
      %p115 = scmp.ne.s32.totalorder %s110, %s112
      %p116 = scmp.eq.s32.totalorder %s34, 0
      %p117 = por %p115, %p116
      %p118 = scmp.ne.s32.totalorder %s110, %s112
      %p119 = scmp.eq.s32.totalorder %s39, 1
      %p120 = por %p118, %p119
      %p121 = scmp.ne.s32.totalorder %s112, %s113
      %p122 = scmp.eq.s32.totalorder %s39, 0
      %p123 = por %p121, %p122
      %p124 = scmp.ne.s32.totalorder %s112, %s113
      %p125 = scmp.eq.s32.totalorder %s40, 1
      %p126 = por %p124, %p125
      %p128 = scmp.ne.s32.totalorder %s113, %s127
      %p129 = scmp.eq.s32.totalorder %s40, 0
      %p130 = por %p128, %p129
      %s132 = sadd.s32 %s131, 1
      %p135 = scmp.eq.s32.totalorder %s34, 1
      %p136 = scmp.ne.s32.totalorder %s131, %s133
      %p137 = scmp.eq.s32.totalorder %s34, 0
      %p138 = por %p136, %p137
      %p139 = scmp.ne.s32.totalorder %s131, %s133
      %p140 = scmp.eq.s32.totalorder %s39, 1
      %p141 = por %p139, %p140
      %p142 = scmp.ne.s32.totalorder %s133, %s134
      %p143 = scmp.eq.s32.totalorder %s39, 0
      %p144 = por %p142, %p143
      %p145 = scmp.ne.s32.totalorder %s133, %s134
      %p146 = scmp.eq.s32.totalorder %s40, 1
      %p147 = por %p145, %p146
      %p149 = scmp.ne.s32.totalorder %s134, %s148
      %p150 = scmp.eq.s32.totalorder %s40, 0
      %p151 = por %p149, %p150
      %s153 = sadd.s32 %s152, 1
      %p156 = scmp.eq.s32.totalorder %s34, 1
      %p157 = scmp.ne.s32.totalorder %s152, %s154
      %p158 = scmp.eq.s32.totalorder %s34, 0
      %p159 = por %p157, %p158
      %p160 = scmp.ne.s32.totalorder %s152, %s154
      %p161 = scmp.eq.s32.totalorder %s39, 1
      %p162 = por %p160, %p161
      %p163 = scmp.ne.s32.totalorder %s154, %s155
      %p164 = scmp.eq.s32.totalorder %s39, 0
      %p165 = por %p163, %p164
      %p166 = scmp.ne.s32.totalorder %s154, %s155
      %p167 = scmp.eq.s32.totalorder %s40, 1
      %p168 = por %p166, %p167
      %p170 = scmp.ne.s32.totalorder %s155, %s169
      %p171 = scmp.eq.s32.totalorder %s40, 0
      %p172 = por %p170, %p171
      %s174 = sadd.s32 %s173, 1
      %p177 = scmp.eq.s32.totalorder %s34, 1
      %p178 = scmp.ne.s32.totalorder %s173, %s175
      %p179 = scmp.eq.s32.totalorder %s34, 0
      %p180 = por %p178, %p179
      %p181 = scmp.ne.s32.totalorder %s173, %s175
      %p182 = scmp.eq.s32.totalorder %s39, 1
      %p183 = por %p181, %p182
      %p184 = scmp.ne.s32.totalorder %s175, %s176
      %p185 = scmp.eq.s32.totalorder %s39, 0
      %p186 = por %p184, %p185
      %p187 = scmp.ne.s32.totalorder %s175, %s176
      %p188 = scmp.eq.s32.totalorder %s40, 1
      %p189 = por %p187, %p188
      %p191 = scmp.ne.s32.totalorder %s176, %s190
      %p192 = scmp.eq.s32.totalorder %s40, 0
      %p193 = por %p191, %p192
      %s195 = sadd.s32 %s194, 1
      %p198 = scmp.eq.s32.totalorder %s34, 1
      %p199 = scmp.ne.s32.totalorder %s194, %s196
      %p200 = scmp.eq.s32.totalorder %s34, 0
      %p201 = por %p199, %p200
      %p202 = scmp.ne.s32.totalorder %s194, %s196
      %p203 = scmp.eq.s32.totalorder %s39, 1
      %p204 = por %p202, %p203
      %p205 = scmp.ne.s32.totalorder %s196, %s197
      %p206 = scmp.eq.s32.totalorder %s39, 0
      %p207 = por %p205, %p206
      %p208 = scmp.ne.s32.totalorder %s196, %s197
      %p209 = scmp.eq.s32.totalorder %s40, 1
      %p210 = por %p208, %p209
      %p212 = scmp.ne.s32.totalorder %s197, %s211
      %p213 = scmp.eq.s32.totalorder %s40, 0
      %p214 = por %p212, %p213
      %s216 = sadd.s32 %s215, 1
      %p219 = scmp.eq.s32.totalorder %s34, 1
      %p220 = scmp.ne.s32.totalorder %s215, %s217
      %p221 = scmp.eq.s32.totalorder %s34, 0
      %p222 = por %p220, %p221
      %p223 = scmp.ne.s32.totalorder %s215, %s217
      %p224 = scmp.eq.s32.totalorder %s39, 1
      %p225 = por %p223, %p224
      %p226 = scmp.ne.s32.totalorder %s217, %s218
      %p227 = scmp.eq.s32.totalorder %s39, 0
      %p228 = por %p226, %p227
      %p229 = scmp.ne.s32.totalorder %s217, %s218
      %p230 = scmp.eq.s32.totalorder %s40, 1
      %p231 = por %p229, %p230
      %p233 = scmp.ne.s32.totalorder %s218, %s232
      %p234 = scmp.eq.s32.totalorder %s40, 0
      %p235 = por %p233, %p234
      %s237 = sadd.s32 %s236, 1
      %p240 = scmp.eq.s32.totalorder %s34, 1
      %p241 = scmp.ne.s32.totalorder %s236, %s238
      %p242 = scmp.eq.s32.totalorder %s34, 0
      %p243 = por %p241, %p242
      %p244 = scmp.ne.s32.totalorder %s236, %s238
      %p245 = scmp.eq.s32.totalorder %s39, 1
      %p246 = por %p244, %p245
      %p247 = scmp.ne.s32.totalorder %s238, %s239
      %p248 = scmp.eq.s32.totalorder %s39, 0
      %p249 = por %p247, %p248
      %p250 = scmp.ne.s32.totalorder %s238, %s239
      %p251 = scmp.eq.s32.totalorder %s40, 1
      %p252 = por %p250, %p251
      %p254 = scmp.ne.s32.totalorder %s239, %s253
      %p255 = scmp.eq.s32.totalorder %s40, 0
      %p256 = por %p254, %p255
      %s258 = sadd.s32 %s257, 1
      %p261 = scmp.eq.s32.totalorder %s34, 1
      %p262 = scmp.ne.s32.totalorder %s257, %s259
      %p263 = scmp.eq.s32.totalorder %s34, 0
      %p264 = por %p262, %p263
      %p265 = scmp.ne.s32.totalorder %s257, %s259
      %p266 = scmp.eq.s32.totalorder %s39, 1
      %p267 = por %p265, %p266
      %p268 = scmp.ne.s32.totalorder %s259, %s260
      %p269 = scmp.eq.s32.totalorder %s39, 0
      %p270 = por %p268, %p269
      %p271 = scmp.ne.s32.totalorder %s259, %s260
      %p272 = scmp.eq.s32.totalorder %s40, 1
      %p273 = por %p271, %p272
      %p275 = scmp.ne.s32.totalorder %s260, %s274
      %p276 = scmp.eq.s32.totalorder %s40, 0
      %p277 = por %p275, %p276
      %s278 = ssub.s32 %s41, %s53
      %s279 = ssub.s32 %s42, %s49
      %s280 = sor.u32 %s278, %s279
      %p281 = scmp.eq.s32.totalorder %s280, 0
      %s283 = sadd.s32 %s282, 1
      %s284 = scalar_select %p281, %s282, %s283
      %p287 = pneg %p281
      %p288 = scmp.eq.s32.totalorder %s34, 1
      %p289 = por %p287, %p288
      %p290 = scmp.ne.s32.totalorder %s282, %s285
      %p291 = scmp.eq.s32.totalorder %s34, 0
      %p292 = por %p290, %p291
      %p293 = scmp.ne.s32.totalorder %s282, %s285
      %p294 = scmp.eq.s32.totalorder %s39, 1
      %p295 = por %p293, %p294
      %p296 = scmp.ne.s32.totalorder %s285, %s286
      %p297 = scmp.eq.s32.totalorder %s39, 0
      %p298 = por %p296, %p297
      %p299 = scmp.ne.s32.totalorder %s285, %s286
      %p300 = scmp.eq.s32.totalorder %s40, 1
      %p301 = por %p299, %p300
      %p303 = scmp.ne.s32.totalorder %s286, %s302
      %p304 = scmp.eq.s32.totalorder %s40, 0
      %p305 = por %p303, %p304
      %s306 = ssub.s32 %s41, %s53
      %s307 = ssub.s32 %s42, %s49
      %s308 = sor.u32 %s306, %s307
      %p309 = scmp.eq.s32.totalorder %s308, 0
      %s311 = sadd.s32 %s310, 1
      %s312 = scalar_select %p309, %s310, %s311
      %p315 = pneg %p309
      %p316 = scmp.eq.s32.totalorder %s34, 1
      %p317 = por %p315, %p316
      %p318 = scmp.ne.s32.totalorder %s310, %s313
      %p319 = scmp.eq.s32.totalorder %s34, 0
      %p320 = por %p318, %p319
      %p321 = scmp.ne.s32.totalorder %s310, %s313
      %p322 = scmp.eq.s32.totalorder %s39, 1
      %p323 = por %p321, %p322
      %p324 = scmp.ne.s32.totalorder %s313, %s314
      %p325 = scmp.eq.s32.totalorder %s39, 0
      %p326 = por %p324, %p325
      %p327 = scmp.ne.s32.totalorder %s313, %s314
      %p328 = scmp.eq.s32.totalorder %s40, 1
      %p329 = por %p327, %p328
      %p331 = scmp.ne.s32.totalorder %s314, %s330
      %p332 = scmp.eq.s32.totalorder %s40, 0
      %p333 = por %p331, %p332
      %p334 = scmp.le.s32.totalorder 1, %s34
      %p335 = scmp.lt.s32.totalorder %s34, 3
      %p336 = pnand %p334, %p335
      %p337 = pneg %p336
      // Predicated region
      $region9: #{ffab_forward.36} parent=5 // pred_check
        _
      $region10: #{ffab_forward.36} parent=5 // pred_check_branch
        %339 = sbr.rel (%p336) target = $region12
      $region11: #{ffab_forward.36} parent=5 // pred_region
        %s340 = ssub.s32 %s34, 1
        // Predicated region
        $region13: #{ffab_forward.36} parent=11 // pred_check
          %p341 = pneg %p123
        $region14: #{ffab_forward.36} parent=11 // pred_check_branch
          %343 = sbr.rel (%p341) target = $region16
        $region15: #{ffab_forward.36} parent=11 // pred_region
          %s345 = ssub.s32 128, 128
          %346 = vsyncadd [#allocation6], %s345
          %s348 = sshll.u32 [#allocation7], 4
          %s349 = int_to_ptr.vmem [resolvable:$true] %s348
          %351 = dma.hbm_to_vmem [thread:$0]  %s2, 128, %s349, [#allocation6]
        $region16: #{ffab_forward.36} parent=11 // pred_fallthru
          _
        // Predicated region
        $region17: #{ffab_forward.36} parent=11 // pred_check
          %p352 = pneg %p144
        $region18: #{ffab_forward.36} parent=11 // pred_check_branch
          %354 = sbr.rel (%p352) target = $region20
        $region19: #{ffab_forward.36} parent=11 // pred_region
          %s356 = ssub.s32 128, 128
          %357 = vsyncadd [#allocation9], %s356
          %s359 = sshll.u32 [#allocation8], 4
          %s360 = int_to_ptr.vmem [resolvable:$true] %s359
          %362 = dma.hbm_to_vmem [thread:$0]  %s3, 128, %s360, [#allocation9]
        $region20: #{ffab_forward.36} parent=11 // pred_fallthru
          _
        // Predicated region
        $region21: #{ffab_forward.36} parent=11 // pred_check
          %p363 = pneg %p165
        $region22: #{ffab_forward.36} parent=11 // pred_check_branch
          %365 = sbr.rel (%p363) target = $region24
        $region23: #{ffab_forward.36} parent=11 // pred_region
          %s367 = ssub.s32 128, 128
          %368 = vsyncadd [#allocation9], %s367
          %s370 = sshll.u32 [#allocation10], 4
          %s371 = int_to_ptr.vmem [resolvable:$true] %s370
          %373 = dma.hbm_to_vmem [thread:$0]  %s4, 128, %s371, [#allocation9]
        $region24: #{ffab_forward.36} parent=11 // pred_fallthru
          _
        // Predicated region
        $region25: #{ffab_forward.36} parent=11 // pred_check
          %p374 = pneg %p186
        $region26: #{ffab_forward.36} parent=11 // pred_check_branch
          %376 = sbr.rel (%p374) target = $region28
        $region27: #{ffab_forward.36} parent=11 // pred_region
          %s378 = ssub.s32 128, 128
          %379 = vsyncadd [#allocation12], %s378
          %s381 = sshll.u32 [#allocation11], 4
          %s382 = int_to_ptr.vmem [resolvable:$true] %s381
          %384 = dma.hbm_to_vmem [thread:$0]  %s5, 128, %s382, [#allocation12]
        $region28: #{ffab_forward.36} parent=11 // pred_fallthru
          _
        // Predicated region
        $region29: #{ffab_forward.36} parent=11 // pred_check
          %p385 = pneg %p207
        $region30: #{ffab_forward.36} parent=11 // pred_check_branch
          %387 = sbr.rel (%p385) target = $region32
        $region31: #{ffab_forward.36} parent=11 // pred_region
          %s389 = ssub.s32 128, 128
          %390 = vsyncadd [#allocation12], %s389
          %s392 = sshll.u32 [#allocation13], 4
          %s393 = int_to_ptr.vmem [resolvable:$true] %s392
          %395 = dma.hbm_to_vmem [thread:$0]  %s6, 128, %s393, [#allocation12]
        $region32: #{ffab_forward.36} parent=11 // pred_fallthru
          _
        // Predicated region
        $region33: #{ffab_forward.36} parent=11 // pred_check
          %p396 = pneg %p228
        $region34: #{ffab_forward.36} parent=11 // pred_check_branch
          %398 = sbr.rel (%p396) target = $region36
        $region35: #{ffab_forward.36} parent=11 // pred_region
          %s400 = ssub.s32 128, 128
          %401 = vsyncadd [#allocation15], %s400
          %s403 = sshll.u32 [#allocation14], 4
          %s404 = int_to_ptr.vmem [resolvable:$true] %s403
          %406 = dma.hbm_to_vmem [thread:$0]  %s7, 128, %s404, [#allocation15]
        $region36: #{ffab_forward.36} parent=11 // pred_fallthru
          _
        // Predicated region
        $region37: #{ffab_forward.36} parent=11 // pred_check
          %p407 = pneg %p249
        $region38: #{ffab_forward.36} parent=11 // pred_check_branch
          %409 = sbr.rel (%p407) target = $region40
        $region39: #{ffab_forward.36} parent=11 // pred_region
          %s411 = ssub.s32 128, 128
          %412 = vsyncadd [#allocation15], %s411
          %s414 = sshll.u32 [#allocation16], 4
          %s415 = int_to_ptr.vmem [resolvable:$true] %s414
          %417 = dma.hbm_to_vmem [thread:$0]  %s8, 128, %s415, [#allocation15]
        $region40: #{ffab_forward.36} parent=11 // pred_fallthru
          _
        // Predicated region
        $region41: #{ffab_forward.36} parent=11 // pred_check
          %p418 = pneg %p270
        $region42: #{ffab_forward.36} parent=11 // pred_check_branch
          %420 = sbr.rel (%p418) target = $region44
        $region43: #{ffab_forward.36} parent=11 // pred_region
          %s422 = ssub.s32 128, 128
          %423 = vsyncadd [#allocation18], %s422
          %s425 = sshll.u32 [#allocation17], 4
          %s426 = int_to_ptr.vmem [resolvable:$true] %s425
          %428 = dma.hbm_to_vmem [thread:$0]  %s9, 128, %s426, [#allocation18]
        $region44: #{ffab_forward.36} parent=11 // pred_fallthru
          _
      $region12: #{ffab_forward.36} parent=5 // pred_fallthru
        _
      %p429 = scmp.lt.s32.totalorder %s34, 2
      // Predicated region
      $region45: #{ffab_forward.36} parent=5 // pred_check
        %p430 = pneg %p429
      $region46: #{ffab_forward.36} parent=5 // pred_check_branch
        %432 = sbr.rel (%p430) target = $region48
      $region47: #{ffab_forward.36} parent=5 // pred_region
        // Predicated region
        $region49: #{ffab_forward.36} parent=47 // pred_check
          %p433 = pneg %p68
        $region50: #{ffab_forward.36} parent=47 // pred_check_branch
          %435 = sbr.rel (%p433) target = $region52
        $region51: #{ffab_forward.36} parent=47 // pred_region
          %s436 = sand.u32 %s58, 1
          %s437 = scalar_lea.sflag [#allocation3], %s436
          %s438 = sand.u32 %s58, 1
          %s439 = smul.addr %s438, 16
          %s440 = scalar_lea.vmem [#allocation2], %s439
          %s441 = smul.u32 2, %s42
          %s443 = ssub.s32 256, 256
          %444 = vsyncadd %s437, %s443
          %s445 = smul.addr %s41, 2
          %s446 = sadd.s32 %s441, %s445
          %s447 = smul.addr %s446, 128
          %s448 = scalar_lea.hbm %s0, %s447
          %s450 = sshll.u32 %s440, 4
          %s451 = int_to_ptr.vmem [resolvable:$true] %s450
          %453 = dma.hbm_to_vmem [thread:$0]  %s448, 256, %s451, %s437
        $region52: #{ffab_forward.36} parent=47 // pred_fallthru
          _
        // Predicated region
        $region53: #{ffab_forward.36} parent=47 // pred_check
          %p454 = pneg %p96
        $region54: #{ffab_forward.36} parent=47 // pred_check_branch
          %456 = sbr.rel (%p454) target = $region56
        $region55: #{ffab_forward.36} parent=47 // pred_region
          %s457 = sand.u32 %s34, 1
          %s458 = scalar_lea.sflag [#allocation6], %s457
          %s459 = sand.u32 %s86, 1
          %s460 = smul.addr %s459, 16
          %s461 = scalar_lea.vmem [#allocation5], %s460
          %s462 = smul.u32 2, %s42
          %s464 = ssub.s32 256, 256
          %465 = vsyncadd %s458, %s464
          %s466 = smul.addr %s41, 2
          %s467 = sadd.s32 %s462, %s466
          %s468 = smul.addr %s467, 128
          %s469 = scalar_lea.hbm %s1, %s468
          %s471 = sshll.u32 %s461, 4
          %s472 = int_to_ptr.vmem [resolvable:$true] %s471
          %474 = dma.hbm_to_vmem [thread:$0]  %s469, 256, %s472, %s458
        $region56: #{ffab_forward.36} parent=47 // pred_fallthru
          _
      $region48: #{ffab_forward.36} parent=5 // pred_fallthru
        _
      %p475 = scmp.le.s32.totalorder 1, %s34
      %p476 = scmp.lt.s32.totalorder %s34, 3
      %p477 = pnand %p475, %p476
      %p478 = pneg %p477
      // Predicated region
      $region57: #{ffab_forward.36} parent=5 // pred_check
        _
      $region58: #{ffab_forward.36} parent=5 // pred_check_branch
        %480 = sbr.rel (%p477) target = $region60
      $region59: #{ffab_forward.36} parent=5 // pred_region
        %s481 = ssub.s32 %s34, 1
        %s482 = sand.u32 %s61, 1
        %s483 = scalar_lea.sflag [#allocation3], %s482
        %s484 = sand.u32 %s61, 1
        %s485 = smul.addr %s484, 16
        %s486 = scalar_lea.vmem [#allocation2], %s485
        // Predicated region
        $region61: #{ffab_forward.36} parent=59 // pred_check
          %p487 = pneg %p74
        $region62: #{ffab_forward.36} parent=59 // pred_check_branch
          %489 = sbr.rel (%p487) target = $region64
        $region63: #{ffab_forward.36} parent=59 // pred_region
          %490 = dma.done %s483, 256
        $region64: #{ffab_forward.36} parent=59 // pred_fallthru
          _
        %s491 = sand.u32 %s39, 1
        %s492 = scalar_lea.sflag [#allocation6], %s491
        %s493 = sand.u32 %s89, 1
        %s494 = smul.addr %s493, 16
        %s495 = scalar_lea.vmem [#allocation5], %s494
        // Predicated region
        $region65: #{ffab_forward.36} parent=59 // pred_check
          %p496 = pneg %p102
        $region66: #{ffab_forward.36} parent=59 // pred_check_branch
          %498 = sbr.rel (%p496) target = $region68
        $region67: #{ffab_forward.36} parent=59 // pred_region
          %499 = dma.done %s492, 256
        $region68: #{ffab_forward.36} parent=59 // pred_fallthru
          _
        // Predicated region
        $region69: #{ffab_forward.36} parent=59 // pred_check
          %p500 = pneg %p123
        $region70: #{ffab_forward.36} parent=59 // pred_check_branch
          %502 = sbr.rel (%p500) target = $region72
        $region71: #{ffab_forward.36} parent=59 // pred_region
          %503 = dma.done [#allocation6], 128
        $region72: #{ffab_forward.36} parent=59 // pred_fallthru
          _
        // Predicated region
        $region73: #{ffab_forward.36} parent=59 // pred_check
          %p504 = pneg %p144
        $region74: #{ffab_forward.36} parent=59 // pred_check_branch
          %506 = sbr.rel (%p504) target = $region76
        $region75: #{ffab_forward.36} parent=59 // pred_region
          %507 = dma.done [#allocation9], 128
        $region76: #{ffab_forward.36} parent=59 // pred_fallthru
          _
        // Predicated region
        $region77: #{ffab_forward.36} parent=59 // pred_check
          %p508 = pneg %p165
        $region78: #{ffab_forward.36} parent=59 // pred_check_branch
          %510 = sbr.rel (%p508) target = $region80
        $region79: #{ffab_forward.36} parent=59 // pred_region
          %511 = dma.done [#allocation9], 128
        $region80: #{ffab_forward.36} parent=59 // pred_fallthru
          _
        // Predicated region
        $region81: #{ffab_forward.36} parent=59 // pred_check
          %p512 = pneg %p186
        $region82: #{ffab_forward.36} parent=59 // pred_check_branch
          %514 = sbr.rel (%p512) target = $region84
        $region83: #{ffab_forward.36} parent=59 // pred_region
          %515 = dma.done [#allocation12], 128
        $region84: #{ffab_forward.36} parent=59 // pred_fallthru
          _
        // Predicated region
        $region85: #{ffab_forward.36} parent=59 // pred_check
          %p516 = pneg %p207
        $region86: #{ffab_forward.36} parent=59 // pred_check_branch
          %518 = sbr.rel (%p516) target = $region88
        $region87: #{ffab_forward.36} parent=59 // pred_region
          %519 = dma.done [#allocation12], 128
        $region88: #{ffab_forward.36} parent=59 // pred_fallthru
          _
        // Predicated region
        $region89: #{ffab_forward.36} parent=59 // pred_check
          %p520 = pneg %p228
        $region90: #{ffab_forward.36} parent=59 // pred_check_branch
          %522 = sbr.rel (%p520) target = $region92
        $region91: #{ffab_forward.36} parent=59 // pred_region
          %523 = dma.done [#allocation15], 128
        $region92: #{ffab_forward.36} parent=59 // pred_fallthru
          _
        // Predicated region
        $region93: #{ffab_forward.36} parent=59 // pred_check
          %p524 = pneg %p249
        $region94: #{ffab_forward.36} parent=59 // pred_check_branch
          %526 = sbr.rel (%p524) target = $region96
        $region95: #{ffab_forward.36} parent=59 // pred_region
          %527 = dma.done [#allocation15], 128
        $region96: #{ffab_forward.36} parent=59 // pred_fallthru
          _
        // Predicated region
        $region97: #{ffab_forward.36} parent=59 // pred_check
          %p528 = pneg %p270
        $region98: #{ffab_forward.36} parent=59 // pred_check_branch
          %530 = sbr.rel (%p528) target = $region100
        $region99: #{ffab_forward.36} parent=59 // pred_region
          %531 = dma.done [#allocation18], 128
        $region100: #{ffab_forward.36} parent=59 // pred_fallthru
          _
        %s532 = sand.u32 %s61, 1
        %s533 = scalar_lea.sflag [#allocation3], %s532
        %s534 = sand.u32 %s61, 1
        %s535 = smul.addr %s534, 16
        %s536 = scalar_lea.vmem [#allocation2], %s535
        %p537 = pneg %p74
        %p538 = pneg %p71
        %s539 = sand.u32 %s39, 1
        %s540 = scalar_lea.sflag [#allocation6], %s539
        %s541 = sand.u32 %s89, 1
        %s542 = smul.addr %s541, 16
        %s543 = scalar_lea.vmem [#allocation5], %s542
        %p544 = pneg %p102
        %p545 = pneg %p99
        %p546 = pneg %p123
        %p547 = pneg %p120
        %p548 = pneg %p144
        %p549 = pneg %p141
        %p550 = pneg %p165
        %p551 = pneg %p162
        %p552 = pneg %p186
        %p553 = pneg %p183
        %p554 = pneg %p207
        %p555 = pneg %p204
        %p556 = pneg %p228
        %p557 = pneg %p225
        %p558 = pneg %p249
        %p559 = pneg %p246
        %p560 = pneg %p270
        %p561 = pneg %p267
        %p562 = pneg %p298
        %p563 = pneg %p295
        %s564 = sand.u32 %s285, 1
        %s565 = scalar_lea.sflag [#allocation4], %s564
        %s566 = sand.u32 %s285, 1
        %s567 = smul.addr %s566, 16
        %s568 = scalar_lea.vmem [#allocation19], %s567
        %p569 = pneg %p326
        %p570 = pneg %p323
        %s571 = sand.u32 %s313, 1
        %s572 = scalar_lea.sflag [#allocation21], %s571
        %s573 = sand.u32 %s313, 1
        %s574 = smul.addr %s573, 16
        %s575 = scalar_lea.vmem [#allocation20], %s574
        %s576 = smul.u32 2, %s44
        %s577 = smul.u32 2, %s44
        %s578 = smul.u32 2, %s44
        %s579 = smul.u32 2, %s44
        %v580 = vld [vmem:[%s486] sm:$0xff]
        %v581 = vld [vmem:[%s486 + $0x8] sm:$0xff]
        %v582 = vld [vmem:[%s495] sm:$0xff]
        %v583 = vld [vmem:[%s495 + $0x8] sm:$0xff]
        %v584 = vmul.f32 %v580, %v580
        %v585 = vmul.f32 %v581, %v581
        %v586 = vmul.f32 %v582, %v582
        %v587 = vmul.f32 %v583, %v583
        %v588 = vadd.f32 %v584, %v586
        %v589 = vadd.f32 %v585, %v587
        %v590 = vrsqrt.pop %v588
        %v591 = vmul.f32 %v588, %v590
        %vm592 = vcmp.eq.f32.partialorder %v588, inf
        %v593 = vsel %vm592, %v588, %v591
        %vm594 = vcmp.eq.f32.partialorder %v588, 0.0
        %v595 = vand.u32 %v588, 2147483648
        %v596 = vsel %vm594, %v595, %v593
        %v597 = vrsqrt.pop %v589
        %v598 = vmul.f32 %v589, %v597
        %vm599 = vcmp.eq.f32.partialorder %v589, inf
        %v600 = vsel %vm599, %v589, %v598
        %vm601 = vcmp.eq.f32.partialorder %v589, 0.0
        %v602 = vand.u32 %v589, 2147483648
        %v603 = vsel %vm601, %v602, %v600
        %v604 = vadd.f32 %v596, 1e-06
        %v605 = vadd.f32 %v603, 1e-06
        %v606 = vand.u32 2147483647, %v580
        %v607 = vand.u32 2147483647, %v582
        %v608 = vmin.f32 %v606, %v607
        %v609 = vmax.f32 %v606, %v607
        %v610 = vrcp.pop %v609
        %v611 = vmul.f32 %v608, %v610
        %v612 = vmul.f32 %v611, %v611
        %v613 = vmul.f32 0.002785687, %v612
        %v614 = vadd.f32 %v613, -0.015866
        %v615 = vmul.f32 %v614, %v612
        %v616 = vadd.f32 %v615, 0.04247222
        %v617 = vmul.f32 %v616, %v612
        %v618 = vadd.f32 %v617, -0.074975304
        %v619 = vmul.f32 %v618, %v612
        %v620 = vadd.f32 %v619, 0.1064488
        %v621 = vmul.f32 %v620, %v612
        %v622 = vadd.f32 %v621, -0.14207031
        %v623 = vmul.f32 %v622, %v612
        %v624 = vadd.f32 %v623, 0.19993454
        %v625 = vmul.f32 %v624, %v612
        %v626 = vadd.f32 %v625, -0.33333147
        %v627 = vmul.f32 %v626, %v612
        %v628 = vmul.f32 %v627, %v611
        %v629 = vadd.f32 %v628, %v611
        %vm630 = vcmp.gt.f32.partialorder %v607, %v606
        %v631 = vsub.f32 1.5707964, %v629
        %v632 = vsel %vm630, %v631, %v629
        %vm633 = vcmp.lt.f32.partialorder %v580, 0.0
        %v634 = vsub.f32 3.1415927, %v632
        %v635 = vsel %vm633, %v634, %v632
        %vm636 = vcmp.lt.s32.totalorder %v580, 0
        %v637 = vsel %vm636, 3.1415927, 0.0
        %vm638 = vcmp.eq.f32.partialorder %v582, 0.0
        %v639 = vsel %vm638, %v637, %v635
        %vm640 = vcmp.ne.f32.partialorder %v580, %v580
        %vm641 = vcmp.ne.f32.partialorder %v582, %v582
        %vm642 = vmor %vm640, %vm641
        %v643 = vsel %vm642, nan, %v639
        %vm644 = vcmp.lt.f32.partialorder %v580, 0.0
        %v645 = vsel %vm644, 2.3561945, 0.7853982
        %vm646 = vcmp.eq.s32.totalorder %v606, inf
        %vm647 = vcmp.eq.s32.totalorder %v607, inf
        %vm648 = vmand %vm646, %vm647
        %v649 = vsel %vm648, %v645, %v643
        %v650 = vand.u32 2147483647, %v649
        %v651 = vand.u32 %v582, 2147483648
        %v652 = vor.u32 %v650, %v651
        %v653 = vand.u32 2147483647, %v581
        %v654 = vand.u32 2147483647, %v583
        %v655 = vmin.f32 %v653, %v654
        %v656 = vmax.f32 %v653, %v654
        %v657 = vrcp.pop %v656
        %v658 = vmul.f32 %v655, %v657
        %v659 = vmul.f32 %v658, %v658
        %v660 = vmul.f32 0.002785687, %v659
        %v661 = vadd.f32 %v660, -0.015866
        %v662 = vmul.f32 %v661, %v659
        %v663 = vadd.f32 %v662, 0.04247222
        %v664 = vmul.f32 %v663, %v659
        %v665 = vadd.f32 %v664, -0.074975304
        %v666 = vmul.f32 %v665, %v659
        %v667 = vadd.f32 %v666, 0.1064488
        %v668 = vmul.f32 %v667, %v659
        %v669 = vadd.f32 %v668, -0.14207031
        %v670 = vmul.f32 %v669, %v659
        %v671 = vadd.f32 %v670, 0.19993454
        %v672 = vmul.f32 %v671, %v659
        %v673 = vadd.f32 %v672, -0.33333147
        %v674 = vmul.f32 %v673, %v659
        %v675 = vmul.f32 %v674, %v658
        %v676 = vadd.f32 %v675, %v658
        %vm677 = vcmp.gt.f32.partialorder %v654, %v653
        %v678 = vsub.f32 1.5707964, %v676
        %v679 = vsel %vm677, %v678, %v676
        %vm680 = vcmp.lt.f32.partialorder %v581, 0.0
        %v681 = vsub.f32 3.1415927, %v679
        %v682 = vsel %vm680, %v681, %v679
        %vm683 = vcmp.lt.s32.totalorder %v581, 0
        %v684 = vsel %vm683, 3.1415927, 0.0
        %vm685 = vcmp.eq.f32.partialorder %v583, 0.0
        %v686 = vsel %vm685, %v684, %v682
        %vm687 = vcmp.ne.f32.partialorder %v581, %v581
        %vm688 = vcmp.ne.f32.partialorder %v583, %v583
        %vm689 = vmor %vm687, %vm688
        %v690 = vsel %vm689, nan, %v686
        %vm691 = vcmp.lt.f32.partialorder %v581, 0.0
        %v692 = vsel %vm691, 2.3561945, 0.7853982
        %vm693 = vcmp.eq.s32.totalorder %v653, inf
        %vm694 = vcmp.eq.s32.totalorder %v654, inf
        %vm695 = vmand %vm693, %vm694
        %v696 = vsel %vm695, %v692, %v690
        %v697 = vand.u32 2147483647, %v696
        %v698 = vand.u32 %v583, 2147483648
        %v699 = vor.u32 %v697, %v698
        %v700 = vld [vmem:[#allocation13] sm:$0xff]
        %702 = vset.pattern.permute.xlu0 0
        %703 = vperm.xlu0 %702, %v700
        %v704 = vpop.permute.xlu0 %703
        %v706 = vlaneseq
        %v707 = vshrl.u32 %v706, 7
        %v708 = vsub.s32 0, %v707
        %v709 = vrot.slane %v652, %v708
        %v710 = vlaneseq
        %v711 = vshrl.u32 %v710, 7
        %v712 = vsub.s32 0, %v711
        %v713 = vrot.slane %v699, %v712
        %v714 = vmul.f32 %v704, %v709
        %v715 = vmul.f32 %v704, %v713
        %716 = vset.pattern.permute.xlu0 1
        %717 = vperm.xlu0 %716, %v700
        %v718 = vpop.permute.xlu0 %717
        %v720 = vlaneseq
        %v721 = vshrl.u32 %v720, 7
        %v722 = vsub.s32 1, %v721
        %v723 = vrot.slane %v652, %v722
        %v724 = vlaneseq
        %v725 = vshrl.u32 %v724, 7
        %v726 = vsub.s32 1, %v725
        %v727 = vrot.slane %v699, %v726
        %v728 = vmul.f32 %v718, %v723
        %v729 = vmul.f32 %v718, %v727
        %v730 = vadd.f32 %v714, %v728
        %v731 = vadd.f32 %v715, %v729
        %732 = vset.pattern.permute.xlu0 2
        %733 = vperm.xlu0 %732, %v700
        %v734 = vpop.permute.xlu0 %733
        %v736 = vlaneseq
        %v737 = vshrl.u32 %v736, 7
        %v738 = vsub.s32 2, %v737
        %v739 = vrot.slane %v652, %v738
        %v740 = vlaneseq
        %v741 = vshrl.u32 %v740, 7
        %v742 = vsub.s32 2, %v741
        %v743 = vrot.slane %v699, %v742
        %v744 = vmul.f32 %v734, %v739
        %v745 = vmul.f32 %v734, %v743
        %v746 = vadd.f32 %v730, %v744
        %v747 = vadd.f32 %v731, %v745
        %748 = vset.pattern.permute.xlu0 3
        %749 = vperm.xlu0 %748, %v700
        %v750 = vpop.permute.xlu0 %749
        %v752 = vlaneseq
        %v753 = vshrl.u32 %v752, 7
        %v754 = vsub.s32 3, %v753
        %v755 = vrot.slane %v652, %v754
        %v756 = vlaneseq
        %v757 = vshrl.u32 %v756, 7
        %v758 = vsub.s32 3, %v757
        %v759 = vrot.slane %v699, %v758
        %v760 = vmul.f32 %v750, %v755
        %v761 = vmul.f32 %v750, %v759
        %v762 = vadd.f32 %v746, %v760
        %v763 = vadd.f32 %v747, %v761
        %764 = vset.pattern.permute.xlu0 4
        %765 = vperm.xlu0 %764, %v700
        %v766 = vpop.permute.xlu0 %765
        %v768 = vlaneseq
        %v769 = vshrl.u32 %v768, 7
        %v770 = vsub.s32 4, %v769
        %v771 = vrot.slane %v652, %v770
        %v772 = vlaneseq
        %v773 = vshrl.u32 %v772, 7
        %v774 = vsub.s32 4, %v773
        %v775 = vrot.slane %v699, %v774
        %v776 = vmul.f32 %v766, %v771
        %v777 = vmul.f32 %v766, %v775
        %v778 = vadd.f32 %v762, %v776
        %v779 = vadd.f32 %v763, %v777
        %780 = vset.pattern.permute.xlu0 5
        %781 = vperm.xlu0 %780, %v700
        %v782 = vpop.permute.xlu0 %781
        %v784 = vlaneseq
        %v785 = vshrl.u32 %v784, 7
        %v786 = vsub.s32 5, %v785
        %v787 = vrot.slane %v652, %v786
        %v788 = vlaneseq
        %v789 = vshrl.u32 %v788, 7
        %v790 = vsub.s32 5, %v789
        %v791 = vrot.slane %v699, %v790
        %v792 = vmul.f32 %v782, %v787
        %v793 = vmul.f32 %v782, %v791
        %v794 = vadd.f32 %v778, %v792
        %v795 = vadd.f32 %v779, %v793
        %796 = vset.pattern.permute.xlu0 6
        %797 = vperm.xlu0 %796, %v700
        %v798 = vpop.permute.xlu0 %797
        %v800 = vlaneseq
        %v801 = vshrl.u32 %v800, 7
        %v802 = vsub.s32 6, %v801
        %v803 = vrot.slane %v652, %v802
        %v804 = vlaneseq
        %v805 = vshrl.u32 %v804, 7
        %v806 = vsub.s32 6, %v805
        %v807 = vrot.slane %v699, %v806
        %v808 = vmul.f32 %v798, %v803
        %v809 = vmul.f32 %v798, %v807
        %v810 = vadd.f32 %v794, %v808
        %v811 = vadd.f32 %v795, %v809
        %812 = vset.pattern.permute.xlu0 7
        %813 = vperm.xlu0 %812, %v700
        %v814 = vpop.permute.xlu0 %813
        %v816 = vlaneseq
        %v817 = vshrl.u32 %v816, 7
        %v818 = vsub.s32 7, %v817
        %v819 = vrot.slane %v652, %v818
        %v820 = vlaneseq
        %v821 = vshrl.u32 %v820, 7
        %v822 = vsub.s32 7, %v821
        %v823 = vrot.slane %v699, %v822
        %v824 = vmul.f32 %v814, %v819
        %v825 = vmul.f32 %v814, %v823
        %v826 = vadd.f32 %v810, %v824
        %v827 = vadd.f32 %v811, %v825
        %v828 = vld [vmem:[#allocation14] sm:$0xff]
        %830 = vset.pattern.permute.xlu0 0
        %831 = vperm.xlu0 %830, %v828
        %v832 = vpop.permute.xlu0 %831
        %v834 = vadd.f32 %v826, %v832
        %v835 = vadd.f32 %v827, %v832
        %vm836 = vcmp.ge.f32.partialorder %v834, 0.0
        %vm837 = vcmp.ge.f32.partialorder %v835, 0.0
        %v838 = vmul.f32 %v834, 0.1
        %v839 = vmul.f32 %v835, 0.1
        %v840 = vsel %vm836, %v834, %v838
        %v841 = vsel %vm837, %v835, %v839
        %v842 = vld [vmem:[#allocation16] sm:$0xff]
        %844 = vset.pattern.permute.xlu0 0
        %845 = vperm.xlu0 %844, %v842
        %v846 = vpop.permute.xlu0 %845
        %v848 = vlaneseq
        %v849 = vshrl.u32 %v848, 7
        %v850 = vsub.s32 0, %v849
        %v851 = vrot.slane %v840, %v850
        %v852 = vlaneseq
        %v853 = vshrl.u32 %v852, 7
        %v854 = vsub.s32 0, %v853
        %v855 = vrot.slane %v841, %v854
        %v856 = vmul.f32 %v846, %v851
        %v857 = vmul.f32 %v846, %v855
        %858 = vset.pattern.permute.xlu0 1
        %859 = vperm.xlu0 %858, %v842
        %v860 = vpop.permute.xlu0 %859
        %v862 = vlaneseq
        %v863 = vshrl.u32 %v862, 7
        %v864 = vsub.s32 1, %v863
        %v865 = vrot.slane %v840, %v864
        %v866 = vlaneseq
        %v867 = vshrl.u32 %v866, 7
        %v868 = vsub.s32 1, %v867
        %v869 = vrot.slane %v841, %v868
        %v870 = vmul.f32 %v860, %v865
        %v871 = vmul.f32 %v860, %v869
        %v872 = vadd.f32 %v856, %v870
        %v873 = vadd.f32 %v857, %v871
        %874 = vset.pattern.permute.xlu0 2
        %875 = vperm.xlu0 %874, %v842
        %v876 = vpop.permute.xlu0 %875
        %v878 = vlaneseq
        %v879 = vshrl.u32 %v878, 7
        %v880 = vsub.s32 2, %v879
        %v881 = vrot.slane %v840, %v880
        %v882 = vlaneseq
        %v883 = vshrl.u32 %v882, 7
        %v884 = vsub.s32 2, %v883
        %v885 = vrot.slane %v841, %v884
        %v886 = vmul.f32 %v876, %v881
        %v887 = vmul.f32 %v876, %v885
        %v888 = vadd.f32 %v872, %v886
        %v889 = vadd.f32 %v873, %v887
        %890 = vset.pattern.permute.xlu0 3
        %891 = vperm.xlu0 %890, %v842
        %v892 = vpop.permute.xlu0 %891
        %v894 = vlaneseq
        %v895 = vshrl.u32 %v894, 7
        %v896 = vsub.s32 3, %v895
        %v897 = vrot.slane %v840, %v896
        %v898 = vlaneseq
        %v899 = vshrl.u32 %v898, 7
        %v900 = vsub.s32 3, %v899
        %v901 = vrot.slane %v841, %v900
        %v902 = vmul.f32 %v892, %v897
        %v903 = vmul.f32 %v892, %v901
        %v904 = vadd.f32 %v888, %v902
        %v905 = vadd.f32 %v889, %v903
        %906 = vset.pattern.permute.xlu0 4
        %907 = vperm.xlu0 %906, %v842
        %v908 = vpop.permute.xlu0 %907
        %v910 = vlaneseq
        %v911 = vshrl.u32 %v910, 7
        %v912 = vsub.s32 4, %v911
        %v913 = vrot.slane %v840, %v912
        %v914 = vlaneseq
        %v915 = vshrl.u32 %v914, 7
        %v916 = vsub.s32 4, %v915
        %v917 = vrot.slane %v841, %v916
        %v918 = vmul.f32 %v908, %v913
        %v919 = vmul.f32 %v908, %v917
        %v920 = vadd.f32 %v904, %v918
        %v921 = vadd.f32 %v905, %v919
        %922 = vset.pattern.permute.xlu0 5
        %923 = vperm.xlu0 %922, %v842
        %v924 = vpop.permute.xlu0 %923
        %v926 = vlaneseq
        %v927 = vshrl.u32 %v926, 7
        %v928 = vsub.s32 5, %v927
        %v929 = vrot.slane %v840, %v928
        %v930 = vlaneseq
        %v931 = vshrl.u32 %v930, 7
        %v932 = vsub.s32 5, %v931
        %v933 = vrot.slane %v841, %v932
        %v934 = vmul.f32 %v924, %v929
        %v935 = vmul.f32 %v924, %v933
        %v936 = vadd.f32 %v920, %v934
        %v937 = vadd.f32 %v921, %v935
        %938 = vset.pattern.permute.xlu0 6
        %939 = vperm.xlu0 %938, %v842
        %v940 = vpop.permute.xlu0 %939
        %v942 = vlaneseq
        %v943 = vshrl.u32 %v942, 7
        %v944 = vsub.s32 6, %v943
        %v945 = vrot.slane %v840, %v944
        %v946 = vlaneseq
        %v947 = vshrl.u32 %v946, 7
        %v948 = vsub.s32 6, %v947
        %v949 = vrot.slane %v841, %v948
        %v950 = vmul.f32 %v940, %v945
        %v951 = vmul.f32 %v940, %v949
        %v952 = vadd.f32 %v936, %v950
        %v953 = vadd.f32 %v937, %v951
        %954 = vset.pattern.permute.xlu0 7
        %955 = vperm.xlu0 %954, %v842
        %v956 = vpop.permute.xlu0 %955
        %v958 = vlaneseq
        %v959 = vshrl.u32 %v958, 7
        %v960 = vsub.s32 7, %v959
        %v961 = vrot.slane %v840, %v960
        %v962 = vlaneseq
        %v963 = vshrl.u32 %v962, 7
        %v964 = vsub.s32 7, %v963
        %v965 = vrot.slane %v841, %v964
        %v966 = vmul.f32 %v956, %v961
        %v967 = vmul.f32 %v956, %v965
        %v968 = vadd.f32 %v952, %v966
        %v969 = vadd.f32 %v953, %v967
        %v970 = vld [vmem:[#allocation17] sm:$0xff]
        %972 = vset.pattern.permute.xlu0 0
        %973 = vperm.xlu0 %972, %v970
        %v974 = vpop.permute.xlu0 %973
        %v976 = vadd.f32 %v968, %v974
        %v977 = vadd.f32 %v969, %v974
        %v978 = vand.u32 2147483647, %v976
        %vm979 = vcmp.le.f32.partialorder %v978, 0.7853982
        %vm980 = vcmp.lt.s32.totalorder %v976, 0
        %v981 = vand.u32 %v976, 2139095040
        %v982 = vshrl.u32 %v981, 23
        %v983 = vsub.s32 %v982, 127
        %v984 = vand.u32 2147483647, %v976
        %v985 = vand.u32 %v984, 8388607
        %v986 = vor.u32 %v985, 8388608
        %v987 = vsub.s32 0, %v986
        %v988 = vadd.s32 %v983, 1
        %vm989 = vcmp.gt.s32.totalorder %v988, 0
        %v990 = vsel %vm989, %v988, 0
        %v991 = vshrl.u32 %v990, 5
        %v992 = vand.u32 %v990, 31
        %v993 = vsub.s32 32, %v992
        %v994 = vshrl.u32 683565275, %v993
        %v995 = vshll.u32 683565275, %v992
        %v996 = vshrl.u32 2475754826, %v993
        %v997 = vor.u32 %v995, %v996
        %v998 = vshll.u32 2475754826, %v992
        %v999 = vshrl.u32 2131351028, %v993
        %v1000 = vor.u32 %v998, %v999
        %v1001 = vshll.u32 2131351028, %v992
        %v1002 = vshrl.u32 2102212464, %v993
        %v1003 = vor.u32 %v1001, %v1002
        %v1004 = vshll.u32 2102212464, %v992
        %v1005 = vshrl.u32 920167782, %v993
        %v1006 = vor.u32 %v1004, %v1005
        %v1007 = vshll.u32 920167782, %v992
        %v1008 = vshrl.u32 1326507024, %v993
        %v1009 = vor.u32 %v1007, %v1008
        %vm1010 = vcmp.lt.s32.totalorder %v991, 1
        %vm1011 = vcmp.lt.s32.totalorder %v991, 2
        %vm1012 = vcmp.lt.s32.totalorder %v991, 3
        %vm1013 = vcmp.lt.s32.totalorder %v991, 4
        %v1014 = vsel %vm1010, %v994, %v997
        %v1015 = vsel %vm1013, %v1003, 2102212464
        %v1016 = vsel %vm1012, %v1000, %v1015
        %v1017 = vsel %vm1011, %v1014, %v1016
        %v1018 = vsel %vm1010, %v997, %v1000
        %v1019 = vsel %vm1013, %v1006, 920167782
        %v1020 = vsel %vm1012, %v1003, %v1019
        %v1021 = vsel %vm1011, %v1018, %v1020
        %v1022 = vsel %vm1010, %v1000, %v1003
        %v1023 = vsel %vm1013, %v1009, 1326507024
        %v1024 = vsel %vm1012, %v1006, %v1023
        %v1025 = vsel %vm1011, %v1022, %v1024
        %v1026 = vshll.u32 %v986, 8
        %v1027 = vmul.u32.u64.compose %v1026, %v1025
        %v1028 = vextract.low.u32 %v1027
        %v1029 = vextract.high.u32 %v1027
        %v1030 = vmul.u32.u64.compose %v1026, %v1021
        %v1031 = vextract.low.u32 %v1030
        %v1032 = vextract.high.u32 %v1030
        %v1033 = vmul.u32 %v1026, %v1017
        %v1034 = vadd.s32 %v1029, %v1031
        %vm1035 = vc.u32 %v1029, %v1031
        %v1036 = vadd.s32 %v1032, 1
        %v1037 = vsel %vm1035, %v1036, %v1032
        %v1038 = vadd.s32 %v1033, %v1037
        %v1039 = vadd.s32 %v1038, 536870912
        %v1040 = vshrl.u32 %v1039, 30
        %v1041 = vshll.u32 %v1040, 30
        %v1042 = vsub.s32 %v1038, %v1041
        %vm1043 = vcmp.lt.s32.totalorder %v1042, 0
        %v1044 = vsub.s32 0, %v1042
        %v1045 = vsel %vm1043, %v1044, %v1042
        %v1046 = vclz %v1045
        %v1047 = vsub.s32 %v1046, 2
        %vm1048 = vcmp.gt.s32.totalorder 0, %v1047
        %v1049 = vsel %vm1048, 0, %v1047
        %v1050 = vsub.s32 32, %v1049
        %v1051 = vshll.u32 %v1042, %v1049
        %v1052 = vshrl.u32 %v1034, %v1050
        %v1053 = vor.u32 %v1051, %v1052
        %v1054 = vsub.s32 4294967266, %v1049
        %v1055 = vadd.s32 %v1054, 127
        %v1056 = vshll.u32 %v1055, 23
        %v1057 = vor.u32 4788187, %v1056
        %v1058 = vand.u32 2147483647, %v1057
        %v1060 = vcvt.s32.f32 %v1053
        %v1061 = vmul.f32 %v1060, %v1058
        %v1062 = vxor.u32 %v1061, 2147483648
        %v1063 = vsel %vm980, %v1062, %v1061
        %v1064 = vsub.s32 4, %v1040
        %v1065 = vsel %vm980, %v1064, %v1040
        %v1066 = vsel %vm979, %v976, %v1063
        %v1067 = vsel %vm979, 0, %v1065
        %v1068 = vcosq.f32.pop %v1066
        %v1069 = vsinq.f32.pop %v1066
        %vm1070 = vweird.f32 %v976
        %v1071 = vand.u32 %v1067, 3
        %vm1072 = vcmp.lt.s32.totalorder %v1071, 2
        %vm1073 = vcmp.eq.s32.totalorder %v1071, 0
        %v1074 = vxor.u32 %v1069, 2147483648
        %v1075 = vsel %vm1073, %v1068, %v1074
        %vm1076 = vcmp.eq.s32.totalorder %v1071, 2
        %v1077 = vxor.u32 %v1068, 2147483648
        %v1078 = vsel %vm1076, %v1077, %v1069
        %v1079 = vsel %vm1072, %v1075, %v1078
        %v1080 = vsel %vm1070, nan, %v1079
        %v1081 = vand.u32 2147483647, %v977
        %vm1082 = vcmp.le.f32.partialorder %v1081, 0.7853982
        %vm1083 = vcmp.lt.s32.totalorder %v977, 0
        %v1084 = vand.u32 %v977, 2139095040
        %v1085 = vshrl.u32 %v1084, 23
        %v1086 = vsub.s32 %v1085, 127
        %v1087 = vand.u32 2147483647, %v977
        %v1088 = vand.u32 %v1087, 8388607
        %v1089 = vor.u32 %v1088, 8388608
        %v1090 = vsub.s32 0, %v1089
        %v1091 = vadd.s32 %v1086, 1
        %vm1092 = vcmp.gt.s32.totalorder %v1091, 0
        %v1093 = vsel %vm1092, %v1091, 0
        %v1094 = vshrl.u32 %v1093, 5
        %v1095 = vand.u32 %v1093, 31
        %v1096 = vsub.s32 32, %v1095
        %v1097 = vshrl.u32 683565275, %v1096
        %v1098 = vshll.u32 683565275, %v1095
        %v1099 = vshrl.u32 2475754826, %v1096
        %v1100 = vor.u32 %v1098, %v1099
        %v1101 = vshll.u32 2475754826, %v1095
        %v1102 = vshrl.u32 2131351028, %v1096
        %v1103 = vor.u32 %v1101, %v1102
        %v1104 = vshll.u32 2131351028, %v1095
        %v1105 = vshrl.u32 2102212464, %v1096
        %v1106 = vor.u32 %v1104, %v1105
        %v1107 = vshll.u32 2102212464, %v1095
        %v1108 = vshrl.u32 920167782, %v1096
        %v1109 = vor.u32 %v1107, %v1108
        %v1110 = vshll.u32 920167782, %v1095
        %v1111 = vshrl.u32 1326507024, %v1096
        %v1112 = vor.u32 %v1110, %v1111
        %vm1113 = vcmp.lt.s32.totalorder %v1094, 1
        %vm1114 = vcmp.lt.s32.totalorder %v1094, 2
        %vm1115 = vcmp.lt.s32.totalorder %v1094, 3
        %vm1116 = vcmp.lt.s32.totalorder %v1094, 4
        %v1117 = vsel %vm1113, %v1097, %v1100
        %v1118 = vsel %vm1116, %v1106, 2102212464
        %v1119 = vsel %vm1115, %v1103, %v1118
        %v1120 = vsel %vm1114, %v1117, %v1119
        %v1121 = vsel %vm1113, %v1100, %v1103
        %v1122 = vsel %vm1116, %v1109, 920167782
        %v1123 = vsel %vm1115, %v1106, %v1122
        %v1124 = vsel %vm1114, %v1121, %v1123
        %v1125 = vsel %vm1113, %v1103, %v1106
        %v1126 = vsel %vm1116, %v1112, 1326507024
        %v1127 = vsel %vm1115, %v1109, %v1126
        %v1128 = vsel %vm1114, %v1125, %v1127
        %v1129 = vshll.u32 %v1089, 8
        %v1130 = vmul.u32.u64.compose %v1129, %v1128
        %v1131 = vextract.low.u32 %v1130
        %v1132 = vextract.high.u32 %v1130
        %v1133 = vmul.u32.u64.compose %v1129, %v1124
        %v1134 = vextract.low.u32 %v1133
        %v1135 = vextract.high.u32 %v1133
        %v1136 = vmul.u32 %v1129, %v1120
        %v1137 = vadd.s32 %v1132, %v1134
        %vm1138 = vc.u32 %v1132, %v1134
        %v1139 = vadd.s32 %v1135, 1
        %v1140 = vsel %vm1138, %v1139, %v1135
        %v1141 = vadd.s32 %v1136, %v1140
        %v1142 = vadd.s32 %v1141, 536870912
        %v1143 = vshrl.u32 %v1142, 30
        %v1144 = vshll.u32 %v1143, 30
        %v1145 = vsub.s32 %v1141, %v1144
        %vm1146 = vcmp.lt.s32.totalorder %v1145, 0
        %v1147 = vsub.s32 0, %v1145
        %v1148 = vsel %vm1146, %v1147, %v1145
        %v1149 = vclz %v1148
        %v1150 = vsub.s32 %v1149, 2
        %vm1151 = vcmp.gt.s32.totalorder 0, %v1150
        %v1152 = vsel %vm1151, 0, %v1150
        %v1153 = vsub.s32 32, %v1152
        %v1154 = vshll.u32 %v1145, %v1152
        %v1155 = vshrl.u32 %v1137, %v1153
        %v1156 = vor.u32 %v1154, %v1155
        %v1157 = vsub.s32 4294967266, %v1152
        %v1158 = vadd.s32 %v1157, 127
        %v1159 = vshll.u32 %v1158, 23
        %v1160 = vor.u32 4788187, %v1159
        %v1161 = vand.u32 2147483647, %v1160
        %v1163 = vcvt.s32.f32 %v1156
        %v1164 = vmul.f32 %v1163, %v1161
        %v1165 = vxor.u32 %v1164, 2147483648
        %v1166 = vsel %vm1083, %v1165, %v1164
        %v1167 = vsub.s32 4, %v1143
        %v1168 = vsel %vm1083, %v1167, %v1143
        %v1169 = vsel %vm1082, %v977, %v1166
        %v1170 = vsel %vm1082, 0, %v1168
        %v1171 = vcosq.f32.pop %v1169
        %v1172 = vsinq.f32.pop %v1169
        %vm1173 = vweird.f32 %v977
        %v1174 = vand.u32 %v1170, 3
        %vm1175 = vcmp.lt.s32.totalorder %v1174, 2
        %vm1176 = vcmp.eq.s32.totalorder %v1174, 0
        %v1177 = vxor.u32 %v1172, 2147483648
        %v1178 = vsel %vm1176, %v1171, %v1177
        %vm1179 = vcmp.eq.s32.totalorder %v1174, 2
        %v1180 = vxor.u32 %v1171, 2147483648
        %v1181 = vsel %vm1179, %v1180, %v1172
        %v1182 = vsel %vm1175, %v1178, %v1181
        %v1183 = vsel %vm1173, nan, %v1182
        %v1184 = vand.u32 2147483647, %v976
        %vm1185 = vcmp.le.f32.partialorder %v1184, 0.7853982
        %vm1186 = vcmp.lt.s32.totalorder %v976, 0
        %v1187 = vand.u32 %v976, 2139095040
        %v1188 = vshrl.u32 %v1187, 23
        %v1189 = vsub.s32 %v1188, 127
        %v1190 = vand.u32 2147483647, %v976
        %v1191 = vand.u32 %v1190, 8388607
        %v1192 = vor.u32 %v1191, 8388608
        %v1193 = vsub.s32 0, %v1192
        %v1194 = vadd.s32 %v1189, 1
        %vm1195 = vcmp.gt.s32.totalorder %v1194, 0
        %v1196 = vsel %vm1195, %v1194, 0
        %v1197 = vshrl.u32 %v1196, 5
        %v1198 = vand.u32 %v1196, 31
        %v1199 = vsub.s32 32, %v1198
        %v1200 = vshrl.u32 683565275, %v1199
        %v1201 = vshll.u32 683565275, %v1198
        %v1202 = vshrl.u32 2475754826, %v1199
        %v1203 = vor.u32 %v1201, %v1202
        %v1204 = vshll.u32 2475754826, %v1198
        %v1205 = vshrl.u32 2131351028, %v1199
        %v1206 = vor.u32 %v1204, %v1205
        %v1207 = vshll.u32 2131351028, %v1198
        %v1208 = vshrl.u32 2102212464, %v1199
        %v1209 = vor.u32 %v1207, %v1208
        %v1210 = vshll.u32 2102212464, %v1198
        %v1211 = vshrl.u32 920167782, %v1199
        %v1212 = vor.u32 %v1210, %v1211
        %v1213 = vshll.u32 920167782, %v1198
        %v1214 = vshrl.u32 1326507024, %v1199
        %v1215 = vor.u32 %v1213, %v1214
        %vm1216 = vcmp.lt.s32.totalorder %v1197, 1
        %vm1217 = vcmp.lt.s32.totalorder %v1197, 2
        %vm1218 = vcmp.lt.s32.totalorder %v1197, 3
        %vm1219 = vcmp.lt.s32.totalorder %v1197, 4
        %v1220 = vsel %vm1216, %v1200, %v1203
        %v1221 = vsel %vm1219, %v1209, 2102212464
        %v1222 = vsel %vm1218, %v1206, %v1221
        %v1223 = vsel %vm1217, %v1220, %v1222
        %v1224 = vsel %vm1216, %v1203, %v1206
        %v1225 = vsel %vm1219, %v1212, 920167782
        %v1226 = vsel %vm1218, %v1209, %v1225
        %v1227 = vsel %vm1217, %v1224, %v1226
        %v1228 = vsel %vm1216, %v1206, %v1209
        %v1229 = vsel %vm1219, %v1215, 1326507024
        %v1230 = vsel %vm1218, %v1212, %v1229
        %v1231 = vsel %vm1217, %v1228, %v1230
        %v1232 = vshll.u32 %v1192, 8
        %v1233 = vmul.u32.u64.compose %v1232, %v1231
        %v1234 = vextract.low.u32 %v1233
        %v1235 = vextract.high.u32 %v1233
        %v1236 = vmul.u32.u64.compose %v1232, %v1227
        %v1237 = vextract.low.u32 %v1236
        %v1238 = vextract.high.u32 %v1236
        %v1239 = vmul.u32 %v1232, %v1223
        %v1240 = vadd.s32 %v1235, %v1237
        %vm1241 = vc.u32 %v1235, %v1237
        %v1242 = vadd.s32 %v1238, 1
        %v1243 = vsel %vm1241, %v1242, %v1238
        %v1244 = vadd.s32 %v1239, %v1243
        %v1245 = vadd.s32 %v1244, 536870912
        %v1246 = vshrl.u32 %v1245, 30
        %v1247 = vshll.u32 %v1246, 30
        %v1248 = vsub.s32 %v1244, %v1247
        %vm1249 = vcmp.lt.s32.totalorder %v1248, 0
        %v1250 = vsub.s32 0, %v1248
        %v1251 = vsel %vm1249, %v1250, %v1248
        %v1252 = vclz %v1251
        %v1253 = vsub.s32 %v1252, 2
        %vm1254 = vcmp.gt.s32.totalorder 0, %v1253
        %v1255 = vsel %vm1254, 0, %v1253
        %v1256 = vsub.s32 32, %v1255
        %v1257 = vshll.u32 %v1248, %v1255
        %v1258 = vshrl.u32 %v1240, %v1256
        %v1259 = vor.u32 %v1257, %v1258
        %v1260 = vsub.s32 4294967266, %v1255
        %v1261 = vadd.s32 %v1260, 127
        %v1262 = vshll.u32 %v1261, 23
        %v1263 = vor.u32 4788187, %v1262
        %v1264 = vand.u32 2147483647, %v1263
        %v1266 = vcvt.s32.f32 %v1259
        %v1267 = vmul.f32 %v1266, %v1264
        %v1268 = vxor.u32 %v1267, 2147483648
        %v1269 = vsel %vm1186, %v1268, %v1267
        %v1270 = vsub.s32 4, %v1246
        %v1271 = vsel %vm1186, %v1270, %v1246
        %v1272 = vsel %vm1185, %v976, %v1269
        %v1273 = vsel %vm1185, 0, %v1271
        %v1274 = vcosq.f32.pop %v1272
        %v1275 = vsinq.f32.pop %v1272
        %vm1276 = vweird.f32 %v976
        %v1277 = vadd.s32 %v1273, 3
        %v1278 = vand.u32 %v1277, 3
        %vm1279 = vcmp.lt.s32.totalorder %v1278, 2
        %vm1280 = vcmp.eq.s32.totalorder %v1278, 0
        %v1281 = vxor.u32 %v1275, 2147483648
        %v1282 = vsel %vm1280, %v1274, %v1281
        %vm1283 = vcmp.eq.s32.totalorder %v1278, 2
        %v1284 = vxor.u32 %v1274, 2147483648
        %v1285 = vsel %vm1283, %v1284, %v1275
        %v1286 = vsel %vm1279, %v1282, %v1285
        %v1287 = vsel %vm1276, nan, %v1286
        %v1288 = vand.u32 2147483647, %v977
        %vm1289 = vcmp.le.f32.partialorder %v1288, 0.7853982
        %vm1290 = vcmp.lt.s32.totalorder %v977, 0
        %v1291 = vand.u32 %v977, 2139095040
        %v1292 = vshrl.u32 %v1291, 23
        %v1293 = vsub.s32 %v1292, 127
        %v1294 = vand.u32 2147483647, %v977
        %v1295 = vand.u32 %v1294, 8388607
        %v1296 = vor.u32 %v1295, 8388608
        %v1297 = vsub.s32 0, %v1296
        %v1298 = vadd.s32 %v1293, 1
        %vm1299 = vcmp.gt.s32.totalorder %v1298, 0
        %v1300 = vsel %vm1299, %v1298, 0
        %v1301 = vshrl.u32 %v1300, 5
        %v1302 = vand.u32 %v1300, 31
        %v1303 = vsub.s32 32, %v1302
        %v1304 = vshrl.u32 683565275, %v1303
        %v1305 = vshll.u32 683565275, %v1302
        %v1306 = vshrl.u32 2475754826, %v1303
        %v1307 = vor.u32 %v1305, %v1306
        %v1308 = vshll.u32 2475754826, %v1302
        %v1309 = vshrl.u32 2131351028, %v1303
        %v1310 = vor.u32 %v1308, %v1309
        %v1311 = vshll.u32 2131351028, %v1302
        %v1312 = vshrl.u32 2102212464, %v1303
        %v1313 = vor.u32 %v1311, %v1312
        %v1314 = vshll.u32 2102212464, %v1302
        %v1315 = vshrl.u32 920167782, %v1303
        %v1316 = vor.u32 %v1314, %v1315
        %v1317 = vshll.u32 920167782, %v1302
        %v1318 = vshrl.u32 1326507024, %v1303
        %v1319 = vor.u32 %v1317, %v1318
        %vm1320 = vcmp.lt.s32.totalorder %v1301, 1
        %vm1321 = vcmp.lt.s32.totalorder %v1301, 2
        %vm1322 = vcmp.lt.s32.totalorder %v1301, 3
        %vm1323 = vcmp.lt.s32.totalorder %v1301, 4
        %v1324 = vsel %vm1320, %v1304, %v1307
        %v1325 = vsel %vm1323, %v1313, 2102212464
        %v1326 = vsel %vm1322, %v1310, %v1325
        %v1327 = vsel %vm1321, %v1324, %v1326
        %v1328 = vsel %vm1320, %v1307, %v1310
        %v1329 = vsel %vm1323, %v1316, 920167782
        %v1330 = vsel %vm1322, %v1313, %v1329
        %v1331 = vsel %vm1321, %v1328, %v1330
        %v1332 = vsel %vm1320, %v1310, %v1313
        %v1333 = vsel %vm1323, %v1319, 1326507024
        %v1334 = vsel %vm1322, %v1316, %v1333
        %v1335 = vsel %vm1321, %v1332, %v1334
        %v1336 = vshll.u32 %v1296, 8
        %v1337 = vmul.u32.u64.compose %v1336, %v1335
        %v1338 = vextract.low.u32 %v1337
        %v1339 = vextract.high.u32 %v1337
        %v1340 = vmul.u32.u64.compose %v1336, %v1331
        %v1341 = vextract.low.u32 %v1340
        %v1342 = vextract.high.u32 %v1340
        %v1343 = vmul.u32 %v1336, %v1327
        %v1344 = vadd.s32 %v1339, %v1341
        %vm1345 = vc.u32 %v1339, %v1341
        %v1346 = vadd.s32 %v1342, 1
        %v1347 = vsel %vm1345, %v1346, %v1342
        %v1348 = vadd.s32 %v1343, %v1347
        %v1349 = vadd.s32 %v1348, 536870912
        %v1350 = vshrl.u32 %v1349, 30
        %v1351 = vshll.u32 %v1350, 30
        %v1352 = vsub.s32 %v1348, %v1351
        %vm1353 = vcmp.lt.s32.totalorder %v1352, 0
        %v1354 = vsub.s32 0, %v1352
        %v1355 = vsel %vm1353, %v1354, %v1352
        %v1356 = vclz %v1355
        %v1357 = vsub.s32 %v1356, 2
        %vm1358 = vcmp.gt.s32.totalorder 0, %v1357
        %v1359 = vsel %vm1358, 0, %v1357
        %v1360 = vsub.s32 32, %v1359
        %v1361 = vshll.u32 %v1352, %v1359
        %v1362 = vshrl.u32 %v1344, %v1360
        %v1363 = vor.u32 %v1361, %v1362
        %v1364 = vsub.s32 4294967266, %v1359
        %v1365 = vadd.s32 %v1364, 127
        %v1366 = vshll.u32 %v1365, 23
        %v1367 = vor.u32 4788187, %v1366
        %v1368 = vand.u32 2147483647, %v1367
        %v1370 = vcvt.s32.f32 %v1363
        %v1371 = vmul.f32 %v1370, %v1368
        %v1372 = vxor.u32 %v1371, 2147483648
        %v1373 = vsel %vm1290, %v1372, %v1371
        %v1374 = vsub.s32 4, %v1350
        %v1375 = vsel %vm1290, %v1374, %v1350
        %v1376 = vsel %vm1289, %v977, %v1373
        %v1377 = vsel %vm1289, 0, %v1375
        %v1378 = vcosq.f32.pop %v1376
        %v1379 = vsinq.f32.pop %v1376
        %vm1380 = vweird.f32 %v977
        %v1381 = vadd.s32 %v1377, 3
        %v1382 = vand.u32 %v1381, 3
        %vm1383 = vcmp.lt.s32.totalorder %v1382, 2
        %vm1384 = vcmp.eq.s32.totalorder %v1382, 0
        %v1385 = vxor.u32 %v1379, 2147483648
        %v1386 = vsel %vm1384, %v1378, %v1385
        %vm1387 = vcmp.eq.s32.totalorder %v1382, 2
        %v1388 = vxor.u32 %v1378, 2147483648
        %v1389 = vsel %vm1387, %v1388, %v1379
        %v1390 = vsel %vm1383, %v1386, %v1389
        %v1391 = vsel %vm1380, nan, %v1390
        %v1392 = vld [vmem:[#allocation7] sm:$0xff]
        %1394 = vset.pattern.permute.xlu0 0
        %1395 = vperm.xlu0 %1394, %v1392
        %v1396 = vpop.permute.xlu0 %1395
        %v1398 = vlaneseq
        %v1399 = vshrl.u32 %v1398, 7
        %v1400 = vsub.s32 0, %v1399
        %v1401 = vrot.slane %v604, %v1400
        %v1402 = vlaneseq
        %v1403 = vshrl.u32 %v1402, 7
        %v1404 = vsub.s32 0, %v1403
        %v1405 = vrot.slane %v605, %v1404
        %v1406 = vmul.f32 %v1396, %v1401
        %v1407 = vmul.f32 %v1396, %v1405
        %1408 = vset.pattern.permute.xlu0 1
        %1409 = vperm.xlu0 %1408, %v1392
        %v1410 = vpop.permute.xlu0 %1409
        %v1412 = vlaneseq
        %v1413 = vshrl.u32 %v1412, 7
        %v1414 = vsub.s32 1, %v1413
        %v1415 = vrot.slane %v604, %v1414
        %v1416 = vlaneseq
        %v1417 = vshrl.u32 %v1416, 7
        %v1418 = vsub.s32 1, %v1417
        %v1419 = vrot.slane %v605, %v1418
        %v1420 = vmul.f32 %v1410, %v1415
        %v1421 = vmul.f32 %v1410, %v1419
        %v1422 = vadd.f32 %v1406, %v1420
        %v1423 = vadd.f32 %v1407, %v1421
        %1424 = vset.pattern.permute.xlu0 2
        %1425 = vperm.xlu0 %1424, %v1392
        %v1426 = vpop.permute.xlu0 %1425
        %v1428 = vlaneseq
        %v1429 = vshrl.u32 %v1428, 7
        %v1430 = vsub.s32 2, %v1429
        %v1431 = vrot.slane %v604, %v1430
        %v1432 = vlaneseq
        %v1433 = vshrl.u32 %v1432, 7
        %v1434 = vsub.s32 2, %v1433
        %v1435 = vrot.slane %v605, %v1434
        %v1436 = vmul.f32 %v1426, %v1431
        %v1437 = vmul.f32 %v1426, %v1435
        %v1438 = vadd.f32 %v1422, %v1436
        %v1439 = vadd.f32 %v1423, %v1437
        %1440 = vset.pattern.permute.xlu0 3
        %1441 = vperm.xlu0 %1440, %v1392
        %v1442 = vpop.permute.xlu0 %1441
        %v1444 = vlaneseq
        %v1445 = vshrl.u32 %v1444, 7
        %v1446 = vsub.s32 3, %v1445
        %v1447 = vrot.slane %v604, %v1446
        %v1448 = vlaneseq
        %v1449 = vshrl.u32 %v1448, 7
        %v1450 = vsub.s32 3, %v1449
        %v1451 = vrot.slane %v605, %v1450
        %v1452 = vmul.f32 %v1442, %v1447
        %v1453 = vmul.f32 %v1442, %v1451
        %v1454 = vadd.f32 %v1438, %v1452
        %v1455 = vadd.f32 %v1439, %v1453
        %1456 = vset.pattern.permute.xlu0 4
        %1457 = vperm.xlu0 %1456, %v1392
        %v1458 = vpop.permute.xlu0 %1457
        %v1460 = vlaneseq
        %v1461 = vshrl.u32 %v1460, 7
        %v1462 = vsub.s32 4, %v1461
        %v1463 = vrot.slane %v604, %v1462
        %v1464 = vlaneseq
        %v1465 = vshrl.u32 %v1464, 7
        %v1466 = vsub.s32 4, %v1465
        %v1467 = vrot.slane %v605, %v1466
        %v1468 = vmul.f32 %v1458, %v1463
        %v1469 = vmul.f32 %v1458, %v1467
        %v1470 = vadd.f32 %v1454, %v1468
        %v1471 = vadd.f32 %v1455, %v1469
        %1472 = vset.pattern.permute.xlu0 5
        %1473 = vperm.xlu0 %1472, %v1392
        %v1474 = vpop.permute.xlu0 %1473
        %v1476 = vlaneseq
        %v1477 = vshrl.u32 %v1476, 7
        %v1478 = vsub.s32 5, %v1477
        %v1479 = vrot.slane %v604, %v1478
        %v1480 = vlaneseq
        %v1481 = vshrl.u32 %v1480, 7
        %v1482 = vsub.s32 5, %v1481
        %v1483 = vrot.slane %v605, %v1482
        %v1484 = vmul.f32 %v1474, %v1479
        %v1485 = vmul.f32 %v1474, %v1483
        %v1486 = vadd.f32 %v1470, %v1484
        %v1487 = vadd.f32 %v1471, %v1485
        %1488 = vset.pattern.permute.xlu0 6
        %1489 = vperm.xlu0 %1488, %v1392
        %v1490 = vpop.permute.xlu0 %1489
        %v1492 = vlaneseq
        %v1493 = vshrl.u32 %v1492, 7
        %v1494 = vsub.s32 6, %v1493
        %v1495 = vrot.slane %v604, %v1494
        %v1496 = vlaneseq
        %v1497 = vshrl.u32 %v1496, 7
        %v1498 = vsub.s32 6, %v1497
        %v1499 = vrot.slane %v605, %v1498
        %v1500 = vmul.f32 %v1490, %v1495
        %v1501 = vmul.f32 %v1490, %v1499
        %v1502 = vadd.f32 %v1486, %v1500
        %v1503 = vadd.f32 %v1487, %v1501
        %1504 = vset.pattern.permute.xlu0 7
        %1505 = vperm.xlu0 %1504, %v1392
        %v1506 = vpop.permute.xlu0 %1505
        %v1508 = vlaneseq
        %v1509 = vshrl.u32 %v1508, 7
        %v1510 = vsub.s32 7, %v1509
        %v1511 = vrot.slane %v604, %v1510
        %v1512 = vlaneseq
        %v1513 = vshrl.u32 %v1512, 7
        %v1514 = vsub.s32 7, %v1513
        %v1515 = vrot.slane %v605, %v1514
        %v1516 = vmul.f32 %v1506, %v1511
        %v1517 = vmul.f32 %v1506, %v1515
        %v1518 = vadd.f32 %v1502, %v1516
        %v1519 = vadd.f32 %v1503, %v1517
        %v1520 = vld [vmem:[#allocation8] sm:$0xff]
        %1522 = vset.pattern.permute.xlu0 0
        %1523 = vperm.xlu0 %1522, %v1520
        %v1524 = vpop.permute.xlu0 %1523
        %v1526 = vadd.f32 %v1518, %v1524
        %v1527 = vadd.f32 %v1519, %v1524
        %vm1528 = vcmp.ge.f32.partialorder %v1526, 0.0
        %vm1529 = vcmp.ge.f32.partialorder %v1527, 0.0
        %v1530 = vmul.f32 %v1526, 0.1
        %v1531 = vmul.f32 %v1527, 0.1
        %v1532 = vsel %vm1528, %v1526, %v1530
        %v1533 = vsel %vm1529, %v1527, %v1531
        %v1534 = vld [vmem:[#allocation10] sm:$0xff]
        %1536 = vset.pattern.permute.xlu0 0
        %1537 = vperm.xlu0 %1536, %v1534
        %v1538 = vpop.permute.xlu0 %1537
        %v1540 = vlaneseq
        %v1541 = vshrl.u32 %v1540, 7
        %v1542 = vsub.s32 0, %v1541
        %v1543 = vrot.slane %v1532, %v1542
        %v1544 = vlaneseq
        %v1545 = vshrl.u32 %v1544, 7
        %v1546 = vsub.s32 0, %v1545
        %v1547 = vrot.slane %v1533, %v1546
        %v1548 = vmul.f32 %v1538, %v1543
        %v1549 = vmul.f32 %v1538, %v1547
        %1550 = vset.pattern.permute.xlu0 1
        %1551 = vperm.xlu0 %1550, %v1534
        %v1552 = vpop.permute.xlu0 %1551
        %v1554 = vlaneseq
        %v1555 = vshrl.u32 %v1554, 7
        %v1556 = vsub.s32 1, %v1555
        %v1557 = vrot.slane %v1532, %v1556
        %v1558 = vlaneseq
        %v1559 = vshrl.u32 %v1558, 7
        %v1560 = vsub.s32 1, %v1559
        %v1561 = vrot.slane %v1533, %v1560
        %v1562 = vmul.f32 %v1552, %v1557
        %v1563 = vmul.f32 %v1552, %v1561
        %v1564 = vadd.f32 %v1548, %v1562
        %v1565 = vadd.f32 %v1549, %v1563
        %1566 = vset.pattern.permute.xlu0 2
        %1567 = vperm.xlu0 %1566, %v1534
        %v1568 = vpop.permute.xlu0 %1567
        %v1570 = vlaneseq
        %v1571 = vshrl.u32 %v1570, 7
        %v1572 = vsub.s32 2, %v1571
        %v1573 = vrot.slane %v1532, %v1572
        %v1574 = vlaneseq
        %v1575 = vshrl.u32 %v1574, 7
        %v1576 = vsub.s32 2, %v1575
        %v1577 = vrot.slane %v1533, %v1576
        %v1578 = vmul.f32 %v1568, %v1573
        %v1579 = vmul.f32 %v1568, %v1577
        %v1580 = vadd.f32 %v1564, %v1578
        %v1581 = vadd.f32 %v1565, %v1579
        %1582 = vset.pattern.permute.xlu0 3
        %1583 = vperm.xlu0 %1582, %v1534
        %v1584 = vpop.permute.xlu0 %1583
        %v1586 = vlaneseq
        %v1587 = vshrl.u32 %v1586, 7
        %v1588 = vsub.s32 3, %v1587
        %v1589 = vrot.slane %v1532, %v1588
        %v1590 = vlaneseq
        %v1591 = vshrl.u32 %v1590, 7
        %v1592 = vsub.s32 3, %v1591
        %v1593 = vrot.slane %v1533, %v1592
        %v1594 = vmul.f32 %v1584, %v1589
        %v1595 = vmul.f32 %v1584, %v1593
        %v1596 = vadd.f32 %v1580, %v1594
        %v1597 = vadd.f32 %v1581, %v1595
        %1598 = vset.pattern.permute.xlu0 4
        %1599 = vperm.xlu0 %1598, %v1534
        %v1600 = vpop.permute.xlu0 %1599
        %v1602 = vlaneseq
        %v1603 = vshrl.u32 %v1602, 7
        %v1604 = vsub.s32 4, %v1603
        %v1605 = vrot.slane %v1532, %v1604
        %v1606 = vlaneseq
        %v1607 = vshrl.u32 %v1606, 7
        %v1608 = vsub.s32 4, %v1607
        %v1609 = vrot.slane %v1533, %v1608
        %v1610 = vmul.f32 %v1600, %v1605
        %v1611 = vmul.f32 %v1600, %v1609
        %v1612 = vadd.f32 %v1596, %v1610
        %v1613 = vadd.f32 %v1597, %v1611
        %1614 = vset.pattern.permute.xlu0 5
        %1615 = vperm.xlu0 %1614, %v1534
        %v1616 = vpop.permute.xlu0 %1615
        %v1618 = vlaneseq
        %v1619 = vshrl.u32 %v1618, 7
        %v1620 = vsub.s32 5, %v1619
        %v1621 = vrot.slane %v1532, %v1620
        %v1622 = vlaneseq
        %v1623 = vshrl.u32 %v1622, 7
        %v1624 = vsub.s32 5, %v1623
        %v1625 = vrot.slane %v1533, %v1624
        %v1626 = vmul.f32 %v1616, %v1621
        %v1627 = vmul.f32 %v1616, %v1625
        %v1628 = vadd.f32 %v1612, %v1626
        %v1629 = vadd.f32 %v1613, %v1627
        %1630 = vset.pattern.permute.xlu0 6
        %1631 = vperm.xlu0 %1630, %v1534
        %v1632 = vpop.permute.xlu0 %1631
        %v1634 = vlaneseq
        %v1635 = vshrl.u32 %v1634, 7
        %v1636 = vsub.s32 6, %v1635
        %v1637 = vrot.slane %v1532, %v1636
        %v1638 = vlaneseq
        %v1639 = vshrl.u32 %v1638, 7
        %v1640 = vsub.s32 6, %v1639
        %v1641 = vrot.slane %v1533, %v1640
        %v1642 = vmul.f32 %v1632, %v1637
        %v1643 = vmul.f32 %v1632, %v1641
        %v1644 = vadd.f32 %v1628, %v1642
        %v1645 = vadd.f32 %v1629, %v1643
        %1646 = vset.pattern.permute.xlu0 7
        %1647 = vperm.xlu0 %1646, %v1534
        %v1648 = vpop.permute.xlu0 %1647
        %v1650 = vlaneseq
        %v1651 = vshrl.u32 %v1650, 7
        %v1652 = vsub.s32 7, %v1651
        %v1653 = vrot.slane %v1532, %v1652
        %v1654 = vlaneseq
        %v1655 = vshrl.u32 %v1654, 7
        %v1656 = vsub.s32 7, %v1655
        %v1657 = vrot.slane %v1533, %v1656
        %v1658 = vmul.f32 %v1648, %v1653
        %v1659 = vmul.f32 %v1648, %v1657
        %v1660 = vadd.f32 %v1644, %v1658
        %v1661 = vadd.f32 %v1645, %v1659
        %v1662 = vld [vmem:[#allocation11] sm:$0xff]
        %1664 = vset.pattern.permute.xlu0 0
        %1665 = vperm.xlu0 %1664, %v1662
        %v1666 = vpop.permute.xlu0 %1665
        %v1668 = vadd.f32 %v1660, %v1666
        %v1669 = vadd.f32 %v1661, %v1666
        %v1670 = vmax.f32 %v1668, 0.0
        %v1671 = vmax.f32 %v1669, 0.0
        %v1672 = vmin.f32 %v1670, 10000.0
        %v1673 = vmin.f32 %v1671, 10000.0
        %v1674 = vmul.f32 %v1672, %v1080
        %v1675 = vmul.f32 %v1673, %v1183
        %1676 = vst [vmem:[%s568] sm:$0xff] %v1674
        %1677 = vst [vmem:[%s568 + $0x8] sm:$0xff] %v1675
        %v1678 = vmul.f32 %v1672, %v1287
        %v1679 = vmul.f32 %v1673, %v1391
        %1680 = vst [vmem:[%s575] sm:$0xff] %v1678
        %1681 = vst [vmem:[%s575 + $0x8] sm:$0xff] %v1679
        %s1682 = sand.u32 %s285, 1
        %s1683 = scalar_lea.sflag [#allocation4], %s1682
        %s1684 = sand.u32 %s285, 1
        %s1685 = smul.addr %s1684, 16
        %s1686 = scalar_lea.vmem [#allocation19], %s1685
        %s1687 = sand.u32 %s313, 1
        %s1688 = scalar_lea.sflag [#allocation21], %s1687
        %s1689 = sand.u32 %s313, 1
        %s1690 = smul.addr %s1689, 16
        %s1691 = scalar_lea.vmem [#allocation20], %s1690
        // Predicated region
        $region101: #{ffab_forward.36} parent=59 // pred_check
          %p1692 = pneg %p295
        $region102: #{ffab_forward.36} parent=59 // pred_check_branch
          %1694 = sbr.rel (%p1692) target = $region104
        $region103: #{ffab_forward.36} parent=59 // pred_region
          %s1695 = smul.u32 2, %s44
          %s1697 = ssub.s32 256, 256
          %1698 = vsyncadd %s1683, %s1697
          %s1699 = smul.addr %s43, 2
          %s1700 = sadd.s32 %s1695, %s1699
          %s1701 = smul.addr %s1700, 128
          %s1702 = scalar_lea.hbm %s10, %s1701
          %s1704 = sshll.u32 %s1686, 4
          %s1705 = int_to_ptr.vmem [resolvable:$true] %s1704
          %1707 = dma.vmem_to_hbm [thread:$0]  %s1705, 256, %s1702, %s1683
        $region104: #{ffab_forward.36} parent=59 // pred_fallthru
          _
        // Predicated region
        $region105: #{ffab_forward.36} parent=59 // pred_check
          %p1708 = pneg %p323
        $region106: #{ffab_forward.36} parent=59 // pred_check_branch
          %1710 = sbr.rel (%p1708) target = $region108
        $region107: #{ffab_forward.36} parent=59 // pred_region
          %s1711 = smul.u32 2, %s44
          %s1713 = ssub.s32 256, 256
          %1714 = vsyncadd %s1688, %s1713
          %s1715 = smul.addr %s43, 2
          %s1716 = sadd.s32 %s1711, %s1715
          %s1717 = smul.addr %s1716, 128
          %s1718 = scalar_lea.hbm %s11, %s1717
          %s1720 = sshll.u32 %s1691, 4
          %s1721 = int_to_ptr.vmem [resolvable:$true] %s1720
          %1723 = dma.vmem_to_hbm [thread:$0]  %s1721, 256, %s1718, %s1688
        $region108: #{ffab_forward.36} parent=59 // pred_fallthru
          _
      $region60: #{ffab_forward.36} parent=5 // pred_fallthru
        _
      %p1724 = scmp.le.s32.totalorder 2, %s34
      // Predicated region
      $region109: #{ffab_forward.36} parent=5 // pred_check
        %p1725 = pneg %p1724
      $region110: #{ffab_forward.36} parent=5 // pred_check_branch
        %1727 = sbr.rel (%p1725) target = $region112
      $region111: #{ffab_forward.36} parent=5 // pred_region
        %s1728 = ssub.s32 %s34, 2
        // Predicated region
        $region113: #{ffab_forward.36} parent=111 // pred_check
          %p1729 = pneg %p301
        $region114: #{ffab_forward.36} parent=111 // pred_check_branch
          %1731 = sbr.rel (%p1729) target = $region116
        $region115: #{ffab_forward.36} parent=111 // pred_region
          %s1732 = sand.u32 %s286, 1
          %s1733 = scalar_lea.sflag [#allocation4], %s1732
          %s1734 = sand.u32 %s286, 1
          %s1735 = smul.addr %s1734, 16
          %s1736 = scalar_lea.vmem [#allocation19], %s1735
          %1737 = dma.done %s1733, 256
        $region116: #{ffab_forward.36} parent=111 // pred_fallthru
          _
        // Predicated region
        $region117: #{ffab_forward.36} parent=111 // pred_check
          %p1738 = pneg %p329
        $region118: #{ffab_forward.36} parent=111 // pred_check_branch
          %1740 = sbr.rel (%p1738) target = $region120
        $region119: #{ffab_forward.36} parent=111 // pred_region
          %s1741 = sand.u32 %s314, 1
          %s1742 = scalar_lea.sflag [#allocation21], %s1741
          %s1743 = sand.u32 %s314, 1
          %s1744 = smul.addr %s1743, 16
          %s1745 = scalar_lea.vmem [#allocation20], %s1744
          %1746 = dma.done %s1742, 256
        $region120: #{ffab_forward.36} parent=111 // pred_fallthru
          _
      $region112: #{ffab_forward.36} parent=5 // pred_fallthru
        _
    $region6: #{ffab_forward.36} parent=1 // loop_footer
      %s38 = sadd.s32 1, %s34
    $region7: #{ffab_forward.36} parent=1 // loop_footer_branch
      %33 = sbr.rel target = $region3
    $region8: #{ffab_forward.36} parent=1 // loop_exit
      _
    %1747 = vsyncpa [#allocation3], 1
    %s1748 = scalar_lea.sflag [#allocation3], 1
    %1749 = vsyncpa %s1748, 1
    %1750 = vsyncpa [#allocation6], 1
    %s1751 = scalar_lea.sflag [#allocation6], 1
    %1752 = vsyncpa %s1751, 1
    %1753 = vsyncpa [#allocation9], 1
    %1754 = vsyncpa [#allocation12], 1
    %1755 = vsyncpa [#allocation15], 1
    %1756 = vsyncpa [#allocation18], 1
    %1757 = vsyncpa [#allocation4], 1
    %s1758 = scalar_lea.sflag [#allocation4], 1
    %1759 = vsyncpa %s1758, 1
    %1760 = vsyncpa [#allocation21], 1
    %s1761 = scalar_lea.sflag [#allocation21], 1
    %1762 = vsyncpa %s1761, 1

// kernel: reverse.23
$region0: #{reverse.23}
  %s0 = inlined_call_operand.vmem [shape: f32[2,8,16,7], index: 0, kind: input, shape index: {}]
  %s1 = inlined_call_operand.vmem [shape: f32[2,8,16,7], index: 1, kind: output, shape index: {}]
  $region1: #{reverse.23} parent=0
    #allocation0 [shape = 'u8[131072]{0}', space=vmem, size = 0x20000, scoped, tag = 'operand span for operand 0']
    #allocation1 [shape = 'u8[65536]{0}', space=vmem, size = 0x10000, scoped, tag = 'operand span for operand 1']
    %s2 = scalar_lea.vmem [#allocation0], 8
    // Predicated region
    $region2: #{reverse.23} parent=1 // pred_check
      _
    $region3: #{reverse.23} parent=1 // pred_check_branch
      %4 = sbr.rel (0) target = $region5
    $region4: #{reverse.23} parent=1 // pred_region
      // Predicated region
      $region6: #{reverse.23} parent=4 // pred_check
        _
      $region7: #{reverse.23} parent=4 // pred_check_branch
        %6 = sbr.rel (0) target = $region9
      $region8: #{reverse.23} parent=4 // pred_region
        // Predicated region
        $region21: #{reverse.23} parent=8 // pred_check
          _
        $region22: #{reverse.23} parent=8 // pred_check_branch
          %51 = sbr.rel (0) target = $region24
        $region23: #{reverse.23} parent=8 // pred_region
          loop: start=0, step=1, limit=1
          $region25: #{reverse.23} parent=23 // loop_pre_header
            _
          $region26: #{reverse.23} parent=23 // loop_header
            %s53 = sphi 0, %s57
            %p54 = scmp.ge.s32.totalorder %s53, 1
            %s58 = sphi %s0, %s0
            %s59 = sphi %s2, %s2
          $region27: #{reverse.23} parent=23 // loop_header_branch
            %56 = sbr.rel (%p54) target = $region31
          $region28: #{reverse.23} parent=23 // loop_body
            %v60 = vld [vmem:[%s58] sm:$0xff]
            %61 = vst [vmem:[%s59] sm:$0xff] %v60
            %v62 = vld [vmem:[%s58 + $0x8] sm:$0xff]
            %63 = vst [vmem:[%s59 + $0x10] sm:$0xff] %v62
            %v64 = vld [vmem:[%s58 + $0x10] sm:$0xff]
            %65 = vst [vmem:[%s59 + $0x20] sm:$0xff] %v64
            %v66 = vld [vmem:[%s58 + $0x18] sm:$0xff]
            %67 = vst [vmem:[%s59 + $0x30] sm:$0xff] %v66
            %v68 = vld [vmem:[%s58 + $0x20] sm:$0xff]
            %69 = vst [vmem:[%s59 + $0x40] sm:$0xff] %v68
            %v70 = vld [vmem:[%s58 + $0x28] sm:$0xff]
            %71 = vst [vmem:[%s59 + $0x50] sm:$0xff] %v70
            %v72 = vld [vmem:[%s58 + $0x30] sm:$0xff]
            %73 = vst [vmem:[%s59 + $0x60] sm:$0xff] %v72
            %v74 = vld [vmem:[%s58 + $0x38] sm:$0xff]
            %75 = vst [vmem:[%s59 + $0x70] sm:$0xff] %v74
            %v76 = vld [vmem:[%s58 + $0x40] sm:$0xff]
            %77 = vst [vmem:[%s59 + $0x80] sm:$0xff] %v76
            %v78 = vld [vmem:[%s58 + $0x48] sm:$0xff]
            %79 = vst [vmem:[%s59 + $0x90] sm:$0xff] %v78
            %v80 = vld [vmem:[%s58 + $0x50] sm:$0xff]
            %81 = vst [vmem:[%s59 + $0xa0] sm:$0xff] %v80
            %v82 = vld [vmem:[%s58 + $0x58] sm:$0xff]
            %83 = vst [vmem:[%s59 + $0xb0] sm:$0xff] %v82
            %v84 = vld [vmem:[%s58 + $0x60] sm:$0xff]
            %85 = vst [vmem:[%s59 + $0xc0] sm:$0xff] %v84
            %v86 = vld [vmem:[%s58 + $0x68] sm:$0xff]
            %87 = vst [vmem:[%s59 + $0xd0] sm:$0xff] %v86
            %v88 = vld [vmem:[%s58 + $0x70] sm:$0xff]
            %89 = vst [vmem:[%s59 + $0xe0] sm:$0xff] %v88
            %v90 = vld [vmem:[%s58 + $0x78] sm:$0xff]
            %91 = vst [vmem:[%s59 + $0xf0] sm:$0xff] %v90
          $region29: #{reverse.23} parent=23 // loop_footer
            %s57 = sadd.s32 1, %s53
          $region30: #{reverse.23} parent=23 // loop_footer_branch
            %52 = sbr.rel target = $region26
          $region31: #{reverse.23} parent=23 // loop_exit
            _
        $region24: #{reverse.23} parent=8 // pred_fallthru
          _
        // Predicated region
        $region32: #{reverse.23} parent=8 // pred_check
          _
        $region33: #{reverse.23} parent=8 // pred_check_branch
          %93 = sbr.rel target = $region35
        $region34: #{reverse.23} parent=8 // pred_region
          _
        $region35: #{reverse.23} parent=8 // pred_fallthru
          _
      $region9: #{reverse.23} parent=4 // pred_fallthru
        _
      // Predicated region
      $region10: #{reverse.23} parent=4 // pred_check
        _
      $region11: #{reverse.23} parent=4 // pred_check_branch
        %8 = sbr.rel target = $region13
      $region12: #{reverse.23} parent=4 // pred_region
        loop: start=0, step=1, limit=1
        $region14: #{reverse.23} parent=12 // loop_pre_header
          _
        $region15: #{reverse.23} parent=12 // loop_header
          %s11 = sphi 0, %s15
          %p12 = scmp.ge.s32.totalorder %s11, 1
          %s16 = sphi %s0, %s0
          %s17 = sphi %s2, %s2
        $region16: #{reverse.23} parent=12 // loop_header_branch
          %14 = sbr.rel (%p12) target = $region20
        $region17: #{reverse.23} parent=12 // loop_body
          %v18 = vld [vmem:[%s16] sm:$0xff]
          %19 = vst [vmem:[%s17] sm:$0xff] %v18
          %v20 = vld [vmem:[%s16 + $0x8] sm:$0xff]
          %21 = vst [vmem:[%s17 + $0x10] sm:$0xff] %v20
          %v22 = vld [vmem:[%s16 + $0x10] sm:$0xff]
          %23 = vst [vmem:[%s17 + $0x20] sm:$0xff] %v22
          %v24 = vld [vmem:[%s16 + $0x18] sm:$0xff]
          %25 = vst [vmem:[%s17 + $0x30] sm:$0xff] %v24
          %v26 = vld [vmem:[%s16 + $0x20] sm:$0xff]
          %27 = vst [vmem:[%s17 + $0x40] sm:$0xff] %v26
          %v28 = vld [vmem:[%s16 + $0x28] sm:$0xff]
          %29 = vst [vmem:[%s17 + $0x50] sm:$0xff] %v28
          %v30 = vld [vmem:[%s16 + $0x30] sm:$0xff]
          %31 = vst [vmem:[%s17 + $0x60] sm:$0xff] %v30
          %v32 = vld [vmem:[%s16 + $0x38] sm:$0xff]
          %33 = vst [vmem:[%s17 + $0x70] sm:$0xff] %v32
          %v34 = vld [vmem:[%s16 + $0x40] sm:$0xff]
          %35 = vst [vmem:[%s17 + $0x80] sm:$0xff] %v34
          %v36 = vld [vmem:[%s16 + $0x48] sm:$0xff]
          %37 = vst [vmem:[%s17 + $0x90] sm:$0xff] %v36
          %v38 = vld [vmem:[%s16 + $0x50] sm:$0xff]
          %39 = vst [vmem:[%s17 + $0xa0] sm:$0xff] %v38
          %v40 = vld [vmem:[%s16 + $0x58] sm:$0xff]
          %41 = vst [vmem:[%s17 + $0xb0] sm:$0xff] %v40
          %v42 = vld [vmem:[%s16 + $0x60] sm:$0xff]
          %43 = vst [vmem:[%s17 + $0xc0] sm:$0xff] %v42
          %v44 = vld [vmem:[%s16 + $0x68] sm:$0xff]
          %45 = vst [vmem:[%s17 + $0xd0] sm:$0xff] %v44
          %v46 = vld [vmem:[%s16 + $0x70] sm:$0xff]
          %47 = vst [vmem:[%s17 + $0xe0] sm:$0xff] %v46
          %v48 = vld [vmem:[%s16 + $0x78] sm:$0xff]
          %49 = vst [vmem:[%s17 + $0xf0] sm:$0xff] %v48
        $region18: #{reverse.23} parent=12 // loop_footer
          %s15 = sadd.s32 1, %s11
        $region19: #{reverse.23} parent=12 // loop_footer_branch
          %10 = sbr.rel target = $region15
        $region20: #{reverse.23} parent=12 // loop_exit
          _
      $region13: #{reverse.23} parent=4 // pred_fallthru
        _
    $region5: #{reverse.23} parent=1 // pred_fallthru
      _
    %94 = vnop
    %s95 = scalar_lea.vmem [#allocation0], 7
    %v96 = vld [vmem:[%s95] ss:$-1 sm:$0xff]
    %v97 = vrot.slane %v96, 1
    %98 = vst [vmem:[#allocation1] sm:$0xff] %v97
    %s99 = scalar_lea.vmem [#allocation0], 8
    %s100 = scalar_lea.vmem %s99, 7 [#allocation0]
    %v101 = vld [vmem:[%s100] ss:$-1 sm:$0xff]
    %v102 = vrot.slane %v101, 1
    %v103 = vlaneseq
    %v104 = vshrl.u32 %v103, 7
    %vm105 = vcmp.lt.s32.totalorder %v104, 7
    %106 = vst.msk [vmem:[#allocation1] sm:$0xff] %vm105, %v102
    %s107 = scalar_lea.vmem [#allocation1], 8
    %s108 = scalar_lea.vmem [#allocation0], 16
    %s109 = scalar_lea.vmem %s108, 7 [#allocation0]
    %v110 = vld [vmem:[%s109] ss:$-1 sm:$0xff]
    %v111 = vrot.slane %v110, 1
    %112 = vst [vmem:[%s107] sm:$0xff] %v111
    %s113 = scalar_lea.vmem %s108, 8 [#allocation0]
    %s114 = scalar_lea.vmem %s113, 7 [#allocation0]
    %v115 = vld [vmem:[%s114] ss:$-1 sm:$0xff]
    %v116 = vrot.slane %v115, 1
    %v117 = vlaneseq
    %v118 = vshrl.u32 %v117, 7
    %vm119 = vcmp.lt.s32.totalorder %v118, 7
    %120 = vst.msk [vmem:[%s107] sm:$0xff] %vm119, %v116
    %s121 = scalar_lea.vmem [#allocation1], 16
    %s122 = scalar_lea.vmem [#allocation0], 32
    %s123 = scalar_lea.vmem %s122, 7 [#allocation0]
    %v124 = vld [vmem:[%s123] ss:$-1 sm:$0xff]
    %v125 = vrot.slane %v124, 1
    %126 = vst [vmem:[%s121] sm:$0xff] %v125
    %s127 = scalar_lea.vmem %s122, 8 [#allocation0]
    %s128 = scalar_lea.vmem %s127, 7 [#allocation0]
    %v129 = vld [vmem:[%s128] ss:$-1 sm:$0xff]
    %v130 = vrot.slane %v129, 1
    %v131 = vlaneseq
    %v132 = vshrl.u32 %v131, 7
    %vm133 = vcmp.lt.s32.totalorder %v132, 7
    %134 = vst.msk [vmem:[%s121] sm:$0xff] %vm133, %v130
    %s135 = scalar_lea.vmem [#allocation1], 24
    %s136 = scalar_lea.vmem [#allocation0], 48
    %s137 = scalar_lea.vmem %s136, 7 [#allocation0]
    %v138 = vld [vmem:[%s137] ss:$-1 sm:$0xff]
    %v139 = vrot.slane %v138, 1
    %140 = vst [vmem:[%s135] sm:$0xff] %v139
    %s141 = scalar_lea.vmem %s136, 8 [#allocation0]
    %s142 = scalar_lea.vmem %s141, 7 [#allocation0]
    %v143 = vld [vmem:[%s142] ss:$-1 sm:$0xff]
    %v144 = vrot.slane %v143, 1
    %v145 = vlaneseq
    %v146 = vshrl.u32 %v145, 7
    %vm147 = vcmp.lt.s32.totalorder %v146, 7
    %148 = vst.msk [vmem:[%s135] sm:$0xff] %vm147, %v144
    %s149 = scalar_lea.vmem [#allocation1], 32
    %s150 = scalar_lea.vmem [#allocation0], 64
    %s151 = scalar_lea.vmem %s150, 7 [#allocation0]
    %v152 = vld [vmem:[%s151] ss:$-1 sm:$0xff]
    %v153 = vrot.slane %v152, 1
    %154 = vst [vmem:[%s149] sm:$0xff] %v153
    %s155 = scalar_lea.vmem %s150, 8 [#allocation0]
    %s156 = scalar_lea.vmem %s155, 7 [#allocation0]
    %v157 = vld [vmem:[%s156] ss:$-1 sm:$0xff]
    %v158 = vrot.slane %v157, 1
    %v159 = vlaneseq
    %v160 = vshrl.u32 %v159, 7
    %vm161 = vcmp.lt.s32.totalorder %v160, 7
    %162 = vst.msk [vmem:[%s149] sm:$0xff] %vm161, %v158
    %s163 = scalar_lea.vmem [#allocation1], 40
    %s164 = scalar_lea.vmem [#allocation0], 80
    %s165 = scalar_lea.vmem %s164, 7 [#allocation0]
    %v166 = vld [vmem:[%s165] ss:$-1 sm:$0xff]
    %v167 = vrot.slane %v166, 1
    %168 = vst [vmem:[%s163] sm:$0xff] %v167
    %s169 = scalar_lea.vmem %s164, 8 [#allocation0]
    %s170 = scalar_lea.vmem %s169, 7 [#allocation0]
    %v171 = vld [vmem:[%s170] ss:$-1 sm:$0xff]
    %v172 = vrot.slane %v171, 1
    %v173 = vlaneseq
    %v174 = vshrl.u32 %v173, 7
    %vm175 = vcmp.lt.s32.totalorder %v174, 7
    %176 = vst.msk [vmem:[%s163] sm:$0xff] %vm175, %v172
    %s177 = scalar_lea.vmem [#allocation1], 48
    %s178 = scalar_lea.vmem [#allocation0], 96
    %s179 = scalar_lea.vmem %s178, 7 [#allocation0]
    %v180 = vld [vmem:[%s179] ss:$-1 sm:$0xff]
    %v181 = vrot.slane %v180, 1
    %182 = vst [vmem:[%s177] sm:$0xff] %v181
    %s183 = scalar_lea.vmem %s178, 8 [#allocation0]
    %s184 = scalar_lea.vmem %s183, 7 [#allocation0]
    %v185 = vld [vmem:[%s184] ss:$-1 sm:$0xff]
    %v186 = vrot.slane %v185, 1
    %v187 = vlaneseq
    %v188 = vshrl.u32 %v187, 7
    %vm189 = vcmp.lt.s32.totalorder %v188, 7
    %190 = vst.msk [vmem:[%s177] sm:$0xff] %vm189, %v186
    %s191 = scalar_lea.vmem [#allocation1], 56
    %s192 = scalar_lea.vmem [#allocation0], 112
    %s193 = scalar_lea.vmem %s192, 7 [#allocation0]
    %v194 = vld [vmem:[%s193] ss:$-1 sm:$0xff]
    %v195 = vrot.slane %v194, 1
    %196 = vst [vmem:[%s191] sm:$0xff] %v195
    %s197 = scalar_lea.vmem %s192, 8 [#allocation0]
    %s198 = scalar_lea.vmem %s197, 7 [#allocation0]
    %v199 = vld [vmem:[%s198] ss:$-1 sm:$0xff]
    %v200 = vrot.slane %v199, 1
    %v201 = vlaneseq
    %v202 = vshrl.u32 %v201, 7
    %vm203 = vcmp.lt.s32.totalorder %v202, 7
    %204 = vst.msk [vmem:[%s191] sm:$0xff] %vm203, %v200
    %s205 = scalar_lea.vmem [#allocation1], 64
    %s206 = scalar_lea.vmem [#allocation0], 128
    %s207 = scalar_lea.vmem %s206, 7 [#allocation0]
    %v208 = vld [vmem:[%s207] ss:$-1 sm:$0xff]
    %v209 = vrot.slane %v208, 1
    %210 = vst [vmem:[%s205] sm:$0xff] %v209
    %s211 = scalar_lea.vmem %s206, 8 [#allocation0]
    %s212 = scalar_lea.vmem %s211, 7 [#allocation0]
    %v213 = vld [vmem:[%s212] ss:$-1 sm:$0xff]
    %v214 = vrot.slane %v213, 1
    %v215 = vlaneseq
    %v216 = vshrl.u32 %v215, 7
    %vm217 = vcmp.lt.s32.totalorder %v216, 7
    %218 = vst.msk [vmem:[%s205] sm:$0xff] %vm217, %v214
    %s219 = scalar_lea.vmem [#allocation1], 72
    %s220 = scalar_lea.vmem [#allocation0], 144
    %s221 = scalar_lea.vmem %s220, 7 [#allocation0]
    %v222 = vld [vmem:[%s221] ss:$-1 sm:$0xff]
    %v223 = vrot.slane %v222, 1
    %224 = vst [vmem:[%s219] sm:$0xff] %v223
    %s225 = scalar_lea.vmem %s220, 8 [#allocation0]
    %s226 = scalar_lea.vmem %s225, 7 [#allocation0]
    %v227 = vld [vmem:[%s226] ss:$-1 sm:$0xff]
    %v228 = vrot.slane %v227, 1
    %v229 = vlaneseq
    %v230 = vshrl.u32 %v229, 7
    %vm231 = vcmp.lt.s32.totalorder %v230, 7
    %232 = vst.msk [vmem:[%s219] sm:$0xff] %vm231, %v228
    %s233 = scalar_lea.vmem [#allocation1], 80
    %s234 = scalar_lea.vmem [#allocation0], 160
    %s235 = scalar_lea.vmem %s234, 7 [#allocation0]
    %v236 = vld [vmem:[%s235] ss:$-1 sm:$0xff]
    %v237 = vrot.slane %v236, 1
    %238 = vst [vmem:[%s233] sm:$0xff] %v237
    %s239 = scalar_lea.vmem %s234, 8 [#allocation0]
    %s240 = scalar_lea.vmem %s239, 7 [#allocation0]
    %v241 = vld [vmem:[%s240] ss:$-1 sm:$0xff]
    %v242 = vrot.slane %v241, 1
    %v243 = vlaneseq
    %v244 = vshrl.u32 %v243, 7
    %vm245 = vcmp.lt.s32.totalorder %v244, 7
    %246 = vst.msk [vmem:[%s233] sm:$0xff] %vm245, %v242
    %s247 = scalar_lea.vmem [#allocation1], 88
    %s248 = scalar_lea.vmem [#allocation0], 176
    %s249 = scalar_lea.vmem %s248, 7 [#allocation0]
    %v250 = vld [vmem:[%s249] ss:$-1 sm:$0xff]
    %v251 = vrot.slane %v250, 1
    %252 = vst [vmem:[%s247] sm:$0xff] %v251
    %s253 = scalar_lea.vmem %s248, 8 [#allocation0]
    %s254 = scalar_lea.vmem %s253, 7 [#allocation0]
    %v255 = vld [vmem:[%s254] ss:$-1 sm:$0xff]
    %v256 = vrot.slane %v255, 1
    %v257 = vlaneseq
    %v258 = vshrl.u32 %v257, 7
    %vm259 = vcmp.lt.s32.totalorder %v258, 7
    %260 = vst.msk [vmem:[%s247] sm:$0xff] %vm259, %v256
    %s261 = scalar_lea.vmem [#allocation1], 96
    %s262 = scalar_lea.vmem [#allocation0], 192
    %s263 = scalar_lea.vmem %s262, 7 [#allocation0]
    %v264 = vld [vmem:[%s263] ss:$-1 sm:$0xff]
    %v265 = vrot.slane %v264, 1
    %266 = vst [vmem:[%s261] sm:$0xff] %v265
    %s267 = scalar_lea.vmem %s262, 8 [#allocation0]
    %s268 = scalar_lea.vmem %s267, 7 [#allocation0]
    %v269 = vld [vmem:[%s268] ss:$-1 sm:$0xff]
    %v270 = vrot.slane %v269, 1
    %v271 = vlaneseq
    %v272 = vshrl.u32 %v271, 7
    %vm273 = vcmp.lt.s32.totalorder %v272, 7
    %274 = vst.msk [vmem:[%s261] sm:$0xff] %vm273, %v270
    %s275 = scalar_lea.vmem [#allocation1], 104
    %s276 = scalar_lea.vmem [#allocation0], 208
    %s277 = scalar_lea.vmem %s276, 7 [#allocation0]
    %v278 = vld [vmem:[%s277] ss:$-1 sm:$0xff]
    %v279 = vrot.slane %v278, 1
    %280 = vst [vmem:[%s275] sm:$0xff] %v279
    %s281 = scalar_lea.vmem %s276, 8 [#allocation0]
    %s282 = scalar_lea.vmem %s281, 7 [#allocation0]
    %v283 = vld [vmem:[%s282] ss:$-1 sm:$0xff]
    %v284 = vrot.slane %v283, 1
    %v285 = vlaneseq
    %v286 = vshrl.u32 %v285, 7
    %vm287 = vcmp.lt.s32.totalorder %v286, 7
    %288 = vst.msk [vmem:[%s275] sm:$0xff] %vm287, %v284
    %s289 = scalar_lea.vmem [#allocation1], 112
    %s290 = scalar_lea.vmem [#allocation0], 224
    %s291 = scalar_lea.vmem %s290, 7 [#allocation0]
    %v292 = vld [vmem:[%s291] ss:$-1 sm:$0xff]
    %v293 = vrot.slane %v292, 1
    %294 = vst [vmem:[%s289] sm:$0xff] %v293
    %s295 = scalar_lea.vmem %s290, 8 [#allocation0]
    %s296 = scalar_lea.vmem %s295, 7 [#allocation0]
    %v297 = vld [vmem:[%s296] ss:$-1 sm:$0xff]
    %v298 = vrot.slane %v297, 1
    %v299 = vlaneseq
    %v300 = vshrl.u32 %v299, 7
    %vm301 = vcmp.lt.s32.totalorder %v300, 7
    %302 = vst.msk [vmem:[%s289] sm:$0xff] %vm301, %v298
    %s303 = scalar_lea.vmem [#allocation1], 120
    %s304 = scalar_lea.vmem [#allocation0], 240
    %s305 = scalar_lea.vmem %s304, 7 [#allocation0]
    %v306 = vld [vmem:[%s305] ss:$-1 sm:$0xff]
    %v307 = vrot.slane %v306, 1
    %308 = vst [vmem:[%s303] sm:$0xff] %v307
    %s309 = scalar_lea.vmem %s304, 8 [#allocation0]
    %s310 = scalar_lea.vmem %s309, 7 [#allocation0]
    %v311 = vld [vmem:[%s310] ss:$-1 sm:$0xff]
    %v312 = vrot.slane %v311, 1
    %v313 = vlaneseq
    %v314 = vshrl.u32 %v313, 7
    %vm315 = vcmp.lt.s32.totalorder %v314, 7
    %316 = vst.msk [vmem:[%s303] sm:$0xff] %vm315, %v312
    // Predicated region
    $region36: #{reverse.23} parent=1 // pred_check
      _
    $region37: #{reverse.23} parent=1 // pred_check_branch
      %318 = sbr.rel (0) target = $region39
    $region38: #{reverse.23} parent=1 // pred_region
      // Predicated region
      $region40: #{reverse.23} parent=38 // pred_check
        _
      $region41: #{reverse.23} parent=38 // pred_check_branch
        %320 = sbr.rel (0) target = $region43
      $region42: #{reverse.23} parent=38 // pred_region
        // Predicated region
        $region55: #{reverse.23} parent=42 // pred_check
          _
        $region56: #{reverse.23} parent=42 // pred_check_branch
          %365 = sbr.rel (0) target = $region58
        $region57: #{reverse.23} parent=42 // pred_region
          loop: start=0, step=1, limit=1
          $region59: #{reverse.23} parent=57 // loop_pre_header
            _
          $region60: #{reverse.23} parent=57 // loop_header
            %s367 = sphi 0, %s371
            %p368 = scmp.ge.s32.totalorder %s367, 1
            %s372 = sphi [#allocation1], [#allocation1]
            %s373 = sphi %s1, %s1
          $region61: #{reverse.23} parent=57 // loop_header_branch
            %370 = sbr.rel (%p368) target = $region65
          $region62: #{reverse.23} parent=57 // loop_body
            %v374 = vld [vmem:[%s372] sm:$0xff]
            %375 = vst [vmem:[%s373] sm:$0xff] %v374
            %v376 = vld [vmem:[%s372 + $0x8] sm:$0xff]
            %377 = vst [vmem:[%s373 + $0x8] sm:$0xff] %v376
            %v378 = vld [vmem:[%s372 + $0x10] sm:$0xff]
            %379 = vst [vmem:[%s373 + $0x10] sm:$0xff] %v378
            %v380 = vld [vmem:[%s372 + $0x18] sm:$0xff]
            %381 = vst [vmem:[%s373 + $0x18] sm:$0xff] %v380
            %v382 = vld [vmem:[%s372 + $0x20] sm:$0xff]
            %383 = vst [vmem:[%s373 + $0x20] sm:$0xff] %v382
            %v384 = vld [vmem:[%s372 + $0x28] sm:$0xff]
            %385 = vst [vmem:[%s373 + $0x28] sm:$0xff] %v384
            %v386 = vld [vmem:[%s372 + $0x30] sm:$0xff]
            %387 = vst [vmem:[%s373 + $0x30] sm:$0xff] %v386
            %v388 = vld [vmem:[%s372 + $0x38] sm:$0xff]
            %389 = vst [vmem:[%s373 + $0x38] sm:$0xff] %v388
            %v390 = vld [vmem:[%s372 + $0x40] sm:$0xff]
            %391 = vst [vmem:[%s373 + $0x40] sm:$0xff] %v390
            %v392 = vld [vmem:[%s372 + $0x48] sm:$0xff]
            %393 = vst [vmem:[%s373 + $0x48] sm:$0xff] %v392
            %v394 = vld [vmem:[%s372 + $0x50] sm:$0xff]
            %395 = vst [vmem:[%s373 + $0x50] sm:$0xff] %v394
            %v396 = vld [vmem:[%s372 + $0x58] sm:$0xff]
            %397 = vst [vmem:[%s373 + $0x58] sm:$0xff] %v396
            %v398 = vld [vmem:[%s372 + $0x60] sm:$0xff]
            %399 = vst [vmem:[%s373 + $0x60] sm:$0xff] %v398
            %v400 = vld [vmem:[%s372 + $0x68] sm:$0xff]
            %401 = vst [vmem:[%s373 + $0x68] sm:$0xff] %v400
            %v402 = vld [vmem:[%s372 + $0x70] sm:$0xff]
            %403 = vst [vmem:[%s373 + $0x70] sm:$0xff] %v402
            %v404 = vld [vmem:[%s372 + $0x78] sm:$0xff]
            %405 = vst [vmem:[%s373 + $0x78] sm:$0xff] %v404
          $region63: #{reverse.23} parent=57 // loop_footer
            %s371 = sadd.s32 1, %s367
          $region64: #{reverse.23} parent=57 // loop_footer_branch
            %366 = sbr.rel target = $region60
          $region65: #{reverse.23} parent=57 // loop_exit
            _
        $region58: #{reverse.23} parent=42 // pred_fallthru
          _
        // Predicated region
        $region66: #{reverse.23} parent=42 // pred_check
          _
        $region67: #{reverse.23} parent=42 // pred_check_branch
          %407 = sbr.rel target = $region69
        $region68: #{reverse.23} parent=42 // pred_region
          _
        $region69: #{reverse.23} parent=42 // pred_fallthru
          _
      $region43: #{reverse.23} parent=38 // pred_fallthru
        _
      // Predicated region
      $region44: #{reverse.23} parent=38 // pred_check
        _
      $region45: #{reverse.23} parent=38 // pred_check_branch
        %322 = sbr.rel target = $region47
      $region46: #{reverse.23} parent=38 // pred_region
        loop: start=0, step=1, limit=1
        $region48: #{reverse.23} parent=46 // loop_pre_header
          _
        $region49: #{reverse.23} parent=46 // loop_header
          %s325 = sphi 0, %s329
          %p326 = scmp.ge.s32.totalorder %s325, 1
          %s330 = sphi [#allocation1], [#allocation1]
          %s331 = sphi %s1, %s1
        $region50: #{reverse.23} parent=46 // loop_header_branch
          %328 = sbr.rel (%p326) target = $region54
        $region51: #{reverse.23} parent=46 // loop_body
          %v332 = vld [vmem:[%s330] sm:$0xff]
          %333 = vst [vmem:[%s331] sm:$0xff] %v332
          %v334 = vld [vmem:[%s330 + $0x8] sm:$0xff]
          %335 = vst [vmem:[%s331 + $0x8] sm:$0xff] %v334
          %v336 = vld [vmem:[%s330 + $0x10] sm:$0xff]
          %337 = vst [vmem:[%s331 + $0x10] sm:$0xff] %v336
          %v338 = vld [vmem:[%s330 + $0x18] sm:$0xff]
          %339 = vst [vmem:[%s331 + $0x18] sm:$0xff] %v338
          %v340 = vld [vmem:[%s330 + $0x20] sm:$0xff]
          %341 = vst [vmem:[%s331 + $0x20] sm:$0xff] %v340
          %v342 = vld [vmem:[%s330 + $0x28] sm:$0xff]
          %343 = vst [vmem:[%s331 + $0x28] sm:$0xff] %v342
          %v344 = vld [vmem:[%s330 + $0x30] sm:$0xff]
          %345 = vst [vmem:[%s331 + $0x30] sm:$0xff] %v344
          %v346 = vld [vmem:[%s330 + $0x38] sm:$0xff]
          %347 = vst [vmem:[%s331 + $0x38] sm:$0xff] %v346
          %v348 = vld [vmem:[%s330 + $0x40] sm:$0xff]
          %349 = vst [vmem:[%s331 + $0x40] sm:$0xff] %v348
          %v350 = vld [vmem:[%s330 + $0x48] sm:$0xff]
          %351 = vst [vmem:[%s331 + $0x48] sm:$0xff] %v350
          %v352 = vld [vmem:[%s330 + $0x50] sm:$0xff]
          %353 = vst [vmem:[%s331 + $0x50] sm:$0xff] %v352
          %v354 = vld [vmem:[%s330 + $0x58] sm:$0xff]
          %355 = vst [vmem:[%s331 + $0x58] sm:$0xff] %v354
          %v356 = vld [vmem:[%s330 + $0x60] sm:$0xff]
          %357 = vst [vmem:[%s331 + $0x60] sm:$0xff] %v356
          %v358 = vld [vmem:[%s330 + $0x68] sm:$0xff]
          %359 = vst [vmem:[%s331 + $0x68] sm:$0xff] %v358
          %v360 = vld [vmem:[%s330 + $0x70] sm:$0xff]
          %361 = vst [vmem:[%s331 + $0x70] sm:$0xff] %v360
          %v362 = vld [vmem:[%s330 + $0x78] sm:$0xff]
          %363 = vst [vmem:[%s331 + $0x78] sm:$0xff] %v362
        $region52: #{reverse.23} parent=46 // loop_footer
          %s329 = sadd.s32 1, %s325
        $region53: #{reverse.23} parent=46 // loop_footer_branch
          %324 = sbr.rel target = $region49
        $region54: #{reverse.23} parent=46 // loop_exit
          _
      $region47: #{reverse.23} parent=38 // pred_fallthru
        _
    $region39: #{reverse.23} parent=1 // pred_fallthru
      _
    %408 = vnop

// kernel: ffab_forward.37
$region0: #{ffab_forward.37}
  #allocation0 [shape = 'u32[]', space=smem, size = 0x4, offset = 0x4, fixed_abs, tag = 'smem constant byte address 0x4 - core index']
  #allocation1 [shape = 'u32[144,128]{1,0:T(1,128)}', space=vmem, size = 0x12000, scoped, tag = 'internal scratch']
  %s0 = inlined_call_operand.hbm [shape: f32[2,8,256], index: 0, kind: input, shape index: {}]
  %s1 = inlined_call_operand.hbm [shape: f32[2,4,256], index: 1, kind: input, shape index: {}]
  %s2 = inlined_call_operand.hbm [shape: f32[2,4,256], index: 2, kind: input, shape index: {}]
  %s3 = inlined_call_operand.hbm [shape: f32[4,4], index: 3, kind: input, shape index: {}]
  %s4 = inlined_call_operand.hbm [shape: f32[4,4], index: 4, kind: input, shape index: {}]
  %s5 = inlined_call_operand.hbm [shape: f32[4,4], index: 5, kind: input, shape index: {}]
  %s6 = inlined_call_operand.hbm [shape: f32[4,4], index: 6, kind: input, shape index: {}]
  %s7 = inlined_call_operand.hbm [shape: f32[4,1], index: 7, kind: input, shape index: {}]
  %s8 = inlined_call_operand.hbm [shape: f32[2,4,256], index: 8, kind: output, shape index: {}]
  %s9 = sld [smem:[#allocation0]]
  $region97: #{ffab_forward.37} parent=0
    _
  %s11 = ssub.s32 1, %s9
  %s12 = scalar_select 0, %s11, %s9
  $region1: #{ffab_forward.37} parent=0
    #allocation2 [shape = 'u8[16384]{0}', space=vmem, size = 0x4000, scoped, tag = 'input window, operand 0']
    #allocation3 [shape = 's32[2]{0}', space=sflag, size = 0x8, scoped, tag = 'scoped memory for ffab_forward.37']
    #allocation4 [shape = 's32[2]{0}', space=sflag, size = 0x8, scoped, tag = 'scoped memory for ffab_forward.37']
    #allocation5 [shape = 'u8[8192]{0}', space=vmem, size = 0x2000, scoped, tag = 'input window, operand 1']
    #allocation6 [shape = 's32[2]{0}', space=sflag, size = 0x8, scoped, tag = 'scoped memory for ffab_forward.37']
    #allocation7 [shape = 'u8[8192]{0}', space=vmem, size = 0x2000, scoped, tag = 'input window, operand 2']
    #allocation8 [shape = 'u8[2048]{0}', space=vmem, size = 0x800, scoped, tag = 'input window, operand 3, single buffered']
    #allocation9 [shape = 's32[1]{0}', space=sflag, size = 0x4, scoped, tag = 'scoped memory for ffab_forward.37']
    #allocation10 [shape = 'u8[2048]{0}', space=vmem, size = 0x800, scoped, tag = 'input window, operand 4, single buffered']
    #allocation11 [shape = 'u8[2048]{0}', space=vmem, size = 0x800, scoped, tag = 'input window, operand 5, single buffered']
    #allocation12 [shape = 's32[1]{0}', space=sflag, size = 0x4, scoped, tag = 'scoped memory for ffab_forward.37']
    #allocation13 [shape = 'u8[2048]{0}', space=vmem, size = 0x800, scoped, tag = 'input window, operand 6, single buffered']
    #allocation14 [shape = 'u8[2048]{0}', space=vmem, size = 0x800, scoped, tag = 'input window, operand 7, single buffered']
    #allocation15 [shape = 's32[1]{0}', space=sflag, size = 0x4, scoped, tag = 'scoped memory for ffab_forward.37']
    #allocation16 [shape = 'u8[8192]{0}', space=vmem, size = 0x2000, scoped, tag = 'output window, operand 0']
    %13 = vsyncpa [#allocation3], 0
    %s14 = scalar_lea.sflag [#allocation3], 1
    %15 = vsyncpa %s14, 0
    %16 = vsyncpa [#allocation6], 0
    %s17 = scalar_lea.sflag [#allocation6], 1
    %18 = vsyncpa %s17, 0
    %19 = vsyncpa [#allocation9], 0
    %20 = vsyncpa [#allocation12], 0
    %21 = vsyncpa [#allocation15], 0
    %22 = vsyncpa [#allocation4], 0
    %s23 = scalar_lea.sflag [#allocation4], 1
    %24 = vsyncpa %s23, 0
    loop: start=0, step=1, limit=4
    $region2: #{ffab_forward.37} parent=1 // loop_pre_header
      _
    $region3: #{ffab_forward.37} parent=1 // loop_header
      %s26 = sphi 0, %s30
      %p27 = scmp.ge.s32.totalorder %s26, 4
      %s33 = sphi 0, %s45
      %s34 = sphi 0, %s41
      %s35 = sphi 0, %s33
      %s36 = sphi 0, %s34
      %s37 = sphi 0, %s35
      %s38 = sphi 0, %s36
      %s50 = sphi 0, %s52
      %s53 = sphi 0, %s50
      %s54 = sphi 0, %s53
      %s70 = sphi 0, %s54
      %s78 = sphi 0, %s80
      %s81 = sphi 0, %s78
      %s82 = sphi 0, %s81
      %s98 = sphi 0, %s82
      %s106 = sphi 0, %s108
      %s109 = sphi 0, %s106
      %s110 = sphi 0, %s109
      %s126 = sphi 0, %s110
      %s130 = sphi 0, %s130
      %s132 = sphi 0, %s130
      %s133 = sphi 0, %s132
      %s147 = sphi 0, %s133
      %s151 = sphi 0, %s151
      %s153 = sphi 0, %s151
      %s154 = sphi 0, %s153
      %s168 = sphi 0, %s154
      %s172 = sphi 0, %s172
      %s174 = sphi 0, %s172
      %s175 = sphi 0, %s174
      %s189 = sphi 0, %s175
      %s193 = sphi 0, %s193
      %s195 = sphi 0, %s193
      %s196 = sphi 0, %s195
      %s210 = sphi 0, %s196
      %s214 = sphi 0, %s214
      %s216 = sphi 0, %s214
      %s217 = sphi 0, %s216
      %s231 = sphi 0, %s217
      %s239 = sphi 0, %s241
      %s242 = sphi 0, %s239
      %s243 = sphi 0, %s242
      %s259 = sphi 0, %s243
    $region4: #{ffab_forward.37} parent=1 // loop_header_branch
      %29 = sbr.rel (%p27) target = $region8
    $region5: #{ffab_forward.37} parent=1 // loop_body
      %s31 = ssub.s32 %s26, 1
      %s32 = ssub.s32 %s26, 2
      %s39 = sadd.s32 1, %s34
      %p40 = scmp.ge.s32.totalorder %s39, 1
      %s41 = scalar_select %p40, 0, %s39
      %s42 = sadd.s32 1, %s33
      %s43 = scalar_select %p40, %s42, %s33
      %p44 = scmp.ge.s32.totalorder %s43, 2
      %s45 = scalar_select %p44, 0, %s43
      %s46 = ssub.s32 %s33, %s45
      %s47 = ssub.s32 %s34, %s41
      %s48 = sor.u32 %s46, %s47
      %p49 = scmp.eq.s32.totalorder %s48, 0
      %s51 = sadd.s32 %s50, 1
      %s52 = scalar_select %p49, %s50, %s51
      %p55 = pneg %p49
      %p56 = scmp.eq.s32.totalorder %s26, 1
      %p57 = por %p55, %p56
      %p58 = scmp.ne.s32.totalorder %s50, %s53
      %p59 = scmp.eq.s32.totalorder %s26, 0
      %p60 = por %p58, %p59
      %p61 = scmp.ne.s32.totalorder %s50, %s53
      %p62 = scmp.eq.s32.totalorder %s31, 1
      %p63 = por %p61, %p62
      %p64 = scmp.ne.s32.totalorder %s53, %s54
      %p65 = scmp.eq.s32.totalorder %s31, 0
      %p66 = por %p64, %p65
      %p67 = scmp.ne.s32.totalorder %s53, %s54
      %p68 = scmp.eq.s32.totalorder %s32, 1
      %p69 = por %p67, %p68
      %p71 = scmp.ne.s32.totalorder %s54, %s70
      %p72 = scmp.eq.s32.totalorder %s32, 0
      %p73 = por %p71, %p72
      %s74 = ssub.s32 %s33, %s45
      %s75 = ssub.s32 %s34, %s41
      %s76 = sor.u32 %s74, %s75
      %p77 = scmp.eq.s32.totalorder %s76, 0
      %s79 = sadd.s32 %s78, 1
      %s80 = scalar_select %p77, %s78, %s79
      %p83 = pneg %p77
      %p84 = scmp.eq.s32.totalorder %s26, 1
      %p85 = por %p83, %p84
      %p86 = scmp.ne.s32.totalorder %s78, %s81
      %p87 = scmp.eq.s32.totalorder %s26, 0
      %p88 = por %p86, %p87
      %p89 = scmp.ne.s32.totalorder %s78, %s81
      %p90 = scmp.eq.s32.totalorder %s31, 1
      %p91 = por %p89, %p90
      %p92 = scmp.ne.s32.totalorder %s81, %s82
      %p93 = scmp.eq.s32.totalorder %s31, 0
      %p94 = por %p92, %p93
      %p95 = scmp.ne.s32.totalorder %s81, %s82
      %p96 = scmp.eq.s32.totalorder %s32, 1
      %p97 = por %p95, %p96
      %p99 = scmp.ne.s32.totalorder %s82, %s98
      %p100 = scmp.eq.s32.totalorder %s32, 0
      %p101 = por %p99, %p100
      %s102 = ssub.s32 %s33, %s45
      %s103 = ssub.s32 %s34, %s41
      %s104 = sor.u32 %s102, %s103
      %p105 = scmp.eq.s32.totalorder %s104, 0
      %s107 = sadd.s32 %s106, 1
      %s108 = scalar_select %p105, %s106, %s107
      %p111 = pneg %p105
      %p112 = scmp.eq.s32.totalorder %s26, 1
      %p113 = por %p111, %p112
      %p114 = scmp.ne.s32.totalorder %s106, %s109
      %p115 = scmp.eq.s32.totalorder %s26, 0
      %p116 = por %p114, %p115
      %p117 = scmp.ne.s32.totalorder %s106, %s109
      %p118 = scmp.eq.s32.totalorder %s31, 1
      %p119 = por %p117, %p118
      %p120 = scmp.ne.s32.totalorder %s109, %s110
      %p121 = scmp.eq.s32.totalorder %s31, 0
      %p122 = por %p120, %p121
      %p123 = scmp.ne.s32.totalorder %s109, %s110
      %p124 = scmp.eq.s32.totalorder %s32, 1
      %p125 = por %p123, %p124
      %p127 = scmp.ne.s32.totalorder %s110, %s126
      %p128 = scmp.eq.s32.totalorder %s32, 0
      %p129 = por %p127, %p128
      %s131 = sadd.s32 %s130, 1
      %p134 = scmp.eq.s32.totalorder %s26, 1
      %p135 = scmp.ne.s32.totalorder %s130, %s132
      %p136 = scmp.eq.s32.totalorder %s26, 0
      %p137 = por %p135, %p136
      %p138 = scmp.ne.s32.totalorder %s130, %s132
      %p139 = scmp.eq.s32.totalorder %s31, 1
      %p140 = por %p138, %p139
      %p141 = scmp.ne.s32.totalorder %s132, %s133
      %p142 = scmp.eq.s32.totalorder %s31, 0
      %p143 = por %p141, %p142
      %p144 = scmp.ne.s32.totalorder %s132, %s133
      %p145 = scmp.eq.s32.totalorder %s32, 1
      %p146 = por %p144, %p145
      %p148 = scmp.ne.s32.totalorder %s133, %s147
      %p149 = scmp.eq.s32.totalorder %s32, 0
      %p150 = por %p148, %p149
      %s152 = sadd.s32 %s151, 1
      %p155 = scmp.eq.s32.totalorder %s26, 1
      %p156 = scmp.ne.s32.totalorder %s151, %s153
      %p157 = scmp.eq.s32.totalorder %s26, 0
      %p158 = por %p156, %p157
      %p159 = scmp.ne.s32.totalorder %s151, %s153
      %p160 = scmp.eq.s32.totalorder %s31, 1
      %p161 = por %p159, %p160
      %p162 = scmp.ne.s32.totalorder %s153, %s154
      %p163 = scmp.eq.s32.totalorder %s31, 0
      %p164 = por %p162, %p163
      %p165 = scmp.ne.s32.totalorder %s153, %s154
      %p166 = scmp.eq.s32.totalorder %s32, 1
      %p167 = por %p165, %p166
      %p169 = scmp.ne.s32.totalorder %s154, %s168
      %p170 = scmp.eq.s32.totalorder %s32, 0
      %p171 = por %p169, %p170
      %s173 = sadd.s32 %s172, 1
      %p176 = scmp.eq.s32.totalorder %s26, 1
      %p177 = scmp.ne.s32.totalorder %s172, %s174
      %p178 = scmp.eq.s32.totalorder %s26, 0
      %p179 = por %p177, %p178
      %p180 = scmp.ne.s32.totalorder %s172, %s174
      %p181 = scmp.eq.s32.totalorder %s31, 1
      %p182 = por %p180, %p181
      %p183 = scmp.ne.s32.totalorder %s174, %s175
      %p184 = scmp.eq.s32.totalorder %s31, 0
      %p185 = por %p183, %p184
      %p186 = scmp.ne.s32.totalorder %s174, %s175
      %p187 = scmp.eq.s32.totalorder %s32, 1
      %p188 = por %p186, %p187
      %p190 = scmp.ne.s32.totalorder %s175, %s189
      %p191 = scmp.eq.s32.totalorder %s32, 0
      %p192 = por %p190, %p191
      %s194 = sadd.s32 %s193, 1
      %p197 = scmp.eq.s32.totalorder %s26, 1
      %p198 = scmp.ne.s32.totalorder %s193, %s195
      %p199 = scmp.eq.s32.totalorder %s26, 0
      %p200 = por %p198, %p199
      %p201 = scmp.ne.s32.totalorder %s193, %s195
      %p202 = scmp.eq.s32.totalorder %s31, 1
      %p203 = por %p201, %p202
      %p204 = scmp.ne.s32.totalorder %s195, %s196
      %p205 = scmp.eq.s32.totalorder %s31, 0
      %p206 = por %p204, %p205
      %p207 = scmp.ne.s32.totalorder %s195, %s196
      %p208 = scmp.eq.s32.totalorder %s32, 1
      %p209 = por %p207, %p208
      %p211 = scmp.ne.s32.totalorder %s196, %s210
      %p212 = scmp.eq.s32.totalorder %s32, 0
      %p213 = por %p211, %p212
      %s215 = sadd.s32 %s214, 1
      %p218 = scmp.eq.s32.totalorder %s26, 1
      %p219 = scmp.ne.s32.totalorder %s214, %s216
      %p220 = scmp.eq.s32.totalorder %s26, 0
      %p221 = por %p219, %p220
      %p222 = scmp.ne.s32.totalorder %s214, %s216
      %p223 = scmp.eq.s32.totalorder %s31, 1
      %p224 = por %p222, %p223
      %p225 = scmp.ne.s32.totalorder %s216, %s217
      %p226 = scmp.eq.s32.totalorder %s31, 0
      %p227 = por %p225, %p226
      %p228 = scmp.ne.s32.totalorder %s216, %s217
      %p229 = scmp.eq.s32.totalorder %s32, 1
      %p230 = por %p228, %p229
      %p232 = scmp.ne.s32.totalorder %s217, %s231
      %p233 = scmp.eq.s32.totalorder %s32, 0
      %p234 = por %p232, %p233
      %s235 = ssub.s32 %s33, %s45
      %s236 = ssub.s32 %s34, %s41
      %s237 = sor.u32 %s235, %s236
      %p238 = scmp.eq.s32.totalorder %s237, 0
      %s240 = sadd.s32 %s239, 1
      %s241 = scalar_select %p238, %s239, %s240
      %p244 = pneg %p238
      %p245 = scmp.eq.s32.totalorder %s26, 1
      %p246 = por %p244, %p245
      %p247 = scmp.ne.s32.totalorder %s239, %s242
      %p248 = scmp.eq.s32.totalorder %s26, 0
      %p249 = por %p247, %p248
      %p250 = scmp.ne.s32.totalorder %s239, %s242
      %p251 = scmp.eq.s32.totalorder %s31, 1
      %p252 = por %p250, %p251
      %p253 = scmp.ne.s32.totalorder %s242, %s243
      %p254 = scmp.eq.s32.totalorder %s31, 0
      %p255 = por %p253, %p254
      %p256 = scmp.ne.s32.totalorder %s242, %s243
      %p257 = scmp.eq.s32.totalorder %s32, 1
      %p258 = por %p256, %p257
      %p260 = scmp.ne.s32.totalorder %s243, %s259
      %p261 = scmp.eq.s32.totalorder %s32, 0
      %p262 = por %p260, %p261
      %p263 = scmp.le.s32.totalorder 1, %s26
      %p264 = scmp.lt.s32.totalorder %s26, 3
      %p265 = pnand %p263, %p264
      %p266 = pneg %p265
      // Predicated region
      $region9: #{ffab_forward.37} parent=5 // pred_check
        _
      $region10: #{ffab_forward.37} parent=5 // pred_check_branch
        %268 = sbr.rel (%p265) target = $region12
      $region11: #{ffab_forward.37} parent=5 // pred_region
        %s269 = ssub.s32 %s26, 1
        // Predicated region
        $region13: #{ffab_forward.37} parent=11 // pred_check
          %p270 = pneg %p143
        $region14: #{ffab_forward.37} parent=11 // pred_check_branch
          %272 = sbr.rel (%p270) target = $region16
        $region15: #{ffab_forward.37} parent=11 // pred_region
          %s274 = ssub.s32 64, 64
          %275 = vsyncadd [#allocation9], %s274
          %s277 = sshll.u32 [#allocation8], 4
          %s278 = int_to_ptr.vmem [resolvable:$true] %s277
          %280 = dma.hbm_to_vmem [thread:$0]  %s3, 64, %s278, [#allocation9]
        $region16: #{ffab_forward.37} parent=11 // pred_fallthru
          _
        // Predicated region
        $region17: #{ffab_forward.37} parent=11 // pred_check
          %p281 = pneg %p164
        $region18: #{ffab_forward.37} parent=11 // pred_check_branch
          %283 = sbr.rel (%p281) target = $region20
        $region19: #{ffab_forward.37} parent=11 // pred_region
          %s285 = ssub.s32 64, 64
          %286 = vsyncadd [#allocation9], %s285
          %s288 = sshll.u32 [#allocation10], 4
          %s289 = int_to_ptr.vmem [resolvable:$true] %s288
          %291 = dma.hbm_to_vmem [thread:$0]  %s4, 64, %s289, [#allocation9]
        $region20: #{ffab_forward.37} parent=11 // pred_fallthru
          _
        // Predicated region
        $region21: #{ffab_forward.37} parent=11 // pred_check
          %p292 = pneg %p185
        $region22: #{ffab_forward.37} parent=11 // pred_check_branch
          %294 = sbr.rel (%p292) target = $region24
        $region23: #{ffab_forward.37} parent=11 // pred_region
          %s296 = ssub.s32 64, 64
          %297 = vsyncadd [#allocation12], %s296
          %s299 = sshll.u32 [#allocation11], 4
          %s300 = int_to_ptr.vmem [resolvable:$true] %s299
          %302 = dma.hbm_to_vmem [thread:$0]  %s5, 64, %s300, [#allocation12]
        $region24: #{ffab_forward.37} parent=11 // pred_fallthru
          _
        // Predicated region
        $region25: #{ffab_forward.37} parent=11 // pred_check
          %p303 = pneg %p206
        $region26: #{ffab_forward.37} parent=11 // pred_check_branch
          %305 = sbr.rel (%p303) target = $region28
        $region27: #{ffab_forward.37} parent=11 // pred_region
          %s307 = ssub.s32 64, 64
          %308 = vsyncadd [#allocation12], %s307
          %s310 = sshll.u32 [#allocation13], 4
          %s311 = int_to_ptr.vmem [resolvable:$true] %s310
          %313 = dma.hbm_to_vmem [thread:$0]  %s6, 64, %s311, [#allocation12]
        $region28: #{ffab_forward.37} parent=11 // pred_fallthru
          _
        // Predicated region
        $region29: #{ffab_forward.37} parent=11 // pred_check
          %p314 = pneg %p227
        $region30: #{ffab_forward.37} parent=11 // pred_check_branch
          %316 = sbr.rel (%p314) target = $region32
        $region31: #{ffab_forward.37} parent=11 // pred_region
          %s318 = ssub.s32 64, 64
          %319 = vsyncadd [#allocation15], %s318
          %s321 = sshll.u32 [#allocation14], 4
          %s322 = int_to_ptr.vmem [resolvable:$true] %s321
          %324 = dma.hbm_to_vmem [thread:$0]  %s7, 64, %s322, [#allocation15]
        $region32: #{ffab_forward.37} parent=11 // pred_fallthru
          _
      $region12: #{ffab_forward.37} parent=5 // pred_fallthru
        _
      %p325 = scmp.lt.s32.totalorder %s26, 2
      // Predicated region
      $region33: #{ffab_forward.37} parent=5 // pred_check
        %p326 = pneg %p325
      $region34: #{ffab_forward.37} parent=5 // pred_check_branch
        %328 = sbr.rel (%p326) target = $region36
      $region35: #{ffab_forward.37} parent=5 // pred_region
        // Predicated region
        $region37: #{ffab_forward.37} parent=35 // pred_check
          %p329 = pneg %p60
        $region38: #{ffab_forward.37} parent=35 // pred_check_branch
          %331 = sbr.rel (%p329) target = $region40
        $region39: #{ffab_forward.37} parent=35 // pred_region
          %s332 = sand.u32 %s50, 1
          %s333 = scalar_lea.sflag [#allocation3], %s332
          %s334 = sand.u32 %s50, 1
          %s335 = smul.addr %s334, 16
          %s336 = scalar_lea.vmem [#allocation2], %s335
          %s337 = smul.u32 2, %s34
          %s339 = ssub.s32 256, 256
          %340 = vsyncadd %s333, %s339
          %s341 = smul.addr %s33, 2
          %s342 = sadd.s32 %s337, %s341
          %s343 = smul.addr %s342, 128
          %s344 = scalar_lea.hbm %s0, %s343
          %s346 = sshll.u32 %s336, 4
          %s347 = int_to_ptr.vmem [resolvable:$true] %s346
          %349 = dma.hbm_to_vmem [thread:$0]  %s344, 256, %s347, %s333
        $region40: #{ffab_forward.37} parent=35 // pred_fallthru
          _
        // Predicated region
        $region41: #{ffab_forward.37} parent=35 // pred_check
          %p350 = pneg %p88
        $region42: #{ffab_forward.37} parent=35 // pred_check_branch
          %352 = sbr.rel (%p350) target = $region44
        $region43: #{ffab_forward.37} parent=35 // pred_region
          %s353 = sand.u32 %s26, 1
          %s354 = scalar_lea.sflag [#allocation6], %s353
          %s355 = sand.u32 %s78, 1
          %s356 = smul.addr %s355, 8
          %s357 = scalar_lea.vmem [#allocation5], %s356
          %s358 = smul.u32 2, %s34
          %s360 = ssub.s32 128, 128
          %361 = vsyncadd %s354, %s360
          %s362 = smul.addr %s33, 2
          %s363 = sadd.s32 %s358, %s362
          %s364 = smul.addr %s363, 64
          %s365 = scalar_lea.hbm %s1, %s364
          %s367 = sshll.u32 %s357, 4
          %s368 = int_to_ptr.vmem [resolvable:$true] %s367
          %370 = dma.hbm_to_vmem [thread:$0]  %s365, 128, %s368, %s354
        $region44: #{ffab_forward.37} parent=35 // pred_fallthru
          _
        // Predicated region
        $region45: #{ffab_forward.37} parent=35 // pred_check
          %p371 = pneg %p116
        $region46: #{ffab_forward.37} parent=35 // pred_check_branch
          %373 = sbr.rel (%p371) target = $region48
        $region47: #{ffab_forward.37} parent=35 // pred_region
          %s374 = sand.u32 %s26, 1
          %s375 = scalar_lea.sflag [#allocation6], %s374
          %s376 = sand.u32 %s106, 1
          %s377 = smul.addr %s376, 8
          %s378 = scalar_lea.vmem [#allocation7], %s377
          %s379 = smul.u32 2, %s34
          %s381 = ssub.s32 128, 128
          %382 = vsyncadd %s375, %s381
          %s383 = smul.addr %s33, 2
          %s384 = sadd.s32 %s379, %s383
          %s385 = smul.addr %s384, 64
          %s386 = scalar_lea.hbm %s2, %s385
          %s388 = sshll.u32 %s378, 4
          %s389 = int_to_ptr.vmem [resolvable:$true] %s388
          %391 = dma.hbm_to_vmem [thread:$0]  %s386, 128, %s389, %s375
        $region48: #{ffab_forward.37} parent=35 // pred_fallthru
          _
      $region36: #{ffab_forward.37} parent=5 // pred_fallthru
        _
      %p392 = scmp.le.s32.totalorder 1, %s26
      %p393 = scmp.lt.s32.totalorder %s26, 3
      %p394 = pnand %p392, %p393
      %p395 = pneg %p394
      // Predicated region
      $region49: #{ffab_forward.37} parent=5 // pred_check
        _
      $region50: #{ffab_forward.37} parent=5 // pred_check_branch
        %397 = sbr.rel (%p394) target = $region52
      $region51: #{ffab_forward.37} parent=5 // pred_region
        %s398 = ssub.s32 %s26, 1
        %s399 = sand.u32 %s53, 1
        %s400 = scalar_lea.sflag [#allocation3], %s399
        %s401 = sand.u32 %s53, 1
        %s402 = smul.addr %s401, 16
        %s403 = scalar_lea.vmem [#allocation2], %s402
        // Predicated region
        $region53: #{ffab_forward.37} parent=51 // pred_check
          %p404 = pneg %p66
        $region54: #{ffab_forward.37} parent=51 // pred_check_branch
          %406 = sbr.rel (%p404) target = $region56
        $region55: #{ffab_forward.37} parent=51 // pred_region
          %407 = dma.done %s400, 256
        $region56: #{ffab_forward.37} parent=51 // pred_fallthru
          _
        %s408 = sand.u32 %s31, 1
        %s409 = scalar_lea.sflag [#allocation6], %s408
        %s410 = sand.u32 %s81, 1
        %s411 = smul.addr %s410, 8
        %s412 = scalar_lea.vmem [#allocation5], %s411
        // Predicated region
        $region57: #{ffab_forward.37} parent=51 // pred_check
          %p413 = pneg %p94
        $region58: #{ffab_forward.37} parent=51 // pred_check_branch
          %415 = sbr.rel (%p413) target = $region60
        $region59: #{ffab_forward.37} parent=51 // pred_region
          %416 = dma.done %s409, 128
        $region60: #{ffab_forward.37} parent=51 // pred_fallthru
          _
        %s417 = sand.u32 %s31, 1
        %s418 = scalar_lea.sflag [#allocation6], %s417
        %s419 = sand.u32 %s109, 1
        %s420 = smul.addr %s419, 8
        %s421 = scalar_lea.vmem [#allocation7], %s420
        // Predicated region
        $region61: #{ffab_forward.37} parent=51 // pred_check
          %p422 = pneg %p122
        $region62: #{ffab_forward.37} parent=51 // pred_check_branch
          %424 = sbr.rel (%p422) target = $region64
        $region63: #{ffab_forward.37} parent=51 // pred_region
          %425 = dma.done %s418, 128
        $region64: #{ffab_forward.37} parent=51 // pred_fallthru
          _
        // Predicated region
        $region65: #{ffab_forward.37} parent=51 // pred_check
          %p426 = pneg %p143
        $region66: #{ffab_forward.37} parent=51 // pred_check_branch
          %428 = sbr.rel (%p426) target = $region68
        $region67: #{ffab_forward.37} parent=51 // pred_region
          %429 = dma.done [#allocation9], 64
        $region68: #{ffab_forward.37} parent=51 // pred_fallthru
          _
        // Predicated region
        $region69: #{ffab_forward.37} parent=51 // pred_check
          %p430 = pneg %p164
        $region70: #{ffab_forward.37} parent=51 // pred_check_branch
          %432 = sbr.rel (%p430) target = $region72
        $region71: #{ffab_forward.37} parent=51 // pred_region
          %433 = dma.done [#allocation9], 64
        $region72: #{ffab_forward.37} parent=51 // pred_fallthru
          _
        // Predicated region
        $region73: #{ffab_forward.37} parent=51 // pred_check
          %p434 = pneg %p185
        $region74: #{ffab_forward.37} parent=51 // pred_check_branch
          %436 = sbr.rel (%p434) target = $region76
        $region75: #{ffab_forward.37} parent=51 // pred_region
          %437 = dma.done [#allocation12], 64
        $region76: #{ffab_forward.37} parent=51 // pred_fallthru
          _
        // Predicated region
        $region77: #{ffab_forward.37} parent=51 // pred_check
          %p438 = pneg %p206
        $region78: #{ffab_forward.37} parent=51 // pred_check_branch
          %440 = sbr.rel (%p438) target = $region80
        $region79: #{ffab_forward.37} parent=51 // pred_region
          %441 = dma.done [#allocation12], 64
        $region80: #{ffab_forward.37} parent=51 // pred_fallthru
          _
        // Predicated region
        $region81: #{ffab_forward.37} parent=51 // pred_check
          %p442 = pneg %p227
        $region82: #{ffab_forward.37} parent=51 // pred_check_branch
          %444 = sbr.rel (%p442) target = $region84
        $region83: #{ffab_forward.37} parent=51 // pred_region
          %445 = dma.done [#allocation15], 64
        $region84: #{ffab_forward.37} parent=51 // pred_fallthru
          _
        %s446 = sand.u32 %s53, 1
        %s447 = scalar_lea.sflag [#allocation3], %s446
        %s448 = sand.u32 %s53, 1
        %s449 = smul.addr %s448, 16
        %s450 = scalar_lea.vmem [#allocation2], %s449
        %p451 = pneg %p66
        %p452 = pneg %p63
        %s453 = sand.u32 %s31, 1
        %s454 = scalar_lea.sflag [#allocation6], %s453
        %s455 = sand.u32 %s81, 1
        %s456 = smul.addr %s455, 8
        %s457 = scalar_lea.vmem [#allocation5], %s456
        %p458 = pneg %p94
        %p459 = pneg %p91
        %s460 = sand.u32 %s31, 1
        %s461 = scalar_lea.sflag [#allocation6], %s460
        %s462 = sand.u32 %s109, 1
        %s463 = smul.addr %s462, 8
        %s464 = scalar_lea.vmem [#allocation7], %s463
        %p465 = pneg %p122
        %p466 = pneg %p119
        %p467 = pneg %p143
        %p468 = pneg %p140
        %p469 = pneg %p164
        %p470 = pneg %p161
        %p471 = pneg %p185
        %p472 = pneg %p182
        %p473 = pneg %p206
        %p474 = pneg %p203
        %p475 = pneg %p227
        %p476 = pneg %p224
        %p477 = pneg %p255
        %p478 = pneg %p252
        %s479 = sand.u32 %s242, 1
        %s480 = scalar_lea.sflag [#allocation4], %s479
        %s481 = sand.u32 %s242, 1
        %s482 = smul.addr %s481, 8
        %s483 = scalar_lea.vmem [#allocation16], %s482
        %s484 = smul.u32 2, %s36
        %s485 = smul.u32 2, %s36
        %s486 = smul.u32 2, %s36
        %s487 = smul.u32 2, %s36
        %v488 = vld [vmem:[%s412] sm:$0xff]
        %v489 = vld [vmem:[%s421] sm:$0xff]
        %v490 = vld [vmem:[%s403] sm:$0xff]
        %v491 = vld [vmem:[%s403 + $0x8] sm:$0xff]
        %v492 = vmax.f32 %v488, -10.0
        %v493 = vmin.f32 %v492, 10.0
        %v495 = vcombine.high %v493, %v493
        %v497 = vadd.f32 %v490, %v493
        %v498 = vadd.f32 %v491, %v495
        %v499 = vmax.f32 %v497, -10.0
        %v500 = vmax.f32 %v498, -10.0
        %v501 = vmin.f32 %v499, 10.0
        %v502 = vmin.f32 %v500, 10.0
        %v503 = vmax.f32 %v489, -10.0
        %v504 = vmin.f32 %v503, 10.0
        %v506 = vcombine.low %v504, %v504
        %v508 = vadd.f32 %v490, %v506
        %v509 = vadd.f32 %v491, %v504
        %v510 = vmax.f32 %v508, -10.0
        %v511 = vmax.f32 %v509, -10.0
        %v512 = vmin.f32 %v510, 10.0
        %v513 = vmin.f32 %v511, 10.0
        %v514 = vld [vmem:[#allocation8] sm:$0xf]
        %516 = vset.pattern.permute.xlu0 0
        %517 = vperm.xlu0 %516, %v514
        %v518 = vpop.permute.xlu0 %517
        %v520 = vlaneseq
        %v521 = vshrl.u32 %v520, 7
        %v522 = vsub.s32 0, %v521
        %v523 = vrot.slane %v501, %v522
        %v524 = vlaneseq
        %v525 = vshrl.u32 %v524, 7
        %v526 = vsub.s32 0, %v525
        %v527 = vrot.slane %v502, %v526
        %v528 = vmul.f32 %v518, %v523
        %v529 = vmul.f32 %v518, %v527
        %530 = vset.pattern.permute.xlu0 1
        %531 = vperm.xlu0 %530, %v514
        %v532 = vpop.permute.xlu0 %531
        %v534 = vlaneseq
        %v535 = vshrl.u32 %v534, 7
        %v536 = vsub.s32 1, %v535
        %v537 = vrot.slane %v501, %v536
        %v538 = vlaneseq
        %v539 = vshrl.u32 %v538, 7
        %v540 = vsub.s32 1, %v539
        %v541 = vrot.slane %v502, %v540
        %v542 = vmul.f32 %v532, %v537
        %v543 = vmul.f32 %v532, %v541
        %v544 = vadd.f32 %v528, %v542
        %v545 = vadd.f32 %v529, %v543
        %546 = vset.pattern.permute.xlu0 2
        %547 = vperm.xlu0 %546, %v514
        %v548 = vpop.permute.xlu0 %547
        %v550 = vlaneseq
        %v551 = vshrl.u32 %v550, 7
        %v552 = vsub.s32 2, %v551
        %v553 = vrot.slane %v501, %v552
        %v554 = vlaneseq
        %v555 = vshrl.u32 %v554, 7
        %v556 = vsub.s32 2, %v555
        %v557 = vrot.slane %v502, %v556
        %v558 = vmul.f32 %v548, %v553
        %v559 = vmul.f32 %v548, %v557
        %v560 = vadd.f32 %v544, %v558
        %v561 = vadd.f32 %v545, %v559
        %562 = vset.pattern.permute.xlu0 3
        %563 = vperm.xlu0 %562, %v514
        %v564 = vpop.permute.xlu0 %563
        %v566 = vlaneseq
        %v567 = vshrl.u32 %v566, 7
        %v568 = vsub.s32 3, %v567
        %v569 = vrot.slane %v501, %v568
        %v570 = vlaneseq
        %v571 = vshrl.u32 %v570, 7
        %v572 = vsub.s32 3, %v571
        %v573 = vrot.slane %v502, %v572
        %v574 = vmul.f32 %v564, %v569
        %v575 = vmul.f32 %v564, %v573
        %v576 = vadd.f32 %v560, %v574
        %v577 = vadd.f32 %v561, %v575
        %v578 = vld [vmem:[#allocation10] sm:$0xf]
        %580 = vset.pattern.permute.xlu0 0
        %581 = vperm.xlu0 %580, %v578
        %v582 = vpop.permute.xlu0 %581
        %v584 = vlaneseq
        %v585 = vshrl.u32 %v584, 7
        %v586 = vsub.s32 4, %v585
        %v587 = vrot.slane %v512, %v586
        %v588 = vlaneseq
        %v589 = vshrl.u32 %v588, 7
        %v590 = vsub.s32 4, %v589
        %v591 = vrot.slane %v513, %v590
        %v592 = vmul.f32 %v582, %v587
        %v593 = vmul.f32 %v582, %v591
        %594 = vset.pattern.permute.xlu0 1
        %595 = vperm.xlu0 %594, %v578
        %v596 = vpop.permute.xlu0 %595
        %v598 = vlaneseq
        %v599 = vshrl.u32 %v598, 7
        %v600 = vsub.s32 5, %v599
        %v601 = vrot.slane %v512, %v600
        %v602 = vlaneseq
        %v603 = vshrl.u32 %v602, 7
        %v604 = vsub.s32 5, %v603
        %v605 = vrot.slane %v513, %v604
        %v606 = vmul.f32 %v596, %v601
        %v607 = vmul.f32 %v596, %v605
        %v608 = vadd.f32 %v592, %v606
        %v609 = vadd.f32 %v593, %v607
        %610 = vset.pattern.permute.xlu0 2
        %611 = vperm.xlu0 %610, %v578
        %v612 = vpop.permute.xlu0 %611
        %v614 = vlaneseq
        %v615 = vshrl.u32 %v614, 7
        %v616 = vsub.s32 6, %v615
        %v617 = vrot.slane %v512, %v616
        %v618 = vlaneseq
        %v619 = vshrl.u32 %v618, 7
        %v620 = vsub.s32 6, %v619
        %v621 = vrot.slane %v513, %v620
        %v622 = vmul.f32 %v612, %v617
        %v623 = vmul.f32 %v612, %v621
        %v624 = vadd.f32 %v608, %v622
        %v625 = vadd.f32 %v609, %v623
        %626 = vset.pattern.permute.xlu0 3
        %627 = vperm.xlu0 %626, %v578
        %v628 = vpop.permute.xlu0 %627
        %v630 = vlaneseq
        %v631 = vshrl.u32 %v630, 7
        %v632 = vsub.s32 7, %v631
        %v633 = vrot.slane %v512, %v632
        %v634 = vlaneseq
        %v635 = vshrl.u32 %v634, 7
        %v636 = vsub.s32 7, %v635
        %v637 = vrot.slane %v513, %v636
        %v638 = vmul.f32 %v628, %v633
        %v639 = vmul.f32 %v628, %v637
        %v640 = vadd.f32 %v624, %v638
        %v641 = vadd.f32 %v625, %v639
        %v642 = vadd.f32 %v576, %v640
        %v643 = vadd.f32 %v577, %v641
        %v644 = vld [vmem:[#allocation11] sm:$0xf]
        %646 = vset.pattern.permute.xlu0 0
        %647 = vperm.xlu0 %646, %v644
        %v648 = vpop.permute.xlu0 %647
        %v651 = vlaneseq
        %v652 = vshrl.u32 %v651, 7
        %v653 = vsub.s32 0, %v652
        %v654 = vrot.slane %v488, %v653
        %v655 = vlaneseq
        %v656 = vshrl.u32 %v655, 7
        %v657 = vsub.s32 4, %v656
        %v658 = vrot.slane %v488, %v657
        %v661 = vlaneseq
        %v662 = vshrl.u32 %v661, 7
        %v663 = vsub.s32 0, %v662
        %v664 = vrot.slane %v654, %v663
        %v665 = vlaneseq
        %v666 = vshrl.u32 %v665, 7
        %v667 = vsub.s32 0, %v666
        %v668 = vrot.slane %v658, %v667
        %v669 = vmul.f32 %v648, %v664
        %v670 = vmul.f32 %v648, %v668
        %671 = vset.pattern.permute.xlu0 1
        %672 = vperm.xlu0 %671, %v644
        %v673 = vpop.permute.xlu0 %672
        %v675 = vlaneseq
        %v676 = vshrl.u32 %v675, 7
        %v677 = vsub.s32 1, %v676
        %v678 = vrot.slane %v488, %v677
        %v679 = vlaneseq
        %v680 = vshrl.u32 %v679, 7
        %v681 = vsub.s32 5, %v680
        %v682 = vrot.slane %v488, %v681
        %v685 = vlaneseq
        %v686 = vshrl.u32 %v685, 7
        %v687 = vsub.s32 1, %v686
        %v688 = vrot.slane %v678, %v687
        %v689 = vlaneseq
        %v690 = vshrl.u32 %v689, 7
        %v691 = vsub.s32 1, %v690
        %v692 = vrot.slane %v682, %v691
        %v693 = vmul.f32 %v673, %v688
        %v694 = vmul.f32 %v673, %v692
        %v695 = vadd.f32 %v669, %v693
        %v696 = vadd.f32 %v670, %v694
        %697 = vset.pattern.permute.xlu0 2
        %698 = vperm.xlu0 %697, %v644
        %v699 = vpop.permute.xlu0 %698
        %v701 = vlaneseq
        %v702 = vshrl.u32 %v701, 7
        %v703 = vsub.s32 2, %v702
        %v704 = vrot.slane %v488, %v703
        %v705 = vlaneseq
        %v706 = vshrl.u32 %v705, 7
        %v707 = vsub.s32 6, %v706
        %v708 = vrot.slane %v488, %v707
        %v711 = vlaneseq
        %v712 = vshrl.u32 %v711, 7
        %v713 = vsub.s32 2, %v712
        %v714 = vrot.slane %v704, %v713
        %v715 = vlaneseq
        %v716 = vshrl.u32 %v715, 7
        %v717 = vsub.s32 2, %v716
        %v718 = vrot.slane %v708, %v717
        %v719 = vmul.f32 %v699, %v714
        %v720 = vmul.f32 %v699, %v718
        %v721 = vadd.f32 %v695, %v719
        %v722 = vadd.f32 %v696, %v720
        %723 = vset.pattern.permute.xlu0 3
        %724 = vperm.xlu0 %723, %v644
        %v725 = vpop.permute.xlu0 %724
        %v727 = vlaneseq
        %v728 = vshrl.u32 %v727, 7
        %v729 = vsub.s32 3, %v728
        %v730 = vrot.slane %v488, %v729
        %v731 = vlaneseq
        %v732 = vshrl.u32 %v731, 7
        %v733 = vsub.s32 7, %v732
        %v734 = vrot.slane %v488, %v733
        %v737 = vlaneseq
        %v738 = vshrl.u32 %v737, 7
        %v739 = vsub.s32 3, %v738
        %v740 = vrot.slane %v730, %v739
        %v741 = vlaneseq
        %v742 = vshrl.u32 %v741, 7
        %v743 = vsub.s32 3, %v742
        %v744 = vrot.slane %v734, %v743
        %v745 = vmul.f32 %v725, %v740
        %v746 = vmul.f32 %v725, %v744
        %v747 = vadd.f32 %v721, %v745
        %v748 = vadd.f32 %v722, %v746
        %v749 = vadd.f32 %v642, %v747
        %v750 = vadd.f32 %v643, %v748
        %v751 = vld [vmem:[#allocation13] sm:$0xf]
        %753 = vset.pattern.permute.xlu0 0
        %754 = vperm.xlu0 %753, %v751
        %v755 = vpop.permute.xlu0 %754
        %v758 = vlaneseq
        %v759 = vshrl.u32 %v758, 7
        %v760 = vsub.s32 0, %v759
        %v761 = vrot.slane %v489, %v760
        %v762 = vlaneseq
        %v763 = vshrl.u32 %v762, 7
        %v764 = vsub.s32 4, %v763
        %v765 = vrot.slane %v489, %v764
        %v768 = vlaneseq
        %v769 = vshrl.u32 %v768, 7
        %v770 = vsub.s32 0, %v769
        %v771 = vrot.slane %v761, %v770
        %v772 = vlaneseq
        %v773 = vshrl.u32 %v772, 7
        %v774 = vsub.s32 0, %v773
        %v775 = vrot.slane %v765, %v774
        %v776 = vmul.f32 %v755, %v771
        %v777 = vmul.f32 %v755, %v775
        %778 = vset.pattern.permute.xlu0 1
        %779 = vperm.xlu0 %778, %v751
        %v780 = vpop.permute.xlu0 %779
        %v782 = vlaneseq
        %v783 = vshrl.u32 %v782, 7
        %v784 = vsub.s32 1, %v783
        %v785 = vrot.slane %v489, %v784
        %v786 = vlaneseq
        %v787 = vshrl.u32 %v786, 7
        %v788 = vsub.s32 5, %v787
        %v789 = vrot.slane %v489, %v788
        %v792 = vlaneseq
        %v793 = vshrl.u32 %v792, 7
        %v794 = vsub.s32 1, %v793
        %v795 = vrot.slane %v785, %v794
        %v796 = vlaneseq
        %v797 = vshrl.u32 %v796, 7
        %v798 = vsub.s32 1, %v797
        %v799 = vrot.slane %v789, %v798
        %v800 = vmul.f32 %v780, %v795
        %v801 = vmul.f32 %v780, %v799
        %v802 = vadd.f32 %v776, %v800
        %v803 = vadd.f32 %v777, %v801
        %804 = vset.pattern.permute.xlu0 2
        %805 = vperm.xlu0 %804, %v751
        %v806 = vpop.permute.xlu0 %805
        %v808 = vlaneseq
        %v809 = vshrl.u32 %v808, 7
        %v810 = vsub.s32 2, %v809
        %v811 = vrot.slane %v489, %v810
        %v812 = vlaneseq
        %v813 = vshrl.u32 %v812, 7
        %v814 = vsub.s32 6, %v813
        %v815 = vrot.slane %v489, %v814
        %v818 = vlaneseq
        %v819 = vshrl.u32 %v818, 7
        %v820 = vsub.s32 2, %v819
        %v821 = vrot.slane %v811, %v820
        %v822 = vlaneseq
        %v823 = vshrl.u32 %v822, 7
        %v824 = vsub.s32 2, %v823
        %v825 = vrot.slane %v815, %v824
        %v826 = vmul.f32 %v806, %v821
        %v827 = vmul.f32 %v806, %v825
        %v828 = vadd.f32 %v802, %v826
        %v829 = vadd.f32 %v803, %v827
        %830 = vset.pattern.permute.xlu0 3
        %831 = vperm.xlu0 %830, %v751
        %v832 = vpop.permute.xlu0 %831
        %v834 = vlaneseq
        %v835 = vshrl.u32 %v834, 7
        %v836 = vsub.s32 3, %v835
        %v837 = vrot.slane %v489, %v836
        %v838 = vlaneseq
        %v839 = vshrl.u32 %v838, 7
        %v840 = vsub.s32 7, %v839
        %v841 = vrot.slane %v489, %v840
        %v844 = vlaneseq
        %v845 = vshrl.u32 %v844, 7
        %v846 = vsub.s32 3, %v845
        %v847 = vrot.slane %v837, %v846
        %v848 = vlaneseq
        %v849 = vshrl.u32 %v848, 7
        %v850 = vsub.s32 3, %v849
        %v851 = vrot.slane %v841, %v850
        %v852 = vmul.f32 %v832, %v847
        %v853 = vmul.f32 %v832, %v851
        %v854 = vadd.f32 %v828, %v852
        %v855 = vadd.f32 %v829, %v853
        %v856 = vadd.f32 %v749, %v854
        %v857 = vadd.f32 %v750, %v855
        %v858 = vld [vmem:[#allocation14] sm:$0xf]
        %860 = vset.pattern.permute.xlu0 0
        %861 = vperm.xlu0 %860, %v858
        %v862 = vpop.permute.xlu0 %861
        %v864 = vadd.f32 %v856, %v862
        %v865 = vadd.f32 %v857, %v862
        %v868 = vcombine.low %v864, %v865
        %870 = vst [vmem:[%s483] sm:$0xff] %v868
        %s871 = sand.u32 %s242, 1
        %s872 = scalar_lea.sflag [#allocation4], %s871
        %s873 = sand.u32 %s242, 1
        %s874 = smul.addr %s873, 8
        %s875 = scalar_lea.vmem [#allocation16], %s874
        // Predicated region
        $region85: #{ffab_forward.37} parent=51 // pred_check
          %p876 = pneg %p252
        $region86: #{ffab_forward.37} parent=51 // pred_check_branch
          %878 = sbr.rel (%p876) target = $region88
        $region87: #{ffab_forward.37} parent=51 // pred_region
          %s879 = smul.u32 2, %s36
          %s881 = ssub.s32 128, 128
          %882 = vsyncadd %s872, %s881
          %s883 = smul.addr %s35, 2
          %s884 = sadd.s32 %s879, %s883
          %s885 = smul.addr %s884, 64
          %s886 = scalar_lea.hbm %s8, %s885
          %s888 = sshll.u32 %s875, 4
          %s889 = int_to_ptr.vmem [resolvable:$true] %s888
          %891 = dma.vmem_to_hbm [thread:$0]  %s889, 128, %s886, %s872
        $region88: #{ffab_forward.37} parent=51 // pred_fallthru
          _
      $region52: #{ffab_forward.37} parent=5 // pred_fallthru
        _
      %p892 = scmp.le.s32.totalorder 2, %s26
      // Predicated region
      $region89: #{ffab_forward.37} parent=5 // pred_check
        %p893 = pneg %p892
      $region90: #{ffab_forward.37} parent=5 // pred_check_branch
        %895 = sbr.rel (%p893) target = $region92
      $region91: #{ffab_forward.37} parent=5 // pred_region
        %s896 = ssub.s32 %s26, 2
        // Predicated region
        $region93: #{ffab_forward.37} parent=91 // pred_check
          %p897 = pneg %p258
        $region94: #{ffab_forward.37} parent=91 // pred_check_branch
          %899 = sbr.rel (%p897) target = $region96
        $region95: #{ffab_forward.37} parent=91 // pred_region
          %s900 = sand.u32 %s243, 1
          %s901 = scalar_lea.sflag [#allocation4], %s900
          %s902 = sand.u32 %s243, 1
          %s903 = smul.addr %s902, 8
          %s904 = scalar_lea.vmem [#allocation16], %s903
          %905 = dma.done %s901, 128
        $region96: #{ffab_forward.37} parent=91 // pred_fallthru
          _
      $region92: #{ffab_forward.37} parent=5 // pred_fallthru
        _
    $region6: #{ffab_forward.37} parent=1 // loop_footer
      %s30 = sadd.s32 1, %s26
    $region7: #{ffab_forward.37} parent=1 // loop_footer_branch
      %25 = sbr.rel target = $region3
    $region8: #{ffab_forward.37} parent=1 // loop_exit
      _
    %906 = vsyncpa [#allocation3], 1
    %s907 = scalar_lea.sflag [#allocation3], 1
    %908 = vsyncpa %s907, 1
    %909 = vsyncpa [#allocation6], 1
    %s910 = scalar_lea.sflag [#allocation6], 1
    %911 = vsyncpa %s910, 1
    %912 = vsyncpa [#allocation9], 1
    %913 = vsyncpa [#allocation12], 1
    %914 = vsyncpa [#allocation15], 1
    %915 = vsyncpa [#allocation4], 1
    %s916 = scalar_lea.sflag [#allocation4], 1
    %917 = vsyncpa %s916, 1

</llo_original>
